<compile_context>
chip_gen: v5e
topology: v5e:2x2
jax: 0.10.0
libtpu: 0.0.40
codegen_flags: <defaults>
</compile_context>

<pallas_src>
import functools

import jax
import jax.numpy as jnp
from jax.experimental import pallas as pl
from jax.experimental.pallas import tpu as pltpu

_VMEM_LIMIT = 32 * 1024 * 1024   # <= v7x physical 64 MiB; generous everywhere.
_LANE = 128                      # TPU lane width; channel dims padded to this.
_BN_EPS = 1e-5                   # torch.nn.BatchNorm2d default eps.


def _ceil_to(x, m):
    return ((x + m - 1) // m) * m


# ---------------------------------------------------------------------------
# Pallas kernels
# ---------------------------------------------------------------------------

def _conv3x3_fused_kernel(*refs, K, TH, Wo, has_affine, relu, has_res):
    """Fused KxK stride-1 conv for one (batch, row-tile) grid step.

    refs = (x, w, b[, scale, shift][, residual], out):
      x:           (Hp, Wp, Cin_p)     bf16, spatially pre-padded, whole image
      w:           (K*K*Cin_p, Cout_p) bf16, im2col-flattened weights
      b:           (1, Cout_p)         f32 bias
      scale/shift: (1, Cout_p)         f32 eval-BatchNorm affine (optional)
      residual:    (TH, Wo, Cout_p)    bf16 shortcut tile (optional)
      out:         (TH, Wo, Cout_p)
    """
    x_ref, w_ref, b_ref = refs[0], refs[1], refs[2]
    i = 3
    if has_affine:
        s_ref, t_ref = refs[i], refs[i + 1]
        i += 2
    if has_res:
        r_ref = refs[i]
        i += 1
    o_ref = refs[i]

    cin_p = x_ref.shape[-1]
    cout_p = o_ref.shape[-1]
    row0 = pl.multiple_of(pl.program_id(1) * TH, TH)

    # im2col slab + single MXU dot: accumulation stays inside the MXU result
    # path instead of K*K VPU adds on a VMEM-resident accumulator.
    patches = []
    for kh in range(K):
        for kw in range(K):
            patches.append(x_ref[pl.ds(row0 + kh, TH), pl.ds(kw, Wo), :])
    slab = jnp.concatenate(patches, axis=-1).reshape(TH * Wo, K * K * cin_p)
    acc = jnp.dot(slab, w_ref[...], preferred_element_type=jnp.float32)

    # Epilogues (in-register; no extra HBM round trips).
    acc = acc + b_ref[...]
    if has_affine:
        acc = acc * s_ref[...] + t_ref[...]
    if relu:
        acc = jnp.maximum(acc, 0.0)
    acc = acc.reshape(TH, Wo, cout_p)
    if has_res:
        acc = acc + r_ref[...].astype(jnp.float32)
    o_ref[...] = acc.astype(o_ref.dtype)


def _affine_relu_kernel(x_ref, s_ref, t_ref, o_ref):
    """Per-channel affine (eval-mode BatchNorm) + ReLU."""
    o_ref[...] = jnp.maximum(x_ref[...] * s_ref[...] + t_ref[...], 0.0)


# ---------------------------------------------------------------------------
# Pallas wrappers
# ---------------------------------------------------------------------------

def conv3x3_fused(x, w, b, *, scale=None, shift=None, residual=None,
                  relu=False, out_dtype=jnp.bfloat16, tile_h=8):
    """Fused NHWC KxK stride-1 'same' conv with optional epilogues.

    x:        (B, H, W, Cin_x) any float dtype (unpadded); Cin_x may already
              include lane padding (extra channels must have zero weights).
    w:        (K, K, Cin_w, Cout) f32 (== torch OIHW transposed), Cin_w<=Cin_x.
    b:        (Cout,) f32.
    scale/shift: (Cout,) f32 epilogue affine (eval BatchNorm), then optional ReLU.
    residual: (B, H, W, Cout_p) added last (Cout_p = ceil(Cout/128)*128).
    Returns (B, H, W, Cout_p); real channels first, padded channels are zero.
    """
    assert (scale is None) == (shift is None)
    B, H, W, cin_x = x.shape
    K, _, cin_w, cout = w.shape
    assert cin_w <= cin_x
    pad = (K - 1) // 2
    cin_p = _ceil_to(cin_x, _LANE)
    cout_p = _ceil_to(cout, _LANE)

    # bf16 inputs/weights (f32 accumulation in the kernel); channels padded to
    # the lane width so loads/stores are lane-dense.
    xp = jnp.pad(x.astype(jnp.bfloat16),
                 ((0, 0), (pad, pad), (pad, pad), (0, cin_p - cin_x)))
    w_flat = jnp.pad(w, ((0, 0), (0, 0), (0, cin_p - cin_w), (0, cout_p - cout))
                     ).reshape(K * K * cin_p, cout_p).astype(jnp.bfloat16)
    b_p = jnp.pad(b, (0, cout_p - cout)).reshape(1, cout_p).astype(jnp.float32)

    Hp, Wp = H + 2 * pad, W + 2 * pad
    Ho, Wo = H, W
    TH = min(tile_h, Ho)
    while Ho % TH:
        TH -= 1
    R = Ho // TH

    has_affine = scale is not None
    has_res = residual is not None

    in_specs = [
        pl.BlockSpec((None, Hp, Wp, cin_p), lambda bi, ri: (bi, 0, 0, 0)),
        pl.BlockSpec((K * K * cin_p, cout_p), lambda bi, ri: (0, 0)),
        pl.BlockSpec((1, cout_p), lambda bi, ri: (0, 0)),
    ]
    args = [xp, w_flat, b_p]
    if has_affine:
        # Pad scale with 1 and shift with 0 so padded channels stay exactly 0.
        s_p = jnp.pad(scale, (0, cout_p - cout), constant_values=1.0
                      ).reshape(1, cout_p).astype(jnp.float32)
        t_p = jnp.pad(shift, (0, cout_p - cout)).reshape(1, cout_p).astype(jnp.float32)
        in_specs += [pl.BlockSpec((1, cout_p), lambda bi, ri: (0, 0)),
                     pl.BlockSpec((1, cout_p), lambda bi, ri: (0, 0))]
        args += [s_p, t_p]
    if has_res:
        assert residual.shape == (B, Ho, Wo, cout_p), residual.shape
        in_specs.append(
            pl.BlockSpec((None, TH, Wo, cout_p), lambda bi, ri: (bi, ri, 0, 0)))
        args.append(residual)

    kernel = functools.partial(_conv3x3_fused_kernel, K=K, TH=TH, Wo=Wo,
                               has_affine=has_affine, relu=relu, has_res=has_res)
    return pl.pallas_call(
        kernel,
        out_shape=jax.ShapeDtypeStruct((B, Ho, Wo, cout_p), out_dtype),
        grid=(B, R),
        in_specs=in_specs,
        out_specs=pl.BlockSpec((None, TH, Wo, cout_p), lambda bi, ri: (bi, ri, 0, 0)),
        compiler_params=pltpu.CompilerParams(
            dimension_semantics=("parallel", "parallel"),
            vmem_limit_bytes=_VMEM_LIMIT),
    )(*args)


def affine_relu(x, scale, shift):
    """Eval-mode BatchNorm2d + ReLU on a small low-resolution NHWC tensor."""
    B, H, W, C = x.shape
    return pl.pallas_call(
        _affine_relu_kernel,
        out_shape=jax.ShapeDtypeStruct((B, H, W, C), jnp.float32),
        grid=(B,),
        in_specs=[
            pl.BlockSpec((None, H, W, C), lambda bi: (bi, 0, 0, 0)),
            pl.BlockSpec((1, C), lambda bi: (0, 0)),
            pl.BlockSpec((1, C), lambda bi: (0, 0)),
        ],
        out_specs=pl.BlockSpec((None, H, W, C), lambda bi: (bi, 0, 0, 0)),
        compiler_params=pltpu.CompilerParams(
            dimension_semantics=("parallel",),
            vmem_limit_bytes=_VMEM_LIMIT),
    )(x.astype(jnp.float32),
      scale.reshape(1, C).astype(jnp.float32),
      shift.reshape(1, C).astype(jnp.float32))


# ---------------------------------------------------------------------------
# Model glue (pure data movement) + forward
# ---------------------------------------------------------------------------

def repeat4_pixel_shuffle2(x):
    """torch: x.repeat((1,4,1,1)) followed by nn.PixelShuffle(2), in NHWC.

    out[b, 2h+i, 2w+j, c] = x[b, h, w, (4c + 2i + j) mod C]
    """
    B, H, W, C = x.shape
    x4 = jnp.tile(x, (1, 1, 1, 4))
    x4 = x4.reshape(B, H, W, C, 2, 2)                 # (..., c, i, j)
    return x4.transpose(0, 1, 4, 2, 5, 3).reshape(B, 2 * H, 2 * W, C)


def _bn_scale_shift(bn_params):
    gamma, beta, mean, var = bn_params
    s = gamma / jnp.sqrt(var + _BN_EPS)
    return s, beta - mean * s


def residual_block_up_forward(params, x_nchw):
    """ResidualBlock(n_input, n_output, k, resample='up', bn=True).forward."""
    x = jnp.transpose(x_nchw, (0, 2, 3, 1)).astype(jnp.float32)   # NHWC
    cout = params["c1_w"].shape[-1]

    # --- shortcut: UpsampleConv(x) = repeat x4 -> PixelShuffle(2) -> Conv2d.
    sc = conv3x3_fused(repeat4_pixel_shuffle2(x),
                       params["sc_w"], params["sc_b"],
                       out_dtype=jnp.bfloat16)                    # (B,2H,2W,Cout_p)

    # --- main branch: BN1 + ReLU (pre-shuffle, small low-res kernel) ...
    s1, t1 = _bn_scale_shift(params["bn1"])
    a = affine_relu(x, s1, t1)

    # ... UpsampleConv with BN2 + ReLU fused as the conv epilogue ...
    s2, t2 = _bn_scale_shift(params["bn2"])
    h = conv3x3_fused(repeat4_pixel_shuffle2(a),
                      params["c1_w"], params["c1_b"],
                      scale=s2, shift=t2, relu=True,
                      out_dtype=jnp.bfloat16)                     # (B,2H,2W,Cout_p)

    # ... Conv2 with the residual add fused as the conv epilogue.
    out = conv3x3_fused(h, params["c2_w"], params["c2_b"],
                        residual=sc, out_dtype=jnp.float32)       # (B,2H,2W,Cout_p)

    out = out[..., :cout]                                         # drop lane padding
    return jnp.transpose(out, (0, 3, 1, 2))                       # NCHW


# ---------------------------------------------------------------------------
# Pure-JAX f32 reference (for correctness check)
# ---------------------------------------------------------------------------

def _ref_conv(x, w, b):
    pad = (w.shape[0] - 1) // 2
    y = jax.lax.conv_general_dilated(
        x, w, window_strides=(1, 1), padding=((pad, pad), (pad, pad)),
        dimension_numbers=("NHWC", "HWIO", "NHWC"))
    return y + b


def residual_block_up_ref(params, x_nchw):
    x = jnp.transpose(x_nchw, (0, 2, 3, 1)).astype(jnp.float32)

    def bn(v, p):
        gamma, beta, mean, var = p
        return (v - mean) / jnp.sqrt(var + _BN_EPS) * gamma + beta

    sc = _ref_conv(repeat4_pixel_shuffle2(x), params["sc_w"], params["sc_b"])
    h = jnp.maximum(bn(x, params["bn1"]), 0.0)
    h = _ref_conv(repeat4_pixel_shuffle2(h), params["c1_w"], params["c1_b"])
    h = jnp.maximum(bn(h, params["bn2"]), 0.0)
    h = _ref_conv(h, params["c2_w"], params["c2_b"])
    return jnp.transpose(sc + h, (0, 3, 1, 2))


# ---------------------------------------------------------------------------
# Deterministic synthetic parameters
# ---------------------------------------------------------------------------

def init_params(key, n_input, n_output, k=3):
    ks = iter(jax.random.split(key, 16))

    def w(cin, cout):
        return 0.05 * jax.random.normal(next(ks), (k, k, cin, cout), jnp.float32)

    def b(c):
        return 0.02 * jax.random.normal(next(ks), (c,), jnp.float32)

    def bn(c):
        return (1.0 + 0.05 * jax.random.normal(next(ks), (c,), jnp.float32),       # gamma
                0.05 * jax.random.normal(next(ks), (c,), jnp.float32),              # beta
                0.05 * jax.random.normal(next(ks), (c,), jnp.float32),              # running mean
                1.0 + 0.05 * jnp.abs(jax.random.normal(next(ks), (c,), jnp.float32)))  # running var

    return dict(
        sc_w=w(n_input, n_output), sc_b=b(n_output),     # conv_shortcut (UpsampleConv)
        c1_w=w(n_input, n_output), c1_b=b(n_output),     # conv1 (UpsampleConv)
        c2_w=w(n_output, n_output), c2_b=b(n_output),    # conv2 (Conv2d)
        bn1=bn(n_input), bn2=bn(n_output),
    )


# ---------------------------------------------------------------------------

if __name__ == "__main__":
    B, C_IN, C_OUT, H, K_SIZE = 2, 4, 8, 16, 3

    key = jax.random.PRNGKey(0)
    kp, kx = jax.random.split(key)
    params = init_params(kp, C_IN, C_OUT, K_SIZE)
    x = jax.random.normal(kx, (B, C_IN, H, H), jnp.float32)       # NCHW

    fwd = jax.jit(residual_block_up_forward)
    out = jax.block_until_ready(fwd(params, x))

    assert out.shape == (B, C_OUT, 2 * H, 2 * H), out.shape
    assert bool(jnp.all(jnp.isfinite(out)))

    ref = residual_block_up_ref(params, x)
    err = float(jnp.max(jnp.abs(out - ref)))
    assert err < 5e-2, f"max abs err vs f32 reference: {err}"

    print("KERNEL_OK")
</pallas_src>

<mosaic_0001>
module attributes {stable_mosaic.version = 11 : i64} {
  func.func @_affine_relu_kernel(%arg0: i32, %arg1: memref<1x16x16x4xf32, #tpu.memory_space<vmem>>, %arg2: memref<1x4xf32, #tpu.memory_space<vmem>>, %arg3: memref<1x4xf32, #tpu.memory_space<vmem>>, %arg4: memref<1x16x16x4xf32, #tpu.memory_space<vmem>>) attributes {dimension_semantics = [#tpu.dimension_semantics<parallel>], iteration_bounds = array<i64: 2>, scalar_prefetch = 0 : i64, scratch_operands = 0 : i64, tpu.core_type = #tpu.core_type<tc>, window_params = [{transform_indices = @transform_0, window_bounds = array<i64: 1, 16, 16, 4>}, {pipeline_mode = #tpu.pipeline_mode<synchronous>, transform_indices = @transform_1, window_bounds = array<i64: 1, 4>}, {pipeline_mode = #tpu.pipeline_mode<synchronous>, transform_indices = @transform_2, window_bounds = array<i64: 1, 4>}, {transform_indices = @transform_3, window_bounds = array<i64: 1, 16, 16, 4>}]} {
    %c0 = arith.constant 0 : index
    %c0_0 = arith.constant 0 : index
    %c0_1 = arith.constant 0 : index
    %c0_2 = arith.constant 0 : index
    %0 = vector.load %arg1[%c0, %c0_0, %c0_1, %c0_2] : memref<1x16x16x4xf32, #tpu.memory_space<vmem>>, vector<1x16x16x4xf32>
    %1 = vector.shape_cast %0 : vector<1x16x16x4xf32> to vector<16x16x4xf32>
    %c0_3 = arith.constant 0 : index
    %c0_4 = arith.constant 0 : index
    %2 = vector.load %arg2[%c0_3, %c0_4] : memref<1x4xf32, #tpu.memory_space<vmem>>, vector<1x4xf32>
    %3 = vector.shape_cast %2 : vector<1x4xf32> to vector<1x1x4xf32>
    %4 = vector.broadcast %3 : vector<1x1x4xf32> to vector<16x16x4xf32>
    %5 = arith.mulf %1, %4 : vector<16x16x4xf32>
    %c0_5 = arith.constant 0 : index
    %c0_6 = arith.constant 0 : index
    %6 = vector.load %arg3[%c0_5, %c0_6] : memref<1x4xf32, #tpu.memory_space<vmem>>, vector<1x4xf32>
    %7 = vector.shape_cast %6 : vector<1x4xf32> to vector<1x1x4xf32>
    %8 = vector.broadcast %7 : vector<1x1x4xf32> to vector<16x16x4xf32>
    %9 = arith.addf %5, %8 : vector<16x16x4xf32>
    %cst = arith.constant 0.000000e+00 : f32
    %10 = vector.broadcast %cst : f32 to vector<16x16x4xf32>
    %11 = arith.maximumf %9, %10 : vector<16x16x4xf32>
    %c0_7 = arith.constant 0 : index
    %c0_8 = arith.constant 0 : index
    %c0_9 = arith.constant 0 : index
    %c0_10 = arith.constant 0 : index
    %12 = vector.load %arg4[%c0_7, %c0_8, %c0_9, %c0_10] : memref<1x16x16x4xf32, #tpu.memory_space<vmem>>, vector<1x16x16x4xf32>
    %13 = vector.shape_cast %12 : vector<1x16x16x4xf32> to vector<16x16x4xf32>
    %14 = vector.shape_cast %11 : vector<16x16x4xf32> to vector<1x16x16x4xf32>
    tpu.vector_store %arg4[%c0_7, %c0_8, %c0_9, %c0_10], %14 {strides = array<i32>} : memref<1x16x16x4xf32, #tpu.memory_space<vmem>>, vector<1x16x16x4xf32>,
    return
  }
  func.func @transform_0(%arg0: i32) -> (i32, i32, i32, i32) {
    %c0_i32 = arith.constant 0 : i32
    %c0_i32_0 = arith.constant 0 : i32
    %c0_i32_1 = arith.constant 0 : i32
    %c0_i32_2 = arith.constant 0 : i32
    return %arg0, %c0_i32, %c0_i32_0, %c0_i32_1 : i32, i32, i32, i32
  }
  func.func @transform_1(%arg0: i32) -> (i32, i32) {
    %c0_i32 = arith.constant 0 : i32
    %c0_i32_0 = arith.constant 0 : i32
    %c0_i32_1 = arith.constant 0 : i32
    return %c0_i32, %c0_i32_0 : i32, i32
  }
  func.func @transform_2(%arg0: i32) -> (i32, i32) {
    %c0_i32 = arith.constant 0 : i32
    %c0_i32_0 = arith.constant 0 : i32
    %c0_i32_1 = arith.constant 0 : i32
    return %c0_i32, %c0_i32_0 : i32, i32
  }
  func.func @transform_3(%arg0: i32) -> (i32, i32, i32, i32) {
    %c0_i32 = arith.constant 0 : i32
    %c0_i32_0 = arith.constant 0 : i32
    %c0_i32_1 = arith.constant 0 : i32
    %c0_i32_2 = arith.constant 0 : i32
    return %arg0, %c0_i32, %c0_i32_0, %c0_i32_1 : i32, i32, i32, i32
  }
}

module attributes {stable_mosaic.version = 11 : i64} {
  func.func @_conv3x3_fused_kernel(%arg0: i32, %arg1: i32, %arg2: memref<1x34x34x128xbf16, #tpu.memory_space<vmem>>, %arg3: memref<1152x128xbf16, #tpu.memory_space<vmem>>, %arg4: memref<1x128xf32, #tpu.memory_space<vmem>>, %arg5: memref<1x8x32x128xbf16, #tpu.memory_space<vmem>>) attributes {dimension_semantics = [#tpu.dimension_semantics<parallel>, #tpu.dimension_semantics<parallel>], iteration_bounds = array<i64: 2, 4>, scalar_prefetch = 0 : i64, scratch_operands = 0 : i64, tpu.core_type = #tpu.core_type<tc>, window_params = [{transform_indices = @transform_0, window_bounds = array<i64: 1, 34, 34, 128>}, {pipeline_mode = #tpu.pipeline_mode<synchronous>, transform_indices = @transform_1, window_bounds = array<i64: 1152, 128>}, {pipeline_mode = #tpu.pipeline_mode<synchronous>, transform_indices = @transform_2, window_bounds = array<i64: 1, 128>}, {transform_indices = @transform_3, window_bounds = array<i64: 1, 8, 32, 128>}]} {
    %c8_i32 = arith.constant 8 : i32
    %0 = arith.muli %arg1, %c8_i32 : i32
    %1 = tpu.assume_multiple %0, 8 : i32
    %c0_i32 = arith.constant 0 : i32
    %2 = arith.addi %1, %c0_i32 : i32
    %c0 = arith.constant 0 : index
    %3 = arith.index_cast %2 : i32 to index
    %c0_0 = arith.constant 0 : index
    %c0_1 = arith.constant 0 : index
    %4 = vector.load %arg2[%c0, %3, %c0_0, %c0_1] : memref<1x34x34x128xbf16, #tpu.memory_space<vmem>>, vector<1x8x32x128xbf16>
    %5 = vector.shape_cast %4 : vector<1x8x32x128xbf16> to vector<8x32x128xbf16>
    %c0_i32_2 = arith.constant 0 : i32
    %6 = arith.addi %1, %c0_i32_2 : i32
    %c0_3 = arith.constant 0 : index
    %7 = arith.index_cast %6 : i32 to index
    %c1 = arith.constant 1 : index
    %c0_4 = arith.constant 0 : index
    %8 = vector.load %arg2[%c0_3, %7, %c1, %c0_4] : memref<1x34x34x128xbf16, #tpu.memory_space<vmem>>, vector<1x8x32x128xbf16>
    %9 = vector.shape_cast %8 : vector<1x8x32x128xbf16> to vector<8x32x128xbf16>
    %c0_i32_5 = arith.constant 0 : i32
    %10 = arith.addi %1, %c0_i32_5 : i32
    %c0_6 = arith.constant 0 : index
    %11 = arith.index_cast %10 : i32 to index
    %c2 = arith.constant 2 : index
    %c0_7 = arith.constant 0 : index
    %12 = vector.load %arg2[%c0_6, %11, %c2, %c0_7] : memref<1x34x34x128xbf16, #tpu.memory_space<vmem>>, vector<1x8x32x128xbf16>
    %13 = vector.shape_cast %12 : vector<1x8x32x128xbf16> to vector<8x32x128xbf16>
    %c1_i32 = arith.constant 1 : i32
    %14 = arith.addi %1, %c1_i32 : i32
    %c0_8 = arith.constant 0 : index
    %15 = arith.index_cast %14 : i32 to index
    %c0_9 = arith.constant 0 : index
    %c0_10 = arith.constant 0 : index
    %16 = vector.load %arg2[%c0_8, %15, %c0_9, %c0_10] : memref<1x34x34x128xbf16, #tpu.memory_space<vmem>>, vector<1x8x32x128xbf16>
    %17 = vector.shape_cast %16 : vector<1x8x32x128xbf16> to vector<8x32x128xbf16>
    %c1_i32_11 = arith.constant 1 : i32
    %18 = arith.addi %1, %c1_i32_11 : i32
    %c0_12 = arith.constant 0 : index
    %19 = arith.index_cast %18 : i32 to index
    %c1_13 = arith.constant 1 : index
    %c0_14 = arith.constant 0 : index
    %20 = vector.load %arg2[%c0_12, %19, %c1_13, %c0_14] : memref<1x34x34x128xbf16, #tpu.memory_space<vmem>>, vector<1x8x32x128xbf16>
    %21 = vector.shape_cast %20 : vector<1x8x32x128xbf16> to vector<8x32x128xbf16>
    %c1_i32_15 = arith.constant 1 : i32
    %22 = arith.addi %1, %c1_i32_15 : i32
    %c0_16 = arith.constant 0 : index
    %23 = arith.index_cast %22 : i32 to index
    %c2_17 = arith.constant 2 : index
    %c0_18 = arith.constant 0 : index
    %24 = vector.load %arg2[%c0_16, %23, %c2_17, %c0_18] : memref<1x34x34x128xbf16, #tpu.memory_space<vmem>>, vector<1x8x32x128xbf16>
    %25 = vector.shape_cast %24 : vector<1x8x32x128xbf16> to vector<8x32x128xbf16>
    %c2_i32 = arith.constant 2 : i32
    %26 = arith.addi %1, %c2_i32 : i32
    %c0_19 = arith.constant 0 : index
    %27 = arith.index_cast %26 : i32 to index
    %c0_20 = arith.constant 0 : index
    %c0_21 = arith.constant 0 : index
    %28 = vector.load %arg2[%c0_19, %27, %c0_20, %c0_21] : memref<1x34x34x128xbf16, #tpu.memory_space<vmem>>, vector<1x8x32x128xbf16>
    %29 = vector.shape_cast %28 : vector<1x8x32x128xbf16> to vector<8x32x128xbf16>
    %c2_i32_22 = arith.constant 2 : i32
    %30 = arith.addi %1, %c2_i32_22 : i32
    %c0_23 = arith.constant 0 : index
    %31 = arith.index_cast %30 : i32 to index
    %c1_24 = arith.constant 1 : index
    %c0_25 = arith.constant 0 : index
    %32 = vector.load %arg2[%c0_23, %31, %c1_24, %c0_25] : memref<1x34x34x128xbf16, #tpu.memory_space<vmem>>, vector<1x8x32x128xbf16>
    %33 = vector.shape_cast %32 : vector<1x8x32x128xbf16> to vector<8x32x128xbf16>
    %c2_i32_26 = arith.constant 2 : i32
    %34 = arith.addi %1, %c2_i32_26 : i32
    %c0_27 = arith.constant 0 : index
    %35 = arith.index_cast %34 : i32 to index
    %c2_28 = arith.constant 2 : index
    %c0_29 = arith.constant 0 : index
    %36 = vector.load %arg2[%c0_27, %35, %c2_28, %c0_29] : memref<1x34x34x128xbf16, #tpu.memory_space<vmem>>, vector<1x8x32x128xbf16>
    %37 = vector.shape_cast %36 : vector<1x8x32x128xbf16> to vector<8x32x128xbf16>
    %38 = tpu.concatenate %5, %9, %13, %17, %21, %25, %29, %33, %37 in 2 : vector<8x32x128xbf16>, vector<8x32x128xbf16>, vector<8x32x128xbf16>, vector<8x32x128xbf16>, vector<8x32x128xbf16>, vector<8x32x128xbf16>, vector<8x32x128xbf16>, vector<8x32x128xbf16>, vector<8x32x128xbf16> -> vector<8x32x1152xbf16>
    %39 = vector.shape_cast %38 : vector<8x32x1152xbf16> to vector<256x1152xbf16>
    %c0_30 = arith.constant 0 : index
    %c0_31 = arith.constant 0 : index
    %40 = vector.load %arg3[%c0_30, %c0_31] : memref<1152x128xbf16, #tpu.memory_space<vmem>>, vector<1152x128xbf16>
    %cst = arith.constant dense<0.000000e+00> : vector<256x128xf32>
    %41 = tpu.matmul %39, %40, %cst {dimension_numbers = #tpu.dot_dimension_numbers<[1], [0], [0], [1], [0, 0, 1, 1], [], []>} : vector<256x1152xbf16>, vector<1152x128xbf16>, vector<256x128xf32> -> vector<256x128xf32>
    %c0_32 = arith.constant 0 : index
    %c0_33 = arith.constant 0 : index
    %42 = vector.load %arg4[%c0_32, %c0_33] : memref<1x128xf32, #tpu.memory_space<vmem>>, vector<1x128xf32>
    %43 = vector.broadcast %42 : vector<1x128xf32> to vector<256x128xf32>
    %44 = arith.addf %41, %43 : vector<256x128xf32>
    %45 = vector.shape_cast %44 : vector<256x128xf32> to vector<8x32x128xf32>
    %46 = arith.truncf %45 : vector<8x32x128xf32> to vector<8x32x128xbf16>
    %c0_34 = arith.constant 0 : index
    %c0_35 = arith.constant 0 : index
    %c0_36 = arith.constant 0 : index
    %c0_37 = arith.constant 0 : index
    %47 = vector.load %arg5[%c0_34, %c0_35, %c0_36, %c0_37] : memref<1x8x32x128xbf16, #tpu.memory_space<vmem>>, vector<1x8x32x128xbf16>
    %48 = vector.shape_cast %47 : vector<1x8x32x128xbf16> to vector<8x32x128xbf16>
    %49 = vector.shape_cast %46 : vector<8x32x128xbf16> to vector<1x8x32x128xbf16>
    tpu.vector_store %arg5[%c0_34, %c0_35, %c0_36, %c0_37], %49 {strides = array<i32>} : memref<1x8x32x128xbf16, #tpu.memory_space<vmem>>, vector<1x8x32x128xbf16>,
    return
  }
  func.func @transform_0(%arg0: i32, %arg1: i32) -> (i32, i32, i32, i32) {
    %c0_i32 = arith.constant 0 : i32
    %c0_i32_0 = arith.constant 0 : i32
    %c0_i32_1 = arith.constant 0 : i32
    %c0_i32_2 = arith.constant 0 : i32
    return %arg0, %c0_i32, %c0_i32_0, %c0_i32_1 : i32, i32, i32, i32
  }
  func.func @transform_1(%arg0: i32, %arg1: i32) -> (i32, i32) {
    %c0_i32 = arith.constant 0 : i32
    %c0_i32_0 = arith.constant 0 : i32
    %c0_i32_1 = arith.constant 0 : i32
    return %c0_i32, %c0_i32_0 : i32, i32
  }
  func.func @transform_2(%arg0: i32, %arg1: i32) -> (i32, i32) {
    %c0_i32 = arith.constant 0 : i32
    %c0_i32_0 = arith.constant 0 : i32
    %c0_i32_1 = arith.constant 0 : i32
    return %c0_i32, %c0_i32_0 : i32, i32
  }
  func.func @transform_3(%arg0: i32, %arg1: i32) -> (i32, i32, i32, i32) {
    %c0_i32 = arith.constant 0 : i32
    %c0_i32_0 = arith.constant 0 : i32
    %c0_i32_1 = arith.constant 0 : i32
    return %arg0, %arg1, %c0_i32, %c0_i32_0 : i32, i32, i32, i32
  }
}

module attributes {stable_mosaic.version = 11 : i64} {
  func.func @_conv3x3_fused_kernel(%arg0: i32, %arg1: i32, %arg2: memref<1x34x34x128xbf16, #tpu.memory_space<vmem>>, %arg3: memref<1152x128xbf16, #tpu.memory_space<vmem>>, %arg4: memref<1x128xf32, #tpu.memory_space<vmem>>, %arg5: memref<1x128xf32, #tpu.memory_space<vmem>>, %arg6: memref<1x128xf32, #tpu.memory_space<vmem>>, %arg7: memref<1x8x32x128xbf16, #tpu.memory_space<vmem>>) attributes {dimension_semantics = [#tpu.dimension_semantics<parallel>, #tpu.dimension_semantics<parallel>], iteration_bounds = array<i64: 2, 4>, scalar_prefetch = 0 : i64, scratch_operands = 0 : i64, tpu.core_type = #tpu.core_type<tc>, window_params = [{transform_indices = @transform_0, window_bounds = array<i64: 1, 34, 34, 128>}, {pipeline_mode = #tpu.pipeline_mode<synchronous>, transform_indices = @transform_1, window_bounds = array<i64: 1152, 128>}, {pipeline_mode = #tpu.pipeline_mode<synchronous>, transform_indices = @transform_2, window_bounds = array<i64: 1, 128>}, {pipeline_mode = #tpu.pipeline_mode<synchronous>, transform_indices = @transform_3, window_bounds = array<i64: 1, 128>}, {pipeline_mode = #tpu.pipeline_mode<synchronous>, transform_indices = @transform_4, window_bounds = array<i64: 1, 128>}, {transform_indices = @transform_5, window_bounds = array<i64: 1, 8, 32, 128>}]} {
    %c8_i32 = arith.constant 8 : i32
    %0 = arith.muli %arg1, %c8_i32 : i32
    %1 = tpu.assume_multiple %0, 8 : i32
    %c0_i32 = arith.constant 0 : i32
    %2 = arith.addi %1, %c0_i32 : i32
    %c0 = arith.constant 0 : index
    %3 = arith.index_cast %2 : i32 to index
    %c0_0 = arith.constant 0 : index
    %c0_1 = arith.constant 0 : index
    %4 = vector.load %arg2[%c0, %3, %c0_0, %c0_1] : memref<1x34x34x128xbf16, #tpu.memory_space<vmem>>, vector<1x8x32x128xbf16>
    %5 = vector.shape_cast %4 : vector<1x8x32x128xbf16> to vector<8x32x128xbf16>
    %c0_i32_2 = arith.constant 0 : i32
    %6 = arith.addi %1, %c0_i32_2 : i32
    %c0_3 = arith.constant 0 : index
    %7 = arith.index_cast %6 : i32 to index
    %c1 = arith.constant 1 : index
    %c0_4 = arith.constant 0 : index
    %8 = vector.load %arg2[%c0_3, %7, %c1, %c0_4] : memref<1x34x34x128xbf16, #tpu.memory_space<vmem>>, vector<1x8x32x128xbf16>
    %9 = vector.shape_cast %8 : vector<1x8x32x128xbf16> to vector<8x32x128xbf16>
    %c0_i32_5 = arith.constant 0 : i32
    %10 = arith.addi %1, %c0_i32_5 : i32
    %c0_6 = arith.constant 0 : index
    %11 = arith.index_cast %10 : i32 to index
    %c2 = arith.constant 2 : index
    %c0_7 = arith.constant 0 : index
    %12 = vector.load %arg2[%c0_6, %11, %c2, %c0_7] : memref<1x34x34x128xbf16, #tpu.memory_space<vmem>>, vector<1x8x32x128xbf16>
    %13 = vector.shape_cast %12 : vector<1x8x32x128xbf16> to vector<8x32x128xbf16>
    %c1_i32 = arith.constant 1 : i32
    %14 = arith.addi %1, %c1_i32 : i32
    %c0_8 = arith.constant 0 : index
    %15 = arith.index_cast %14 : i32 to index
    %c0_9 = arith.constant 0 : index
    %c0_10 = arith.constant 0 : index
    %16 = vector.load %arg2[%c0_8, %15, %c0_9, %c0_10] : memref<1x34x34x128xbf16, #tpu.memory_space<vmem>>, vector<1x8x32x128xbf16>
    %17 = vector.shape_cast %16 : vector<1x8x32x128xbf16> to vector<8x32x128xbf16>
    %c1_i32_11 = arith.constant 1 : i32
    %18 = arith.addi %1, %c1_i32_11 : i32
    %c0_12 = arith.constant 0 : index
    %19 = arith.index_cast %18 : i32 to index
    %c1_13 = arith.constant 1 : index
    %c0_14 = arith.constant 0 : index
    %20 = vector.load %arg2[%c0_12, %19, %c1_13, %c0_14] : memref<1x34x34x128xbf16, #tpu.memory_space<vmem>>, vector<1x8x32x128xbf16>
    %21 = vector.shape_cast %20 : vector<1x8x32x128xbf16> to vector<8x32x128xbf16>
    %c1_i32_15 = arith.constant 1 : i32
    %22 = arith.addi %1, %c1_i32_15 : i32
    %c0_16 = arith.constant 0 : index
    %23 = arith.index_cast %22 : i32 to index
    %c2_17 = arith.constant 2 : index
    %c0_18 = arith.constant 0 : index
    %24 = vector.load %arg2[%c0_16, %23, %c2_17, %c0_18] : memref<1x34x34x128xbf16, #tpu.memory_space<vmem>>, vector<1x8x32x128xbf16>
    %25 = vector.shape_cast %24 : vector<1x8x32x128xbf16> to vector<8x32x128xbf16>
    %c2_i32 = arith.constant 2 : i32
    %26 = arith.addi %1, %c2_i32 : i32
    %c0_19 = arith.constant 0 : index
    %27 = arith.index_cast %26 : i32 to index
    %c0_20 = arith.constant 0 : index
    %c0_21 = arith.constant 0 : index
    %28 = vector.load %arg2[%c0_19, %27, %c0_20, %c0_21] : memref<1x34x34x128xbf16, #tpu.memory_space<vmem>>, vector<1x8x32x128xbf16>
    %29 = vector.shape_cast %28 : vector<1x8x32x128xbf16> to vector<8x32x128xbf16>
    %c2_i32_22 = arith.constant 2 : i32
    %30 = arith.addi %1, %c2_i32_22 : i32
    %c0_23 = arith.constant 0 : index
    %31 = arith.index_cast %30 : i32 to index
    %c1_24 = arith.constant 1 : index
    %c0_25 = arith.constant 0 : index
    %32 = vector.load %arg2[%c0_23, %31, %c1_24, %c0_25] : memref<1x34x34x128xbf16, #tpu.memory_space<vmem>>, vector<1x8x32x128xbf16>
    %33 = vector.shape_cast %32 : vector<1x8x32x128xbf16> to vector<8x32x128xbf16>
    %c2_i32_26 = arith.constant 2 : i32
    %34 = arith.addi %1, %c2_i32_26 : i32
    %c0_27 = arith.constant 0 : index
    %35 = arith.index_cast %34 : i32 to index
    %c2_28 = arith.constant 2 : index
    %c0_29 = arith.constant 0 : index
    %36 = vector.load %arg2[%c0_27, %35, %c2_28, %c0_29] : memref<1x34x34x128xbf16, #tpu.memory_space<vmem>>, vector<1x8x32x128xbf16>
    %37 = vector.shape_cast %36 : vector<1x8x32x128xbf16> to vector<8x32x128xbf16>
    %38 = tpu.concatenate %5, %9, %13, %17, %21, %25, %29, %33, %37 in 2 : vector<8x32x128xbf16>, vector<8x32x128xbf16>, vector<8x32x128xbf16>, vector<8x32x128xbf16>, vector<8x32x128xbf16>, vector<8x32x128xbf16>, vector<8x32x128xbf16>, vector<8x32x128xbf16>, vector<8x32x128xbf16> -> vector<8x32x1152xbf16>
    %39 = vector.shape_cast %38 : vector<8x32x1152xbf16> to vector<256x1152xbf16>
    %c0_30 = arith.constant 0 : index
    %c0_31 = arith.constant 0 : index
    %40 = vector.load %arg3[%c0_30, %c0_31] : memref<1152x128xbf16, #tpu.memory_space<vmem>>, vector<1152x128xbf16>
    %cst = arith.constant dense<0.000000e+00> : vector<256x128xf32>
    %41 = tpu.matmul %39, %40, %cst {dimension_numbers = #tpu.dot_dimension_numbers<[1], [0], [0], [1], [0, 0, 1, 1], [], []>} : vector<256x1152xbf16>, vector<1152x128xbf16>, vector<256x128xf32> -> vector<256x128xf32>
    %c0_32 = arith.constant 0 : index
    %c0_33 = arith.constant 0 : index
    %42 = vector.load %arg4[%c0_32, %c0_33] : memref<1x128xf32, #tpu.memory_space<vmem>>, vector<1x128xf32>
    %43 = vector.broadcast %42 : vector<1x128xf32> to vector<256x128xf32>
    %44 = arith.addf %41, %43 : vector<256x128xf32>
    %c0_34 = arith.constant 0 : index
    %c0_35 = arith.constant 0 : index
    %45 = vector.load %arg5[%c0_34, %c0_35] : memref<1x128xf32, #tpu.memory_space<vmem>>, vector<1x128xf32>
    %46 = vector.broadcast %45 : vector<1x128xf32> to vector<256x128xf32>
    %47 = arith.mulf %44, %46 : vector<256x128xf32>
    %c0_36 = arith.constant 0 : index
    %c0_37 = arith.constant 0 : index
    %48 = vector.load %arg6[%c0_36, %c0_37] : memref<1x128xf32, #tpu.memory_space<vmem>>, vector<1x128xf32>
    %49 = vector.broadcast %48 : vector<1x128xf32> to vector<256x128xf32>
    %50 = arith.addf %47, %49 : vector<256x128xf32>
    %cst_38 = arith.constant 0.000000e+00 : f32
    %51 = vector.broadcast %cst_38 : f32 to vector<256x128xf32>
    %52 = arith.maximumf %50, %51 : vector<256x128xf32>
    %53 = vector.shape_cast %52 : vector<256x128xf32> to vector<8x32x128xf32>
    %54 = arith.truncf %53 : vector<8x32x128xf32> to vector<8x32x128xbf16>
    %c0_39 = arith.constant 0 : index
    %c0_40 = arith.constant 0 : index
    %c0_41 = arith.constant 0 : index
    %c0_42 = arith.constant 0 : index
    %55 = vector.load %arg7[%c0_39, %c0_40, %c0_41, %c0_42] : memref<1x8x32x128xbf16, #tpu.memory_space<vmem>>, vector<1x8x32x128xbf16>
    %56 = vector.shape_cast %55 : vector<1x8x32x128xbf16> to vector<8x32x128xbf16>
    %57 = vector.shape_cast %54 : vector<8x32x128xbf16> to vector<1x8x32x128xbf16>
    tpu.vector_store %arg7[%c0_39, %c0_40, %c0_41, %c0_42], %57 {strides = array<i32>} : memref<1x8x32x128xbf16, #tpu.memory_space<vmem>>, vector<1x8x32x128xbf16>,
    return
  }
  func.func @transform_0(%arg0: i32, %arg1: i32) -> (i32, i32, i32, i32) {
    %c0_i32 = arith.constant 0 : i32
    %c0_i32_0 = arith.constant 0 : i32
    %c0_i32_1 = arith.constant 0 : i32
    %c0_i32_2 = arith.constant 0 : i32
    return %arg0, %c0_i32, %c0_i32_0, %c0_i32_1 : i32, i32, i32, i32
  }
  func.func @transform_1(%arg0: i32, %arg1: i32) -> (i32, i32) {
    %c0_i32 = arith.constant 0 : i32
    %c0_i32_0 = arith.constant 0 : i32
    %c0_i32_1 = arith.constant 0 : i32
    return %c0_i32, %c0_i32_0 : i32, i32
  }
  func.func @transform_2(%arg0: i32, %arg1: i32) -> (i32, i32) {
    %c0_i32 = arith.constant 0 : i32
    %c0_i32_0 = arith.constant 0 : i32
    %c0_i32_1 = arith.constant 0 : i32
    return %c0_i32, %c0_i32_0 : i32, i32
  }
  func.func @transform_3(%arg0: i32, %arg1: i32) -> (i32, i32) {
    %c0_i32 = arith.constant 0 : i32
    %c0_i32_0 = arith.constant 0 : i32
    %c0_i32_1 = arith.constant 0 : i32
    return %c0_i32, %c0_i32_0 : i32, i32
  }
  func.func @transform_4(%arg0: i32, %arg1: i32) -> (i32, i32) {
    %c0_i32 = arith.constant 0 : i32
    %c0_i32_0 = arith.constant 0 : i32
    %c0_i32_1 = arith.constant 0 : i32
    return %c0_i32, %c0_i32_0 : i32, i32
  }
  func.func @transform_5(%arg0: i32, %arg1: i32) -> (i32, i32, i32, i32) {
    %c0_i32 = arith.constant 0 : i32
    %c0_i32_0 = arith.constant 0 : i32
    %c0_i32_1 = arith.constant 0 : i32
    return %arg0, %arg1, %c0_i32, %c0_i32_0 : i32, i32, i32, i32
  }
}

module attributes {stable_mosaic.version = 11 : i64} {
  func.func @_conv3x3_fused_kernel(%arg0: i32, %arg1: i32, %arg2: memref<1x34x34x128xbf16, #tpu.memory_space<vmem>>, %arg3: memref<1152x128xbf16, #tpu.memory_space<vmem>>, %arg4: memref<1x128xf32, #tpu.memory_space<vmem>>, %arg5: memref<1x8x32x128xbf16, #tpu.memory_space<vmem>>, %arg6: memref<1x8x32x128xf32, #tpu.memory_space<vmem>>) attributes {dimension_semantics = [#tpu.dimension_semantics<parallel>, #tpu.dimension_semantics<parallel>], iteration_bounds = array<i64: 2, 4>, scalar_prefetch = 0 : i64, scratch_operands = 0 : i64, tpu.core_type = #tpu.core_type<tc>, window_params = [{transform_indices = @transform_0, window_bounds = array<i64: 1, 34, 34, 128>}, {pipeline_mode = #tpu.pipeline_mode<synchronous>, transform_indices = @transform_1, window_bounds = array<i64: 1152, 128>}, {pipeline_mode = #tpu.pipeline_mode<synchronous>, transform_indices = @transform_2, window_bounds = array<i64: 1, 128>}, {transform_indices = @transform_3, window_bounds = array<i64: 1, 8, 32, 128>}, {transform_indices = @transform_4, window_bounds = array<i64: 1, 8, 32, 128>}]} {
    %c8_i32 = arith.constant 8 : i32
    %0 = arith.muli %arg1, %c8_i32 : i32
    %1 = tpu.assume_multiple %0, 8 : i32
    %c0_i32 = arith.constant 0 : i32
    %2 = arith.addi %1, %c0_i32 : i32
    %c0 = arith.constant 0 : index
    %3 = arith.index_cast %2 : i32 to index
    %c0_0 = arith.constant 0 : index
    %c0_1 = arith.constant 0 : index
    %4 = vector.load %arg2[%c0, %3, %c0_0, %c0_1] : memref<1x34x34x128xbf16, #tpu.memory_space<vmem>>, vector<1x8x32x128xbf16>
    %5 = vector.shape_cast %4 : vector<1x8x32x128xbf16> to vector<8x32x128xbf16>
    %c0_i32_2 = arith.constant 0 : i32
    %6 = arith.addi %1, %c0_i32_2 : i32
    %c0_3 = arith.constant 0 : index
    %7 = arith.index_cast %6 : i32 to index
    %c1 = arith.constant 1 : index
    %c0_4 = arith.constant 0 : index
    %8 = vector.load %arg2[%c0_3, %7, %c1, %c0_4] : memref<1x34x34x128xbf16, #tpu.memory_space<vmem>>, vector<1x8x32x128xbf16>
    %9 = vector.shape_cast %8 : vector<1x8x32x128xbf16> to vector<8x32x128xbf16>
    %c0_i32_5 = arith.constant 0 : i32
    %10 = arith.addi %1, %c0_i32_5 : i32
    %c0_6 = arith.constant 0 : index
    %11 = arith.index_cast %10 : i32 to index
    %c2 = arith.constant 2 : index
    %c0_7 = arith.constant 0 : index
    %12 = vector.load %arg2[%c0_6, %11, %c2, %c0_7] : memref<1x34x34x128xbf16, #tpu.memory_space<vmem>>, vector<1x8x32x128xbf16>
    %13 = vector.shape_cast %12 : vector<1x8x32x128xbf16> to vector<8x32x128xbf16>
    %c1_i32 = arith.constant 1 : i32
    %14 = arith.addi %1, %c1_i32 : i32
    %c0_8 = arith.constant 0 : index
    %15 = arith.index_cast %14 : i32 to index
    %c0_9 = arith.constant 0 : index
    %c0_10 = arith.constant 0 : index
    %16 = vector.load %arg2[%c0_8, %15, %c0_9, %c0_10] : memref<1x34x34x128xbf16, #tpu.memory_space<vmem>>, vector<1x8x32x128xbf16>
    %17 = vector.shape_cast %16 : vector<1x8x32x128xbf16> to vector<8x32x128xbf16>
    %c1_i32_11 = arith.constant 1 : i32
    %18 = arith.addi %1, %c1_i32_11 : i32
    %c0_12 = arith.constant 0 : index
    %19 = arith.index_cast %18 : i32 to index
    %c1_13 = arith.constant 1 : index
    %c0_14 = arith.constant 0 : index
    %20 = vector.load %arg2[%c0_12, %19, %c1_13, %c0_14] : memref<1x34x34x128xbf16, #tpu.memory_space<vmem>>, vector<1x8x32x128xbf16>
    %21 = vector.shape_cast %20 : vector<1x8x32x128xbf16> to vector<8x32x128xbf16>
    %c1_i32_15 = arith.constant 1 : i32
    %22 = arith.addi %1, %c1_i32_15 : i32
    %c0_16 = arith.constant 0 : index
    %23 = arith.index_cast %22 : i32 to index
    %c2_17 = arith.constant 2 : index
    %c0_18 = arith.constant 0 : index
    %24 = vector.load %arg2[%c0_16, %23, %c2_17, %c0_18] : memref<1x34x34x128xbf16, #tpu.memory_space<vmem>>, vector<1x8x32x128xbf16>
    %25 = vector.shape_cast %24 : vector<1x8x32x128xbf16> to vector<8x32x128xbf16>
    %c2_i32 = arith.constant 2 : i32
    %26 = arith.addi %1, %c2_i32 : i32
    %c0_19 = arith.constant 0 : index
    %27 = arith.index_cast %26 : i32 to index
    %c0_20 = arith.constant 0 : index
    %c0_21 = arith.constant 0 : index
    %28 = vector.load %arg2[%c0_19, %27, %c0_20, %c0_21] : memref<1x34x34x128xbf16, #tpu.memory_space<vmem>>, vector<1x8x32x128xbf16>
    %29 = vector.shape_cast %28 : vector<1x8x32x128xbf16> to vector<8x32x128xbf16>
    %c2_i32_22 = arith.constant 2 : i32
    %30 = arith.addi %1, %c2_i32_22 : i32
    %c0_23 = arith.constant 0 : index
    %31 = arith.index_cast %30 : i32 to index
    %c1_24 = arith.constant 1 : index
    %c0_25 = arith.constant 0 : index
    %32 = vector.load %arg2[%c0_23, %31, %c1_24, %c0_25] : memref<1x34x34x128xbf16, #tpu.memory_space<vmem>>, vector<1x8x32x128xbf16>
    %33 = vector.shape_cast %32 : vector<1x8x32x128xbf16> to vector<8x32x128xbf16>
    %c2_i32_26 = arith.constant 2 : i32
    %34 = arith.addi %1, %c2_i32_26 : i32
    %c0_27 = arith.constant 0 : index
    %35 = arith.index_cast %34 : i32 to index
    %c2_28 = arith.constant 2 : index
    %c0_29 = arith.constant 0 : index
    %36 = vector.load %arg2[%c0_27, %35, %c2_28, %c0_29] : memref<1x34x34x128xbf16, #tpu.memory_space<vmem>>, vector<1x8x32x128xbf16>
    %37 = vector.shape_cast %36 : vector<1x8x32x128xbf16> to vector<8x32x128xbf16>
    %38 = tpu.concatenate %5, %9, %13, %17, %21, %25, %29, %33, %37 in 2 : vector<8x32x128xbf16>, vector<8x32x128xbf16>, vector<8x32x128xbf16>, vector<8x32x128xbf16>, vector<8x32x128xbf16>, vector<8x32x128xbf16>, vector<8x32x128xbf16>, vector<8x32x128xbf16>, vector<8x32x128xbf16> -> vector<8x32x1152xbf16>
    %39 = vector.shape_cast %38 : vector<8x32x1152xbf16> to vector<256x1152xbf16>
    %c0_30 = arith.constant 0 : index
    %c0_31 = arith.constant 0 : index
    %40 = vector.load %arg3[%c0_30, %c0_31] : memref<1152x128xbf16, #tpu.memory_space<vmem>>, vector<1152x128xbf16>
    %cst = arith.constant dense<0.000000e+00> : vector<256x128xf32>
    %41 = tpu.matmul %39, %40, %cst {dimension_numbers = #tpu.dot_dimension_numbers<[1], [0], [0], [1], [0, 0, 1, 1], [], []>} : vector<256x1152xbf16>, vector<1152x128xbf16>, vector<256x128xf32> -> vector<256x128xf32>
    %c0_32 = arith.constant 0 : index
    %c0_33 = arith.constant 0 : index
    %42 = vector.load %arg4[%c0_32, %c0_33] : memref<1x128xf32, #tpu.memory_space<vmem>>, vector<1x128xf32>
    %43 = vector.broadcast %42 : vector<1x128xf32> to vector<256x128xf32>
    %44 = arith.addf %41, %43 : vector<256x128xf32>
    %45 = vector.shape_cast %44 : vector<256x128xf32> to vector<8x32x128xf32>
    %c0_34 = arith.constant 0 : index
    %c0_35 = arith.constant 0 : index
    %c0_36 = arith.constant 0 : index
    %c0_37 = arith.constant 0 : index
    %46 = vector.load %arg5[%c0_34, %c0_35, %c0_36, %c0_37] : memref<1x8x32x128xbf16, #tpu.memory_space<vmem>>, vector<1x8x32x128xbf16>
    %47 = vector.shape_cast %46 : vector<1x8x32x128xbf16> to vector<8x32x128xbf16>
    %48 = arith.extf %47 : vector<8x32x128xbf16> to vector<8x32x128xf32>
    %49 = arith.addf %45, %48 : vector<8x32x128xf32>
    %c0_38 = arith.constant 0 : index
    %c0_39 = arith.constant 0 : index
    %c0_40 = arith.constant 0 : index
    %c0_41 = arith.constant 0 : index
    %50 = vector.load %arg6[%c0_38, %c0_39, %c0_40, %c0_41] : memref<1x8x32x128xf32, #tpu.memory_space<vmem>>, vector<1x8x32x128xf32>
    %51 = vector.shape_cast %50 : vector<1x8x32x128xf32> to vector<8x32x128xf32>
    %52 = vector.shape_cast %49 : vector<8x32x128xf32> to vector<1x8x32x128xf32>
    tpu.vector_store %arg6[%c0_38, %c0_39, %c0_40, %c0_41], %52 {strides = array<i32>} : memref<1x8x32x128xf32, #tpu.memory_space<vmem>>, vector<1x8x32x128xf32>,
    return
  }
  func.func @transform_0(%arg0: i32, %arg1: i32) -> (i32, i32, i32, i32) {
    %c0_i32 = arith.constant 0 : i32
    %c0_i32_0 = arith.constant 0 : i32
    %c0_i32_1 = arith.constant 0 : i32
    %c0_i32_2 = arith.constant 0 : i32
    return %arg0, %c0_i32, %c0_i32_0, %c0_i32_1 : i32, i32, i32, i32
  }
  func.func @transform_1(%arg0: i32, %arg1: i32) -> (i32, i32) {
    %c0_i32 = arith.constant 0 : i32
    %c0_i32_0 = arith.constant 0 : i32
    %c0_i32_1 = arith.constant 0 : i32
    return %c0_i32, %c0_i32_0 : i32, i32
  }
  func.func @transform_2(%arg0: i32, %arg1: i32) -> (i32, i32) {
    %c0_i32 = arith.constant 0 : i32
    %c0_i32_0 = arith.constant 0 : i32
    %c0_i32_1 = arith.constant 0 : i32
    return %c0_i32, %c0_i32_0 : i32, i32
  }
  func.func @transform_3(%arg0: i32, %arg1: i32) -> (i32, i32, i32, i32) {
    %c0_i32 = arith.constant 0 : i32
    %c0_i32_0 = arith.constant 0 : i32
    %c0_i32_1 = arith.constant 0 : i32
    return %arg0, %arg1, %c0_i32, %c0_i32_0 : i32, i32, i32, i32
  }
  func.func @transform_4(%arg0: i32, %arg1: i32) -> (i32, i32, i32, i32) {
    %c0_i32 = arith.constant 0 : i32
    %c0_i32_0 = arith.constant 0 : i32
    %c0_i32_1 = arith.constant 0 : i32
    return %arg0, %arg1, %c0_i32, %c0_i32_0 : i32, i32, i32, i32
  }
}

</mosaic_0001>

<llo_original>
// kernel: residual_block_up_forward.5
$region0: #{residual_block_up_forward.5}
  #allocation0 [shape = 'u32[]', space=smem, size = 0x4, offset = 0x4, fixed_abs, tag = 'smem constant byte address 0x4 - core index']
  #allocation1 [shape = 'u32[72,128]{1,0:T(1,128)}', space=vmem, size = 0x9000, scoped, tag = 'internal scratch']
  %s0 = inlined_call_operand.vmem [shape: f32[2,16,16,4], index: 0, kind: input, shape index: {}]
  %s1 = inlined_call_operand.vmem [shape: f32[1,4], index: 1, kind: input, shape index: {}]
  %s2 = inlined_call_operand.vmem [shape: f32[1,4], index: 2, kind: input, shape index: {}]
  %s3 = inlined_call_operand.vmem [shape: f32[2,16,16,4], index: 3, kind: output, shape index: {}]
  %s4 = sld [smem:[#allocation0]]
  $region45: #{residual_block_up_forward.5} parent=0
    _
  %s6 = ssub.s32 1, %s4
  %s7 = scalar_select 0, %s6, %s4
  loop: start=0, step=1, limit=4
  $region2: #{residual_block_up_forward.5} parent=0 // loop_pre_header
    _
  $region3: #{residual_block_up_forward.5} parent=0 // loop_header
    %s9 = sphi 0, %s13
    %p10 = scmp.ge.s32.totalorder %s9, 4
    %s19 = sphi 0, %s21
    %s22 = sphi 0, %s19
    %s23 = sphi 0, %s22
    %s39 = sphi 0, %s23
    %s43 = sphi 0, %s43
    %s45 = sphi 0, %s43
    %s46 = sphi 0, %s45
    %s60 = sphi 0, %s46
    %s64 = sphi 0, %s64
    %s66 = sphi 0, %s64
    %s67 = sphi 0, %s66
    %s81 = sphi 0, %s67
    %s87 = sphi 0, %s89
    %s90 = sphi 0, %s87
    %s91 = sphi 0, %s90
    %s107 = sphi 0, %s91
  $region4: #{residual_block_up_forward.5} parent=0 // loop_header_branch
    %12 = sbr.rel (%p10) target = $region8
  $region5: #{residual_block_up_forward.5} parent=0 // loop_body
    %s14 = ssub.s32 %s9, 1
    %s15 = ssub.s32 %s9, 2
    %s16 = sadd.s32 %s9, 1
    %s17 = ssub.s32 %s9, %s16
    %p18 = scmp.eq.s32.totalorder %s17, 0
    %s20 = sadd.s32 %s19, 1
    %s21 = scalar_select %p18, %s19, %s20
    %p24 = pneg %p18
    %p25 = scmp.eq.s32.totalorder %s9, 1
    %p26 = por %p24, %p25
    %p27 = scmp.ne.s32.totalorder %s19, %s22
    %p28 = scmp.eq.s32.totalorder %s9, 0
    %p29 = por %p27, %p28
    %p30 = scmp.ne.s32.totalorder %s19, %s22
    %p31 = scmp.eq.s32.totalorder %s14, 1
    %p32 = por %p30, %p31
    %p33 = scmp.ne.s32.totalorder %s22, %s23
    %p34 = scmp.eq.s32.totalorder %s14, 0
    %p35 = por %p33, %p34
    %p36 = scmp.ne.s32.totalorder %s22, %s23
    %p37 = scmp.eq.s32.totalorder %s15, 1
    %p38 = por %p36, %p37
    %p40 = scmp.ne.s32.totalorder %s23, %s39
    %p41 = scmp.eq.s32.totalorder %s15, 0
    %p42 = por %p40, %p41
    %s44 = sadd.s32 %s43, 1
    %p47 = scmp.eq.s32.totalorder %s9, 1
    %p48 = scmp.ne.s32.totalorder %s43, %s45
    %p49 = scmp.eq.s32.totalorder %s9, 0
    %p50 = por %p48, %p49
    %p51 = scmp.ne.s32.totalorder %s43, %s45
    %p52 = scmp.eq.s32.totalorder %s14, 1
    %p53 = por %p51, %p52
    %p54 = scmp.ne.s32.totalorder %s45, %s46
    %p55 = scmp.eq.s32.totalorder %s14, 0
    %p56 = por %p54, %p55
    %p57 = scmp.ne.s32.totalorder %s45, %s46
    %p58 = scmp.eq.s32.totalorder %s15, 1
    %p59 = por %p57, %p58
    %p61 = scmp.ne.s32.totalorder %s46, %s60
    %p62 = scmp.eq.s32.totalorder %s15, 0
    %p63 = por %p61, %p62
    %s65 = sadd.s32 %s64, 1
    %p68 = scmp.eq.s32.totalorder %s9, 1
    %p69 = scmp.ne.s32.totalorder %s64, %s66
    %p70 = scmp.eq.s32.totalorder %s9, 0
    %p71 = por %p69, %p70
    %p72 = scmp.ne.s32.totalorder %s64, %s66
    %p73 = scmp.eq.s32.totalorder %s14, 1
    %p74 = por %p72, %p73
    %p75 = scmp.ne.s32.totalorder %s66, %s67
    %p76 = scmp.eq.s32.totalorder %s14, 0
    %p77 = por %p75, %p76
    %p78 = scmp.ne.s32.totalorder %s66, %s67
    %p79 = scmp.eq.s32.totalorder %s15, 1
    %p80 = por %p78, %p79
    %p82 = scmp.ne.s32.totalorder %s67, %s81
    %p83 = scmp.eq.s32.totalorder %s15, 0
    %p84 = por %p82, %p83
    %s85 = ssub.s32 %s9, %s16
    %p86 = scmp.eq.s32.totalorder %s85, 0
    %s88 = sadd.s32 %s87, 1
    %s89 = scalar_select %p86, %s87, %s88
    %p92 = pneg %p86
    %p93 = scmp.eq.s32.totalorder %s9, 1
    %p94 = por %p92, %p93
    %p95 = scmp.ne.s32.totalorder %s87, %s90
    %p96 = scmp.eq.s32.totalorder %s9, 0
    %p97 = por %p95, %p96
    %p98 = scmp.ne.s32.totalorder %s87, %s90
    %p99 = scmp.eq.s32.totalorder %s14, 1
    %p100 = por %p98, %p99
    %p101 = scmp.ne.s32.totalorder %s90, %s91
    %p102 = scmp.eq.s32.totalorder %s14, 0
    %p103 = por %p101, %p102
    %p104 = scmp.ne.s32.totalorder %s90, %s91
    %p105 = scmp.eq.s32.totalorder %s15, 1
    %p106 = por %p104, %p105
    %p108 = scmp.ne.s32.totalorder %s91, %s107
    %p109 = scmp.eq.s32.totalorder %s15, 0
    %p110 = por %p108, %p109
    %p111 = scmp.le.s32.totalorder 1, %s9
    %p112 = scmp.lt.s32.totalorder %s9, 3
    %p113 = pnand %p111, %p112
    %p114 = pneg %p113
    // Predicated region
    $region9: #{residual_block_up_forward.5} parent=5 // pred_check
      _
    $region10: #{residual_block_up_forward.5} parent=5 // pred_check_branch
      %116 = sbr.rel (%p113) target = $region12
    $region11: #{residual_block_up_forward.5} parent=5 // pred_region
      %s117 = ssub.s32 %s9, 1
      // Predicated region
      $region13: #{residual_block_up_forward.5} parent=11 // pred_check
        %p118 = pneg %p56
      $region14: #{residual_block_up_forward.5} parent=11 // pred_check_branch
        %120 = sbr.rel (%p118) target = $region16
      $region15: #{residual_block_up_forward.5} parent=11 // pred_region
        _
      $region16: #{residual_block_up_forward.5} parent=11 // pred_fallthru
        _
      // Predicated region
      $region17: #{residual_block_up_forward.5} parent=11 // pred_check
        %p121 = pneg %p77
      $region18: #{residual_block_up_forward.5} parent=11 // pred_check_branch
        %123 = sbr.rel (%p121) target = $region20
      $region19: #{residual_block_up_forward.5} parent=11 // pred_region
        _
      $region20: #{residual_block_up_forward.5} parent=11 // pred_fallthru
        _
    $region12: #{residual_block_up_forward.5} parent=5 // pred_fallthru
      _
    %p124 = scmp.lt.s32.totalorder %s9, 2
    // Predicated region
    $region21: #{residual_block_up_forward.5} parent=5 // pred_check
      %p125 = pneg %p124
    $region22: #{residual_block_up_forward.5} parent=5 // pred_check_branch
      %127 = sbr.rel (%p125) target = $region24
    $region23: #{residual_block_up_forward.5} parent=5 // pred_region
      // Predicated region
      $region25: #{residual_block_up_forward.5} parent=23 // pred_check
        %p128 = pneg %p29
      $region26: #{residual_block_up_forward.5} parent=23 // pred_check_branch
        %130 = sbr.rel (%p128) target = $region28
      $region27: #{residual_block_up_forward.5} parent=23 // pred_region
        %p131 = scmp.lt.s32.totalorder %s9, 1
        %s132 = scalar_select %p131, %s9, 1
        %s133 = smul.addr %s132, 32
        %s134 = smul.addr %s133, 8
        %s135 = scalar_lea.vmem %s0, %s134
      $region28: #{residual_block_up_forward.5} parent=23 // pred_fallthru
        _
    $region24: #{residual_block_up_forward.5} parent=5 // pred_fallthru
      _
    %p136 = scmp.le.s32.totalorder 1, %s9
    %p137 = scmp.lt.s32.totalorder %s9, 3
    %p138 = pnand %p136, %p137
    %p139 = pneg %p138
    // Predicated region
    $region29: #{residual_block_up_forward.5} parent=5 // pred_check
      _
    $region30: #{residual_block_up_forward.5} parent=5 // pred_check_branch
      %141 = sbr.rel (%p138) target = $region32
    $region31: #{residual_block_up_forward.5} parent=5 // pred_region
      %s142 = ssub.s32 %s9, 1
      %p143 = scmp.lt.s32.totalorder %s14, 1
      %s144 = scalar_select %p143, %s14, 1
      %s145 = smul.addr %s144, 32
      %s146 = smul.addr %s145, 8
      %s147 = scalar_lea.vmem %s0, %s146
      %p148 = pneg %p35
      %p149 = pneg %p32
      %p150 = pneg %p56
      %p151 = pneg %p53
      %p152 = pneg %p77
      %p153 = pneg %p74
      %p154 = pneg %p103
      %p155 = pneg %p100
      %p156 = scmp.lt.s32.totalorder %s14, 1
      %s157 = scalar_select %p156, %s14, 1
      %s158 = smul.addr %s157, 32
      %s159 = smul.addr %s158, 8
      %s160 = scalar_lea.vmem %s3, %s159
      %p161 = scmp.lt.s32.totalorder %s14, 1
      %s162 = scalar_select %p161, %s14, 1
      %s163 = smul.addr %s162, 32
      %s164 = smul.addr %s163, 8
      %s165 = scalar_lea.vmem %s0, %s164
      %p166 = scmp.lt.s32.totalorder %s14, 1
      %s167 = scalar_select %p166, %s14, 1
      %s168 = smul.addr %s167, 32
      %s169 = smul.addr %s168, 8
      %s170 = scalar_lea.vmem %s3, %s169
      %v171 = vld [vmem:[%s165] sm:$0xff]
      %v172 = vld [vmem:[%s165 + $0x8] sm:$0xff]
      %v173 = vld [vmem:[%s165 + $0x10] sm:$0xff]
      %v174 = vld [vmem:[%s165 + $0x18] sm:$0xff]
      %v175 = vld [vmem:[%s165 + $0x20] sm:$0xff]
      %v176 = vld [vmem:[%s165 + $0x28] sm:$0xff]
      %v177 = vld [vmem:[%s165 + $0x30] sm:$0xff]
      %v178 = vld [vmem:[%s165 + $0x38] sm:$0xff]
      %v179 = vld [vmem:[%s165 + $0x40] sm:$0xff]
      %v180 = vld [vmem:[%s165 + $0x48] sm:$0xff]
      %v181 = vld [vmem:[%s165 + $0x50] sm:$0xff]
      %v182 = vld [vmem:[%s165 + $0x58] sm:$0xff]
      %v183 = vld [vmem:[%s165 + $0x60] sm:$0xff]
      %v184 = vld [vmem:[%s165 + $0x68] sm:$0xff]
      %v185 = vld [vmem:[%s165 + $0x70] sm:$0xff]
      %v186 = vld [vmem:[%s165 + $0x78] sm:$0xff]
      %v187 = vld [vmem:[%s165 + $0x80] sm:$0xff]
      %v188 = vld [vmem:[%s165 + $0x88] sm:$0xff]
      %v189 = vld [vmem:[%s165 + $0x90] sm:$0xff]
      %v190 = vld [vmem:[%s165 + $0x98] sm:$0xff]
      %v191 = vld [vmem:[%s165 + $0xa0] sm:$0xff]
      %v192 = vld [vmem:[%s165 + $0xa8] sm:$0xff]
      %v193 = vld [vmem:[%s165 + $0xb0] sm:$0xff]
      %v194 = vld [vmem:[%s165 + $0xb8] sm:$0xff]
      %v195 = vld [vmem:[%s165 + $0xc0] sm:$0xff]
      %v196 = vld [vmem:[%s165 + $0xc8] sm:$0xff]
      %v197 = vld [vmem:[%s165 + $0xd0] sm:$0xff]
      %v198 = vld [vmem:[%s165 + $0xd8] sm:$0xff]
      %v199 = vld [vmem:[%s165 + $0xe0] sm:$0xff]
      %v200 = vld [vmem:[%s165 + $0xe8] sm:$0xff]
      %v201 = vld [vmem:[%s165 + $0xf0] sm:$0xff]
      %v202 = vld [vmem:[%s165 + $0xf8] sm:$0xff]
      %v203 = vld [vmem:[%s1] sm:$0x1]
      %v205 = vperm.slane %v203, 0
      %v207 = vmul.f32 %v171, %v205
      %v208 = vmul.f32 %v172, %v205
      %v209 = vmul.f32 %v173, %v205
      %v210 = vmul.f32 %v174, %v205
      %v211 = vmul.f32 %v175, %v205
      %v212 = vmul.f32 %v176, %v205
      %v213 = vmul.f32 %v177, %v205
      %v214 = vmul.f32 %v178, %v205
      %v215 = vmul.f32 %v179, %v205
      %v216 = vmul.f32 %v180, %v205
      %v217 = vmul.f32 %v181, %v205
      %v218 = vmul.f32 %v182, %v205
      %v219 = vmul.f32 %v183, %v205
      %v220 = vmul.f32 %v184, %v205
      %v221 = vmul.f32 %v185, %v205
      %v222 = vmul.f32 %v186, %v205
      %v223 = vmul.f32 %v187, %v205
      %v224 = vmul.f32 %v188, %v205
      %v225 = vmul.f32 %v189, %v205
      %v226 = vmul.f32 %v190, %v205
      %v227 = vmul.f32 %v191, %v205
      %v228 = vmul.f32 %v192, %v205
      %v229 = vmul.f32 %v193, %v205
      %v230 = vmul.f32 %v194, %v205
      %v231 = vmul.f32 %v195, %v205
      %v232 = vmul.f32 %v196, %v205
      %v233 = vmul.f32 %v197, %v205
      %v234 = vmul.f32 %v198, %v205
      %v235 = vmul.f32 %v199, %v205
      %v236 = vmul.f32 %v200, %v205
      %v237 = vmul.f32 %v201, %v205
      %v238 = vmul.f32 %v202, %v205
      %v239 = vld [vmem:[%s2] sm:$0x1]
      %v241 = vperm.slane %v239, 0
      %v243 = vadd.f32 %v207, %v241
      %v244 = vadd.f32 %v208, %v241
      %v245 = vadd.f32 %v209, %v241
      %v246 = vadd.f32 %v210, %v241
      %v247 = vadd.f32 %v211, %v241
      %v248 = vadd.f32 %v212, %v241
      %v249 = vadd.f32 %v213, %v241
      %v250 = vadd.f32 %v214, %v241
      %v251 = vadd.f32 %v215, %v241
      %v252 = vadd.f32 %v216, %v241
      %v253 = vadd.f32 %v217, %v241
      %v254 = vadd.f32 %v218, %v241
      %v255 = vadd.f32 %v219, %v241
      %v256 = vadd.f32 %v220, %v241
      %v257 = vadd.f32 %v221, %v241
      %v258 = vadd.f32 %v222, %v241
      %v259 = vadd.f32 %v223, %v241
      %v260 = vadd.f32 %v224, %v241
      %v261 = vadd.f32 %v225, %v241
      %v262 = vadd.f32 %v226, %v241
      %v263 = vadd.f32 %v227, %v241
      %v264 = vadd.f32 %v228, %v241
      %v265 = vadd.f32 %v229, %v241
      %v266 = vadd.f32 %v230, %v241
      %v267 = vadd.f32 %v231, %v241
      %v268 = vadd.f32 %v232, %v241
      %v269 = vadd.f32 %v233, %v241
      %v270 = vadd.f32 %v234, %v241
      %v271 = vadd.f32 %v235, %v241
      %v272 = vadd.f32 %v236, %v241
      %v273 = vadd.f32 %v237, %v241
      %v274 = vadd.f32 %v238, %v241
      %v275 = vmax.f32 %v243, 0.0
      %v276 = vmax.f32 %v244, 0.0
      %v277 = vmax.f32 %v245, 0.0
      %v278 = vmax.f32 %v246, 0.0
      %v279 = vmax.f32 %v247, 0.0
      %v280 = vmax.f32 %v248, 0.0
      %v281 = vmax.f32 %v249, 0.0
      %v282 = vmax.f32 %v250, 0.0
      %v283 = vmax.f32 %v251, 0.0
      %v284 = vmax.f32 %v252, 0.0
      %v285 = vmax.f32 %v253, 0.0
      %v286 = vmax.f32 %v254, 0.0
      %v287 = vmax.f32 %v255, 0.0
      %v288 = vmax.f32 %v256, 0.0
      %v289 = vmax.f32 %v257, 0.0
      %v290 = vmax.f32 %v258, 0.0
      %v291 = vmax.f32 %v259, 0.0
      %v292 = vmax.f32 %v260, 0.0
      %v293 = vmax.f32 %v261, 0.0
      %v294 = vmax.f32 %v262, 0.0
      %v295 = vmax.f32 %v263, 0.0
      %v296 = vmax.f32 %v264, 0.0
      %v297 = vmax.f32 %v265, 0.0
      %v298 = vmax.f32 %v266, 0.0
      %v299 = vmax.f32 %v267, 0.0
      %v300 = vmax.f32 %v268, 0.0
      %v301 = vmax.f32 %v269, 0.0
      %v302 = vmax.f32 %v270, 0.0
      %v303 = vmax.f32 %v271, 0.0
      %v304 = vmax.f32 %v272, 0.0
      %v305 = vmax.f32 %v273, 0.0
      %v306 = vmax.f32 %v274, 0.0
      %vm307 = vcmask 31744
      %308 = vst.msk [vmem:[%s170] sm:$0xff] %vm307, %v275
      %309 = vst.msk [vmem:[%s170 + $0x8] sm:$0xff] %vm307, %v276
      %310 = vst.msk [vmem:[%s170 + $0x10] sm:$0xff] %vm307, %v277
      %311 = vst.msk [vmem:[%s170 + $0x18] sm:$0xff] %vm307, %v278
      %312 = vst.msk [vmem:[%s170 + $0x20] sm:$0xff] %vm307, %v279
      %313 = vst.msk [vmem:[%s170 + $0x28] sm:$0xff] %vm307, %v280
      %314 = vst.msk [vmem:[%s170 + $0x30] sm:$0xff] %vm307, %v281
      %315 = vst.msk [vmem:[%s170 + $0x38] sm:$0xff] %vm307, %v282
      %316 = vst.msk [vmem:[%s170 + $0x40] sm:$0xff] %vm307, %v283
      %317 = vst.msk [vmem:[%s170 + $0x48] sm:$0xff] %vm307, %v284
      %318 = vst.msk [vmem:[%s170 + $0x50] sm:$0xff] %vm307, %v285
      %319 = vst.msk [vmem:[%s170 + $0x58] sm:$0xff] %vm307, %v286
      %320 = vst.msk [vmem:[%s170 + $0x60] sm:$0xff] %vm307, %v287
      %321 = vst.msk [vmem:[%s170 + $0x68] sm:$0xff] %vm307, %v288
      %322 = vst.msk [vmem:[%s170 + $0x70] sm:$0xff] %vm307, %v289
      %323 = vst.msk [vmem:[%s170 + $0x78] sm:$0xff] %vm307, %v290
      %324 = vst.msk [vmem:[%s170 + $0x80] sm:$0xff] %vm307, %v291
      %325 = vst.msk [vmem:[%s170 + $0x88] sm:$0xff] %vm307, %v292
      %326 = vst.msk [vmem:[%s170 + $0x90] sm:$0xff] %vm307, %v293
      %327 = vst.msk [vmem:[%s170 + $0x98] sm:$0xff] %vm307, %v294
      %328 = vst.msk [vmem:[%s170 + $0xa0] sm:$0xff] %vm307, %v295
      %329 = vst.msk [vmem:[%s170 + $0xa8] sm:$0xff] %vm307, %v296
      %330 = vst.msk [vmem:[%s170 + $0xb0] sm:$0xff] %vm307, %v297
      %331 = vst.msk [vmem:[%s170 + $0xb8] sm:$0xff] %vm307, %v298
      %332 = vst.msk [vmem:[%s170 + $0xc0] sm:$0xff] %vm307, %v299
      %333 = vst.msk [vmem:[%s170 + $0xc8] sm:$0xff] %vm307, %v300
      %334 = vst.msk [vmem:[%s170 + $0xd0] sm:$0xff] %vm307, %v301
      %335 = vst.msk [vmem:[%s170 + $0xd8] sm:$0xff] %vm307, %v302
      %336 = vst.msk [vmem:[%s170 + $0xe0] sm:$0xff] %vm307, %v303
      %337 = vst.msk [vmem:[%s170 + $0xe8] sm:$0xff] %vm307, %v304
      %338 = vst.msk [vmem:[%s170 + $0xf0] sm:$0xff] %vm307, %v305
      %339 = vst.msk [vmem:[%s170 + $0xf8] sm:$0xff] %vm307, %v306
      %p340 = scmp.lt.s32.totalorder %s14, 1
      %s341 = scalar_select %p340, %s14, 1
      %s342 = smul.addr %s341, 32
      %s343 = smul.addr %s342, 8
      %s344 = scalar_lea.vmem %s3, %s343
      // Predicated region
      $region33: #{residual_block_up_forward.5} parent=31 // pred_check
        %p345 = pneg %p100
      $region34: #{residual_block_up_forward.5} parent=31 // pred_check_branch
        %347 = sbr.rel (%p345) target = $region36
      $region35: #{residual_block_up_forward.5} parent=31 // pred_region
        _
      $region36: #{residual_block_up_forward.5} parent=31 // pred_fallthru
        _
    $region32: #{residual_block_up_forward.5} parent=5 // pred_fallthru
      _
    %p348 = scmp.le.s32.totalorder 2, %s9
    // Predicated region
    $region37: #{residual_block_up_forward.5} parent=5 // pred_check
      %p349 = pneg %p348
    $region38: #{residual_block_up_forward.5} parent=5 // pred_check_branch
      %351 = sbr.rel (%p349) target = $region40
    $region39: #{residual_block_up_forward.5} parent=5 // pred_region
      %s352 = ssub.s32 %s9, 2
      // Predicated region
      $region41: #{residual_block_up_forward.5} parent=39 // pred_check
        %p353 = pneg %p106
      $region42: #{residual_block_up_forward.5} parent=39 // pred_check_branch
        %355 = sbr.rel (%p353) target = $region44
      $region43: #{residual_block_up_forward.5} parent=39 // pred_region
        %p356 = scmp.lt.s32.totalorder %s15, 1
        %s357 = scalar_select %p356, %s15, 1
        %s358 = smul.addr %s357, 32
        %s359 = smul.addr %s358, 8
        %s360 = scalar_lea.vmem %s3, %s359
      $region44: #{residual_block_up_forward.5} parent=39 // pred_fallthru
        _
    $region40: #{residual_block_up_forward.5} parent=5 // pred_fallthru
      _
  $region6: #{residual_block_up_forward.5} parent=0 // loop_footer
    %s13 = sadd.s32 1, %s9
  $region7: #{residual_block_up_forward.5} parent=0 // loop_footer_branch
    %8 = sbr.rel target = $region3
  $region8: #{residual_block_up_forward.5} parent=0 // loop_exit
    _

// kernel: residual_block_up_forward.4
$region0: #{residual_block_up_forward.4}
  #allocation0 [shape = 'u32[]', space=smem, size = 0x4, offset = 0x4, fixed_abs, tag = 'smem constant byte address 0x4 - core index']
  #allocation1 [shape = 'u32[72,128]{1,0:T(1,128)}', space=vmem, size = 0x9000, scoped, tag = 'internal scratch']
  %s0 = inlined_call_operand.vmem [shape: bf16[2,34,34,128], index: 0, kind: input, shape index: {}]
  %s1 = inlined_call_operand.vmem [shape: bf16[1152,128], index: 1, kind: input, shape index: {}]
  %s2 = inlined_call_operand.vmem [shape: f32[1,128], index: 2, kind: input, shape index: {}]
  %s3 = inlined_call_operand.vmem [shape: bf16[2,32,32,128], index: 3, kind: output, shape index: {}]
  %s4 = sld [smem:[#allocation0]]
  $region45: #{residual_block_up_forward.4} parent=0
    _
  %s6 = ssub.s32 1, %s4
  %s7 = scalar_select 0, %s6, %s4
  loop: start=0, step=1, limit=10
  $region2: #{residual_block_up_forward.4} parent=0 // loop_pre_header
    _
  $region3: #{residual_block_up_forward.4} parent=0 // loop_header
    %s9 = sphi 0, %s13
    %p10 = scmp.ge.s32.totalorder %s9, 10
    %s16 = sphi 0, %s28
    %s17 = sphi 0, %s24
    %s18 = sphi 0, %s16
    %s19 = sphi 0, %s17
    %s20 = sphi 0, %s18
    %s21 = sphi 0, %s19
    %s31 = sphi 0, %s33
    %s34 = sphi 0, %s31
    %s35 = sphi 0, %s34
    %s51 = sphi 0, %s35
    %s55 = sphi 0, %s55
    %s57 = sphi 0, %s55
    %s58 = sphi 0, %s57
    %s72 = sphi 0, %s58
    %s76 = sphi 0, %s76
    %s78 = sphi 0, %s76
    %s79 = sphi 0, %s78
    %s93 = sphi 0, %s79
    %s101 = sphi 0, %s103
    %s104 = sphi 0, %s101
    %s105 = sphi 0, %s104
    %s121 = sphi 0, %s105
  $region4: #{residual_block_up_forward.4} parent=0 // loop_header_branch
    %12 = sbr.rel (%p10) target = $region8
  $region5: #{residual_block_up_forward.4} parent=0 // loop_body
    %s14 = ssub.s32 %s9, 1
    %s15 = ssub.s32 %s9, 2
    %s22 = sadd.s32 1, %s17
    %p23 = scmp.ge.s32.totalorder %s22, 4
    %s24 = scalar_select %p23, 0, %s22
    %s25 = sadd.s32 1, %s16
    %s26 = scalar_select %p23, %s25, %s16
    %p27 = scmp.ge.s32.totalorder %s26, 2
    %s28 = scalar_select %p27, 0, %s26
    %s29 = ssub.s32 %s16, %s28
    %p30 = scmp.eq.s32.totalorder %s29, 0
    %s32 = sadd.s32 %s31, 1
    %s33 = scalar_select %p30, %s31, %s32
    %p36 = pneg %p30
    %p37 = scmp.eq.s32.totalorder %s9, 7
    %p38 = por %p36, %p37
    %p39 = scmp.ne.s32.totalorder %s31, %s34
    %p40 = scmp.eq.s32.totalorder %s9, 0
    %p41 = por %p39, %p40
    %p42 = scmp.ne.s32.totalorder %s31, %s34
    %p43 = scmp.eq.s32.totalorder %s14, 7
    %p44 = por %p42, %p43
    %p45 = scmp.ne.s32.totalorder %s34, %s35
    %p46 = scmp.eq.s32.totalorder %s14, 0
    %p47 = por %p45, %p46
    %p48 = scmp.ne.s32.totalorder %s34, %s35
    %p49 = scmp.eq.s32.totalorder %s15, 7
    %p50 = por %p48, %p49
    %p52 = scmp.ne.s32.totalorder %s35, %s51
    %p53 = scmp.eq.s32.totalorder %s15, 0
    %p54 = por %p52, %p53
    %s56 = sadd.s32 %s55, 1
    %p59 = scmp.eq.s32.totalorder %s9, 7
    %p60 = scmp.ne.s32.totalorder %s55, %s57
    %p61 = scmp.eq.s32.totalorder %s9, 0
    %p62 = por %p60, %p61
    %p63 = scmp.ne.s32.totalorder %s55, %s57
    %p64 = scmp.eq.s32.totalorder %s14, 7
    %p65 = por %p63, %p64
    %p66 = scmp.ne.s32.totalorder %s57, %s58
    %p67 = scmp.eq.s32.totalorder %s14, 0
    %p68 = por %p66, %p67
    %p69 = scmp.ne.s32.totalorder %s57, %s58
    %p70 = scmp.eq.s32.totalorder %s15, 7
    %p71 = por %p69, %p70
    %p73 = scmp.ne.s32.totalorder %s58, %s72
    %p74 = scmp.eq.s32.totalorder %s15, 0
    %p75 = por %p73, %p74
    %s77 = sadd.s32 %s76, 1
    %p80 = scmp.eq.s32.totalorder %s9, 7
    %p81 = scmp.ne.s32.totalorder %s76, %s78
    %p82 = scmp.eq.s32.totalorder %s9, 0
    %p83 = por %p81, %p82
    %p84 = scmp.ne.s32.totalorder %s76, %s78
    %p85 = scmp.eq.s32.totalorder %s14, 7
    %p86 = por %p84, %p85
    %p87 = scmp.ne.s32.totalorder %s78, %s79
    %p88 = scmp.eq.s32.totalorder %s14, 0
    %p89 = por %p87, %p88
    %p90 = scmp.ne.s32.totalorder %s78, %s79
    %p91 = scmp.eq.s32.totalorder %s15, 7
    %p92 = por %p90, %p91
    %p94 = scmp.ne.s32.totalorder %s79, %s93
    %p95 = scmp.eq.s32.totalorder %s15, 0
    %p96 = por %p94, %p95
    %s97 = ssub.s32 %s16, %s28
    %s98 = ssub.s32 %s17, %s24
    %s99 = sor.u32 %s97, %s98
    %p100 = scmp.eq.s32.totalorder %s99, 0
    %s102 = sadd.s32 %s101, 1
    %s103 = scalar_select %p100, %s101, %s102
    %p106 = pneg %p100
    %p107 = scmp.eq.s32.totalorder %s9, 7
    %p108 = por %p106, %p107
    %p109 = scmp.ne.s32.totalorder %s101, %s104
    %p110 = scmp.eq.s32.totalorder %s9, 0
    %p111 = por %p109, %p110
    %p112 = scmp.ne.s32.totalorder %s101, %s104
    %p113 = scmp.eq.s32.totalorder %s14, 7
    %p114 = por %p112, %p113
    %p115 = scmp.ne.s32.totalorder %s104, %s105
    %p116 = scmp.eq.s32.totalorder %s14, 0
    %p117 = por %p115, %p116
    %p118 = scmp.ne.s32.totalorder %s104, %s105
    %p119 = scmp.eq.s32.totalorder %s15, 7
    %p120 = por %p118, %p119
    %p122 = scmp.ne.s32.totalorder %s105, %s121
    %p123 = scmp.eq.s32.totalorder %s15, 0
    %p124 = por %p122, %p123
    %p125 = scmp.le.s32.totalorder 1, %s9
    %p126 = scmp.lt.s32.totalorder %s9, 9
    %p127 = pnand %p125, %p126
    %p128 = pneg %p127
    // Predicated region
    $region9: #{residual_block_up_forward.4} parent=5 // pred_check
      _
    $region10: #{residual_block_up_forward.4} parent=5 // pred_check_branch
      %130 = sbr.rel (%p127) target = $region12
    $region11: #{residual_block_up_forward.4} parent=5 // pred_region
      %s131 = ssub.s32 %s9, 1
      // Predicated region
      $region13: #{residual_block_up_forward.4} parent=11 // pred_check
        %p132 = pneg %p68
      $region14: #{residual_block_up_forward.4} parent=11 // pred_check_branch
        %134 = sbr.rel (%p132) target = $region16
      $region15: #{residual_block_up_forward.4} parent=11 // pred_region
        _
      $region16: #{residual_block_up_forward.4} parent=11 // pred_fallthru
        _
      // Predicated region
      $region17: #{residual_block_up_forward.4} parent=11 // pred_check
        %p135 = pneg %p89
      $region18: #{residual_block_up_forward.4} parent=11 // pred_check_branch
        %137 = sbr.rel (%p135) target = $region20
      $region19: #{residual_block_up_forward.4} parent=11 // pred_region
        _
      $region20: #{residual_block_up_forward.4} parent=11 // pred_fallthru
        _
    $region12: #{residual_block_up_forward.4} parent=5 // pred_fallthru
      _
    %p138 = scmp.lt.s32.totalorder %s9, 8
    // Predicated region
    $region21: #{residual_block_up_forward.4} parent=5 // pred_check
      %p139 = pneg %p138
    $region22: #{residual_block_up_forward.4} parent=5 // pred_check_branch
      %141 = sbr.rel (%p139) target = $region24
    $region23: #{residual_block_up_forward.4} parent=5 // pred_region
      // Predicated region
      $region25: #{residual_block_up_forward.4} parent=23 // pred_check
        %p142 = pneg %p41
      $region26: #{residual_block_up_forward.4} parent=23 // pred_check_branch
        %144 = sbr.rel (%p142) target = $region28
      $region27: #{residual_block_up_forward.4} parent=23 // pred_region
        %p145 = scmp.lt.s32.totalorder %s16, 1
        %s146 = scalar_select %p145, %s16, 1
        %s147 = smul.addr %s146, 170
        %s148 = smul.addr %s147, 4
        %s149 = scalar_lea.vmem %s0, %s148
      $region28: #{residual_block_up_forward.4} parent=23 // pred_fallthru
        _
    $region24: #{residual_block_up_forward.4} parent=5 // pred_fallthru
      _
    %p150 = scmp.le.s32.totalorder 1, %s9
    %p151 = scmp.lt.s32.totalorder %s9, 9
    %p152 = pnand %p150, %p151
    %p153 = pneg %p152
    // Predicated region
    $region29: #{residual_block_up_forward.4} parent=5 // pred_check
      _
    $region30: #{residual_block_up_forward.4} parent=5 // pred_check_branch
      %155 = sbr.rel (%p152) target = $region32
    $region31: #{residual_block_up_forward.4} parent=5 // pred_region
      %s156 = ssub.s32 %s9, 1
      %p157 = scmp.lt.s32.totalorder %s18, 1
      %s158 = scalar_select %p157, %s18, 1
      %s159 = smul.addr %s158, 170
      %s160 = smul.addr %s159, 4
      %s161 = scalar_lea.vmem %s0, %s160
      %p162 = pneg %p47
      %p163 = pneg %p44
      %p164 = pneg %p68
      %p165 = pneg %p65
      %p166 = pneg %p89
      %p167 = pneg %p86
      %p168 = pneg %p117
      %p169 = pneg %p114
      %s170 = smul.u32 8, %s19
      %p171 = scmp.lt.s32.totalorder %s18, 1
      %s172 = scalar_select %p171, %s18, 1
      %p173 = scmp.lt.s32.totalorder %s170, 31
      %s174 = scalar_select %p173, %s170, 31
      %s175 = smul.addr %s174, 4
      %s176 = smul.addr %s172, 128
      %s177 = sadd.s32 %s175, %s176
      %s178 = smul.addr %s177, 4
      %s179 = scalar_lea.vmem %s3, %s178
      %p180 = scmp.lt.s32.totalorder %s18, 1
      %s181 = scalar_select %p180, %s18, 1
      %s182 = smul.addr %s181, 170
      %s183 = smul.addr %s182, 4
      %s184 = scalar_lea.vmem %s0, %s183
      %s185 = smul.u32 8, %s19
      %p186 = scmp.lt.s32.totalorder %s18, 1
      %s187 = scalar_select %p186, %s18, 1
      %p188 = scmp.lt.s32.totalorder %s185, 31
      %s189 = scalar_select %p188, %s185, 31
      %s190 = smul.addr %s189, 4
      %s191 = smul.addr %s187, 128
      %s192 = sadd.s32 %s190, %s191
      %s193 = smul.addr %s192, 4
      %s194 = scalar_lea.vmem %s3, %s193
      %s195 = smul.u32 8, %s19
      %s196 = smul.u32 %s19, 8
      %s197 = smul.u32 %s196, 5
      %s198 = smul.addr %s197, 4
      %s199 = scalar_lea.vmem %s184, %s198
      %v200 = vld [vmem:[%s199] sm:$0xf]
      %v201 = vld [vmem:[%s199 + $0x4] sm:$0xf]
      %v202 = vld [vmem:[%s199 + $0x8] sm:$0xf]
      %v203 = vld [vmem:[%s199 + $0xc] sm:$0xf]
      %v204 = vld [vmem:[%s199 + $0x14] sm:$0xf]
      %v205 = vld [vmem:[%s199 + $0x18] sm:$0xf]
      %v206 = vld [vmem:[%s199 + $0x1c] sm:$0xf]
      %v207 = vld [vmem:[%s199 + $0x20] sm:$0xf]
      %v208 = vld [vmem:[%s199 + $0x28] sm:$0xf]
      %v209 = vld [vmem:[%s199 + $0x2c] sm:$0xf]
      %v210 = vld [vmem:[%s199 + $0x30] sm:$0xf]
      %v211 = vld [vmem:[%s199 + $0x34] sm:$0xf]
      %v212 = vld [vmem:[%s199 + $0x3c] sm:$0xf]
      %v213 = vld [vmem:[%s199 + $0x40] sm:$0xf]
      %v214 = vld [vmem:[%s199 + $0x44] sm:$0xf]
      %v215 = vld [vmem:[%s199 + $0x48] sm:$0xf]
      %v216 = vld [vmem:[%s199 + $0x50] sm:$0xf]
      %v217 = vld [vmem:[%s199 + $0x54] sm:$0xf]
      %v218 = vld [vmem:[%s199 + $0x58] sm:$0xf]
      %v219 = vld [vmem:[%s199 + $0x5c] sm:$0xf]
      %v220 = vld [vmem:[%s199 + $0x64] sm:$0xf]
      %v221 = vld [vmem:[%s199 + $0x68] sm:$0xf]
      %v222 = vld [vmem:[%s199 + $0x6c] sm:$0xf]
      %v223 = vld [vmem:[%s199 + $0x70] sm:$0xf]
      %v224 = vld [vmem:[%s199 + $0x78] sm:$0xf]
      %v225 = vld [vmem:[%s199 + $0x7c] sm:$0xf]
      %v226 = vld [vmem:[%s199 + $0x80] sm:$0xf]
      %v227 = vld [vmem:[%s199 + $0x84] sm:$0xf]
      %v228 = vld [vmem:[%s199 + $0x8c] sm:$0xf]
      %v229 = vld [vmem:[%s199 + $0x90] sm:$0xf]
      %v230 = vld [vmem:[%s199 + $0x94] sm:$0xf]
      %v231 = vld [vmem:[%s199 + $0x98] sm:$0xf]
      %v232 = vld [vmem:[%s199 + $0x10] sm:$0x1]
      %v233 = vld [vmem:[%s199 + $0x24] sm:$0x1]
      %v234 = vld [vmem:[%s199 + $0x38] sm:$0x1]
      %v235 = vld [vmem:[%s199 + $0x4c] sm:$0x1]
      %v236 = vld [vmem:[%s199 + $0x60] sm:$0x1]
      %v237 = vld [vmem:[%s199 + $0x74] sm:$0x1]
      %v238 = vld [vmem:[%s199 + $0x88] sm:$0x1]
      %v239 = vld [vmem:[%s199 + $0x9c] sm:$0x1]
      %v240 = vld [vmem:[%s199] sm:$0xe]
      %v241 = vld [vmem:[%s199 + $0x14] sm:$0xe]
      %v242 = vld [vmem:[%s199 + $0x28] sm:$0xe]
      %v243 = vld [vmem:[%s199 + $0x3c] sm:$0xe]
      %v244 = vld [vmem:[%s199 + $0x50] sm:$0xe]
      %v245 = vld [vmem:[%s199 + $0x64] sm:$0xe]
      %v246 = vld [vmem:[%s199 + $0x78] sm:$0xe]
      %v247 = vld [vmem:[%s199 + $0x8c] sm:$0xe]
      %s248 = sadd.s32 %s196, 1
      %s249 = smul.u32 %s248, 5
      %s250 = smul.addr %s249, 4
      %s251 = scalar_lea.vmem %s184, %s250
      %v252 = vld [vmem:[%s251] sm:$0xf]
      %v253 = vld [vmem:[%s251 + $0x4] sm:$0xf]
      %v254 = vld [vmem:[%s251 + $0x8] sm:$0xf]
      %v255 = vld [vmem:[%s251 + $0xc] sm:$0xf]
      %v256 = vld [vmem:[%s251 + $0x14] sm:$0xf]
      %v257 = vld [vmem:[%s251 + $0x18] sm:$0xf]
      %v258 = vld [vmem:[%s251 + $0x1c] sm:$0xf]
      %v259 = vld [vmem:[%s251 + $0x20] sm:$0xf]
      %v260 = vld [vmem:[%s251 + $0x28] sm:$0xf]
      %v261 = vld [vmem:[%s251 + $0x2c] sm:$0xf]
      %v262 = vld [vmem:[%s251 + $0x30] sm:$0xf]
      %v263 = vld [vmem:[%s251 + $0x34] sm:$0xf]
      %v264 = vld [vmem:[%s251 + $0x3c] sm:$0xf]
      %v265 = vld [vmem:[%s251 + $0x40] sm:$0xf]
      %v266 = vld [vmem:[%s251 + $0x44] sm:$0xf]
      %v267 = vld [vmem:[%s251 + $0x48] sm:$0xf]
      %v268 = vld [vmem:[%s251 + $0x50] sm:$0xf]
      %v269 = vld [vmem:[%s251 + $0x54] sm:$0xf]
      %v270 = vld [vmem:[%s251 + $0x58] sm:$0xf]
      %v271 = vld [vmem:[%s251 + $0x5c] sm:$0xf]
      %v272 = vld [vmem:[%s251 + $0x64] sm:$0xf]
      %v273 = vld [vmem:[%s251 + $0x68] sm:$0xf]
      %v274 = vld [vmem:[%s251 + $0x6c] sm:$0xf]
      %v275 = vld [vmem:[%s251 + $0x70] sm:$0xf]
      %v276 = vld [vmem:[%s251 + $0x78] sm:$0xf]
      %v277 = vld [vmem:[%s251 + $0x7c] sm:$0xf]
      %v278 = vld [vmem:[%s251 + $0x80] sm:$0xf]
      %v279 = vld [vmem:[%s251 + $0x84] sm:$0xf]
      %v280 = vld [vmem:[%s251 + $0x8c] sm:$0xf]
      %v281 = vld [vmem:[%s251 + $0x90] sm:$0xf]
      %v282 = vld [vmem:[%s251 + $0x94] sm:$0xf]
      %v283 = vld [vmem:[%s251 + $0x98] sm:$0xf]
      %v284 = vld [vmem:[%s251 + $0x10] sm:$0x1]
      %v285 = vld [vmem:[%s251 + $0x24] sm:$0x1]
      %v286 = vld [vmem:[%s251 + $0x38] sm:$0x1]
      %v287 = vld [vmem:[%s251 + $0x4c] sm:$0x1]
      %v288 = vld [vmem:[%s251 + $0x60] sm:$0x1]
      %v289 = vld [vmem:[%s251 + $0x74] sm:$0x1]
      %v290 = vld [vmem:[%s251 + $0x88] sm:$0x1]
      %v291 = vld [vmem:[%s251 + $0x9c] sm:$0x1]
      %v292 = vld [vmem:[%s251] sm:$0xe]
      %v293 = vld [vmem:[%s251 + $0x14] sm:$0xe]
      %v294 = vld [vmem:[%s251 + $0x28] sm:$0xe]
      %v295 = vld [vmem:[%s251 + $0x3c] sm:$0xe]
      %v296 = vld [vmem:[%s251 + $0x50] sm:$0xe]
      %v297 = vld [vmem:[%s251 + $0x64] sm:$0xe]
      %v298 = vld [vmem:[%s251 + $0x78] sm:$0xe]
      %v299 = vld [vmem:[%s251 + $0x8c] sm:$0xe]
      %s300 = sadd.s32 %s196, 2
      %s301 = smul.u32 %s300, 5
      %s302 = smul.addr %s301, 4
      %s303 = scalar_lea.vmem %s184, %s302
      %v304 = vld [vmem:[%s303] sm:$0xf]
      %v305 = vld [vmem:[%s303 + $0x4] sm:$0xf]
      %v306 = vld [vmem:[%s303 + $0x8] sm:$0xf]
      %v307 = vld [vmem:[%s303 + $0xc] sm:$0xf]
      %v308 = vld [vmem:[%s303 + $0x14] sm:$0xf]
      %v309 = vld [vmem:[%s303 + $0x18] sm:$0xf]
      %v310 = vld [vmem:[%s303 + $0x1c] sm:$0xf]
      %v311 = vld [vmem:[%s303 + $0x20] sm:$0xf]
      %v312 = vld [vmem:[%s303 + $0x28] sm:$0xf]
      %v313 = vld [vmem:[%s303 + $0x2c] sm:$0xf]
      %v314 = vld [vmem:[%s303 + $0x30] sm:$0xf]
      %v315 = vld [vmem:[%s303 + $0x34] sm:$0xf]
      %v316 = vld [vmem:[%s303 + $0x3c] sm:$0xf]
      %v317 = vld [vmem:[%s303 + $0x40] sm:$0xf]
      %v318 = vld [vmem:[%s303 + $0x44] sm:$0xf]
      %v319 = vld [vmem:[%s303 + $0x48] sm:$0xf]
      %v320 = vld [vmem:[%s303 + $0x50] sm:$0xf]
      %v321 = vld [vmem:[%s303 + $0x54] sm:$0xf]
      %v322 = vld [vmem:[%s303 + $0x58] sm:$0xf]
      %v323 = vld [vmem:[%s303 + $0x5c] sm:$0xf]
      %v324 = vld [vmem:[%s303 + $0x64] sm:$0xf]
      %v325 = vld [vmem:[%s303 + $0x68] sm:$0xf]
      %v326 = vld [vmem:[%s303 + $0x6c] sm:$0xf]
      %v327 = vld [vmem:[%s303 + $0x70] sm:$0xf]
      %v328 = vld [vmem:[%s303 + $0x78] sm:$0xf]
      %v329 = vld [vmem:[%s303 + $0x7c] sm:$0xf]
      %v330 = vld [vmem:[%s303 + $0x80] sm:$0xf]
      %v331 = vld [vmem:[%s303 + $0x84] sm:$0xf]
      %v332 = vld [vmem:[%s303 + $0x8c] sm:$0xf]
      %v333 = vld [vmem:[%s303 + $0x90] sm:$0xf]
      %v334 = vld [vmem:[%s303 + $0x94] sm:$0xf]
      %v335 = vld [vmem:[%s303 + $0x98] sm:$0xf]
      %v336 = vld [vmem:[%s303 + $0x10] sm:$0x1]
      %v337 = vld [vmem:[%s303 + $0x24] sm:$0x1]
      %v338 = vld [vmem:[%s303 + $0x38] sm:$0x1]
      %v339 = vld [vmem:[%s303 + $0x4c] sm:$0x1]
      %v340 = vld [vmem:[%s303 + $0x60] sm:$0x1]
      %v341 = vld [vmem:[%s303 + $0x74] sm:$0x1]
      %v342 = vld [vmem:[%s303 + $0x88] sm:$0x1]
      %v343 = vld [vmem:[%s303 + $0x9c] sm:$0x1]
      %v344 = vld [vmem:[%s303] sm:$0xe]
      %v345 = vld [vmem:[%s303 + $0x14] sm:$0xe]
      %v346 = vld [vmem:[%s303 + $0x28] sm:$0xe]
      %v347 = vld [vmem:[%s303 + $0x3c] sm:$0xe]
      %v348 = vld [vmem:[%s303 + $0x50] sm:$0xe]
      %v349 = vld [vmem:[%s303 + $0x64] sm:$0xe]
      %v350 = vld [vmem:[%s303 + $0x78] sm:$0xe]
      %v351 = vld [vmem:[%s303 + $0x8c] sm:$0xe]
      %v384 = vunpack.c.l.b16 %v200
      %v385 = vunpack.c.l.b16 %v201
      %v386 = vunpack.c.l.b16 %v202
      %v387 = vunpack.c.l.b16 %v203
      %v388 = vunpack.c.l.b16 %v204
      %v389 = vunpack.c.l.b16 %v205
      %v390 = vunpack.c.l.b16 %v206
      %v391 = vunpack.c.l.b16 %v207
      %v392 = vunpack.c.l.b16 %v208
      %v393 = vunpack.c.l.b16 %v209
      %v394 = vunpack.c.l.b16 %v210
      %v395 = vunpack.c.l.b16 %v211
      %v396 = vunpack.c.l.b16 %v212
      %v397 = vunpack.c.l.b16 %v213
      %v398 = vunpack.c.l.b16 %v214
      %v399 = vunpack.c.l.b16 %v215
      %v400 = vunpack.c.l.b16 %v216
      %v401 = vunpack.c.l.b16 %v217
      %v402 = vunpack.c.l.b16 %v218
      %v403 = vunpack.c.l.b16 %v219
      %v404 = vunpack.c.l.b16 %v220
      %v405 = vunpack.c.l.b16 %v221
      %v406 = vunpack.c.l.b16 %v222
      %v407 = vunpack.c.l.b16 %v223
      %v408 = vunpack.c.l.b16 %v224
      %v409 = vunpack.c.l.b16 %v225
      %v410 = vunpack.c.l.b16 %v226
      %v411 = vunpack.c.l.b16 %v227
      %v412 = vunpack.c.l.b16 %v228
      %v413 = vunpack.c.l.b16 %v229
      %v414 = vunpack.c.l.b16 %v230
      %v415 = vunpack.c.l.b16 %v231
      %v416 = vpack.c.b16 %v385, %v384
      %v417 = vpack.c.b16 %v387, %v386
      %v418 = vpack.c.b16 %v389, %v388
      %v419 = vpack.c.b16 %v391, %v390
      %v420 = vpack.c.b16 %v393, %v392
      %v421 = vpack.c.b16 %v395, %v394
      %v422 = vpack.c.b16 %v397, %v396
      %v423 = vpack.c.b16 %v399, %v398
      %v424 = vpack.c.b16 %v401, %v400
      %v425 = vpack.c.b16 %v403, %v402
      %v426 = vpack.c.b16 %v405, %v404
      %v427 = vpack.c.b16 %v407, %v406
      %v428 = vpack.c.b16 %v409, %v408
      %v429 = vpack.c.b16 %v411, %v410
      %v430 = vpack.c.b16 %v413, %v412
      %v431 = vpack.c.b16 %v415, %v414
      %v456 = vunpack.c.l.b16 %v232
      %v457 = vunpack.c.l.b16 %v233
      %v458 = vunpack.c.l.b16 %v234
      %v459 = vunpack.c.l.b16 %v235
      %v460 = vunpack.c.l.b16 %v236
      %v461 = vunpack.c.l.b16 %v237
      %v462 = vunpack.c.l.b16 %v238
      %v463 = vunpack.c.l.b16 %v239
      %v464 = vpack.c.b16 %v456, %v456
      %v465 = vpack.c.b16 %v457, %v457
      %v466 = vpack.c.b16 %v458, %v458
      %v467 = vpack.c.b16 %v459, %v459
      %v468 = vpack.c.b16 %v460, %v460
      %v469 = vpack.c.b16 %v461, %v461
      %v470 = vpack.c.b16 %v462, %v462
      %v471 = vpack.c.b16 %v463, %v463
      %vm472 = vsmask.f32 7424
      %v474 = vshrl.u32 %v416, 16
      %v476 = vshll.u32 %v416, 16
      %v478 = vrot.slane %v476, 1
      %v479 = vor.u32 %v474, %v478
      %v481 = vshll.u32 %v417, 16
      %v483 = vrot.slane %v481, 1
      %v484 = vsel %vm472, %v479, %v483
      %v485 = vshrl.u32 %v417, 16
      %v487 = vor.u32 %v485, %v483
      %v489 = vshll.u32 %v464, 16
      %v491 = vrot.slane %v489, 1
      %v492 = vsel %vm472, %v487, %v491
      %v494 = vshrl.u32 %v418, 16
      %v496 = vshll.u32 %v418, 16
      %v498 = vrot.slane %v496, 1
      %v499 = vor.u32 %v494, %v498
      %v501 = vshll.u32 %v419, 16
      %v503 = vrot.slane %v501, 1
      %v504 = vsel %vm472, %v499, %v503
      %v505 = vshrl.u32 %v419, 16
      %v507 = vor.u32 %v505, %v503
      %v509 = vshll.u32 %v465, 16
      %v511 = vrot.slane %v509, 1
      %v512 = vsel %vm472, %v507, %v511
      %v514 = vshrl.u32 %v420, 16
      %v516 = vshll.u32 %v420, 16
      %v518 = vrot.slane %v516, 1
      %v519 = vor.u32 %v514, %v518
      %v521 = vshll.u32 %v421, 16
      %v523 = vrot.slane %v521, 1
      %v524 = vsel %vm472, %v519, %v523
      %v525 = vshrl.u32 %v421, 16
      %v527 = vor.u32 %v525, %v523
      %v529 = vshll.u32 %v466, 16
      %v531 = vrot.slane %v529, 1
      %v532 = vsel %vm472, %v527, %v531
      %v534 = vshrl.u32 %v422, 16
      %v536 = vshll.u32 %v422, 16
      %v538 = vrot.slane %v536, 1
      %v539 = vor.u32 %v534, %v538
      %v541 = vshll.u32 %v423, 16
      %v543 = vrot.slane %v541, 1
      %v544 = vsel %vm472, %v539, %v543
      %v545 = vshrl.u32 %v423, 16
      %v547 = vor.u32 %v545, %v543
      %v549 = vshll.u32 %v467, 16
      %v551 = vrot.slane %v549, 1
      %v552 = vsel %vm472, %v547, %v551
      %v554 = vshrl.u32 %v424, 16
      %v556 = vshll.u32 %v424, 16
      %v558 = vrot.slane %v556, 1
      %v559 = vor.u32 %v554, %v558
      %v561 = vshll.u32 %v425, 16
      %v563 = vrot.slane %v561, 1
      %v564 = vsel %vm472, %v559, %v563
      %v565 = vshrl.u32 %v425, 16
      %v567 = vor.u32 %v565, %v563
      %v569 = vshll.u32 %v468, 16
      %v571 = vrot.slane %v569, 1
      %v572 = vsel %vm472, %v567, %v571
      %v574 = vshrl.u32 %v426, 16
      %v576 = vshll.u32 %v426, 16
      %v578 = vrot.slane %v576, 1
      %v579 = vor.u32 %v574, %v578
      %v581 = vshll.u32 %v427, 16
      %v583 = vrot.slane %v581, 1
      %v584 = vsel %vm472, %v579, %v583
      %v585 = vshrl.u32 %v427, 16
      %v587 = vor.u32 %v585, %v583
      %v589 = vshll.u32 %v469, 16
      %v591 = vrot.slane %v589, 1
      %v592 = vsel %vm472, %v587, %v591
      %v594 = vshrl.u32 %v428, 16
      %v596 = vshll.u32 %v428, 16
      %v598 = vrot.slane %v596, 1
      %v599 = vor.u32 %v594, %v598
      %v601 = vshll.u32 %v429, 16
      %v603 = vrot.slane %v601, 1
      %v604 = vsel %vm472, %v599, %v603
      %v605 = vshrl.u32 %v429, 16
      %v607 = vor.u32 %v605, %v603
      %v609 = vshll.u32 %v470, 16
      %v611 = vrot.slane %v609, 1
      %v612 = vsel %vm472, %v607, %v611
      %v614 = vshrl.u32 %v430, 16
      %v616 = vshll.u32 %v430, 16
      %v618 = vrot.slane %v616, 1
      %v619 = vor.u32 %v614, %v618
      %v621 = vshll.u32 %v431, 16
      %v623 = vrot.slane %v621, 1
      %v624 = vsel %vm472, %v619, %v623
      %v625 = vshrl.u32 %v431, 16
      %v627 = vor.u32 %v625, %v623
      %v629 = vshll.u32 %v471, 16
      %v631 = vrot.slane %v629, 1
      %v632 = vsel %vm472, %v627, %v631
      %v657 = vunpack.c.l.b16 %v240
      %v658 = vunpack.c.l.b16 %v241
      %v659 = vunpack.c.l.b16 %v242
      %v660 = vunpack.c.l.b16 %v243
      %v661 = vunpack.c.l.b16 %v244
      %v662 = vunpack.c.l.b16 %v245
      %v663 = vunpack.c.l.b16 %v246
      %v664 = vunpack.c.l.b16 %v247
      %v665 = vpack.c.b16 %v385, %v657
      %v666 = vpack.c.b16 %v389, %v658
      %v667 = vpack.c.b16 %v393, %v659
      %v668 = vpack.c.b16 %v397, %v660
      %v669 = vpack.c.b16 %v401, %v661
      %v670 = vpack.c.b16 %v405, %v662
      %v671 = vpack.c.b16 %v409, %v663
      %v672 = vpack.c.b16 %v413, %v664
      %vm673 = vcmask 1046528
      %v674 = vrot.slane %v665, 1
      %v675 = vrot.slane %v417, 1
      %v676 = vsel %vm673, %v674, %v675
      %v677 = vrot.slane %v464, 1
      %v678 = vsel %vm673, %v675, %v677
      %v679 = vrot.slane %v666, 1
      %v680 = vrot.slane %v419, 1
      %v681 = vsel %vm673, %v679, %v680
      %v682 = vrot.slane %v465, 1
      %v683 = vsel %vm673, %v680, %v682
      %v684 = vrot.slane %v667, 1
      %v685 = vrot.slane %v421, 1
      %v686 = vsel %vm673, %v684, %v685
      %v687 = vrot.slane %v466, 1
      %v688 = vsel %vm673, %v685, %v687
      %v689 = vrot.slane %v668, 1
      %v690 = vrot.slane %v423, 1
      %v691 = vsel %vm673, %v689, %v690
      %v692 = vrot.slane %v467, 1
      %v693 = vsel %vm673, %v690, %v692
      %v694 = vrot.slane %v669, 1
      %v695 = vrot.slane %v425, 1
      %v696 = vsel %vm673, %v694, %v695
      %v697 = vrot.slane %v468, 1
      %v698 = vsel %vm673, %v695, %v697
      %v699 = vrot.slane %v670, 1
      %v700 = vrot.slane %v427, 1
      %v701 = vsel %vm673, %v699, %v700
      %v702 = vrot.slane %v469, 1
      %v703 = vsel %vm673, %v700, %v702
      %v704 = vrot.slane %v671, 1
      %v705 = vrot.slane %v429, 1
      %v706 = vsel %vm673, %v704, %v705
      %v707 = vrot.slane %v470, 1
      %v708 = vsel %vm673, %v705, %v707
      %v709 = vrot.slane %v672, 1
      %v710 = vrot.slane %v431, 1
      %v711 = vsel %vm673, %v709, %v710
      %v712 = vrot.slane %v471, 1
      %v713 = vsel %vm673, %v710, %v712
      %v762 = vunpack.c.l.b16 %v252
      %v763 = vunpack.c.l.b16 %v253
      %v764 = vunpack.c.l.b16 %v254
      %v765 = vunpack.c.l.b16 %v255
      %v766 = vunpack.c.l.b16 %v256
      %v767 = vunpack.c.l.b16 %v257
      %v768 = vunpack.c.l.b16 %v258
      %v769 = vunpack.c.l.b16 %v259
      %v770 = vunpack.c.l.b16 %v260
      %v771 = vunpack.c.l.b16 %v261
      %v772 = vunpack.c.l.b16 %v262
      %v773 = vunpack.c.l.b16 %v263
      %v774 = vunpack.c.l.b16 %v264
      %v775 = vunpack.c.l.b16 %v265
      %v776 = vunpack.c.l.b16 %v266
      %v777 = vunpack.c.l.b16 %v267
      %v778 = vunpack.c.l.b16 %v268
      %v779 = vunpack.c.l.b16 %v269
      %v780 = vunpack.c.l.b16 %v270
      %v781 = vunpack.c.l.b16 %v271
      %v782 = vunpack.c.l.b16 %v272
      %v783 = vunpack.c.l.b16 %v273
      %v784 = vunpack.c.l.b16 %v274
      %v785 = vunpack.c.l.b16 %v275
      %v786 = vunpack.c.l.b16 %v276
      %v787 = vunpack.c.l.b16 %v277
      %v788 = vunpack.c.l.b16 %v278
      %v789 = vunpack.c.l.b16 %v279
      %v790 = vunpack.c.l.b16 %v280
      %v791 = vunpack.c.l.b16 %v281
      %v792 = vunpack.c.l.b16 %v282
      %v793 = vunpack.c.l.b16 %v283
      %v794 = vpack.c.b16 %v763, %v762
      %v795 = vpack.c.b16 %v765, %v764
      %v796 = vpack.c.b16 %v767, %v766
      %v797 = vpack.c.b16 %v769, %v768
      %v798 = vpack.c.b16 %v771, %v770
      %v799 = vpack.c.b16 %v773, %v772
      %v800 = vpack.c.b16 %v775, %v774
      %v801 = vpack.c.b16 %v777, %v776
      %v802 = vpack.c.b16 %v779, %v778
      %v803 = vpack.c.b16 %v781, %v780
      %v804 = vpack.c.b16 %v783, %v782
      %v805 = vpack.c.b16 %v785, %v784
      %v806 = vpack.c.b16 %v787, %v786
      %v807 = vpack.c.b16 %v789, %v788
      %v808 = vpack.c.b16 %v791, %v790
      %v809 = vpack.c.b16 %v793, %v792
      %v834 = vunpack.c.l.b16 %v284
      %v835 = vunpack.c.l.b16 %v285
      %v836 = vunpack.c.l.b16 %v286
      %v837 = vunpack.c.l.b16 %v287
      %v838 = vunpack.c.l.b16 %v288
      %v839 = vunpack.c.l.b16 %v289
      %v840 = vunpack.c.l.b16 %v290
      %v841 = vunpack.c.l.b16 %v291
      %v842 = vpack.c.b16 %v834, %v834
      %v843 = vpack.c.b16 %v835, %v835
      %v844 = vpack.c.b16 %v836, %v836
      %v845 = vpack.c.b16 %v837, %v837
      %v846 = vpack.c.b16 %v838, %v838
      %v847 = vpack.c.b16 %v839, %v839
      %v848 = vpack.c.b16 %v840, %v840
      %v849 = vpack.c.b16 %v841, %v841
      %v851 = vshrl.u32 %v794, 16
      %v853 = vshll.u32 %v794, 16
      %v855 = vrot.slane %v853, 1
      %v856 = vor.u32 %v851, %v855
      %v858 = vshll.u32 %v795, 16
      %v860 = vrot.slane %v858, 1
      %v861 = vsel %vm472, %v856, %v860
      %v862 = vshrl.u32 %v795, 16
      %v864 = vor.u32 %v862, %v860
      %v866 = vshll.u32 %v842, 16
      %v868 = vrot.slane %v866, 1
      %v869 = vsel %vm472, %v864, %v868
      %v871 = vshrl.u32 %v796, 16
      %v873 = vshll.u32 %v796, 16
      %v875 = vrot.slane %v873, 1
      %v876 = vor.u32 %v871, %v875
      %v878 = vshll.u32 %v797, 16
      %v880 = vrot.slane %v878, 1
      %v881 = vsel %vm472, %v876, %v880
      %v882 = vshrl.u32 %v797, 16
      %v884 = vor.u32 %v882, %v880
      %v886 = vshll.u32 %v843, 16
      %v888 = vrot.slane %v886, 1
      %v889 = vsel %vm472, %v884, %v888
      %v891 = vshrl.u32 %v798, 16
      %v893 = vshll.u32 %v798, 16
      %v895 = vrot.slane %v893, 1
      %v896 = vor.u32 %v891, %v895
      %v898 = vshll.u32 %v799, 16
      %v900 = vrot.slane %v898, 1
      %v901 = vsel %vm472, %v896, %v900
      %v902 = vshrl.u32 %v799, 16
      %v904 = vor.u32 %v902, %v900
      %v906 = vshll.u32 %v844, 16
      %v908 = vrot.slane %v906, 1
      %v909 = vsel %vm472, %v904, %v908
      %v911 = vshrl.u32 %v800, 16
      %v913 = vshll.u32 %v800, 16
      %v915 = vrot.slane %v913, 1
      %v916 = vor.u32 %v911, %v915
      %v918 = vshll.u32 %v801, 16
      %v920 = vrot.slane %v918, 1
      %v921 = vsel %vm472, %v916, %v920
      %v922 = vshrl.u32 %v801, 16
      %v924 = vor.u32 %v922, %v920
      %v926 = vshll.u32 %v845, 16
      %v928 = vrot.slane %v926, 1
      %v929 = vsel %vm472, %v924, %v928
      %v931 = vshrl.u32 %v802, 16
      %v933 = vshll.u32 %v802, 16
      %v935 = vrot.slane %v933, 1
      %v936 = vor.u32 %v931, %v935
      %v938 = vshll.u32 %v803, 16
      %v940 = vrot.slane %v938, 1
      %v941 = vsel %vm472, %v936, %v940
      %v942 = vshrl.u32 %v803, 16
      %v944 = vor.u32 %v942, %v940
      %v946 = vshll.u32 %v846, 16
      %v948 = vrot.slane %v946, 1
      %v949 = vsel %vm472, %v944, %v948
      %v951 = vshrl.u32 %v804, 16
      %v953 = vshll.u32 %v804, 16
      %v955 = vrot.slane %v953, 1
      %v956 = vor.u32 %v951, %v955
      %v958 = vshll.u32 %v805, 16
      %v960 = vrot.slane %v958, 1
      %v961 = vsel %vm472, %v956, %v960
      %v962 = vshrl.u32 %v805, 16
      %v964 = vor.u32 %v962, %v960
      %v966 = vshll.u32 %v847, 16
      %v968 = vrot.slane %v966, 1
      %v969 = vsel %vm472, %v964, %v968
      %v971 = vshrl.u32 %v806, 16
      %v973 = vshll.u32 %v806, 16
      %v975 = vrot.slane %v973, 1
      %v976 = vor.u32 %v971, %v975
      %v978 = vshll.u32 %v807, 16
      %v980 = vrot.slane %v978, 1
      %v981 = vsel %vm472, %v976, %v980
      %v982 = vshrl.u32 %v807, 16
      %v984 = vor.u32 %v982, %v980
      %v986 = vshll.u32 %v848, 16
      %v988 = vrot.slane %v986, 1
      %v989 = vsel %vm472, %v984, %v988
      %v991 = vshrl.u32 %v808, 16
      %v993 = vshll.u32 %v808, 16
      %v995 = vrot.slane %v993, 1
      %v996 = vor.u32 %v991, %v995
      %v998 = vshll.u32 %v809, 16
      %v1000 = vrot.slane %v998, 1
      %v1001 = vsel %vm472, %v996, %v1000
      %v1002 = vshrl.u32 %v809, 16
      %v1004 = vor.u32 %v1002, %v1000
      %v1006 = vshll.u32 %v849, 16
      %v1008 = vrot.slane %v1006, 1
      %v1009 = vsel %vm472, %v1004, %v1008
      %v1034 = vunpack.c.l.b16 %v292
      %v1035 = vunpack.c.l.b16 %v293
      %v1036 = vunpack.c.l.b16 %v294
      %v1037 = vunpack.c.l.b16 %v295
      %v1038 = vunpack.c.l.b16 %v296
      %v1039 = vunpack.c.l.b16 %v297
      %v1040 = vunpack.c.l.b16 %v298
      %v1041 = vunpack.c.l.b16 %v299
      %v1042 = vpack.c.b16 %v763, %v1034
      %v1043 = vpack.c.b16 %v767, %v1035
      %v1044 = vpack.c.b16 %v771, %v1036
      %v1045 = vpack.c.b16 %v775, %v1037
      %v1046 = vpack.c.b16 %v779, %v1038
      %v1047 = vpack.c.b16 %v783, %v1039
      %v1048 = vpack.c.b16 %v787, %v1040
      %v1049 = vpack.c.b16 %v791, %v1041
      %v1050 = vrot.slane %v1042, 1
      %v1051 = vrot.slane %v795, 1
      %v1052 = vsel %vm673, %v1050, %v1051
      %v1053 = vrot.slane %v842, 1
      %v1054 = vsel %vm673, %v1051, %v1053
      %v1055 = vrot.slane %v1043, 1
      %v1056 = vrot.slane %v797, 1
      %v1057 = vsel %vm673, %v1055, %v1056
      %v1058 = vrot.slane %v843, 1
      %v1059 = vsel %vm673, %v1056, %v1058
      %v1060 = vrot.slane %v1044, 1
      %v1061 = vrot.slane %v799, 1
      %v1062 = vsel %vm673, %v1060, %v1061
      %v1063 = vrot.slane %v844, 1
      %v1064 = vsel %vm673, %v1061, %v1063
      %v1065 = vrot.slane %v1045, 1
      %v1066 = vrot.slane %v801, 1
      %v1067 = vsel %vm673, %v1065, %v1066
      %v1068 = vrot.slane %v845, 1
      %v1069 = vsel %vm673, %v1066, %v1068
      %v1070 = vrot.slane %v1046, 1
      %v1071 = vrot.slane %v803, 1
      %v1072 = vsel %vm673, %v1070, %v1071
      %v1073 = vrot.slane %v846, 1
      %v1074 = vsel %vm673, %v1071, %v1073
      %v1075 = vrot.slane %v1047, 1
      %v1076 = vrot.slane %v805, 1
      %v1077 = vsel %vm673, %v1075, %v1076
      %v1078 = vrot.slane %v847, 1
      %v1079 = vsel %vm673, %v1076, %v1078
      %v1080 = vrot.slane %v1048, 1
      %v1081 = vrot.slane %v807, 1
      %v1082 = vsel %vm673, %v1080, %v1081
      %v1083 = vrot.slane %v848, 1
      %v1084 = vsel %vm673, %v1081, %v1083
      %v1085 = vrot.slane %v1049, 1
      %v1086 = vrot.slane %v809, 1
      %v1087 = vsel %vm673, %v1085, %v1086
      %v1088 = vrot.slane %v849, 1
      %v1089 = vsel %vm673, %v1086, %v1088
      %v1138 = vunpack.c.l.b16 %v304
      %v1139 = vunpack.c.l.b16 %v305
      %v1140 = vunpack.c.l.b16 %v306
      %v1141 = vunpack.c.l.b16 %v307
      %v1142 = vunpack.c.l.b16 %v308
      %v1143 = vunpack.c.l.b16 %v309
      %v1144 = vunpack.c.l.b16 %v310
      %v1145 = vunpack.c.l.b16 %v311
      %v1146 = vunpack.c.l.b16 %v312
      %v1147 = vunpack.c.l.b16 %v313
      %v1148 = vunpack.c.l.b16 %v314
      %v1149 = vunpack.c.l.b16 %v315
      %v1150 = vunpack.c.l.b16 %v316
      %v1151 = vunpack.c.l.b16 %v317
      %v1152 = vunpack.c.l.b16 %v318
      %v1153 = vunpack.c.l.b16 %v319
      %v1154 = vunpack.c.l.b16 %v320
      %v1155 = vunpack.c.l.b16 %v321
      %v1156 = vunpack.c.l.b16 %v322
      %v1157 = vunpack.c.l.b16 %v323
      %v1158 = vunpack.c.l.b16 %v324
      %v1159 = vunpack.c.l.b16 %v325
      %v1160 = vunpack.c.l.b16 %v326
      %v1161 = vunpack.c.l.b16 %v327
      %v1162 = vunpack.c.l.b16 %v328
      %v1163 = vunpack.c.l.b16 %v329
      %v1164 = vunpack.c.l.b16 %v330
      %v1165 = vunpack.c.l.b16 %v331
      %v1166 = vunpack.c.l.b16 %v332
      %v1167 = vunpack.c.l.b16 %v333
      %v1168 = vunpack.c.l.b16 %v334
      %v1169 = vunpack.c.l.b16 %v335
      %v1170 = vpack.c.b16 %v1139, %v1138
      %v1171 = vpack.c.b16 %v1141, %v1140
      %v1172 = vpack.c.b16 %v1143, %v1142
      %v1173 = vpack.c.b16 %v1145, %v1144
      %v1174 = vpack.c.b16 %v1147, %v1146
      %v1175 = vpack.c.b16 %v1149, %v1148
      %v1176 = vpack.c.b16 %v1151, %v1150
      %v1177 = vpack.c.b16 %v1153, %v1152
      %v1178 = vpack.c.b16 %v1155, %v1154
      %v1179 = vpack.c.b16 %v1157, %v1156
      %v1180 = vpack.c.b16 %v1159, %v1158
      %v1181 = vpack.c.b16 %v1161, %v1160
      %v1182 = vpack.c.b16 %v1163, %v1162
      %v1183 = vpack.c.b16 %v1165, %v1164
      %v1184 = vpack.c.b16 %v1167, %v1166
      %v1185 = vpack.c.b16 %v1169, %v1168
      %v1210 = vunpack.c.l.b16 %v336
      %v1211 = vunpack.c.l.b16 %v337
      %v1212 = vunpack.c.l.b16 %v338
      %v1213 = vunpack.c.l.b16 %v339
      %v1214 = vunpack.c.l.b16 %v340
      %v1215 = vunpack.c.l.b16 %v341
      %v1216 = vunpack.c.l.b16 %v342
      %v1217 = vunpack.c.l.b16 %v343
      %v1218 = vpack.c.b16 %v1210, %v1210
      %v1219 = vpack.c.b16 %v1211, %v1211
      %v1220 = vpack.c.b16 %v1212, %v1212
      %v1221 = vpack.c.b16 %v1213, %v1213
      %v1222 = vpack.c.b16 %v1214, %v1214
      %v1223 = vpack.c.b16 %v1215, %v1215
      %v1224 = vpack.c.b16 %v1216, %v1216
      %v1225 = vpack.c.b16 %v1217, %v1217
      %v1227 = vshrl.u32 %v1170, 16
      %v1229 = vshll.u32 %v1170, 16
      %v1231 = vrot.slane %v1229, 1
      %v1232 = vor.u32 %v1227, %v1231
      %v1234 = vshll.u32 %v1171, 16
      %v1236 = vrot.slane %v1234, 1
      %v1237 = vsel %vm472, %v1232, %v1236
      %v1238 = vshrl.u32 %v1171, 16
      %v1240 = vor.u32 %v1238, %v1236
      %v1242 = vshll.u32 %v1218, 16
      %v1244 = vrot.slane %v1242, 1
      %v1245 = vsel %vm472, %v1240, %v1244
      %v1247 = vshrl.u32 %v1172, 16
      %v1249 = vshll.u32 %v1172, 16
      %v1251 = vrot.slane %v1249, 1
      %v1252 = vor.u32 %v1247, %v1251
      %v1254 = vshll.u32 %v1173, 16
      %v1256 = vrot.slane %v1254, 1
      %v1257 = vsel %vm472, %v1252, %v1256
      %v1258 = vshrl.u32 %v1173, 16
      %v1260 = vor.u32 %v1258, %v1256
      %v1262 = vshll.u32 %v1219, 16
      %v1264 = vrot.slane %v1262, 1
      %v1265 = vsel %vm472, %v1260, %v1264
      %v1267 = vshrl.u32 %v1174, 16
      %v1269 = vshll.u32 %v1174, 16
      %v1271 = vrot.slane %v1269, 1
      %v1272 = vor.u32 %v1267, %v1271
      %v1274 = vshll.u32 %v1175, 16
      %v1276 = vrot.slane %v1274, 1
      %v1277 = vsel %vm472, %v1272, %v1276
      %v1278 = vshrl.u32 %v1175, 16
      %v1280 = vor.u32 %v1278, %v1276
      %v1282 = vshll.u32 %v1220, 16
      %v1284 = vrot.slane %v1282, 1
      %v1285 = vsel %vm472, %v1280, %v1284
      %v1287 = vshrl.u32 %v1176, 16
      %v1289 = vshll.u32 %v1176, 16
      %v1291 = vrot.slane %v1289, 1
      %v1292 = vor.u32 %v1287, %v1291
      %v1294 = vshll.u32 %v1177, 16
      %v1296 = vrot.slane %v1294, 1
      %v1297 = vsel %vm472, %v1292, %v1296
      %v1298 = vshrl.u32 %v1177, 16
      %v1300 = vor.u32 %v1298, %v1296
      %v1302 = vshll.u32 %v1221, 16
      %v1304 = vrot.slane %v1302, 1
      %v1305 = vsel %vm472, %v1300, %v1304
      %v1307 = vshrl.u32 %v1178, 16
      %v1309 = vshll.u32 %v1178, 16
      %v1311 = vrot.slane %v1309, 1
      %v1312 = vor.u32 %v1307, %v1311
      %v1314 = vshll.u32 %v1179, 16
      %v1316 = vrot.slane %v1314, 1
      %v1317 = vsel %vm472, %v1312, %v1316
      %v1318 = vshrl.u32 %v1179, 16
      %v1320 = vor.u32 %v1318, %v1316
      %v1322 = vshll.u32 %v1222, 16
      %v1324 = vrot.slane %v1322, 1
      %v1325 = vsel %vm472, %v1320, %v1324
      %v1327 = vshrl.u32 %v1180, 16
      %v1329 = vshll.u32 %v1180, 16
      %v1331 = vrot.slane %v1329, 1
      %v1332 = vor.u32 %v1327, %v1331
      %v1334 = vshll.u32 %v1181, 16
      %v1336 = vrot.slane %v1334, 1
      %v1337 = vsel %vm472, %v1332, %v1336
      %v1338 = vshrl.u32 %v1181, 16
      %v1340 = vor.u32 %v1338, %v1336
      %v1342 = vshll.u32 %v1223, 16
      %v1344 = vrot.slane %v1342, 1
      %v1345 = vsel %vm472, %v1340, %v1344
      %v1347 = vshrl.u32 %v1182, 16
      %v1349 = vshll.u32 %v1182, 16
      %v1351 = vrot.slane %v1349, 1
      %v1352 = vor.u32 %v1347, %v1351
      %v1354 = vshll.u32 %v1183, 16
      %v1356 = vrot.slane %v1354, 1
      %v1357 = vsel %vm472, %v1352, %v1356
      %v1358 = vshrl.u32 %v1183, 16
      %v1360 = vor.u32 %v1358, %v1356
      %v1362 = vshll.u32 %v1224, 16
      %v1364 = vrot.slane %v1362, 1
      %v1365 = vsel %vm472, %v1360, %v1364
      %v1367 = vshrl.u32 %v1184, 16
      %v1369 = vshll.u32 %v1184, 16
      %v1371 = vrot.slane %v1369, 1
      %v1372 = vor.u32 %v1367, %v1371
      %v1374 = vshll.u32 %v1185, 16
      %v1376 = vrot.slane %v1374, 1
      %v1377 = vsel %vm472, %v1372, %v1376
      %v1378 = vshrl.u32 %v1185, 16
      %v1380 = vor.u32 %v1378, %v1376
      %v1382 = vshll.u32 %v1225, 16
      %v1384 = vrot.slane %v1382, 1
      %v1385 = vsel %vm472, %v1380, %v1384
      %v1410 = vunpack.c.l.b16 %v344
      %v1411 = vunpack.c.l.b16 %v345
      %v1412 = vunpack.c.l.b16 %v346
      %v1413 = vunpack.c.l.b16 %v347
      %v1414 = vunpack.c.l.b16 %v348
      %v1415 = vunpack.c.l.b16 %v349
      %v1416 = vunpack.c.l.b16 %v350
      %v1417 = vunpack.c.l.b16 %v351
      %v1418 = vpack.c.b16 %v1139, %v1410
      %v1419 = vpack.c.b16 %v1143, %v1411
      %v1420 = vpack.c.b16 %v1147, %v1412
      %v1421 = vpack.c.b16 %v1151, %v1413
      %v1422 = vpack.c.b16 %v1155, %v1414
      %v1423 = vpack.c.b16 %v1159, %v1415
      %v1424 = vpack.c.b16 %v1163, %v1416
      %v1425 = vpack.c.b16 %v1167, %v1417
      %v1426 = vrot.slane %v1418, 1
      %v1427 = vrot.slane %v1171, 1
      %v1428 = vsel %vm673, %v1426, %v1427
      %v1429 = vrot.slane %v1218, 1
      %v1430 = vsel %vm673, %v1427, %v1429
      %v1431 = vrot.slane %v1419, 1
      %v1432 = vrot.slane %v1173, 1
      %v1433 = vsel %vm673, %v1431, %v1432
      %v1434 = vrot.slane %v1219, 1
      %v1435 = vsel %vm673, %v1432, %v1434
      %v1436 = vrot.slane %v1420, 1
      %v1437 = vrot.slane %v1175, 1
      %v1438 = vsel %vm673, %v1436, %v1437
      %v1439 = vrot.slane %v1220, 1
      %v1440 = vsel %vm673, %v1437, %v1439
      %v1441 = vrot.slane %v1421, 1
      %v1442 = vrot.slane %v1177, 1
      %v1443 = vsel %vm673, %v1441, %v1442
      %v1444 = vrot.slane %v1221, 1
      %v1445 = vsel %vm673, %v1442, %v1444
      %v1446 = vrot.slane %v1422, 1
      %v1447 = vrot.slane %v1179, 1
      %v1448 = vsel %vm673, %v1446, %v1447
      %v1449 = vrot.slane %v1222, 1
      %v1450 = vsel %vm673, %v1447, %v1449
      %v1451 = vrot.slane %v1423, 1
      %v1452 = vrot.slane %v1181, 1
      %v1453 = vsel %vm673, %v1451, %v1452
      %v1454 = vrot.slane %v1223, 1
      %v1455 = vsel %vm673, %v1452, %v1454
      %v1456 = vrot.slane %v1424, 1
      %v1457 = vrot.slane %v1183, 1
      %v1458 = vsel %vm673, %v1456, %v1457
      %v1459 = vrot.slane %v1224, 1
      %v1460 = vsel %vm673, %v1457, %v1459
      %v1461 = vrot.slane %v1425, 1
      %v1462 = vrot.slane %v1185, 1
      %v1463 = vsel %vm673, %v1461, %v1462
      %v1464 = vrot.slane %v1225, 1
      %v1465 = vsel %vm673, %v1462, %v1464
      %v1482 = vld [vmem:[%s1] sm:$0xf]
      %v1483 = vld [vmem:[%s1 + $0x4] sm:$0xf]
      %v1484 = vld [vmem:[%s1 + $0x8] sm:$0xf]
      %v1485 = vld [vmem:[%s1 + $0xc] sm:$0xf]
      %v1486 = vld [vmem:[%s1 + $0x10] sm:$0xf]
      %v1487 = vld [vmem:[%s1 + $0x14] sm:$0xf]
      %v1488 = vld [vmem:[%s1 + $0x18] sm:$0xf]
      %v1489 = vld [vmem:[%s1 + $0x1c] sm:$0xf]
      %v1490 = vld [vmem:[%s1 + $0x20] sm:$0xf]
      %v1491 = vld [vmem:[%s1 + $0x24] sm:$0xf]
      %v1492 = vld [vmem:[%s1 + $0x28] sm:$0xf]
      %v1493 = vld [vmem:[%s1 + $0x2c] sm:$0xf]
      %v1494 = vld [vmem:[%s1 + $0x30] sm:$0xf]
      %v1495 = vld [vmem:[%s1 + $0x34] sm:$0xf]
      %v1496 = vld [vmem:[%s1 + $0x38] sm:$0xf]
      %v1497 = vld [vmem:[%s1 + $0x3c] sm:$0xf]
      %v1498 = vld [vmem:[%s1 + $0x40] sm:$0xf]
      %v1499 = vld [vmem:[%s1 + $0x44] sm:$0xf]
      %v1500 = vld [vmem:[%s1 + $0x48] sm:$0xf]
      %v1501 = vld [vmem:[%s1 + $0x4c] sm:$0xf]
      %v1502 = vld [vmem:[%s1 + $0x50] sm:$0xf]
      %v1503 = vld [vmem:[%s1 + $0x54] sm:$0xf]
      %v1504 = vld [vmem:[%s1 + $0x58] sm:$0xf]
      %v1505 = vld [vmem:[%s1 + $0x5c] sm:$0xf]
      %v1506 = vld [vmem:[%s1 + $0x60] sm:$0xf]
      %v1507 = vld [vmem:[%s1 + $0x64] sm:$0xf]
      %v1508 = vld [vmem:[%s1 + $0x68] sm:$0xf]
      %v1509 = vld [vmem:[%s1 + $0x6c] sm:$0xf]
      %v1510 = vld [vmem:[%s1 + $0x70] sm:$0xf]
      %v1511 = vld [vmem:[%s1 + $0x74] sm:$0xf]
      %v1512 = vld [vmem:[%s1 + $0x78] sm:$0xf]
      %v1513 = vld [vmem:[%s1 + $0x7c] sm:$0xf]
      %v1514 = vld [vmem:[%s1 + $0x80] sm:$0xf]
      %v1515 = vld [vmem:[%s1 + $0x84] sm:$0xf]
      %v1516 = vld [vmem:[%s1 + $0x88] sm:$0xf]
      %v1517 = vld [vmem:[%s1 + $0x8c] sm:$0xf]
      %v1518 = vld [vmem:[%s1 + $0x90] sm:$0xf]
      %v1519 = vld [vmem:[%s1 + $0x94] sm:$0xf]
      %v1520 = vld [vmem:[%s1 + $0x98] sm:$0xf]
      %v1521 = vld [vmem:[%s1 + $0x9c] sm:$0xf]
      %v1522 = vld [vmem:[%s1 + $0xa0] sm:$0xf]
      %v1523 = vld [vmem:[%s1 + $0xa4] sm:$0xf]
      %v1524 = vld [vmem:[%s1 + $0xa8] sm:$0xf]
      %v1525 = vld [vmem:[%s1 + $0xac] sm:$0xf]
      %v1526 = vld [vmem:[%s1 + $0xb0] sm:$0xf]
      %v1527 = vld [vmem:[%s1 + $0xb4] sm:$0xf]
      %v1528 = vld [vmem:[%s1 + $0xb8] sm:$0xf]
      %v1529 = vld [vmem:[%s1 + $0xbc] sm:$0xf]
      %v1530 = vld [vmem:[%s1 + $0xc0] sm:$0xf]
      %v1531 = vld [vmem:[%s1 + $0xc4] sm:$0xf]
      %v1532 = vld [vmem:[%s1 + $0xc8] sm:$0xf]
      %v1533 = vld [vmem:[%s1 + $0xcc] sm:$0xf]
      %v1534 = vld [vmem:[%s1 + $0xd0] sm:$0xf]
      %v1535 = vld [vmem:[%s1 + $0xd4] sm:$0xf]
      %v1536 = vld [vmem:[%s1 + $0xd8] sm:$0xf]
      %v1537 = vld [vmem:[%s1 + $0xdc] sm:$0xf]
      %v1538 = vld [vmem:[%s1 + $0xe0] sm:$0xf]
      %v1539 = vld [vmem:[%s1 + $0xe4] sm:$0xf]
      %v1540 = vld [vmem:[%s1 + $0xe8] sm:$0xf]
      %v1541 = vld [vmem:[%s1 + $0xec] sm:$0xf]
      %v1542 = vld [vmem:[%s1 + $0xf0] sm:$0xf]
      %v1543 = vld [vmem:[%s1 + $0xf4] sm:$0xf]
      %v1544 = vld [vmem:[%s1 + $0xf8] sm:$0xf]
      %v1545 = vld [vmem:[%s1 + $0xfc] sm:$0xf]
      %v1546 = vld [vmem:[%s1 + $0x100] sm:$0xf]
      %v1547 = vld [vmem:[%s1 + $0x104] sm:$0xf]
      %v1548 = vld [vmem:[%s1 + $0x108] sm:$0xf]
      %v1549 = vld [vmem:[%s1 + $0x10c] sm:$0xf]
      %v1550 = vld [vmem:[%s1 + $0x110] sm:$0xf]
      %v1551 = vld [vmem:[%s1 + $0x114] sm:$0xf]
      %v1552 = vld [vmem:[%s1 + $0x118] sm:$0xf]
      %v1553 = vld [vmem:[%s1 + $0x11c] sm:$0xf]
      %v1554 = vld [vmem:[%s1 + $0x120] sm:$0xf]
      %v1555 = vld [vmem:[%s1 + $0x124] sm:$0xf]
      %v1556 = vld [vmem:[%s1 + $0x128] sm:$0xf]
      %v1557 = vld [vmem:[%s1 + $0x12c] sm:$0xf]
      %v1558 = vld [vmem:[%s1 + $0x130] sm:$0xf]
      %v1559 = vld [vmem:[%s1 + $0x134] sm:$0xf]
      %v1560 = vld [vmem:[%s1 + $0x138] sm:$0xf]
      %v1561 = vld [vmem:[%s1 + $0x13c] sm:$0xf]
      %v1562 = vld [vmem:[%s1 + $0x140] sm:$0xf]
      %v1563 = vld [vmem:[%s1 + $0x144] sm:$0xf]
      %v1564 = vld [vmem:[%s1 + $0x148] sm:$0xf]
      %v1565 = vld [vmem:[%s1 + $0x14c] sm:$0xf]
      %v1566 = vld [vmem:[%s1 + $0x150] sm:$0xf]
      %v1567 = vld [vmem:[%s1 + $0x154] sm:$0xf]
      %v1568 = vld [vmem:[%s1 + $0x158] sm:$0xf]
      %v1569 = vld [vmem:[%s1 + $0x15c] sm:$0xf]
      %v1570 = vld [vmem:[%s1 + $0x160] sm:$0xf]
      %v1571 = vld [vmem:[%s1 + $0x164] sm:$0xf]
      %v1572 = vld [vmem:[%s1 + $0x168] sm:$0xf]
      %v1573 = vld [vmem:[%s1 + $0x16c] sm:$0xf]
      %v1574 = vld [vmem:[%s1 + $0x170] sm:$0xf]
      %v1575 = vld [vmem:[%s1 + $0x174] sm:$0xf]
      %v1576 = vld [vmem:[%s1 + $0x178] sm:$0xf]
      %v1577 = vld [vmem:[%s1 + $0x17c] sm:$0xf]
      %v1578 = vld [vmem:[%s1 + $0x180] sm:$0xf]
      %v1579 = vld [vmem:[%s1 + $0x184] sm:$0xf]
      %v1580 = vld [vmem:[%s1 + $0x188] sm:$0xf]
      %v1581 = vld [vmem:[%s1 + $0x18c] sm:$0xf]
      %v1582 = vld [vmem:[%s1 + $0x190] sm:$0xf]
      %v1583 = vld [vmem:[%s1 + $0x194] sm:$0xf]
      %v1584 = vld [vmem:[%s1 + $0x198] sm:$0xf]
      %v1585 = vld [vmem:[%s1 + $0x19c] sm:$0xf]
      %v1586 = vld [vmem:[%s1 + $0x1a0] sm:$0xf]
      %v1587 = vld [vmem:[%s1 + $0x1a4] sm:$0xf]
      %v1588 = vld [vmem:[%s1 + $0x1a8] sm:$0xf]
      %v1589 = vld [vmem:[%s1 + $0x1ac] sm:$0xf]
      %v1590 = vld [vmem:[%s1 + $0x1b0] sm:$0xf]
      %v1591 = vld [vmem:[%s1 + $0x1b4] sm:$0xf]
      %v1592 = vld [vmem:[%s1 + $0x1b8] sm:$0xf]
      %v1593 = vld [vmem:[%s1 + $0x1bc] sm:$0xf]
      %v1594 = vld [vmem:[%s1 + $0x1c0] sm:$0xf]
      %v1595 = vld [vmem:[%s1 + $0x1c4] sm:$0xf]
      %v1596 = vld [vmem:[%s1 + $0x1c8] sm:$0xf]
      %v1597 = vld [vmem:[%s1 + $0x1cc] sm:$0xf]
      %v1598 = vld [vmem:[%s1 + $0x1d0] sm:$0xf]
      %v1599 = vld [vmem:[%s1 + $0x1d4] sm:$0xf]
      %v1600 = vld [vmem:[%s1 + $0x1d8] sm:$0xf]
      %v1601 = vld [vmem:[%s1 + $0x1dc] sm:$0xf]
      %v1602 = vld [vmem:[%s1 + $0x1e0] sm:$0xf]
      %v1603 = vld [vmem:[%s1 + $0x1e4] sm:$0xf]
      %v1604 = vld [vmem:[%s1 + $0x1e8] sm:$0xf]
      %v1605 = vld [vmem:[%s1 + $0x1ec] sm:$0xf]
      %v1606 = vld [vmem:[%s1 + $0x1f0] sm:$0xf]
      %v1607 = vld [vmem:[%s1 + $0x1f4] sm:$0xf]
      %v1608 = vld [vmem:[%s1 + $0x1f8] sm:$0xf]
      %v1609 = vld [vmem:[%s1 + $0x1fc] sm:$0xf]
      %v1610 = vld [vmem:[%s1 + $0x200] sm:$0xf]
      %v1611 = vld [vmem:[%s1 + $0x204] sm:$0xf]
      %v1612 = vld [vmem:[%s1 + $0x208] sm:$0xf]
      %v1613 = vld [vmem:[%s1 + $0x20c] sm:$0xf]
      %v1614 = vld [vmem:[%s1 + $0x210] sm:$0xf]
      %v1615 = vld [vmem:[%s1 + $0x214] sm:$0xf]
      %v1616 = vld [vmem:[%s1 + $0x218] sm:$0xf]
      %v1617 = vld [vmem:[%s1 + $0x21c] sm:$0xf]
      %v1618 = vld [vmem:[%s1 + $0x220] sm:$0xf]
      %v1619 = vld [vmem:[%s1 + $0x224] sm:$0xf]
      %v1620 = vld [vmem:[%s1 + $0x228] sm:$0xf]
      %v1621 = vld [vmem:[%s1 + $0x22c] sm:$0xf]
      %v1622 = vld [vmem:[%s1 + $0x230] sm:$0xf]
      %v1623 = vld [vmem:[%s1 + $0x234] sm:$0xf]
      %v1624 = vld [vmem:[%s1 + $0x238] sm:$0xf]
      %v1625 = vld [vmem:[%s1 + $0x23c] sm:$0xf]
      %v1626 = vld [vmem:[%s2] sm:$0x1]
      %v1628 = vperm.slane %v1626, 0
      %v1774 = vunpack.c.l.b16 %v1482
      %v1775 = vunpack.c.l.b16 %v1483
      %v1776 = vunpack.c.l.b16 %v1484
      %v1777 = vunpack.c.l.b16 %v1485
      %v1778 = vunpack.c.l.b16 %v1486
      %v1779 = vunpack.c.l.b16 %v1487
      %v1780 = vunpack.c.l.b16 %v1488
      %v1781 = vunpack.c.l.b16 %v1489
      %v1782 = vunpack.c.l.b16 %v1490
      %v1783 = vunpack.c.l.b16 %v1491
      %v1784 = vunpack.c.l.b16 %v1492
      %v1785 = vunpack.c.l.b16 %v1493
      %v1786 = vunpack.c.l.b16 %v1494
      %v1787 = vunpack.c.l.b16 %v1495
      %v1788 = vunpack.c.l.b16 %v1496
      %v1789 = vunpack.c.l.b16 %v1497
      %v1790 = vunpack.c.l.b16 %v1498
      %v1791 = vunpack.c.l.b16 %v1499
      %v1792 = vunpack.c.l.b16 %v1500
      %v1793 = vunpack.c.l.b16 %v1501
      %v1794 = vunpack.c.l.b16 %v1502
      %v1795 = vunpack.c.l.b16 %v1503
      %v1796 = vunpack.c.l.b16 %v1504
      %v1797 = vunpack.c.l.b16 %v1505
      %v1798 = vunpack.c.l.b16 %v1506
      %v1799 = vunpack.c.l.b16 %v1507
      %v1800 = vunpack.c.l.b16 %v1508
      %v1801 = vunpack.c.l.b16 %v1509
      %v1802 = vunpack.c.l.b16 %v1510
      %v1803 = vunpack.c.l.b16 %v1511
      %v1804 = vunpack.c.l.b16 %v1512
      %v1805 = vunpack.c.l.b16 %v1513
      %v1806 = vunpack.c.l.b16 %v1514
      %v1807 = vunpack.c.l.b16 %v1515
      %v1808 = vunpack.c.l.b16 %v1516
      %v1809 = vunpack.c.l.b16 %v1517
      %v1810 = vunpack.c.l.b16 %v1518
      %v1811 = vunpack.c.l.b16 %v1519
      %v1812 = vunpack.c.l.b16 %v1520
      %v1813 = vunpack.c.l.b16 %v1521
      %v1814 = vunpack.c.l.b16 %v1522
      %v1815 = vunpack.c.l.b16 %v1523
      %v1816 = vunpack.c.l.b16 %v1524
      %v1817 = vunpack.c.l.b16 %v1525
      %v1818 = vunpack.c.l.b16 %v1526
      %v1819 = vunpack.c.l.b16 %v1527
      %v1820 = vunpack.c.l.b16 %v1528
      %v1821 = vunpack.c.l.b16 %v1529
      %v1822 = vunpack.c.l.b16 %v1530
      %v1823 = vunpack.c.l.b16 %v1531
      %v1824 = vunpack.c.l.b16 %v1532
      %v1825 = vunpack.c.l.b16 %v1533
      %v1826 = vunpack.c.l.b16 %v1534
      %v1827 = vunpack.c.l.b16 %v1535
      %v1828 = vunpack.c.l.b16 %v1536
      %v1829 = vunpack.c.l.b16 %v1537
      %v1830 = vunpack.c.l.b16 %v1538
      %v1831 = vunpack.c.l.b16 %v1539
      %v1832 = vunpack.c.l.b16 %v1540
      %v1833 = vunpack.c.l.b16 %v1541
      %v1834 = vunpack.c.l.b16 %v1542
      %v1835 = vunpack.c.l.b16 %v1543
      %v1836 = vunpack.c.l.b16 %v1544
      %v1837 = vunpack.c.l.b16 %v1545
      %v1838 = vunpack.c.l.b16 %v1546
      %v1839 = vunpack.c.l.b16 %v1547
      %v1840 = vunpack.c.l.b16 %v1548
      %v1841 = vunpack.c.l.b16 %v1549
      %v1842 = vunpack.c.l.b16 %v1550
      %v1843 = vunpack.c.l.b16 %v1551
      %v1844 = vunpack.c.l.b16 %v1552
      %v1845 = vunpack.c.l.b16 %v1553
      %v1846 = vunpack.c.l.b16 %v1554
      %v1847 = vunpack.c.l.b16 %v1555
      %v1848 = vunpack.c.l.b16 %v1556
      %v1849 = vunpack.c.l.b16 %v1557
      %v1850 = vunpack.c.l.b16 %v1558
      %v1851 = vunpack.c.l.b16 %v1559
      %v1852 = vunpack.c.l.b16 %v1560
      %v1853 = vunpack.c.l.b16 %v1561
      %v1854 = vunpack.c.l.b16 %v1562
      %v1855 = vunpack.c.l.b16 %v1563
      %v1856 = vunpack.c.l.b16 %v1564
      %v1857 = vunpack.c.l.b16 %v1565
      %v1858 = vunpack.c.l.b16 %v1566
      %v1859 = vunpack.c.l.b16 %v1567
      %v1860 = vunpack.c.l.b16 %v1568
      %v1861 = vunpack.c.l.b16 %v1569
      %v1862 = vunpack.c.l.b16 %v1570
      %v1863 = vunpack.c.l.b16 %v1571
      %v1864 = vunpack.c.l.b16 %v1572
      %v1865 = vunpack.c.l.b16 %v1573
      %v1866 = vunpack.c.l.b16 %v1574
      %v1867 = vunpack.c.l.b16 %v1575
      %v1868 = vunpack.c.l.b16 %v1576
      %v1869 = vunpack.c.l.b16 %v1577
      %v1870 = vunpack.c.l.b16 %v1578
      %v1871 = vunpack.c.l.b16 %v1579
      %v1872 = vunpack.c.l.b16 %v1580
      %v1873 = vunpack.c.l.b16 %v1581
      %v1874 = vunpack.c.l.b16 %v1582
      %v1875 = vunpack.c.l.b16 %v1583
      %v1876 = vunpack.c.l.b16 %v1584
      %v1877 = vunpack.c.l.b16 %v1585
      %v1878 = vunpack.c.l.b16 %v1586
      %v1879 = vunpack.c.l.b16 %v1587
      %v1880 = vunpack.c.l.b16 %v1588
      %v1881 = vunpack.c.l.b16 %v1589
      %v1882 = vunpack.c.l.b16 %v1590
      %v1883 = vunpack.c.l.b16 %v1591
      %v1884 = vunpack.c.l.b16 %v1592
      %v1885 = vunpack.c.l.b16 %v1593
      %v1886 = vunpack.c.l.b16 %v1594
      %v1887 = vunpack.c.l.b16 %v1595
      %v1888 = vunpack.c.l.b16 %v1596
      %v1889 = vunpack.c.l.b16 %v1597
      %v1890 = vunpack.c.l.b16 %v1598
      %v1891 = vunpack.c.l.b16 %v1599
      %v1892 = vunpack.c.l.b16 %v1600
      %v1893 = vunpack.c.l.b16 %v1601
      %v1894 = vunpack.c.l.b16 %v1602
      %v1895 = vunpack.c.l.b16 %v1603
      %v1896 = vunpack.c.l.b16 %v1604
      %v1897 = vunpack.c.l.b16 %v1605
      %v1898 = vunpack.c.l.b16 %v1606
      %v1899 = vunpack.c.l.b16 %v1607
      %v1900 = vunpack.c.l.b16 %v1608
      %v1901 = vunpack.c.l.b16 %v1609
      %v1902 = vunpack.c.l.b16 %v1610
      %v1903 = vunpack.c.l.b16 %v1611
      %v1904 = vunpack.c.l.b16 %v1612
      %v1905 = vunpack.c.l.b16 %v1613
      %v1906 = vunpack.c.l.b16 %v1614
      %v1907 = vunpack.c.l.b16 %v1615
      %v1908 = vunpack.c.l.b16 %v1616
      %v1909 = vunpack.c.l.b16 %v1617
      %v1910 = vunpack.c.l.b16 %v1618
      %v1911 = vunpack.c.l.b16 %v1619
      %v1912 = vunpack.c.l.b16 %v1620
      %v1913 = vunpack.c.l.b16 %v1621
      %v1914 = vunpack.c.l.b16 %v1622
      %v1915 = vunpack.c.l.b16 %v1623
      %v1916 = vunpack.c.l.b16 %v1624
      %v1917 = vunpack.c.l.b16 %v1625
      %v1918 = vpack.c.b16 %v1775, %v1774
      %v1919 = vpack.c.b16 %v1777, %v1776
      %v1920 = vpack.c.b16 %v1779, %v1778
      %v1921 = vpack.c.b16 %v1781, %v1780
      %v1922 = vpack.c.b16 %v1783, %v1782
      %v1923 = vpack.c.b16 %v1785, %v1784
      %v1924 = vpack.c.b16 %v1787, %v1786
      %v1925 = vpack.c.b16 %v1789, %v1788
      %v1926 = vpack.c.b16 %v1791, %v1790
      %v1927 = vpack.c.b16 %v1793, %v1792
      %v1928 = vpack.c.b16 %v1795, %v1794
      %v1929 = vpack.c.b16 %v1797, %v1796
      %v1930 = vpack.c.b16 %v1799, %v1798
      %v1931 = vpack.c.b16 %v1801, %v1800
      %v1932 = vpack.c.b16 %v1803, %v1802
      %v1933 = vpack.c.b16 %v1805, %v1804
      %v1934 = vpack.c.b16 %v1807, %v1806
      %v1935 = vpack.c.b16 %v1809, %v1808
      %v1936 = vpack.c.b16 %v1811, %v1810
      %v1937 = vpack.c.b16 %v1813, %v1812
      %v1938 = vpack.c.b16 %v1815, %v1814
      %v1939 = vpack.c.b16 %v1817, %v1816
      %v1940 = vpack.c.b16 %v1819, %v1818
      %v1941 = vpack.c.b16 %v1821, %v1820
      %v1942 = vpack.c.b16 %v1823, %v1822
      %v1943 = vpack.c.b16 %v1825, %v1824
      %v1944 = vpack.c.b16 %v1827, %v1826
      %v1945 = vpack.c.b16 %v1829, %v1828
      %v1946 = vpack.c.b16 %v1831, %v1830
      %v1947 = vpack.c.b16 %v1833, %v1832
      %v1948 = vpack.c.b16 %v1835, %v1834
      %v1949 = vpack.c.b16 %v1837, %v1836
      %v1950 = vpack.c.b16 %v1839, %v1838
      %v1951 = vpack.c.b16 %v1841, %v1840
      %v1952 = vpack.c.b16 %v1843, %v1842
      %v1953 = vpack.c.b16 %v1845, %v1844
      %v1954 = vpack.c.b16 %v1847, %v1846
      %v1955 = vpack.c.b16 %v1849, %v1848
      %v1956 = vpack.c.b16 %v1851, %v1850
      %v1957 = vpack.c.b16 %v1853, %v1852
      %v1958 = vpack.c.b16 %v1855, %v1854
      %v1959 = vpack.c.b16 %v1857, %v1856
      %v1960 = vpack.c.b16 %v1859, %v1858
      %v1961 = vpack.c.b16 %v1861, %v1860
      %v1962 = vpack.c.b16 %v1863, %v1862
      %v1963 = vpack.c.b16 %v1865, %v1864
      %v1964 = vpack.c.b16 %v1867, %v1866
      %v1965 = vpack.c.b16 %v1869, %v1868
      %v1966 = vpack.c.b16 %v1871, %v1870
      %v1967 = vpack.c.b16 %v1873, %v1872
      %v1968 = vpack.c.b16 %v1875, %v1874
      %v1969 = vpack.c.b16 %v1877, %v1876
      %v1970 = vpack.c.b16 %v1879, %v1878
      %v1971 = vpack.c.b16 %v1881, %v1880
      %v1972 = vpack.c.b16 %v1883, %v1882
      %v1973 = vpack.c.b16 %v1885, %v1884
      %v1974 = vpack.c.b16 %v1887, %v1886
      %v1975 = vpack.c.b16 %v1889, %v1888
      %v1976 = vpack.c.b16 %v1891, %v1890
      %v1977 = vpack.c.b16 %v1893, %v1892
      %v1978 = vpack.c.b16 %v1895, %v1894
      %v1979 = vpack.c.b16 %v1897, %v1896
      %v1980 = vpack.c.b16 %v1899, %v1898
      %v1981 = vpack.c.b16 %v1901, %v1900
      %v1982 = vpack.c.b16 %v1903, %v1902
      %v1983 = vpack.c.b16 %v1905, %v1904
      %v1984 = vpack.c.b16 %v1907, %v1906
      %v1985 = vpack.c.b16 %v1909, %v1908
      %v1986 = vpack.c.b16 %v1911, %v1910
      %v1987 = vpack.c.b16 %v1913, %v1912
      %v1988 = vpack.c.b16 %v1915, %v1914
      %v1989 = vpack.c.b16 %v1917, %v1916
      %2062 = vmatpush.bf16.msra.mxu0 %v1925
      %2063 = vmatpush.bf16.msra.mxu0 %v1924
      %2064 = vmatpush.bf16.msra.mxu0 %v1923
      %2065 = vmatpush.bf16.msra.mxu0 %v1922
      %2066 = vmatpush.bf16.msra.mxu0 %v1921
      %2067 = vmatpush.bf16.msra.mxu0 %v1920
      %2068 = vmatpush.bf16.msra.mxu0 %v1919
      %2069 = vmatpush.bf16.msra.mxu0 %v1918
      %2070 = vmatmul.bf16.gmra.mxu0 %v416
      %v2071 = vpop.f32.mrf.mxu0
      %v2072 = vadd.f32 %v1628, %v2071
      %v2073 = vpop.f32.mrf.mxu0
      %v2074 = vadd.f32 %v1628, %v2073
      %2075 = vmatmul.bf16.gmra.mxu0 %v417
      %v2076 = vpop.f32.mrf.mxu0
      %v2077 = vadd.f32 %v1628, %v2076
      %v2078 = vpop.f32.mrf.mxu0
      %v2079 = vadd.f32 %v1628, %v2078
      %2080 = vmatmul.bf16.gmra.mxu0 %v418
      %v2081 = vpop.f32.mrf.mxu0
      %v2082 = vadd.f32 %v1628, %v2081
      %v2083 = vpop.f32.mrf.mxu0
      %v2084 = vadd.f32 %v1628, %v2083
      %2085 = vmatmul.bf16.gmra.mxu0 %v419
      %v2086 = vpop.f32.mrf.mxu0
      %v2087 = vadd.f32 %v1628, %v2086
      %v2088 = vpop.f32.mrf.mxu0
      %v2089 = vadd.f32 %v1628, %v2088
      %2090 = vmatmul.bf16.gmra.mxu0 %v420
      %v2091 = vpop.f32.mrf.mxu0
      %v2092 = vadd.f32 %v1628, %v2091
      %v2093 = vpop.f32.mrf.mxu0
      %v2094 = vadd.f32 %v1628, %v2093
      %2095 = vmatmul.bf16.gmra.mxu0 %v421
      %v2096 = vpop.f32.mrf.mxu0
      %v2097 = vadd.f32 %v1628, %v2096
      %v2098 = vpop.f32.mrf.mxu0
      %v2099 = vadd.f32 %v1628, %v2098
      %2100 = vmatmul.bf16.gmra.mxu0 %v422
      %v2101 = vpop.f32.mrf.mxu0
      %v2102 = vadd.f32 %v1628, %v2101
      %v2103 = vpop.f32.mrf.mxu0
      %v2104 = vadd.f32 %v1628, %v2103
      %2105 = vmatmul.bf16.gmra.mxu0 %v423
      %v2106 = vpop.f32.mrf.mxu0
      %v2107 = vadd.f32 %v1628, %v2106
      %v2108 = vpop.f32.mrf.mxu0
      %v2109 = vadd.f32 %v1628, %v2108
      %2110 = vmatmul.bf16.gmra.mxu0 %v424
      %v2111 = vpop.f32.mrf.mxu0
      %v2112 = vadd.f32 %v1628, %v2111
      %v2113 = vpop.f32.mrf.mxu0
      %v2114 = vadd.f32 %v1628, %v2113
      %2115 = vmatmul.bf16.gmra.mxu0 %v425
      %v2116 = vpop.f32.mrf.mxu0
      %v2117 = vadd.f32 %v1628, %v2116
      %v2118 = vpop.f32.mrf.mxu0
      %v2119 = vadd.f32 %v1628, %v2118
      %2120 = vmatmul.bf16.gmra.mxu0 %v426
      %v2121 = vpop.f32.mrf.mxu0
      %v2122 = vadd.f32 %v1628, %v2121
      %v2123 = vpop.f32.mrf.mxu0
      %v2124 = vadd.f32 %v1628, %v2123
      %2125 = vmatmul.bf16.gmra.mxu0 %v427
      %v2126 = vpop.f32.mrf.mxu0
      %v2127 = vadd.f32 %v1628, %v2126
      %v2128 = vpop.f32.mrf.mxu0
      %v2129 = vadd.f32 %v1628, %v2128
      %2130 = vmatmul.bf16.gmra.mxu0 %v428
      %v2131 = vpop.f32.mrf.mxu0
      %v2132 = vadd.f32 %v1628, %v2131
      %v2133 = vpop.f32.mrf.mxu0
      %v2134 = vadd.f32 %v1628, %v2133
      %2135 = vmatmul.bf16.gmra.mxu0 %v429
      %v2136 = vpop.f32.mrf.mxu0
      %v2137 = vadd.f32 %v1628, %v2136
      %v2138 = vpop.f32.mrf.mxu0
      %v2139 = vadd.f32 %v1628, %v2138
      %2140 = vmatmul.bf16.gmra.mxu0 %v430
      %v2141 = vpop.f32.mrf.mxu0
      %v2142 = vadd.f32 %v1628, %v2141
      %v2143 = vpop.f32.mrf.mxu0
      %v2144 = vadd.f32 %v1628, %v2143
      %2145 = vmatmul.bf16.gmra.mxu0 %v431
      %v2146 = vpop.f32.mrf.mxu0
      %v2147 = vadd.f32 %v1628, %v2146
      %v2148 = vpop.f32.mrf.mxu0
      %v2149 = vadd.f32 %v1628, %v2148
      %2150 = vdwg.mxu0
      %2151 = vmatpush.bf16.msra.mxu0 %v1933
      %2152 = vmatpush.bf16.msra.mxu0 %v1932
      %2153 = vmatpush.bf16.msra.mxu0 %v1931
      %2154 = vmatpush.bf16.msra.mxu0 %v1930
      %2155 = vmatpush.bf16.msra.mxu0 %v1929
      %2156 = vmatpush.bf16.msra.mxu0 %v1928
      %2157 = vmatpush.bf16.msra.mxu0 %v1927
      %2158 = vmatpush.bf16.msra.mxu0 %v1926
      %2159 = vmatmul.bf16.gmra.mxu0 %v484
      %v2160 = vpop.f32.mrf.mxu0
      %v2161 = vadd.f32 %v2072, %v2160
      %v2162 = vpop.f32.mrf.mxu0
      %v2163 = vadd.f32 %v2074, %v2162
      %2164 = vmatmul.bf16.gmra.mxu0 %v492
      %v2165 = vpop.f32.mrf.mxu0
      %v2166 = vadd.f32 %v2077, %v2165
      %v2167 = vpop.f32.mrf.mxu0
      %v2168 = vadd.f32 %v2079, %v2167
      %2169 = vmatmul.bf16.gmra.mxu0 %v504
      %v2170 = vpop.f32.mrf.mxu0
      %v2171 = vadd.f32 %v2082, %v2170
      %v2172 = vpop.f32.mrf.mxu0
      %v2173 = vadd.f32 %v2084, %v2172
      %2174 = vmatmul.bf16.gmra.mxu0 %v512
      %v2175 = vpop.f32.mrf.mxu0
      %v2176 = vadd.f32 %v2087, %v2175
      %v2177 = vpop.f32.mrf.mxu0
      %v2178 = vadd.f32 %v2089, %v2177
      %2179 = vmatmul.bf16.gmra.mxu0 %v524
      %v2180 = vpop.f32.mrf.mxu0
      %v2181 = vadd.f32 %v2092, %v2180
      %v2182 = vpop.f32.mrf.mxu0
      %v2183 = vadd.f32 %v2094, %v2182
      %2184 = vmatmul.bf16.gmra.mxu0 %v532
      %v2185 = vpop.f32.mrf.mxu0
      %v2186 = vadd.f32 %v2097, %v2185
      %v2187 = vpop.f32.mrf.mxu0
      %v2188 = vadd.f32 %v2099, %v2187
      %2189 = vmatmul.bf16.gmra.mxu0 %v544
      %v2190 = vpop.f32.mrf.mxu0
      %v2191 = vadd.f32 %v2102, %v2190
      %v2192 = vpop.f32.mrf.mxu0
      %v2193 = vadd.f32 %v2104, %v2192
      %2194 = vmatmul.bf16.gmra.mxu0 %v552
      %v2195 = vpop.f32.mrf.mxu0
      %v2196 = vadd.f32 %v2107, %v2195
      %v2197 = vpop.f32.mrf.mxu0
      %v2198 = vadd.f32 %v2109, %v2197
      %2199 = vmatmul.bf16.gmra.mxu0 %v564
      %v2200 = vpop.f32.mrf.mxu0
      %v2201 = vadd.f32 %v2112, %v2200
      %v2202 = vpop.f32.mrf.mxu0
      %v2203 = vadd.f32 %v2114, %v2202
      %2204 = vmatmul.bf16.gmra.mxu0 %v572
      %v2205 = vpop.f32.mrf.mxu0
      %v2206 = vadd.f32 %v2117, %v2205
      %v2207 = vpop.f32.mrf.mxu0
      %v2208 = vadd.f32 %v2119, %v2207
      %2209 = vmatmul.bf16.gmra.mxu0 %v584
      %v2210 = vpop.f32.mrf.mxu0
      %v2211 = vadd.f32 %v2122, %v2210
      %v2212 = vpop.f32.mrf.mxu0
      %v2213 = vadd.f32 %v2124, %v2212
      %2214 = vmatmul.bf16.gmra.mxu0 %v592
      %v2215 = vpop.f32.mrf.mxu0
      %v2216 = vadd.f32 %v2127, %v2215
      %v2217 = vpop.f32.mrf.mxu0
      %v2218 = vadd.f32 %v2129, %v2217
      %2219 = vmatmul.bf16.gmra.mxu0 %v604
      %v2220 = vpop.f32.mrf.mxu0
      %v2221 = vadd.f32 %v2132, %v2220
      %v2222 = vpop.f32.mrf.mxu0
      %v2223 = vadd.f32 %v2134, %v2222
      %2224 = vmatmul.bf16.gmra.mxu0 %v612
      %v2225 = vpop.f32.mrf.mxu0
      %v2226 = vadd.f32 %v2137, %v2225
      %v2227 = vpop.f32.mrf.mxu0
      %v2228 = vadd.f32 %v2139, %v2227
      %2229 = vmatmul.bf16.gmra.mxu0 %v624
      %v2230 = vpop.f32.mrf.mxu0
      %v2231 = vadd.f32 %v2142, %v2230
      %v2232 = vpop.f32.mrf.mxu0
      %v2233 = vadd.f32 %v2144, %v2232
      %2234 = vmatmul.bf16.gmra.mxu0 %v632
      %v2235 = vpop.f32.mrf.mxu0
      %v2236 = vadd.f32 %v2147, %v2235
      %v2237 = vpop.f32.mrf.mxu0
      %v2238 = vadd.f32 %v2149, %v2237
      %2239 = vdwg.mxu0
      %2240 = vmatpush.bf16.msra.mxu0 %v1941
      %2241 = vmatpush.bf16.msra.mxu0 %v1940
      %2242 = vmatpush.bf16.msra.mxu0 %v1939
      %2243 = vmatpush.bf16.msra.mxu0 %v1938
      %2244 = vmatpush.bf16.msra.mxu0 %v1937
      %2245 = vmatpush.bf16.msra.mxu0 %v1936
      %2246 = vmatpush.bf16.msra.mxu0 %v1935
      %2247 = vmatpush.bf16.msra.mxu0 %v1934
      %2248 = vmatmul.bf16.gmra.mxu0 %v676
      %v2249 = vpop.f32.mrf.mxu0
      %v2250 = vadd.f32 %v2161, %v2249
      %v2251 = vpop.f32.mrf.mxu0
      %v2252 = vadd.f32 %v2163, %v2251
      %2253 = vmatmul.bf16.gmra.mxu0 %v678
      %v2254 = vpop.f32.mrf.mxu0
      %v2255 = vadd.f32 %v2166, %v2254
      %v2256 = vpop.f32.mrf.mxu0
      %v2257 = vadd.f32 %v2168, %v2256
      %2258 = vmatmul.bf16.gmra.mxu0 %v681
      %v2259 = vpop.f32.mrf.mxu0
      %v2260 = vadd.f32 %v2171, %v2259
      %v2261 = vpop.f32.mrf.mxu0
      %v2262 = vadd.f32 %v2173, %v2261
      %2263 = vmatmul.bf16.gmra.mxu0 %v683
      %v2264 = vpop.f32.mrf.mxu0
      %v2265 = vadd.f32 %v2176, %v2264
      %v2266 = vpop.f32.mrf.mxu0
      %v2267 = vadd.f32 %v2178, %v2266
      %2268 = vmatmul.bf16.gmra.mxu0 %v686
      %v2269 = vpop.f32.mrf.mxu0
      %v2270 = vadd.f32 %v2181, %v2269
      %v2271 = vpop.f32.mrf.mxu0
      %v2272 = vadd.f32 %v2183, %v2271
      %2273 = vmatmul.bf16.gmra.mxu0 %v688
      %v2274 = vpop.f32.mrf.mxu0
      %v2275 = vadd.f32 %v2186, %v2274
      %v2276 = vpop.f32.mrf.mxu0
      %v2277 = vadd.f32 %v2188, %v2276
      %2278 = vmatmul.bf16.gmra.mxu0 %v691
      %v2279 = vpop.f32.mrf.mxu0
      %v2280 = vadd.f32 %v2191, %v2279
      %v2281 = vpop.f32.mrf.mxu0
      %v2282 = vadd.f32 %v2193, %v2281
      %2283 = vmatmul.bf16.gmra.mxu0 %v693
      %v2284 = vpop.f32.mrf.mxu0
      %v2285 = vadd.f32 %v2196, %v2284
      %v2286 = vpop.f32.mrf.mxu0
      %v2287 = vadd.f32 %v2198, %v2286
      %2288 = vmatmul.bf16.gmra.mxu0 %v696
      %v2289 = vpop.f32.mrf.mxu0
      %v2290 = vadd.f32 %v2201, %v2289
      %v2291 = vpop.f32.mrf.mxu0
      %v2292 = vadd.f32 %v2203, %v2291
      %2293 = vmatmul.bf16.gmra.mxu0 %v698
      %v2294 = vpop.f32.mrf.mxu0
      %v2295 = vadd.f32 %v2206, %v2294
      %v2296 = vpop.f32.mrf.mxu0
      %v2297 = vadd.f32 %v2208, %v2296
      %2298 = vmatmul.bf16.gmra.mxu0 %v701
      %v2299 = vpop.f32.mrf.mxu0
      %v2300 = vadd.f32 %v2211, %v2299
      %v2301 = vpop.f32.mrf.mxu0
      %v2302 = vadd.f32 %v2213, %v2301
      %2303 = vmatmul.bf16.gmra.mxu0 %v703
      %v2304 = vpop.f32.mrf.mxu0
      %v2305 = vadd.f32 %v2216, %v2304
      %v2306 = vpop.f32.mrf.mxu0
      %v2307 = vadd.f32 %v2218, %v2306
      %2308 = vmatmul.bf16.gmra.mxu0 %v706
      %v2309 = vpop.f32.mrf.mxu0
      %v2310 = vadd.f32 %v2221, %v2309
      %v2311 = vpop.f32.mrf.mxu0
      %v2312 = vadd.f32 %v2223, %v2311
      %2313 = vmatmul.bf16.gmra.mxu0 %v708
      %v2314 = vpop.f32.mrf.mxu0
      %v2315 = vadd.f32 %v2226, %v2314
      %v2316 = vpop.f32.mrf.mxu0
      %v2317 = vadd.f32 %v2228, %v2316
      %2318 = vmatmul.bf16.gmra.mxu0 %v711
      %v2319 = vpop.f32.mrf.mxu0
      %v2320 = vadd.f32 %v2231, %v2319
      %v2321 = vpop.f32.mrf.mxu0
      %v2322 = vadd.f32 %v2233, %v2321
      %2323 = vmatmul.bf16.gmra.mxu0 %v713
      %v2324 = vpop.f32.mrf.mxu0
      %v2325 = vadd.f32 %v2236, %v2324
      %v2326 = vpop.f32.mrf.mxu0
      %v2327 = vadd.f32 %v2238, %v2326
      %2328 = vdwg.mxu0
      %2329 = vmatpush.bf16.msra.mxu0 %v1949
      %2330 = vmatpush.bf16.msra.mxu0 %v1948
      %2331 = vmatpush.bf16.msra.mxu0 %v1947
      %2332 = vmatpush.bf16.msra.mxu0 %v1946
      %2333 = vmatpush.bf16.msra.mxu0 %v1945
      %2334 = vmatpush.bf16.msra.mxu0 %v1944
      %2335 = vmatpush.bf16.msra.mxu0 %v1943
      %2336 = vmatpush.bf16.msra.mxu0 %v1942
      %2337 = vmatmul.bf16.gmra.mxu0 %v794
      %v2338 = vpop.f32.mrf.mxu0
      %v2339 = vadd.f32 %v2250, %v2338
      %v2340 = vpop.f32.mrf.mxu0
      %v2341 = vadd.f32 %v2252, %v2340
      %2342 = vmatmul.bf16.gmra.mxu0 %v795
      %v2343 = vpop.f32.mrf.mxu0
      %v2344 = vadd.f32 %v2255, %v2343
      %v2345 = vpop.f32.mrf.mxu0
      %v2346 = vadd.f32 %v2257, %v2345
      %2347 = vmatmul.bf16.gmra.mxu0 %v796
      %v2348 = vpop.f32.mrf.mxu0
      %v2349 = vadd.f32 %v2260, %v2348
      %v2350 = vpop.f32.mrf.mxu0
      %v2351 = vadd.f32 %v2262, %v2350
      %2352 = vmatmul.bf16.gmra.mxu0 %v797
      %v2353 = vpop.f32.mrf.mxu0
      %v2354 = vadd.f32 %v2265, %v2353
      %v2355 = vpop.f32.mrf.mxu0
      %v2356 = vadd.f32 %v2267, %v2355
      %2357 = vmatmul.bf16.gmra.mxu0 %v798
      %v2358 = vpop.f32.mrf.mxu0
      %v2359 = vadd.f32 %v2270, %v2358
      %v2360 = vpop.f32.mrf.mxu0
      %v2361 = vadd.f32 %v2272, %v2360
      %2362 = vmatmul.bf16.gmra.mxu0 %v799
      %v2363 = vpop.f32.mrf.mxu0
      %v2364 = vadd.f32 %v2275, %v2363
      %v2365 = vpop.f32.mrf.mxu0
      %v2366 = vadd.f32 %v2277, %v2365
      %2367 = vmatmul.bf16.gmra.mxu0 %v800
      %v2368 = vpop.f32.mrf.mxu0
      %v2369 = vadd.f32 %v2280, %v2368
      %v2370 = vpop.f32.mrf.mxu0
      %v2371 = vadd.f32 %v2282, %v2370
      %2372 = vmatmul.bf16.gmra.mxu0 %v801
      %v2373 = vpop.f32.mrf.mxu0
      %v2374 = vadd.f32 %v2285, %v2373
      %v2375 = vpop.f32.mrf.mxu0
      %v2376 = vadd.f32 %v2287, %v2375
      %2377 = vmatmul.bf16.gmra.mxu0 %v802
      %v2378 = vpop.f32.mrf.mxu0
      %v2379 = vadd.f32 %v2290, %v2378
      %v2380 = vpop.f32.mrf.mxu0
      %v2381 = vadd.f32 %v2292, %v2380
      %2382 = vmatmul.bf16.gmra.mxu0 %v803
      %v2383 = vpop.f32.mrf.mxu0
      %v2384 = vadd.f32 %v2295, %v2383
      %v2385 = vpop.f32.mrf.mxu0
      %v2386 = vadd.f32 %v2297, %v2385
      %2387 = vmatmul.bf16.gmra.mxu0 %v804
      %v2388 = vpop.f32.mrf.mxu0
      %v2389 = vadd.f32 %v2300, %v2388
      %v2390 = vpop.f32.mrf.mxu0
      %v2391 = vadd.f32 %v2302, %v2390
      %2392 = vmatmul.bf16.gmra.mxu0 %v805
      %v2393 = vpop.f32.mrf.mxu0
      %v2394 = vadd.f32 %v2305, %v2393
      %v2395 = vpop.f32.mrf.mxu0
      %v2396 = vadd.f32 %v2307, %v2395
      %2397 = vmatmul.bf16.gmra.mxu0 %v806
      %v2398 = vpop.f32.mrf.mxu0
      %v2399 = vadd.f32 %v2310, %v2398
      %v2400 = vpop.f32.mrf.mxu0
      %v2401 = vadd.f32 %v2312, %v2400
      %2402 = vmatmul.bf16.gmra.mxu0 %v807
      %v2403 = vpop.f32.mrf.mxu0
      %v2404 = vadd.f32 %v2315, %v2403
      %v2405 = vpop.f32.mrf.mxu0
      %v2406 = vadd.f32 %v2317, %v2405
      %2407 = vmatmul.bf16.gmra.mxu0 %v808
      %v2408 = vpop.f32.mrf.mxu0
      %v2409 = vadd.f32 %v2320, %v2408
      %v2410 = vpop.f32.mrf.mxu0
      %v2411 = vadd.f32 %v2322, %v2410
      %2412 = vmatmul.bf16.gmra.mxu0 %v809
      %v2413 = vpop.f32.mrf.mxu0
      %v2414 = vadd.f32 %v2325, %v2413
      %v2415 = vpop.f32.mrf.mxu0
      %v2416 = vadd.f32 %v2327, %v2415
      %2417 = vdwg.mxu0
      %2418 = vmatpush.bf16.msra.mxu0 %v1957
      %2419 = vmatpush.bf16.msra.mxu0 %v1956
      %2420 = vmatpush.bf16.msra.mxu0 %v1955
      %2421 = vmatpush.bf16.msra.mxu0 %v1954
      %2422 = vmatpush.bf16.msra.mxu0 %v1953
      %2423 = vmatpush.bf16.msra.mxu0 %v1952
      %2424 = vmatpush.bf16.msra.mxu0 %v1951
      %2425 = vmatpush.bf16.msra.mxu0 %v1950
      %2426 = vmatmul.bf16.gmra.mxu0 %v861
      %v2427 = vpop.f32.mrf.mxu0
      %v2428 = vadd.f32 %v2339, %v2427
      %v2429 = vpop.f32.mrf.mxu0
      %v2430 = vadd.f32 %v2341, %v2429
      %2431 = vmatmul.bf16.gmra.mxu0 %v869
      %v2432 = vpop.f32.mrf.mxu0
      %v2433 = vadd.f32 %v2344, %v2432
      %v2434 = vpop.f32.mrf.mxu0
      %v2435 = vadd.f32 %v2346, %v2434
      %2436 = vmatmul.bf16.gmra.mxu0 %v881
      %v2437 = vpop.f32.mrf.mxu0
      %v2438 = vadd.f32 %v2349, %v2437
      %v2439 = vpop.f32.mrf.mxu0
      %v2440 = vadd.f32 %v2351, %v2439
      %2441 = vmatmul.bf16.gmra.mxu0 %v889
      %v2442 = vpop.f32.mrf.mxu0
      %v2443 = vadd.f32 %v2354, %v2442
      %v2444 = vpop.f32.mrf.mxu0
      %v2445 = vadd.f32 %v2356, %v2444
      %2446 = vmatmul.bf16.gmra.mxu0 %v901
      %v2447 = vpop.f32.mrf.mxu0
      %v2448 = vadd.f32 %v2359, %v2447
      %v2449 = vpop.f32.mrf.mxu0
      %v2450 = vadd.f32 %v2361, %v2449
      %2451 = vmatmul.bf16.gmra.mxu0 %v909
      %v2452 = vpop.f32.mrf.mxu0
      %v2453 = vadd.f32 %v2364, %v2452
      %v2454 = vpop.f32.mrf.mxu0
      %v2455 = vadd.f32 %v2366, %v2454
      %2456 = vmatmul.bf16.gmra.mxu0 %v921
      %v2457 = vpop.f32.mrf.mxu0
      %v2458 = vadd.f32 %v2369, %v2457
      %v2459 = vpop.f32.mrf.mxu0
      %v2460 = vadd.f32 %v2371, %v2459
      %2461 = vmatmul.bf16.gmra.mxu0 %v929
      %v2462 = vpop.f32.mrf.mxu0
      %v2463 = vadd.f32 %v2374, %v2462
      %v2464 = vpop.f32.mrf.mxu0
      %v2465 = vadd.f32 %v2376, %v2464
      %2466 = vmatmul.bf16.gmra.mxu0 %v941
      %v2467 = vpop.f32.mrf.mxu0
      %v2468 = vadd.f32 %v2379, %v2467
      %v2469 = vpop.f32.mrf.mxu0
      %v2470 = vadd.f32 %v2381, %v2469
      %2471 = vmatmul.bf16.gmra.mxu0 %v949
      %v2472 = vpop.f32.mrf.mxu0
      %v2473 = vadd.f32 %v2384, %v2472
      %v2474 = vpop.f32.mrf.mxu0
      %v2475 = vadd.f32 %v2386, %v2474
      %2476 = vmatmul.bf16.gmra.mxu0 %v961
      %v2477 = vpop.f32.mrf.mxu0
      %v2478 = vadd.f32 %v2389, %v2477
      %v2479 = vpop.f32.mrf.mxu0
      %v2480 = vadd.f32 %v2391, %v2479
      %2481 = vmatmul.bf16.gmra.mxu0 %v969
      %v2482 = vpop.f32.mrf.mxu0
      %v2483 = vadd.f32 %v2394, %v2482
      %v2484 = vpop.f32.mrf.mxu0
      %v2485 = vadd.f32 %v2396, %v2484
      %2486 = vmatmul.bf16.gmra.mxu0 %v981
      %v2487 = vpop.f32.mrf.mxu0
      %v2488 = vadd.f32 %v2399, %v2487
      %v2489 = vpop.f32.mrf.mxu0
      %v2490 = vadd.f32 %v2401, %v2489
      %2491 = vmatmul.bf16.gmra.mxu0 %v989
      %v2492 = vpop.f32.mrf.mxu0
      %v2493 = vadd.f32 %v2404, %v2492
      %v2494 = vpop.f32.mrf.mxu0
      %v2495 = vadd.f32 %v2406, %v2494
      %2496 = vmatmul.bf16.gmra.mxu0 %v1001
      %v2497 = vpop.f32.mrf.mxu0
      %v2498 = vadd.f32 %v2409, %v2497
      %v2499 = vpop.f32.mrf.mxu0
      %v2500 = vadd.f32 %v2411, %v2499
      %2501 = vmatmul.bf16.gmra.mxu0 %v1009
      %v2502 = vpop.f32.mrf.mxu0
      %v2503 = vadd.f32 %v2414, %v2502
      %v2504 = vpop.f32.mrf.mxu0
      %v2505 = vadd.f32 %v2416, %v2504
      %2506 = vdwg.mxu0
      %2507 = vmatpush.bf16.msra.mxu0 %v1965
      %2508 = vmatpush.bf16.msra.mxu0 %v1964
      %2509 = vmatpush.bf16.msra.mxu0 %v1963
      %2510 = vmatpush.bf16.msra.mxu0 %v1962
      %2511 = vmatpush.bf16.msra.mxu0 %v1961
      %2512 = vmatpush.bf16.msra.mxu0 %v1960
      %2513 = vmatpush.bf16.msra.mxu0 %v1959
      %2514 = vmatpush.bf16.msra.mxu0 %v1958
      %2515 = vmatmul.bf16.gmra.mxu0 %v1052
      %v2516 = vpop.f32.mrf.mxu0
      %v2517 = vadd.f32 %v2428, %v2516
      %v2518 = vpop.f32.mrf.mxu0
      %v2519 = vadd.f32 %v2430, %v2518
      %2520 = vmatmul.bf16.gmra.mxu0 %v1054
      %v2521 = vpop.f32.mrf.mxu0
      %v2522 = vadd.f32 %v2433, %v2521
      %v2523 = vpop.f32.mrf.mxu0
      %v2524 = vadd.f32 %v2435, %v2523
      %2525 = vmatmul.bf16.gmra.mxu0 %v1057
      %v2526 = vpop.f32.mrf.mxu0
      %v2527 = vadd.f32 %v2438, %v2526
      %v2528 = vpop.f32.mrf.mxu0
      %v2529 = vadd.f32 %v2440, %v2528
      %2530 = vmatmul.bf16.gmra.mxu0 %v1059
      %v2531 = vpop.f32.mrf.mxu0
      %v2532 = vadd.f32 %v2443, %v2531
      %v2533 = vpop.f32.mrf.mxu0
      %v2534 = vadd.f32 %v2445, %v2533
      %2535 = vmatmul.bf16.gmra.mxu0 %v1062
      %v2536 = vpop.f32.mrf.mxu0
      %v2537 = vadd.f32 %v2448, %v2536
      %v2538 = vpop.f32.mrf.mxu0
      %v2539 = vadd.f32 %v2450, %v2538
      %2540 = vmatmul.bf16.gmra.mxu0 %v1064
      %v2541 = vpop.f32.mrf.mxu0
      %v2542 = vadd.f32 %v2453, %v2541
      %v2543 = vpop.f32.mrf.mxu0
      %v2544 = vadd.f32 %v2455, %v2543
      %2545 = vmatmul.bf16.gmra.mxu0 %v1067
      %v2546 = vpop.f32.mrf.mxu0
      %v2547 = vadd.f32 %v2458, %v2546
      %v2548 = vpop.f32.mrf.mxu0
      %v2549 = vadd.f32 %v2460, %v2548
      %2550 = vmatmul.bf16.gmra.mxu0 %v1069
      %v2551 = vpop.f32.mrf.mxu0
      %v2552 = vadd.f32 %v2463, %v2551
      %v2553 = vpop.f32.mrf.mxu0
      %v2554 = vadd.f32 %v2465, %v2553
      %2555 = vmatmul.bf16.gmra.mxu0 %v1072
      %v2556 = vpop.f32.mrf.mxu0
      %v2557 = vadd.f32 %v2468, %v2556
      %v2558 = vpop.f32.mrf.mxu0
      %v2559 = vadd.f32 %v2470, %v2558
      %2560 = vmatmul.bf16.gmra.mxu0 %v1074
      %v2561 = vpop.f32.mrf.mxu0
      %v2562 = vadd.f32 %v2473, %v2561
      %v2563 = vpop.f32.mrf.mxu0
      %v2564 = vadd.f32 %v2475, %v2563
      %2565 = vmatmul.bf16.gmra.mxu0 %v1077
      %v2566 = vpop.f32.mrf.mxu0
      %v2567 = vadd.f32 %v2478, %v2566
      %v2568 = vpop.f32.mrf.mxu0
      %v2569 = vadd.f32 %v2480, %v2568
      %2570 = vmatmul.bf16.gmra.mxu0 %v1079
      %v2571 = vpop.f32.mrf.mxu0
      %v2572 = vadd.f32 %v2483, %v2571
      %v2573 = vpop.f32.mrf.mxu0
      %v2574 = vadd.f32 %v2485, %v2573
      %2575 = vmatmul.bf16.gmra.mxu0 %v1082
      %v2576 = vpop.f32.mrf.mxu0
      %v2577 = vadd.f32 %v2488, %v2576
      %v2578 = vpop.f32.mrf.mxu0
      %v2579 = vadd.f32 %v2490, %v2578
      %2580 = vmatmul.bf16.gmra.mxu0 %v1084
      %v2581 = vpop.f32.mrf.mxu0
      %v2582 = vadd.f32 %v2493, %v2581
      %v2583 = vpop.f32.mrf.mxu0
      %v2584 = vadd.f32 %v2495, %v2583
      %2585 = vmatmul.bf16.gmra.mxu0 %v1087
      %v2586 = vpop.f32.mrf.mxu0
      %v2587 = vadd.f32 %v2498, %v2586
      %v2588 = vpop.f32.mrf.mxu0
      %v2589 = vadd.f32 %v2500, %v2588
      %2590 = vmatmul.bf16.gmra.mxu0 %v1089
      %v2591 = vpop.f32.mrf.mxu0
      %v2592 = vadd.f32 %v2503, %v2591
      %v2593 = vpop.f32.mrf.mxu0
      %v2594 = vadd.f32 %v2505, %v2593
      %2595 = vdwg.mxu0
      %2596 = vmatpush.bf16.msra.mxu0 %v1973
      %2597 = vmatpush.bf16.msra.mxu0 %v1972
      %2598 = vmatpush.bf16.msra.mxu0 %v1971
      %2599 = vmatpush.bf16.msra.mxu0 %v1970
      %2600 = vmatpush.bf16.msra.mxu0 %v1969
      %2601 = vmatpush.bf16.msra.mxu0 %v1968
      %2602 = vmatpush.bf16.msra.mxu0 %v1967
      %2603 = vmatpush.bf16.msra.mxu0 %v1966
      %2604 = vmatmul.bf16.gmra.mxu0 %v1170
      %v2605 = vpop.f32.mrf.mxu0
      %v2606 = vadd.f32 %v2517, %v2605
      %v2607 = vpop.f32.mrf.mxu0
      %v2608 = vadd.f32 %v2519, %v2607
      %2609 = vmatmul.bf16.gmra.mxu0 %v1171
      %v2610 = vpop.f32.mrf.mxu0
      %v2611 = vadd.f32 %v2522, %v2610
      %v2612 = vpop.f32.mrf.mxu0
      %v2613 = vadd.f32 %v2524, %v2612
      %2614 = vmatmul.bf16.gmra.mxu0 %v1172
      %v2615 = vpop.f32.mrf.mxu0
      %v2616 = vadd.f32 %v2527, %v2615
      %v2617 = vpop.f32.mrf.mxu0
      %v2618 = vadd.f32 %v2529, %v2617
      %2619 = vmatmul.bf16.gmra.mxu0 %v1173
      %v2620 = vpop.f32.mrf.mxu0
      %v2621 = vadd.f32 %v2532, %v2620
      %v2622 = vpop.f32.mrf.mxu0
      %v2623 = vadd.f32 %v2534, %v2622
      %2624 = vmatmul.bf16.gmra.mxu0 %v1174
      %v2625 = vpop.f32.mrf.mxu0
      %v2626 = vadd.f32 %v2537, %v2625
      %v2627 = vpop.f32.mrf.mxu0
      %v2628 = vadd.f32 %v2539, %v2627
      %2629 = vmatmul.bf16.gmra.mxu0 %v1175
      %v2630 = vpop.f32.mrf.mxu0
      %v2631 = vadd.f32 %v2542, %v2630
      %v2632 = vpop.f32.mrf.mxu0
      %v2633 = vadd.f32 %v2544, %v2632
      %2634 = vmatmul.bf16.gmra.mxu0 %v1176
      %v2635 = vpop.f32.mrf.mxu0
      %v2636 = vadd.f32 %v2547, %v2635
      %v2637 = vpop.f32.mrf.mxu0
      %v2638 = vadd.f32 %v2549, %v2637
      %2639 = vmatmul.bf16.gmra.mxu0 %v1177
      %v2640 = vpop.f32.mrf.mxu0
      %v2641 = vadd.f32 %v2552, %v2640
      %v2642 = vpop.f32.mrf.mxu0
      %v2643 = vadd.f32 %v2554, %v2642
      %2644 = vmatmul.bf16.gmra.mxu0 %v1178
      %v2645 = vpop.f32.mrf.mxu0
      %v2646 = vadd.f32 %v2557, %v2645
      %v2647 = vpop.f32.mrf.mxu0
      %v2648 = vadd.f32 %v2559, %v2647
      %2649 = vmatmul.bf16.gmra.mxu0 %v1179
      %v2650 = vpop.f32.mrf.mxu0
      %v2651 = vadd.f32 %v2562, %v2650
      %v2652 = vpop.f32.mrf.mxu0
      %v2653 = vadd.f32 %v2564, %v2652
      %2654 = vmatmul.bf16.gmra.mxu0 %v1180
      %v2655 = vpop.f32.mrf.mxu0
      %v2656 = vadd.f32 %v2567, %v2655
      %v2657 = vpop.f32.mrf.mxu0
      %v2658 = vadd.f32 %v2569, %v2657
      %2659 = vmatmul.bf16.gmra.mxu0 %v1181
      %v2660 = vpop.f32.mrf.mxu0
      %v2661 = vadd.f32 %v2572, %v2660
      %v2662 = vpop.f32.mrf.mxu0
      %v2663 = vadd.f32 %v2574, %v2662
      %2664 = vmatmul.bf16.gmra.mxu0 %v1182
      %v2665 = vpop.f32.mrf.mxu0
      %v2666 = vadd.f32 %v2577, %v2665
      %v2667 = vpop.f32.mrf.mxu0
      %v2668 = vadd.f32 %v2579, %v2667
      %2669 = vmatmul.bf16.gmra.mxu0 %v1183
      %v2670 = vpop.f32.mrf.mxu0
      %v2671 = vadd.f32 %v2582, %v2670
      %v2672 = vpop.f32.mrf.mxu0
      %v2673 = vadd.f32 %v2584, %v2672
      %2674 = vmatmul.bf16.gmra.mxu0 %v1184
      %v2675 = vpop.f32.mrf.mxu0
      %v2676 = vadd.f32 %v2587, %v2675
      %v2677 = vpop.f32.mrf.mxu0
      %v2678 = vadd.f32 %v2589, %v2677
      %2679 = vmatmul.bf16.gmra.mxu0 %v1185
      %v2680 = vpop.f32.mrf.mxu0
      %v2681 = vadd.f32 %v2592, %v2680
      %v2682 = vpop.f32.mrf.mxu0
      %v2683 = vadd.f32 %v2594, %v2682
      %2684 = vdwg.mxu0
      %2685 = vmatpush.bf16.msra.mxu0 %v1981
      %2686 = vmatpush.bf16.msra.mxu0 %v1980
      %2687 = vmatpush.bf16.msra.mxu0 %v1979
      %2688 = vmatpush.bf16.msra.mxu0 %v1978
      %2689 = vmatpush.bf16.msra.mxu0 %v1977
      %2690 = vmatpush.bf16.msra.mxu0 %v1976
      %2691 = vmatpush.bf16.msra.mxu0 %v1975
      %2692 = vmatpush.bf16.msra.mxu0 %v1974
      %2693 = vmatmul.bf16.gmra.mxu0 %v1237
      %v2694 = vpop.f32.mrf.mxu0
      %v2695 = vadd.f32 %v2606, %v2694
      %v2696 = vpop.f32.mrf.mxu0
      %v2697 = vadd.f32 %v2608, %v2696
      %2698 = vmatmul.bf16.gmra.mxu0 %v1245
      %v2699 = vpop.f32.mrf.mxu0
      %v2700 = vadd.f32 %v2611, %v2699
      %v2701 = vpop.f32.mrf.mxu0
      %v2702 = vadd.f32 %v2613, %v2701
      %2703 = vmatmul.bf16.gmra.mxu0 %v1257
      %v2704 = vpop.f32.mrf.mxu0
      %v2705 = vadd.f32 %v2616, %v2704
      %v2706 = vpop.f32.mrf.mxu0
      %v2707 = vadd.f32 %v2618, %v2706
      %2708 = vmatmul.bf16.gmra.mxu0 %v1265
      %v2709 = vpop.f32.mrf.mxu0
      %v2710 = vadd.f32 %v2621, %v2709
      %v2711 = vpop.f32.mrf.mxu0
      %v2712 = vadd.f32 %v2623, %v2711
      %2713 = vmatmul.bf16.gmra.mxu0 %v1277
      %v2714 = vpop.f32.mrf.mxu0
      %v2715 = vadd.f32 %v2626, %v2714
      %v2716 = vpop.f32.mrf.mxu0
      %v2717 = vadd.f32 %v2628, %v2716
      %2718 = vmatmul.bf16.gmra.mxu0 %v1285
      %v2719 = vpop.f32.mrf.mxu0
      %v2720 = vadd.f32 %v2631, %v2719
      %v2721 = vpop.f32.mrf.mxu0
      %v2722 = vadd.f32 %v2633, %v2721
      %2723 = vmatmul.bf16.gmra.mxu0 %v1297
      %v2724 = vpop.f32.mrf.mxu0
      %v2725 = vadd.f32 %v2636, %v2724
      %v2726 = vpop.f32.mrf.mxu0
      %v2727 = vadd.f32 %v2638, %v2726
      %2728 = vmatmul.bf16.gmra.mxu0 %v1305
      %v2729 = vpop.f32.mrf.mxu0
      %v2730 = vadd.f32 %v2641, %v2729
      %v2731 = vpop.f32.mrf.mxu0
      %v2732 = vadd.f32 %v2643, %v2731
      %2733 = vmatmul.bf16.gmra.mxu0 %v1317
      %v2734 = vpop.f32.mrf.mxu0
      %v2735 = vadd.f32 %v2646, %v2734
      %v2736 = vpop.f32.mrf.mxu0
      %v2737 = vadd.f32 %v2648, %v2736
      %2738 = vmatmul.bf16.gmra.mxu0 %v1325
      %v2739 = vpop.f32.mrf.mxu0
      %v2740 = vadd.f32 %v2651, %v2739
      %v2741 = vpop.f32.mrf.mxu0
      %v2742 = vadd.f32 %v2653, %v2741
      %2743 = vmatmul.bf16.gmra.mxu0 %v1337
      %v2744 = vpop.f32.mrf.mxu0
      %v2745 = vadd.f32 %v2656, %v2744
      %v2746 = vpop.f32.mrf.mxu0
      %v2747 = vadd.f32 %v2658, %v2746
      %2748 = vmatmul.bf16.gmra.mxu0 %v1345
      %v2749 = vpop.f32.mrf.mxu0
      %v2750 = vadd.f32 %v2661, %v2749
      %v2751 = vpop.f32.mrf.mxu0
      %v2752 = vadd.f32 %v2663, %v2751
      %2753 = vmatmul.bf16.gmra.mxu0 %v1357
      %v2754 = vpop.f32.mrf.mxu0
      %v2755 = vadd.f32 %v2666, %v2754
      %v2756 = vpop.f32.mrf.mxu0
      %v2757 = vadd.f32 %v2668, %v2756
      %2758 = vmatmul.bf16.gmra.mxu0 %v1365
      %v2759 = vpop.f32.mrf.mxu0
      %v2760 = vadd.f32 %v2671, %v2759
      %v2761 = vpop.f32.mrf.mxu0
      %v2762 = vadd.f32 %v2673, %v2761
      %2763 = vmatmul.bf16.gmra.mxu0 %v1377
      %v2764 = vpop.f32.mrf.mxu0
      %v2765 = vadd.f32 %v2676, %v2764
      %v2766 = vpop.f32.mrf.mxu0
      %v2767 = vadd.f32 %v2678, %v2766
      %2768 = vmatmul.bf16.gmra.mxu0 %v1385
      %v2769 = vpop.f32.mrf.mxu0
      %v2770 = vadd.f32 %v2681, %v2769
      %v2771 = vpop.f32.mrf.mxu0
      %v2772 = vadd.f32 %v2683, %v2771
      %2773 = vdwg.mxu0
      %2774 = vmatpush.bf16.msra.mxu0 %v1989
      %2775 = vmatpush.bf16.msra.mxu0 %v1988
      %2776 = vmatpush.bf16.msra.mxu0 %v1987
      %2777 = vmatpush.bf16.msra.mxu0 %v1986
      %2778 = vmatpush.bf16.msra.mxu0 %v1985
      %2779 = vmatpush.bf16.msra.mxu0 %v1984
      %2780 = vmatpush.bf16.msra.mxu0 %v1983
      %2781 = vmatpush.bf16.msra.mxu0 %v1982
      %2782 = vmatmul.bf16.gmra.mxu0 %v1428
      %v2783 = vpop.f32.mrf.mxu0
      %v2784 = vadd.f32 %v2695, %v2783
      %v2785 = vpop.f32.mrf.mxu0
      %v2786 = vadd.f32 %v2697, %v2785
      %2787 = vmatmul.bf16.gmra.mxu0 %v1430
      %v2788 = vpop.f32.mrf.mxu0
      %v2789 = vadd.f32 %v2700, %v2788
      %v2790 = vpop.f32.mrf.mxu0
      %v2791 = vadd.f32 %v2702, %v2790
      %2792 = vmatmul.bf16.gmra.mxu0 %v1433
      %v2793 = vpop.f32.mrf.mxu0
      %v2794 = vadd.f32 %v2705, %v2793
      %v2795 = vpop.f32.mrf.mxu0
      %v2796 = vadd.f32 %v2707, %v2795
      %2797 = vmatmul.bf16.gmra.mxu0 %v1435
      %v2798 = vpop.f32.mrf.mxu0
      %v2799 = vadd.f32 %v2710, %v2798
      %v2800 = vpop.f32.mrf.mxu0
      %v2801 = vadd.f32 %v2712, %v2800
      %2802 = vmatmul.bf16.gmra.mxu0 %v1438
      %v2803 = vpop.f32.mrf.mxu0
      %v2804 = vadd.f32 %v2715, %v2803
      %v2805 = vpop.f32.mrf.mxu0
      %v2806 = vadd.f32 %v2717, %v2805
      %2807 = vmatmul.bf16.gmra.mxu0 %v1440
      %v2808 = vpop.f32.mrf.mxu0
      %v2809 = vadd.f32 %v2720, %v2808
      %v2810 = vpop.f32.mrf.mxu0
      %v2811 = vadd.f32 %v2722, %v2810
      %2812 = vmatmul.bf16.gmra.mxu0 %v1443
      %v2813 = vpop.f32.mrf.mxu0
      %v2814 = vadd.f32 %v2725, %v2813
      %v2815 = vpop.f32.mrf.mxu0
      %v2816 = vadd.f32 %v2727, %v2815
      %2817 = vmatmul.bf16.gmra.mxu0 %v1445
      %v2818 = vpop.f32.mrf.mxu0
      %v2819 = vadd.f32 %v2730, %v2818
      %v2820 = vpop.f32.mrf.mxu0
      %v2821 = vadd.f32 %v2732, %v2820
      %2822 = vmatmul.bf16.gmra.mxu0 %v1448
      %v2823 = vpop.f32.mrf.mxu0
      %v2824 = vadd.f32 %v2735, %v2823
      %v2825 = vpop.f32.mrf.mxu0
      %v2826 = vadd.f32 %v2737, %v2825
      %2827 = vmatmul.bf16.gmra.mxu0 %v1450
      %v2828 = vpop.f32.mrf.mxu0
      %v2829 = vadd.f32 %v2740, %v2828
      %v2830 = vpop.f32.mrf.mxu0
      %v2831 = vadd.f32 %v2742, %v2830
      %2832 = vmatmul.bf16.gmra.mxu0 %v1453
      %v2833 = vpop.f32.mrf.mxu0
      %v2834 = vadd.f32 %v2745, %v2833
      %v2835 = vpop.f32.mrf.mxu0
      %v2836 = vadd.f32 %v2747, %v2835
      %2837 = vmatmul.bf16.gmra.mxu0 %v1455
      %v2838 = vpop.f32.mrf.mxu0
      %v2839 = vadd.f32 %v2750, %v2838
      %v2840 = vpop.f32.mrf.mxu0
      %v2841 = vadd.f32 %v2752, %v2840
      %2842 = vmatmul.bf16.gmra.mxu0 %v1458
      %v2843 = vpop.f32.mrf.mxu0
      %v2844 = vadd.f32 %v2755, %v2843
      %v2845 = vpop.f32.mrf.mxu0
      %v2846 = vadd.f32 %v2757, %v2845
      %2847 = vmatmul.bf16.gmra.mxu0 %v1460
      %v2848 = vpop.f32.mrf.mxu0
      %v2849 = vadd.f32 %v2760, %v2848
      %v2850 = vpop.f32.mrf.mxu0
      %v2851 = vadd.f32 %v2762, %v2850
      %2852 = vmatmul.bf16.gmra.mxu0 %v1463
      %v2853 = vpop.f32.mrf.mxu0
      %v2854 = vadd.f32 %v2765, %v2853
      %v2855 = vpop.f32.mrf.mxu0
      %v2856 = vadd.f32 %v2767, %v2855
      %2857 = vmatmul.bf16.gmra.mxu0 %v1465
      %v2858 = vpop.f32.mrf.mxu0
      %v2859 = vadd.f32 %v2770, %v2858
      %v2860 = vpop.f32.mrf.mxu0
      %v2861 = vadd.f32 %v2772, %v2860
      %2862 = vdwg.mxu0
      %v2863 = vpack.c.bf16 %v2784, %v2784
      %v2864 = vpack.c.bf16 %v2786, %v2786
      %v2865 = vpack.c.bf16 %v2789, %v2789
      %v2866 = vpack.c.bf16 %v2791, %v2791
      %v2867 = vpack.c.bf16 %v2794, %v2794
      %v2868 = vpack.c.bf16 %v2796, %v2796
      %v2869 = vpack.c.bf16 %v2799, %v2799
      %v2870 = vpack.c.bf16 %v2801, %v2801
      %v2871 = vpack.c.bf16 %v2804, %v2804
      %v2872 = vpack.c.bf16 %v2806, %v2806
      %v2873 = vpack.c.bf16 %v2809, %v2809
      %v2874 = vpack.c.bf16 %v2811, %v2811
      %v2875 = vpack.c.bf16 %v2814, %v2814
      %v2876 = vpack.c.bf16 %v2816, %v2816
      %v2877 = vpack.c.bf16 %v2819, %v2819
      %v2878 = vpack.c.bf16 %v2821, %v2821
      %v2879 = vpack.c.bf16 %v2824, %v2824
      %v2880 = vpack.c.bf16 %v2826, %v2826
      %v2881 = vpack.c.bf16 %v2829, %v2829
      %v2882 = vpack.c.bf16 %v2831, %v2831
      %v2883 = vpack.c.bf16 %v2834, %v2834
      %v2884 = vpack.c.bf16 %v2836, %v2836
      %v2885 = vpack.c.bf16 %v2839, %v2839
      %v2886 = vpack.c.bf16 %v2841, %v2841
      %v2887 = vpack.c.bf16 %v2844, %v2844
      %v2888 = vpack.c.bf16 %v2846, %v2846
      %v2889 = vpack.c.bf16 %v2849, %v2849
      %v2890 = vpack.c.bf16 %v2851, %v2851
      %v2891 = vpack.c.bf16 %v2854, %v2854
      %v2892 = vpack.c.bf16 %v2856, %v2856
      %v2893 = vpack.c.bf16 %v2859, %v2859
      %v2894 = vpack.c.bf16 %v2861, %v2861
      %2895 = vst [vmem:[%s194] sm:$0xf] %v2863
      %2896 = vst [vmem:[%s194 + $0x4] sm:$0xf] %v2864
      %2897 = vst [vmem:[%s194 + $0x8] sm:$0xf] %v2865
      %2898 = vst [vmem:[%s194 + $0xc] sm:$0xf] %v2866
      %2899 = vst [vmem:[%s194 + $0x10] sm:$0xf] %v2867
      %2900 = vst [vmem:[%s194 + $0x14] sm:$0xf] %v2868
      %2901 = vst [vmem:[%s194 + $0x18] sm:$0xf] %v2869
      %2902 = vst [vmem:[%s194 + $0x1c] sm:$0xf] %v2870
      %2903 = vst [vmem:[%s194 + $0x20] sm:$0xf] %v2871
      %2904 = vst [vmem:[%s194 + $0x24] sm:$0xf] %v2872
      %2905 = vst [vmem:[%s194 + $0x28] sm:$0xf] %v2873
      %2906 = vst [vmem:[%s194 + $0x2c] sm:$0xf] %v2874
      %2907 = vst [vmem:[%s194 + $0x30] sm:$0xf] %v2875
      %2908 = vst [vmem:[%s194 + $0x34] sm:$0xf] %v2876
      %2909 = vst [vmem:[%s194 + $0x38] sm:$0xf] %v2877
      %2910 = vst [vmem:[%s194 + $0x3c] sm:$0xf] %v2878
      %2911 = vst [vmem:[%s194 + $0x40] sm:$0xf] %v2879
      %2912 = vst [vmem:[%s194 + $0x44] sm:$0xf] %v2880
      %2913 = vst [vmem:[%s194 + $0x48] sm:$0xf] %v2881
      %2914 = vst [vmem:[%s194 + $0x4c] sm:$0xf] %v2882
      %2915 = vst [vmem:[%s194 + $0x50] sm:$0xf] %v2883
      %2916 = vst [vmem:[%s194 + $0x54] sm:$0xf] %v2884
      %2917 = vst [vmem:[%s194 + $0x58] sm:$0xf] %v2885
      %2918 = vst [vmem:[%s194 + $0x5c] sm:$0xf] %v2886
      %2919 = vst [vmem:[%s194 + $0x60] sm:$0xf] %v2887
      %2920 = vst [vmem:[%s194 + $0x64] sm:$0xf] %v2888
      %2921 = vst [vmem:[%s194 + $0x68] sm:$0xf] %v2889
      %2922 = vst [vmem:[%s194 + $0x6c] sm:$0xf] %v2890
      %2923 = vst [vmem:[%s194 + $0x70] sm:$0xf] %v2891
      %2924 = vst [vmem:[%s194 + $0x74] sm:$0xf] %v2892
      %2925 = vst [vmem:[%s194 + $0x78] sm:$0xf] %v2893
      %2926 = vst [vmem:[%s194 + $0x7c] sm:$0xf] %v2894
      %s2927 = smul.u32 8, %s19
      %p2928 = scmp.lt.s32.totalorder %s18, 1
      %s2929 = scalar_select %p2928, %s18, 1
      %p2930 = scmp.lt.s32.totalorder %s2927, 31
      %s2931 = scalar_select %p2930, %s2927, 31
      %s2932 = smul.addr %s2931, 4
      %s2933 = smul.addr %s2929, 128
      %s2934 = sadd.s32 %s2932, %s2933
      %s2935 = smul.addr %s2934, 4
      %s2936 = scalar_lea.vmem %s3, %s2935
      // Predicated region
      $region33: #{residual_block_up_forward.4} parent=31 // pred_check
        %p2937 = pneg %p114
      $region34: #{residual_block_up_forward.4} parent=31 // pred_check_branch
        %2939 = sbr.rel (%p2937) target = $region36
      $region35: #{residual_block_up_forward.4} parent=31 // pred_region
        %s2940 = smul.u32 8, %s19
      $region36: #{residual_block_up_forward.4} parent=31 // pred_fallthru
        _
    $region32: #{residual_block_up_forward.4} parent=5 // pred_fallthru
      _
    %p2941 = scmp.le.s32.totalorder 2, %s9
    // Predicated region
    $region37: #{residual_block_up_forward.4} parent=5 // pred_check
      %p2942 = pneg %p2941
    $region38: #{residual_block_up_forward.4} parent=5 // pred_check_branch
      %2944 = sbr.rel (%p2942) target = $region40
    $region39: #{residual_block_up_forward.4} parent=5 // pred_region
      %s2945 = ssub.s32 %s9, 2
      // Predicated region
      $region41: #{residual_block_up_forward.4} parent=39 // pred_check
        %p2946 = pneg %p120
      $region42: #{residual_block_up_forward.4} parent=39 // pred_check_branch
        %2948 = sbr.rel (%p2946) target = $region44
      $region43: #{residual_block_up_forward.4} parent=39 // pred_region
        %s2949 = smul.u32 8, %s21
        %p2950 = scmp.lt.s32.totalorder %s20, 1
        %s2951 = scalar_select %p2950, %s20, 1
        %p2952 = scmp.lt.s32.totalorder %s2949, 31
        %s2953 = scalar_select %p2952, %s2949, 31
        %s2954 = smul.addr %s2953, 4
        %s2955 = smul.addr %s2951, 128
        %s2956 = sadd.s32 %s2954, %s2955
        %s2957 = smul.addr %s2956, 4
        %s2958 = scalar_lea.vmem %s3, %s2957
      $region44: #{residual_block_up_forward.4} parent=39 // pred_fallthru
        _
    $region40: #{residual_block_up_forward.4} parent=5 // pred_fallthru
      _
  $region6: #{residual_block_up_forward.4} parent=0 // loop_footer
    %s13 = sadd.s32 1, %s9
  $region7: #{residual_block_up_forward.4} parent=0 // loop_footer_branch
    %8 = sbr.rel target = $region3
  $region8: #{residual_block_up_forward.4} parent=0 // loop_exit
    _

// kernel: residual_block_up_forward.6
$region0: #{residual_block_up_forward.6}
  #allocation0 [shape = 'u32[]', space=smem, size = 0x4, offset = 0x4, fixed_abs, tag = 'smem constant byte address 0x4 - core index']
  #allocation1 [shape = 'u32[72,128]{1,0:T(1,128)}', space=vmem, size = 0x9000, scoped, tag = 'internal scratch']
  %s0 = inlined_call_operand.vmem [shape: bf16[2,34,34,128], index: 0, kind: input, shape index: {}]
  %s1 = inlined_call_operand.vmem [shape: bf16[1152,128], index: 1, kind: input, shape index: {}]
  %s2 = inlined_call_operand.vmem [shape: f32[1,128], index: 2, kind: input, shape index: {}]
  %s3 = inlined_call_operand.vmem [shape: f32[1,128], index: 3, kind: input, shape index: {}]
  %s4 = inlined_call_operand.vmem [shape: f32[1,128], index: 4, kind: input, shape index: {}]
  %s5 = inlined_call_operand.vmem [shape: bf16[2,32,32,128], index: 5, kind: output, shape index: {}]
  %s6 = sld [smem:[#allocation0]]
  $region53: #{residual_block_up_forward.6} parent=0
    _
  %s8 = ssub.s32 1, %s6
  %s9 = scalar_select 0, %s8, %s6
  loop: start=0, step=1, limit=10
  $region2: #{residual_block_up_forward.6} parent=0 // loop_pre_header
    _
  $region3: #{residual_block_up_forward.6} parent=0 // loop_header
    %s11 = sphi 0, %s15
    %p12 = scmp.ge.s32.totalorder %s11, 10
    %s18 = sphi 0, %s30
    %s19 = sphi 0, %s26
    %s20 = sphi 0, %s18
    %s21 = sphi 0, %s19
    %s22 = sphi 0, %s20
    %s23 = sphi 0, %s21
    %s33 = sphi 0, %s35
    %s36 = sphi 0, %s33
    %s37 = sphi 0, %s36
    %s53 = sphi 0, %s37
    %s57 = sphi 0, %s57
    %s59 = sphi 0, %s57
    %s60 = sphi 0, %s59
    %s74 = sphi 0, %s60
    %s78 = sphi 0, %s78
    %s80 = sphi 0, %s78
    %s81 = sphi 0, %s80
    %s95 = sphi 0, %s81
    %s99 = sphi 0, %s99
    %s101 = sphi 0, %s99
    %s102 = sphi 0, %s101
    %s116 = sphi 0, %s102
    %s120 = sphi 0, %s120
    %s122 = sphi 0, %s120
    %s123 = sphi 0, %s122
    %s137 = sphi 0, %s123
    %s145 = sphi 0, %s147
    %s148 = sphi 0, %s145
    %s149 = sphi 0, %s148
    %s165 = sphi 0, %s149
  $region4: #{residual_block_up_forward.6} parent=0 // loop_header_branch
    %14 = sbr.rel (%p12) target = $region8
  $region5: #{residual_block_up_forward.6} parent=0 // loop_body
    %s16 = ssub.s32 %s11, 1
    %s17 = ssub.s32 %s11, 2
    %s24 = sadd.s32 1, %s19
    %p25 = scmp.ge.s32.totalorder %s24, 4
    %s26 = scalar_select %p25, 0, %s24
    %s27 = sadd.s32 1, %s18
    %s28 = scalar_select %p25, %s27, %s18
    %p29 = scmp.ge.s32.totalorder %s28, 2
    %s30 = scalar_select %p29, 0, %s28
    %s31 = ssub.s32 %s18, %s30
    %p32 = scmp.eq.s32.totalorder %s31, 0
    %s34 = sadd.s32 %s33, 1
    %s35 = scalar_select %p32, %s33, %s34
    %p38 = pneg %p32
    %p39 = scmp.eq.s32.totalorder %s11, 7
    %p40 = por %p38, %p39
    %p41 = scmp.ne.s32.totalorder %s33, %s36
    %p42 = scmp.eq.s32.totalorder %s11, 0
    %p43 = por %p41, %p42
    %p44 = scmp.ne.s32.totalorder %s33, %s36
    %p45 = scmp.eq.s32.totalorder %s16, 7
    %p46 = por %p44, %p45
    %p47 = scmp.ne.s32.totalorder %s36, %s37
    %p48 = scmp.eq.s32.totalorder %s16, 0
    %p49 = por %p47, %p48
    %p50 = scmp.ne.s32.totalorder %s36, %s37
    %p51 = scmp.eq.s32.totalorder %s17, 7
    %p52 = por %p50, %p51
    %p54 = scmp.ne.s32.totalorder %s37, %s53
    %p55 = scmp.eq.s32.totalorder %s17, 0
    %p56 = por %p54, %p55
    %s58 = sadd.s32 %s57, 1
    %p61 = scmp.eq.s32.totalorder %s11, 7
    %p62 = scmp.ne.s32.totalorder %s57, %s59
    %p63 = scmp.eq.s32.totalorder %s11, 0
    %p64 = por %p62, %p63
    %p65 = scmp.ne.s32.totalorder %s57, %s59
    %p66 = scmp.eq.s32.totalorder %s16, 7
    %p67 = por %p65, %p66
    %p68 = scmp.ne.s32.totalorder %s59, %s60
    %p69 = scmp.eq.s32.totalorder %s16, 0
    %p70 = por %p68, %p69
    %p71 = scmp.ne.s32.totalorder %s59, %s60
    %p72 = scmp.eq.s32.totalorder %s17, 7
    %p73 = por %p71, %p72
    %p75 = scmp.ne.s32.totalorder %s60, %s74
    %p76 = scmp.eq.s32.totalorder %s17, 0
    %p77 = por %p75, %p76
    %s79 = sadd.s32 %s78, 1
    %p82 = scmp.eq.s32.totalorder %s11, 7
    %p83 = scmp.ne.s32.totalorder %s78, %s80
    %p84 = scmp.eq.s32.totalorder %s11, 0
    %p85 = por %p83, %p84
    %p86 = scmp.ne.s32.totalorder %s78, %s80
    %p87 = scmp.eq.s32.totalorder %s16, 7
    %p88 = por %p86, %p87
    %p89 = scmp.ne.s32.totalorder %s80, %s81
    %p90 = scmp.eq.s32.totalorder %s16, 0
    %p91 = por %p89, %p90
    %p92 = scmp.ne.s32.totalorder %s80, %s81
    %p93 = scmp.eq.s32.totalorder %s17, 7
    %p94 = por %p92, %p93
    %p96 = scmp.ne.s32.totalorder %s81, %s95
    %p97 = scmp.eq.s32.totalorder %s17, 0
    %p98 = por %p96, %p97
    %s100 = sadd.s32 %s99, 1
    %p103 = scmp.eq.s32.totalorder %s11, 7
    %p104 = scmp.ne.s32.totalorder %s99, %s101
    %p105 = scmp.eq.s32.totalorder %s11, 0
    %p106 = por %p104, %p105
    %p107 = scmp.ne.s32.totalorder %s99, %s101
    %p108 = scmp.eq.s32.totalorder %s16, 7
    %p109 = por %p107, %p108
    %p110 = scmp.ne.s32.totalorder %s101, %s102
    %p111 = scmp.eq.s32.totalorder %s16, 0
    %p112 = por %p110, %p111
    %p113 = scmp.ne.s32.totalorder %s101, %s102
    %p114 = scmp.eq.s32.totalorder %s17, 7
    %p115 = por %p113, %p114
    %p117 = scmp.ne.s32.totalorder %s102, %s116
    %p118 = scmp.eq.s32.totalorder %s17, 0
    %p119 = por %p117, %p118
    %s121 = sadd.s32 %s120, 1
    %p124 = scmp.eq.s32.totalorder %s11, 7
    %p125 = scmp.ne.s32.totalorder %s120, %s122
    %p126 = scmp.eq.s32.totalorder %s11, 0
    %p127 = por %p125, %p126
    %p128 = scmp.ne.s32.totalorder %s120, %s122
    %p129 = scmp.eq.s32.totalorder %s16, 7
    %p130 = por %p128, %p129
    %p131 = scmp.ne.s32.totalorder %s122, %s123
    %p132 = scmp.eq.s32.totalorder %s16, 0
    %p133 = por %p131, %p132
    %p134 = scmp.ne.s32.totalorder %s122, %s123
    %p135 = scmp.eq.s32.totalorder %s17, 7
    %p136 = por %p134, %p135
    %p138 = scmp.ne.s32.totalorder %s123, %s137
    %p139 = scmp.eq.s32.totalorder %s17, 0
    %p140 = por %p138, %p139
    %s141 = ssub.s32 %s18, %s30
    %s142 = ssub.s32 %s19, %s26
    %s143 = sor.u32 %s141, %s142
    %p144 = scmp.eq.s32.totalorder %s143, 0
    %s146 = sadd.s32 %s145, 1
    %s147 = scalar_select %p144, %s145, %s146
    %p150 = pneg %p144
    %p151 = scmp.eq.s32.totalorder %s11, 7
    %p152 = por %p150, %p151
    %p153 = scmp.ne.s32.totalorder %s145, %s148
    %p154 = scmp.eq.s32.totalorder %s11, 0
    %p155 = por %p153, %p154
    %p156 = scmp.ne.s32.totalorder %s145, %s148
    %p157 = scmp.eq.s32.totalorder %s16, 7
    %p158 = por %p156, %p157
    %p159 = scmp.ne.s32.totalorder %s148, %s149
    %p160 = scmp.eq.s32.totalorder %s16, 0
    %p161 = por %p159, %p160
    %p162 = scmp.ne.s32.totalorder %s148, %s149
    %p163 = scmp.eq.s32.totalorder %s17, 7
    %p164 = por %p162, %p163
    %p166 = scmp.ne.s32.totalorder %s149, %s165
    %p167 = scmp.eq.s32.totalorder %s17, 0
    %p168 = por %p166, %p167
    %p169 = scmp.le.s32.totalorder 1, %s11
    %p170 = scmp.lt.s32.totalorder %s11, 9
    %p171 = pnand %p169, %p170
    %p172 = pneg %p171
    // Predicated region
    $region9: #{residual_block_up_forward.6} parent=5 // pred_check
      _
    $region10: #{residual_block_up_forward.6} parent=5 // pred_check_branch
      %174 = sbr.rel (%p171) target = $region12
    $region11: #{residual_block_up_forward.6} parent=5 // pred_region
      %s175 = ssub.s32 %s11, 1
      // Predicated region
      $region13: #{residual_block_up_forward.6} parent=11 // pred_check
        %p176 = pneg %p70
      $region14: #{residual_block_up_forward.6} parent=11 // pred_check_branch
        %178 = sbr.rel (%p176) target = $region16
      $region15: #{residual_block_up_forward.6} parent=11 // pred_region
        _
      $region16: #{residual_block_up_forward.6} parent=11 // pred_fallthru
        _
      // Predicated region
      $region17: #{residual_block_up_forward.6} parent=11 // pred_check
        %p179 = pneg %p91
      $region18: #{residual_block_up_forward.6} parent=11 // pred_check_branch
        %181 = sbr.rel (%p179) target = $region20
      $region19: #{residual_block_up_forward.6} parent=11 // pred_region
        _
      $region20: #{residual_block_up_forward.6} parent=11 // pred_fallthru
        _
      // Predicated region
      $region21: #{residual_block_up_forward.6} parent=11 // pred_check
        %p182 = pneg %p112
      $region22: #{residual_block_up_forward.6} parent=11 // pred_check_branch
        %184 = sbr.rel (%p182) target = $region24
      $region23: #{residual_block_up_forward.6} parent=11 // pred_region
        _
      $region24: #{residual_block_up_forward.6} parent=11 // pred_fallthru
        _
      // Predicated region
      $region25: #{residual_block_up_forward.6} parent=11 // pred_check
        %p185 = pneg %p133
      $region26: #{residual_block_up_forward.6} parent=11 // pred_check_branch
        %187 = sbr.rel (%p185) target = $region28
      $region27: #{residual_block_up_forward.6} parent=11 // pred_region
        _
      $region28: #{residual_block_up_forward.6} parent=11 // pred_fallthru
        _
    $region12: #{residual_block_up_forward.6} parent=5 // pred_fallthru
      _
    %p188 = scmp.lt.s32.totalorder %s11, 8
    // Predicated region
    $region29: #{residual_block_up_forward.6} parent=5 // pred_check
      %p189 = pneg %p188
    $region30: #{residual_block_up_forward.6} parent=5 // pred_check_branch
      %191 = sbr.rel (%p189) target = $region32
    $region31: #{residual_block_up_forward.6} parent=5 // pred_region
      // Predicated region
      $region33: #{residual_block_up_forward.6} parent=31 // pred_check
        %p192 = pneg %p43
      $region34: #{residual_block_up_forward.6} parent=31 // pred_check_branch
        %194 = sbr.rel (%p192) target = $region36
      $region35: #{residual_block_up_forward.6} parent=31 // pred_region
        %p195 = scmp.lt.s32.totalorder %s18, 1
        %s196 = scalar_select %p195, %s18, 1
        %s197 = smul.addr %s196, 170
        %s198 = smul.addr %s197, 4
        %s199 = scalar_lea.vmem %s0, %s198
      $region36: #{residual_block_up_forward.6} parent=31 // pred_fallthru
        _
    $region32: #{residual_block_up_forward.6} parent=5 // pred_fallthru
      _
    %p200 = scmp.le.s32.totalorder 1, %s11
    %p201 = scmp.lt.s32.totalorder %s11, 9
    %p202 = pnand %p200, %p201
    %p203 = pneg %p202
    // Predicated region
    $region37: #{residual_block_up_forward.6} parent=5 // pred_check
      _
    $region38: #{residual_block_up_forward.6} parent=5 // pred_check_branch
      %205 = sbr.rel (%p202) target = $region40
    $region39: #{residual_block_up_forward.6} parent=5 // pred_region
      %s206 = ssub.s32 %s11, 1
      %p207 = scmp.lt.s32.totalorder %s20, 1
      %s208 = scalar_select %p207, %s20, 1
      %s209 = smul.addr %s208, 170
      %s210 = smul.addr %s209, 4
      %s211 = scalar_lea.vmem %s0, %s210
      %p212 = pneg %p49
      %p213 = pneg %p46
      %p214 = pneg %p70
      %p215 = pneg %p67
      %p216 = pneg %p91
      %p217 = pneg %p88
      %p218 = pneg %p112
      %p219 = pneg %p109
      %p220 = pneg %p133
      %p221 = pneg %p130
      %p222 = pneg %p161
      %p223 = pneg %p158
      %s224 = smul.u32 8, %s21
      %p225 = scmp.lt.s32.totalorder %s20, 1
      %s226 = scalar_select %p225, %s20, 1
      %p227 = scmp.lt.s32.totalorder %s224, 31
      %s228 = scalar_select %p227, %s224, 31
      %s229 = smul.addr %s228, 4
      %s230 = smul.addr %s226, 128
      %s231 = sadd.s32 %s229, %s230
      %s232 = smul.addr %s231, 4
      %s233 = scalar_lea.vmem %s5, %s232
      %p234 = scmp.lt.s32.totalorder %s20, 1
      %s235 = scalar_select %p234, %s20, 1
      %s236 = smul.addr %s235, 170
      %s237 = smul.addr %s236, 4
      %s238 = scalar_lea.vmem %s0, %s237
      %s239 = smul.u32 8, %s21
      %p240 = scmp.lt.s32.totalorder %s20, 1
      %s241 = scalar_select %p240, %s20, 1
      %p242 = scmp.lt.s32.totalorder %s239, 31
      %s243 = scalar_select %p242, %s239, 31
      %s244 = smul.addr %s243, 4
      %s245 = smul.addr %s241, 128
      %s246 = sadd.s32 %s244, %s245
      %s247 = smul.addr %s246, 4
      %s248 = scalar_lea.vmem %s5, %s247
      %s249 = smul.u32 8, %s21
      %s250 = smul.u32 %s21, 8
      %s251 = smul.u32 %s250, 5
      %s252 = smul.addr %s251, 4
      %s253 = scalar_lea.vmem %s238, %s252
      %v254 = vld [vmem:[%s253] sm:$0xf]
      %v255 = vld [vmem:[%s253 + $0x4] sm:$0xf]
      %v256 = vld [vmem:[%s253 + $0x8] sm:$0xf]
      %v257 = vld [vmem:[%s253 + $0xc] sm:$0xf]
      %v258 = vld [vmem:[%s253 + $0x14] sm:$0xf]
      %v259 = vld [vmem:[%s253 + $0x18] sm:$0xf]
      %v260 = vld [vmem:[%s253 + $0x1c] sm:$0xf]
      %v261 = vld [vmem:[%s253 + $0x20] sm:$0xf]
      %v262 = vld [vmem:[%s253 + $0x28] sm:$0xf]
      %v263 = vld [vmem:[%s253 + $0x2c] sm:$0xf]
      %v264 = vld [vmem:[%s253 + $0x30] sm:$0xf]
      %v265 = vld [vmem:[%s253 + $0x34] sm:$0xf]
      %v266 = vld [vmem:[%s253 + $0x3c] sm:$0xf]
      %v267 = vld [vmem:[%s253 + $0x40] sm:$0xf]
      %v268 = vld [vmem:[%s253 + $0x44] sm:$0xf]
      %v269 = vld [vmem:[%s253 + $0x48] sm:$0xf]
      %v270 = vld [vmem:[%s253 + $0x50] sm:$0xf]
      %v271 = vld [vmem:[%s253 + $0x54] sm:$0xf]
      %v272 = vld [vmem:[%s253 + $0x58] sm:$0xf]
      %v273 = vld [vmem:[%s253 + $0x5c] sm:$0xf]
      %v274 = vld [vmem:[%s253 + $0x64] sm:$0xf]
      %v275 = vld [vmem:[%s253 + $0x68] sm:$0xf]
      %v276 = vld [vmem:[%s253 + $0x6c] sm:$0xf]
      %v277 = vld [vmem:[%s253 + $0x70] sm:$0xf]
      %v278 = vld [vmem:[%s253 + $0x78] sm:$0xf]
      %v279 = vld [vmem:[%s253 + $0x7c] sm:$0xf]
      %v280 = vld [vmem:[%s253 + $0x80] sm:$0xf]
      %v281 = vld [vmem:[%s253 + $0x84] sm:$0xf]
      %v282 = vld [vmem:[%s253 + $0x8c] sm:$0xf]
      %v283 = vld [vmem:[%s253 + $0x90] sm:$0xf]
      %v284 = vld [vmem:[%s253 + $0x94] sm:$0xf]
      %v285 = vld [vmem:[%s253 + $0x98] sm:$0xf]
      %v286 = vld [vmem:[%s253 + $0x10] sm:$0x1]
      %v287 = vld [vmem:[%s253 + $0x24] sm:$0x1]
      %v288 = vld [vmem:[%s253 + $0x38] sm:$0x1]
      %v289 = vld [vmem:[%s253 + $0x4c] sm:$0x1]
      %v290 = vld [vmem:[%s253 + $0x60] sm:$0x1]
      %v291 = vld [vmem:[%s253 + $0x74] sm:$0x1]
      %v292 = vld [vmem:[%s253 + $0x88] sm:$0x1]
      %v293 = vld [vmem:[%s253 + $0x9c] sm:$0x1]
      %v294 = vld [vmem:[%s253] sm:$0xe]
      %v295 = vld [vmem:[%s253 + $0x14] sm:$0xe]
      %v296 = vld [vmem:[%s253 + $0x28] sm:$0xe]
      %v297 = vld [vmem:[%s253 + $0x3c] sm:$0xe]
      %v298 = vld [vmem:[%s253 + $0x50] sm:$0xe]
      %v299 = vld [vmem:[%s253 + $0x64] sm:$0xe]
      %v300 = vld [vmem:[%s253 + $0x78] sm:$0xe]
      %v301 = vld [vmem:[%s253 + $0x8c] sm:$0xe]
      %s302 = sadd.s32 %s250, 1
      %s303 = smul.u32 %s302, 5
      %s304 = smul.addr %s303, 4
      %s305 = scalar_lea.vmem %s238, %s304
      %v306 = vld [vmem:[%s305] sm:$0xf]
      %v307 = vld [vmem:[%s305 + $0x4] sm:$0xf]
      %v308 = vld [vmem:[%s305 + $0x8] sm:$0xf]
      %v309 = vld [vmem:[%s305 + $0xc] sm:$0xf]
      %v310 = vld [vmem:[%s305 + $0x14] sm:$0xf]
      %v311 = vld [vmem:[%s305 + $0x18] sm:$0xf]
      %v312 = vld [vmem:[%s305 + $0x1c] sm:$0xf]
      %v313 = vld [vmem:[%s305 + $0x20] sm:$0xf]
      %v314 = vld [vmem:[%s305 + $0x28] sm:$0xf]
      %v315 = vld [vmem:[%s305 + $0x2c] sm:$0xf]
      %v316 = vld [vmem:[%s305 + $0x30] sm:$0xf]
      %v317 = vld [vmem:[%s305 + $0x34] sm:$0xf]
      %v318 = vld [vmem:[%s305 + $0x3c] sm:$0xf]
      %v319 = vld [vmem:[%s305 + $0x40] sm:$0xf]
      %v320 = vld [vmem:[%s305 + $0x44] sm:$0xf]
      %v321 = vld [vmem:[%s305 + $0x48] sm:$0xf]
      %v322 = vld [vmem:[%s305 + $0x50] sm:$0xf]
      %v323 = vld [vmem:[%s305 + $0x54] sm:$0xf]
      %v324 = vld [vmem:[%s305 + $0x58] sm:$0xf]
      %v325 = vld [vmem:[%s305 + $0x5c] sm:$0xf]
      %v326 = vld [vmem:[%s305 + $0x64] sm:$0xf]
      %v327 = vld [vmem:[%s305 + $0x68] sm:$0xf]
      %v328 = vld [vmem:[%s305 + $0x6c] sm:$0xf]
      %v329 = vld [vmem:[%s305 + $0x70] sm:$0xf]
      %v330 = vld [vmem:[%s305 + $0x78] sm:$0xf]
      %v331 = vld [vmem:[%s305 + $0x7c] sm:$0xf]
      %v332 = vld [vmem:[%s305 + $0x80] sm:$0xf]
      %v333 = vld [vmem:[%s305 + $0x84] sm:$0xf]
      %v334 = vld [vmem:[%s305 + $0x8c] sm:$0xf]
      %v335 = vld [vmem:[%s305 + $0x90] sm:$0xf]
      %v336 = vld [vmem:[%s305 + $0x94] sm:$0xf]
      %v337 = vld [vmem:[%s305 + $0x98] sm:$0xf]
      %v338 = vld [vmem:[%s305 + $0x10] sm:$0x1]
      %v339 = vld [vmem:[%s305 + $0x24] sm:$0x1]
      %v340 = vld [vmem:[%s305 + $0x38] sm:$0x1]
      %v341 = vld [vmem:[%s305 + $0x4c] sm:$0x1]
      %v342 = vld [vmem:[%s305 + $0x60] sm:$0x1]
      %v343 = vld [vmem:[%s305 + $0x74] sm:$0x1]
      %v344 = vld [vmem:[%s305 + $0x88] sm:$0x1]
      %v345 = vld [vmem:[%s305 + $0x9c] sm:$0x1]
      %v346 = vld [vmem:[%s305] sm:$0xe]
      %v347 = vld [vmem:[%s305 + $0x14] sm:$0xe]
      %v348 = vld [vmem:[%s305 + $0x28] sm:$0xe]
      %v349 = vld [vmem:[%s305 + $0x3c] sm:$0xe]
      %v350 = vld [vmem:[%s305 + $0x50] sm:$0xe]
      %v351 = vld [vmem:[%s305 + $0x64] sm:$0xe]
      %v352 = vld [vmem:[%s305 + $0x78] sm:$0xe]
      %v353 = vld [vmem:[%s305 + $0x8c] sm:$0xe]
      %s354 = sadd.s32 %s250, 2
      %s355 = smul.u32 %s354, 5
      %s356 = smul.addr %s355, 4
      %s357 = scalar_lea.vmem %s238, %s356
      %v358 = vld [vmem:[%s357] sm:$0xf]
      %v359 = vld [vmem:[%s357 + $0x4] sm:$0xf]
      %v360 = vld [vmem:[%s357 + $0x8] sm:$0xf]
      %v361 = vld [vmem:[%s357 + $0xc] sm:$0xf]
      %v362 = vld [vmem:[%s357 + $0x14] sm:$0xf]
      %v363 = vld [vmem:[%s357 + $0x18] sm:$0xf]
      %v364 = vld [vmem:[%s357 + $0x1c] sm:$0xf]
      %v365 = vld [vmem:[%s357 + $0x20] sm:$0xf]
      %v366 = vld [vmem:[%s357 + $0x28] sm:$0xf]
      %v367 = vld [vmem:[%s357 + $0x2c] sm:$0xf]
      %v368 = vld [vmem:[%s357 + $0x30] sm:$0xf]
      %v369 = vld [vmem:[%s357 + $0x34] sm:$0xf]
      %v370 = vld [vmem:[%s357 + $0x3c] sm:$0xf]
      %v371 = vld [vmem:[%s357 + $0x40] sm:$0xf]
      %v372 = vld [vmem:[%s357 + $0x44] sm:$0xf]
      %v373 = vld [vmem:[%s357 + $0x48] sm:$0xf]
      %v374 = vld [vmem:[%s357 + $0x50] sm:$0xf]
      %v375 = vld [vmem:[%s357 + $0x54] sm:$0xf]
      %v376 = vld [vmem:[%s357 + $0x58] sm:$0xf]
      %v377 = vld [vmem:[%s357 + $0x5c] sm:$0xf]
      %v378 = vld [vmem:[%s357 + $0x64] sm:$0xf]
      %v379 = vld [vmem:[%s357 + $0x68] sm:$0xf]
      %v380 = vld [vmem:[%s357 + $0x6c] sm:$0xf]
      %v381 = vld [vmem:[%s357 + $0x70] sm:$0xf]
      %v382 = vld [vmem:[%s357 + $0x78] sm:$0xf]
      %v383 = vld [vmem:[%s357 + $0x7c] sm:$0xf]
      %v384 = vld [vmem:[%s357 + $0x80] sm:$0xf]
      %v385 = vld [vmem:[%s357 + $0x84] sm:$0xf]
      %v386 = vld [vmem:[%s357 + $0x8c] sm:$0xf]
      %v387 = vld [vmem:[%s357 + $0x90] sm:$0xf]
      %v388 = vld [vmem:[%s357 + $0x94] sm:$0xf]
      %v389 = vld [vmem:[%s357 + $0x98] sm:$0xf]
      %v390 = vld [vmem:[%s357 + $0x10] sm:$0x1]
      %v391 = vld [vmem:[%s357 + $0x24] sm:$0x1]
      %v392 = vld [vmem:[%s357 + $0x38] sm:$0x1]
      %v393 = vld [vmem:[%s357 + $0x4c] sm:$0x1]
      %v394 = vld [vmem:[%s357 + $0x60] sm:$0x1]
      %v395 = vld [vmem:[%s357 + $0x74] sm:$0x1]
      %v396 = vld [vmem:[%s357 + $0x88] sm:$0x1]
      %v397 = vld [vmem:[%s357 + $0x9c] sm:$0x1]
      %v398 = vld [vmem:[%s357] sm:$0xe]
      %v399 = vld [vmem:[%s357 + $0x14] sm:$0xe]
      %v400 = vld [vmem:[%s357 + $0x28] sm:$0xe]
      %v401 = vld [vmem:[%s357 + $0x3c] sm:$0xe]
      %v402 = vld [vmem:[%s357 + $0x50] sm:$0xe]
      %v403 = vld [vmem:[%s357 + $0x64] sm:$0xe]
      %v404 = vld [vmem:[%s357 + $0x78] sm:$0xe]
      %v405 = vld [vmem:[%s357 + $0x8c] sm:$0xe]
      %v438 = vunpack.c.l.b16 %v254
      %v439 = vunpack.c.l.b16 %v255
      %v440 = vunpack.c.l.b16 %v256
      %v441 = vunpack.c.l.b16 %v257
      %v442 = vunpack.c.l.b16 %v258
      %v443 = vunpack.c.l.b16 %v259
      %v444 = vunpack.c.l.b16 %v260
      %v445 = vunpack.c.l.b16 %v261
      %v446 = vunpack.c.l.b16 %v262
      %v447 = vunpack.c.l.b16 %v263
      %v448 = vunpack.c.l.b16 %v264
      %v449 = vunpack.c.l.b16 %v265
      %v450 = vunpack.c.l.b16 %v266
      %v451 = vunpack.c.l.b16 %v267
      %v452 = vunpack.c.l.b16 %v268
      %v453 = vunpack.c.l.b16 %v269
      %v454 = vunpack.c.l.b16 %v270
      %v455 = vunpack.c.l.b16 %v271
      %v456 = vunpack.c.l.b16 %v272
      %v457 = vunpack.c.l.b16 %v273
      %v458 = vunpack.c.l.b16 %v274
      %v459 = vunpack.c.l.b16 %v275
      %v460 = vunpack.c.l.b16 %v276
      %v461 = vunpack.c.l.b16 %v277
      %v462 = vunpack.c.l.b16 %v278
      %v463 = vunpack.c.l.b16 %v279
      %v464 = vunpack.c.l.b16 %v280
      %v465 = vunpack.c.l.b16 %v281
      %v466 = vunpack.c.l.b16 %v282
      %v467 = vunpack.c.l.b16 %v283
      %v468 = vunpack.c.l.b16 %v284
      %v469 = vunpack.c.l.b16 %v285
      %v470 = vpack.c.b16 %v439, %v438
      %v471 = vpack.c.b16 %v441, %v440
      %v472 = vpack.c.b16 %v443, %v442
      %v473 = vpack.c.b16 %v445, %v444
      %v474 = vpack.c.b16 %v447, %v446
      %v475 = vpack.c.b16 %v449, %v448
      %v476 = vpack.c.b16 %v451, %v450
      %v477 = vpack.c.b16 %v453, %v452
      %v478 = vpack.c.b16 %v455, %v454
      %v479 = vpack.c.b16 %v457, %v456
      %v480 = vpack.c.b16 %v459, %v458
      %v481 = vpack.c.b16 %v461, %v460
      %v482 = vpack.c.b16 %v463, %v462
      %v483 = vpack.c.b16 %v465, %v464
      %v484 = vpack.c.b16 %v467, %v466
      %v485 = vpack.c.b16 %v469, %v468
      %v510 = vunpack.c.l.b16 %v286
      %v511 = vunpack.c.l.b16 %v287
      %v512 = vunpack.c.l.b16 %v288
      %v513 = vunpack.c.l.b16 %v289
      %v514 = vunpack.c.l.b16 %v290
      %v515 = vunpack.c.l.b16 %v291
      %v516 = vunpack.c.l.b16 %v292
      %v517 = vunpack.c.l.b16 %v293
      %v518 = vpack.c.b16 %v510, %v510
      %v519 = vpack.c.b16 %v511, %v511
      %v520 = vpack.c.b16 %v512, %v512
      %v521 = vpack.c.b16 %v513, %v513
      %v522 = vpack.c.b16 %v514, %v514
      %v523 = vpack.c.b16 %v515, %v515
      %v524 = vpack.c.b16 %v516, %v516
      %v525 = vpack.c.b16 %v517, %v517
      %vm526 = vsmask.f32 7424
      %v528 = vshrl.u32 %v470, 16
      %v530 = vshll.u32 %v470, 16
      %v532 = vrot.slane %v530, 1
      %v533 = vor.u32 %v528, %v532
      %v535 = vshll.u32 %v471, 16
      %v537 = vrot.slane %v535, 1
      %v538 = vsel %vm526, %v533, %v537
      %v539 = vshrl.u32 %v471, 16
      %v541 = vor.u32 %v539, %v537
      %v543 = vshll.u32 %v518, 16
      %v545 = vrot.slane %v543, 1
      %v546 = vsel %vm526, %v541, %v545
      %v548 = vshrl.u32 %v472, 16
      %v550 = vshll.u32 %v472, 16
      %v552 = vrot.slane %v550, 1
      %v553 = vor.u32 %v548, %v552
      %v555 = vshll.u32 %v473, 16
      %v557 = vrot.slane %v555, 1
      %v558 = vsel %vm526, %v553, %v557
      %v559 = vshrl.u32 %v473, 16
      %v561 = vor.u32 %v559, %v557
      %v563 = vshll.u32 %v519, 16
      %v565 = vrot.slane %v563, 1
      %v566 = vsel %vm526, %v561, %v565
      %v568 = vshrl.u32 %v474, 16
      %v570 = vshll.u32 %v474, 16
      %v572 = vrot.slane %v570, 1
      %v573 = vor.u32 %v568, %v572
      %v575 = vshll.u32 %v475, 16
      %v577 = vrot.slane %v575, 1
      %v578 = vsel %vm526, %v573, %v577
      %v579 = vshrl.u32 %v475, 16
      %v581 = vor.u32 %v579, %v577
      %v583 = vshll.u32 %v520, 16
      %v585 = vrot.slane %v583, 1
      %v586 = vsel %vm526, %v581, %v585
      %v588 = vshrl.u32 %v476, 16
      %v590 = vshll.u32 %v476, 16
      %v592 = vrot.slane %v590, 1
      %v593 = vor.u32 %v588, %v592
      %v595 = vshll.u32 %v477, 16
      %v597 = vrot.slane %v595, 1
      %v598 = vsel %vm526, %v593, %v597
      %v599 = vshrl.u32 %v477, 16
      %v601 = vor.u32 %v599, %v597
      %v603 = vshll.u32 %v521, 16
      %v605 = vrot.slane %v603, 1
      %v606 = vsel %vm526, %v601, %v605
      %v608 = vshrl.u32 %v478, 16
      %v610 = vshll.u32 %v478, 16
      %v612 = vrot.slane %v610, 1
      %v613 = vor.u32 %v608, %v612
      %v615 = vshll.u32 %v479, 16
      %v617 = vrot.slane %v615, 1
      %v618 = vsel %vm526, %v613, %v617
      %v619 = vshrl.u32 %v479, 16
      %v621 = vor.u32 %v619, %v617
      %v623 = vshll.u32 %v522, 16
      %v625 = vrot.slane %v623, 1
      %v626 = vsel %vm526, %v621, %v625
      %v628 = vshrl.u32 %v480, 16
      %v630 = vshll.u32 %v480, 16
      %v632 = vrot.slane %v630, 1
      %v633 = vor.u32 %v628, %v632
      %v635 = vshll.u32 %v481, 16
      %v637 = vrot.slane %v635, 1
      %v638 = vsel %vm526, %v633, %v637
      %v639 = vshrl.u32 %v481, 16
      %v641 = vor.u32 %v639, %v637
      %v643 = vshll.u32 %v523, 16
      %v645 = vrot.slane %v643, 1
      %v646 = vsel %vm526, %v641, %v645
      %v648 = vshrl.u32 %v482, 16
      %v650 = vshll.u32 %v482, 16
      %v652 = vrot.slane %v650, 1
      %v653 = vor.u32 %v648, %v652
      %v655 = vshll.u32 %v483, 16
      %v657 = vrot.slane %v655, 1
      %v658 = vsel %vm526, %v653, %v657
      %v659 = vshrl.u32 %v483, 16
      %v661 = vor.u32 %v659, %v657
      %v663 = vshll.u32 %v524, 16
      %v665 = vrot.slane %v663, 1
      %v666 = vsel %vm526, %v661, %v665
      %v668 = vshrl.u32 %v484, 16
      %v670 = vshll.u32 %v484, 16
      %v672 = vrot.slane %v670, 1
      %v673 = vor.u32 %v668, %v672
      %v675 = vshll.u32 %v485, 16
      %v677 = vrot.slane %v675, 1
      %v678 = vsel %vm526, %v673, %v677
      %v679 = vshrl.u32 %v485, 16
      %v681 = vor.u32 %v679, %v677
      %v683 = vshll.u32 %v525, 16
      %v685 = vrot.slane %v683, 1
      %v686 = vsel %vm526, %v681, %v685
      %v711 = vunpack.c.l.b16 %v294
      %v712 = vunpack.c.l.b16 %v295
      %v713 = vunpack.c.l.b16 %v296
      %v714 = vunpack.c.l.b16 %v297
      %v715 = vunpack.c.l.b16 %v298
      %v716 = vunpack.c.l.b16 %v299
      %v717 = vunpack.c.l.b16 %v300
      %v718 = vunpack.c.l.b16 %v301
      %v719 = vpack.c.b16 %v439, %v711
      %v720 = vpack.c.b16 %v443, %v712
      %v721 = vpack.c.b16 %v447, %v713
      %v722 = vpack.c.b16 %v451, %v714
      %v723 = vpack.c.b16 %v455, %v715
      %v724 = vpack.c.b16 %v459, %v716
      %v725 = vpack.c.b16 %v463, %v717
      %v726 = vpack.c.b16 %v467, %v718
      %vm727 = vcmask 1046528
      %v728 = vrot.slane %v719, 1
      %v729 = vrot.slane %v471, 1
      %v730 = vsel %vm727, %v728, %v729
      %v731 = vrot.slane %v518, 1
      %v732 = vsel %vm727, %v729, %v731
      %v733 = vrot.slane %v720, 1
      %v734 = vrot.slane %v473, 1
      %v735 = vsel %vm727, %v733, %v734
      %v736 = vrot.slane %v519, 1
      %v737 = vsel %vm727, %v734, %v736
      %v738 = vrot.slane %v721, 1
      %v739 = vrot.slane %v475, 1
      %v740 = vsel %vm727, %v738, %v739
      %v741 = vrot.slane %v520, 1
      %v742 = vsel %vm727, %v739, %v741
      %v743 = vrot.slane %v722, 1
      %v744 = vrot.slane %v477, 1
      %v745 = vsel %vm727, %v743, %v744
      %v746 = vrot.slane %v521, 1
      %v747 = vsel %vm727, %v744, %v746
      %v748 = vrot.slane %v723, 1
      %v749 = vrot.slane %v479, 1
      %v750 = vsel %vm727, %v748, %v749
      %v751 = vrot.slane %v522, 1
      %v752 = vsel %vm727, %v749, %v751
      %v753 = vrot.slane %v724, 1
      %v754 = vrot.slane %v481, 1
      %v755 = vsel %vm727, %v753, %v754
      %v756 = vrot.slane %v523, 1
      %v757 = vsel %vm727, %v754, %v756
      %v758 = vrot.slane %v725, 1
      %v759 = vrot.slane %v483, 1
      %v760 = vsel %vm727, %v758, %v759
      %v761 = vrot.slane %v524, 1
      %v762 = vsel %vm727, %v759, %v761
      %v763 = vrot.slane %v726, 1
      %v764 = vrot.slane %v485, 1
      %v765 = vsel %vm727, %v763, %v764
      %v766 = vrot.slane %v525, 1
      %v767 = vsel %vm727, %v764, %v766
      %v816 = vunpack.c.l.b16 %v306
      %v817 = vunpack.c.l.b16 %v307
      %v818 = vunpack.c.l.b16 %v308
      %v819 = vunpack.c.l.b16 %v309
      %v820 = vunpack.c.l.b16 %v310
      %v821 = vunpack.c.l.b16 %v311
      %v822 = vunpack.c.l.b16 %v312
      %v823 = vunpack.c.l.b16 %v313
      %v824 = vunpack.c.l.b16 %v314
      %v825 = vunpack.c.l.b16 %v315
      %v826 = vunpack.c.l.b16 %v316
      %v827 = vunpack.c.l.b16 %v317
      %v828 = vunpack.c.l.b16 %v318
      %v829 = vunpack.c.l.b16 %v319
      %v830 = vunpack.c.l.b16 %v320
      %v831 = vunpack.c.l.b16 %v321
      %v832 = vunpack.c.l.b16 %v322
      %v833 = vunpack.c.l.b16 %v323
      %v834 = vunpack.c.l.b16 %v324
      %v835 = vunpack.c.l.b16 %v325
      %v836 = vunpack.c.l.b16 %v326
      %v837 = vunpack.c.l.b16 %v327
      %v838 = vunpack.c.l.b16 %v328
      %v839 = vunpack.c.l.b16 %v329
      %v840 = vunpack.c.l.b16 %v330
      %v841 = vunpack.c.l.b16 %v331
      %v842 = vunpack.c.l.b16 %v332
      %v843 = vunpack.c.l.b16 %v333
      %v844 = vunpack.c.l.b16 %v334
      %v845 = vunpack.c.l.b16 %v335
      %v846 = vunpack.c.l.b16 %v336
      %v847 = vunpack.c.l.b16 %v337
      %v848 = vpack.c.b16 %v817, %v816
      %v849 = vpack.c.b16 %v819, %v818
      %v850 = vpack.c.b16 %v821, %v820
      %v851 = vpack.c.b16 %v823, %v822
      %v852 = vpack.c.b16 %v825, %v824
      %v853 = vpack.c.b16 %v827, %v826
      %v854 = vpack.c.b16 %v829, %v828
      %v855 = vpack.c.b16 %v831, %v830
      %v856 = vpack.c.b16 %v833, %v832
      %v857 = vpack.c.b16 %v835, %v834
      %v858 = vpack.c.b16 %v837, %v836
      %v859 = vpack.c.b16 %v839, %v838
      %v860 = vpack.c.b16 %v841, %v840
      %v861 = vpack.c.b16 %v843, %v842
      %v862 = vpack.c.b16 %v845, %v844
      %v863 = vpack.c.b16 %v847, %v846
      %v888 = vunpack.c.l.b16 %v338
      %v889 = vunpack.c.l.b16 %v339
      %v890 = vunpack.c.l.b16 %v340
      %v891 = vunpack.c.l.b16 %v341
      %v892 = vunpack.c.l.b16 %v342
      %v893 = vunpack.c.l.b16 %v343
      %v894 = vunpack.c.l.b16 %v344
      %v895 = vunpack.c.l.b16 %v345
      %v896 = vpack.c.b16 %v888, %v888
      %v897 = vpack.c.b16 %v889, %v889
      %v898 = vpack.c.b16 %v890, %v890
      %v899 = vpack.c.b16 %v891, %v891
      %v900 = vpack.c.b16 %v892, %v892
      %v901 = vpack.c.b16 %v893, %v893
      %v902 = vpack.c.b16 %v894, %v894
      %v903 = vpack.c.b16 %v895, %v895
      %v905 = vshrl.u32 %v848, 16
      %v907 = vshll.u32 %v848, 16
      %v909 = vrot.slane %v907, 1
      %v910 = vor.u32 %v905, %v909
      %v912 = vshll.u32 %v849, 16
      %v914 = vrot.slane %v912, 1
      %v915 = vsel %vm526, %v910, %v914
      %v916 = vshrl.u32 %v849, 16
      %v918 = vor.u32 %v916, %v914
      %v920 = vshll.u32 %v896, 16
      %v922 = vrot.slane %v920, 1
      %v923 = vsel %vm526, %v918, %v922
      %v925 = vshrl.u32 %v850, 16
      %v927 = vshll.u32 %v850, 16
      %v929 = vrot.slane %v927, 1
      %v930 = vor.u32 %v925, %v929
      %v932 = vshll.u32 %v851, 16
      %v934 = vrot.slane %v932, 1
      %v935 = vsel %vm526, %v930, %v934
      %v936 = vshrl.u32 %v851, 16
      %v938 = vor.u32 %v936, %v934
      %v940 = vshll.u32 %v897, 16
      %v942 = vrot.slane %v940, 1
      %v943 = vsel %vm526, %v938, %v942
      %v945 = vshrl.u32 %v852, 16
      %v947 = vshll.u32 %v852, 16
      %v949 = vrot.slane %v947, 1
      %v950 = vor.u32 %v945, %v949
      %v952 = vshll.u32 %v853, 16
      %v954 = vrot.slane %v952, 1
      %v955 = vsel %vm526, %v950, %v954
      %v956 = vshrl.u32 %v853, 16
      %v958 = vor.u32 %v956, %v954
      %v960 = vshll.u32 %v898, 16
      %v962 = vrot.slane %v960, 1
      %v963 = vsel %vm526, %v958, %v962
      %v965 = vshrl.u32 %v854, 16
      %v967 = vshll.u32 %v854, 16
      %v969 = vrot.slane %v967, 1
      %v970 = vor.u32 %v965, %v969
      %v972 = vshll.u32 %v855, 16
      %v974 = vrot.slane %v972, 1
      %v975 = vsel %vm526, %v970, %v974
      %v976 = vshrl.u32 %v855, 16
      %v978 = vor.u32 %v976, %v974
      %v980 = vshll.u32 %v899, 16
      %v982 = vrot.slane %v980, 1
      %v983 = vsel %vm526, %v978, %v982
      %v985 = vshrl.u32 %v856, 16
      %v987 = vshll.u32 %v856, 16
      %v989 = vrot.slane %v987, 1
      %v990 = vor.u32 %v985, %v989
      %v992 = vshll.u32 %v857, 16
      %v994 = vrot.slane %v992, 1
      %v995 = vsel %vm526, %v990, %v994
      %v996 = vshrl.u32 %v857, 16
      %v998 = vor.u32 %v996, %v994
      %v1000 = vshll.u32 %v900, 16
      %v1002 = vrot.slane %v1000, 1
      %v1003 = vsel %vm526, %v998, %v1002
      %v1005 = vshrl.u32 %v858, 16
      %v1007 = vshll.u32 %v858, 16
      %v1009 = vrot.slane %v1007, 1
      %v1010 = vor.u32 %v1005, %v1009
      %v1012 = vshll.u32 %v859, 16
      %v1014 = vrot.slane %v1012, 1
      %v1015 = vsel %vm526, %v1010, %v1014
      %v1016 = vshrl.u32 %v859, 16
      %v1018 = vor.u32 %v1016, %v1014
      %v1020 = vshll.u32 %v901, 16
      %v1022 = vrot.slane %v1020, 1
      %v1023 = vsel %vm526, %v1018, %v1022
      %v1025 = vshrl.u32 %v860, 16
      %v1027 = vshll.u32 %v860, 16
      %v1029 = vrot.slane %v1027, 1
      %v1030 = vor.u32 %v1025, %v1029
      %v1032 = vshll.u32 %v861, 16
      %v1034 = vrot.slane %v1032, 1
      %v1035 = vsel %vm526, %v1030, %v1034
      %v1036 = vshrl.u32 %v861, 16
      %v1038 = vor.u32 %v1036, %v1034
      %v1040 = vshll.u32 %v902, 16
      %v1042 = vrot.slane %v1040, 1
      %v1043 = vsel %vm526, %v1038, %v1042
      %v1045 = vshrl.u32 %v862, 16
      %v1047 = vshll.u32 %v862, 16
      %v1049 = vrot.slane %v1047, 1
      %v1050 = vor.u32 %v1045, %v1049
      %v1052 = vshll.u32 %v863, 16
      %v1054 = vrot.slane %v1052, 1
      %v1055 = vsel %vm526, %v1050, %v1054
      %v1056 = vshrl.u32 %v863, 16
      %v1058 = vor.u32 %v1056, %v1054
      %v1060 = vshll.u32 %v903, 16
      %v1062 = vrot.slane %v1060, 1
      %v1063 = vsel %vm526, %v1058, %v1062
      %v1088 = vunpack.c.l.b16 %v346
      %v1089 = vunpack.c.l.b16 %v347
      %v1090 = vunpack.c.l.b16 %v348
      %v1091 = vunpack.c.l.b16 %v349
      %v1092 = vunpack.c.l.b16 %v350
      %v1093 = vunpack.c.l.b16 %v351
      %v1094 = vunpack.c.l.b16 %v352
      %v1095 = vunpack.c.l.b16 %v353
      %v1096 = vpack.c.b16 %v817, %v1088
      %v1097 = vpack.c.b16 %v821, %v1089
      %v1098 = vpack.c.b16 %v825, %v1090
      %v1099 = vpack.c.b16 %v829, %v1091
      %v1100 = vpack.c.b16 %v833, %v1092
      %v1101 = vpack.c.b16 %v837, %v1093
      %v1102 = vpack.c.b16 %v841, %v1094
      %v1103 = vpack.c.b16 %v845, %v1095
      %v1104 = vrot.slane %v1096, 1
      %v1105 = vrot.slane %v849, 1
      %v1106 = vsel %vm727, %v1104, %v1105
      %v1107 = vrot.slane %v896, 1
      %v1108 = vsel %vm727, %v1105, %v1107
      %v1109 = vrot.slane %v1097, 1
      %v1110 = vrot.slane %v851, 1
      %v1111 = vsel %vm727, %v1109, %v1110
      %v1112 = vrot.slane %v897, 1
      %v1113 = vsel %vm727, %v1110, %v1112
      %v1114 = vrot.slane %v1098, 1
      %v1115 = vrot.slane %v853, 1
      %v1116 = vsel %vm727, %v1114, %v1115
      %v1117 = vrot.slane %v898, 1
      %v1118 = vsel %vm727, %v1115, %v1117
      %v1119 = vrot.slane %v1099, 1
      %v1120 = vrot.slane %v855, 1
      %v1121 = vsel %vm727, %v1119, %v1120
      %v1122 = vrot.slane %v899, 1
      %v1123 = vsel %vm727, %v1120, %v1122
      %v1124 = vrot.slane %v1100, 1
      %v1125 = vrot.slane %v857, 1
      %v1126 = vsel %vm727, %v1124, %v1125
      %v1127 = vrot.slane %v900, 1
      %v1128 = vsel %vm727, %v1125, %v1127
      %v1129 = vrot.slane %v1101, 1
      %v1130 = vrot.slane %v859, 1
      %v1131 = vsel %vm727, %v1129, %v1130
      %v1132 = vrot.slane %v901, 1
      %v1133 = vsel %vm727, %v1130, %v1132
      %v1134 = vrot.slane %v1102, 1
      %v1135 = vrot.slane %v861, 1
      %v1136 = vsel %vm727, %v1134, %v1135
      %v1137 = vrot.slane %v902, 1
      %v1138 = vsel %vm727, %v1135, %v1137
      %v1139 = vrot.slane %v1103, 1
      %v1140 = vrot.slane %v863, 1
      %v1141 = vsel %vm727, %v1139, %v1140
      %v1142 = vrot.slane %v903, 1
      %v1143 = vsel %vm727, %v1140, %v1142
      %v1192 = vunpack.c.l.b16 %v358
      %v1193 = vunpack.c.l.b16 %v359
      %v1194 = vunpack.c.l.b16 %v360
      %v1195 = vunpack.c.l.b16 %v361
      %v1196 = vunpack.c.l.b16 %v362
      %v1197 = vunpack.c.l.b16 %v363
      %v1198 = vunpack.c.l.b16 %v364
      %v1199 = vunpack.c.l.b16 %v365
      %v1200 = vunpack.c.l.b16 %v366
      %v1201 = vunpack.c.l.b16 %v367
      %v1202 = vunpack.c.l.b16 %v368
      %v1203 = vunpack.c.l.b16 %v369
      %v1204 = vunpack.c.l.b16 %v370
      %v1205 = vunpack.c.l.b16 %v371
      %v1206 = vunpack.c.l.b16 %v372
      %v1207 = vunpack.c.l.b16 %v373
      %v1208 = vunpack.c.l.b16 %v374
      %v1209 = vunpack.c.l.b16 %v375
      %v1210 = vunpack.c.l.b16 %v376
      %v1211 = vunpack.c.l.b16 %v377
      %v1212 = vunpack.c.l.b16 %v378
      %v1213 = vunpack.c.l.b16 %v379
      %v1214 = vunpack.c.l.b16 %v380
      %v1215 = vunpack.c.l.b16 %v381
      %v1216 = vunpack.c.l.b16 %v382
      %v1217 = vunpack.c.l.b16 %v383
      %v1218 = vunpack.c.l.b16 %v384
      %v1219 = vunpack.c.l.b16 %v385
      %v1220 = vunpack.c.l.b16 %v386
      %v1221 = vunpack.c.l.b16 %v387
      %v1222 = vunpack.c.l.b16 %v388
      %v1223 = vunpack.c.l.b16 %v389
      %v1224 = vpack.c.b16 %v1193, %v1192
      %v1225 = vpack.c.b16 %v1195, %v1194
      %v1226 = vpack.c.b16 %v1197, %v1196
      %v1227 = vpack.c.b16 %v1199, %v1198
      %v1228 = vpack.c.b16 %v1201, %v1200
      %v1229 = vpack.c.b16 %v1203, %v1202
      %v1230 = vpack.c.b16 %v1205, %v1204
      %v1231 = vpack.c.b16 %v1207, %v1206
      %v1232 = vpack.c.b16 %v1209, %v1208
      %v1233 = vpack.c.b16 %v1211, %v1210
      %v1234 = vpack.c.b16 %v1213, %v1212
      %v1235 = vpack.c.b16 %v1215, %v1214
      %v1236 = vpack.c.b16 %v1217, %v1216
      %v1237 = vpack.c.b16 %v1219, %v1218
      %v1238 = vpack.c.b16 %v1221, %v1220
      %v1239 = vpack.c.b16 %v1223, %v1222
      %v1264 = vunpack.c.l.b16 %v390
      %v1265 = vunpack.c.l.b16 %v391
      %v1266 = vunpack.c.l.b16 %v392
      %v1267 = vunpack.c.l.b16 %v393
      %v1268 = vunpack.c.l.b16 %v394
      %v1269 = vunpack.c.l.b16 %v395
      %v1270 = vunpack.c.l.b16 %v396
      %v1271 = vunpack.c.l.b16 %v397
      %v1272 = vpack.c.b16 %v1264, %v1264
      %v1273 = vpack.c.b16 %v1265, %v1265
      %v1274 = vpack.c.b16 %v1266, %v1266
      %v1275 = vpack.c.b16 %v1267, %v1267
      %v1276 = vpack.c.b16 %v1268, %v1268
      %v1277 = vpack.c.b16 %v1269, %v1269
      %v1278 = vpack.c.b16 %v1270, %v1270
      %v1279 = vpack.c.b16 %v1271, %v1271
      %v1281 = vshrl.u32 %v1224, 16
      %v1283 = vshll.u32 %v1224, 16
      %v1285 = vrot.slane %v1283, 1
      %v1286 = vor.u32 %v1281, %v1285
      %v1288 = vshll.u32 %v1225, 16
      %v1290 = vrot.slane %v1288, 1
      %v1291 = vsel %vm526, %v1286, %v1290
      %v1292 = vshrl.u32 %v1225, 16
      %v1294 = vor.u32 %v1292, %v1290
      %v1296 = vshll.u32 %v1272, 16
      %v1298 = vrot.slane %v1296, 1
      %v1299 = vsel %vm526, %v1294, %v1298
      %v1301 = vshrl.u32 %v1226, 16
      %v1303 = vshll.u32 %v1226, 16
      %v1305 = vrot.slane %v1303, 1
      %v1306 = vor.u32 %v1301, %v1305
      %v1308 = vshll.u32 %v1227, 16
      %v1310 = vrot.slane %v1308, 1
      %v1311 = vsel %vm526, %v1306, %v1310
      %v1312 = vshrl.u32 %v1227, 16
      %v1314 = vor.u32 %v1312, %v1310
      %v1316 = vshll.u32 %v1273, 16
      %v1318 = vrot.slane %v1316, 1
      %v1319 = vsel %vm526, %v1314, %v1318
      %v1321 = vshrl.u32 %v1228, 16
      %v1323 = vshll.u32 %v1228, 16
      %v1325 = vrot.slane %v1323, 1
      %v1326 = vor.u32 %v1321, %v1325
      %v1328 = vshll.u32 %v1229, 16
      %v1330 = vrot.slane %v1328, 1
      %v1331 = vsel %vm526, %v1326, %v1330
      %v1332 = vshrl.u32 %v1229, 16
      %v1334 = vor.u32 %v1332, %v1330
      %v1336 = vshll.u32 %v1274, 16
      %v1338 = vrot.slane %v1336, 1
      %v1339 = vsel %vm526, %v1334, %v1338
      %v1341 = vshrl.u32 %v1230, 16
      %v1343 = vshll.u32 %v1230, 16
      %v1345 = vrot.slane %v1343, 1
      %v1346 = vor.u32 %v1341, %v1345
      %v1348 = vshll.u32 %v1231, 16
      %v1350 = vrot.slane %v1348, 1
      %v1351 = vsel %vm526, %v1346, %v1350
      %v1352 = vshrl.u32 %v1231, 16
      %v1354 = vor.u32 %v1352, %v1350
      %v1356 = vshll.u32 %v1275, 16
      %v1358 = vrot.slane %v1356, 1
      %v1359 = vsel %vm526, %v1354, %v1358
      %v1361 = vshrl.u32 %v1232, 16
      %v1363 = vshll.u32 %v1232, 16
      %v1365 = vrot.slane %v1363, 1
      %v1366 = vor.u32 %v1361, %v1365
      %v1368 = vshll.u32 %v1233, 16
      %v1370 = vrot.slane %v1368, 1
      %v1371 = vsel %vm526, %v1366, %v1370
      %v1372 = vshrl.u32 %v1233, 16
      %v1374 = vor.u32 %v1372, %v1370
      %v1376 = vshll.u32 %v1276, 16
      %v1378 = vrot.slane %v1376, 1
      %v1379 = vsel %vm526, %v1374, %v1378
      %v1381 = vshrl.u32 %v1234, 16
      %v1383 = vshll.u32 %v1234, 16
      %v1385 = vrot.slane %v1383, 1
      %v1386 = vor.u32 %v1381, %v1385
      %v1388 = vshll.u32 %v1235, 16
      %v1390 = vrot.slane %v1388, 1
      %v1391 = vsel %vm526, %v1386, %v1390
      %v1392 = vshrl.u32 %v1235, 16
      %v1394 = vor.u32 %v1392, %v1390
      %v1396 = vshll.u32 %v1277, 16
      %v1398 = vrot.slane %v1396, 1
      %v1399 = vsel %vm526, %v1394, %v1398
      %v1401 = vshrl.u32 %v1236, 16
      %v1403 = vshll.u32 %v1236, 16
      %v1405 = vrot.slane %v1403, 1
      %v1406 = vor.u32 %v1401, %v1405
      %v1408 = vshll.u32 %v1237, 16
      %v1410 = vrot.slane %v1408, 1
      %v1411 = vsel %vm526, %v1406, %v1410
      %v1412 = vshrl.u32 %v1237, 16
      %v1414 = vor.u32 %v1412, %v1410
      %v1416 = vshll.u32 %v1278, 16
      %v1418 = vrot.slane %v1416, 1
      %v1419 = vsel %vm526, %v1414, %v1418
      %v1421 = vshrl.u32 %v1238, 16
      %v1423 = vshll.u32 %v1238, 16
      %v1425 = vrot.slane %v1423, 1
      %v1426 = vor.u32 %v1421, %v1425
      %v1428 = vshll.u32 %v1239, 16
      %v1430 = vrot.slane %v1428, 1
      %v1431 = vsel %vm526, %v1426, %v1430
      %v1432 = vshrl.u32 %v1239, 16
      %v1434 = vor.u32 %v1432, %v1430
      %v1436 = vshll.u32 %v1279, 16
      %v1438 = vrot.slane %v1436, 1
      %v1439 = vsel %vm526, %v1434, %v1438
      %v1464 = vunpack.c.l.b16 %v398
      %v1465 = vunpack.c.l.b16 %v399
      %v1466 = vunpack.c.l.b16 %v400
      %v1467 = vunpack.c.l.b16 %v401
      %v1468 = vunpack.c.l.b16 %v402
      %v1469 = vunpack.c.l.b16 %v403
      %v1470 = vunpack.c.l.b16 %v404
      %v1471 = vunpack.c.l.b16 %v405
      %v1472 = vpack.c.b16 %v1193, %v1464
      %v1473 = vpack.c.b16 %v1197, %v1465
      %v1474 = vpack.c.b16 %v1201, %v1466
      %v1475 = vpack.c.b16 %v1205, %v1467
      %v1476 = vpack.c.b16 %v1209, %v1468
      %v1477 = vpack.c.b16 %v1213, %v1469
      %v1478 = vpack.c.b16 %v1217, %v1470
      %v1479 = vpack.c.b16 %v1221, %v1471
      %v1480 = vrot.slane %v1472, 1
      %v1481 = vrot.slane %v1225, 1
      %v1482 = vsel %vm727, %v1480, %v1481
      %v1483 = vrot.slane %v1272, 1
      %v1484 = vsel %vm727, %v1481, %v1483
      %v1485 = vrot.slane %v1473, 1
      %v1486 = vrot.slane %v1227, 1
      %v1487 = vsel %vm727, %v1485, %v1486
      %v1488 = vrot.slane %v1273, 1
      %v1489 = vsel %vm727, %v1486, %v1488
      %v1490 = vrot.slane %v1474, 1
      %v1491 = vrot.slane %v1229, 1
      %v1492 = vsel %vm727, %v1490, %v1491
      %v1493 = vrot.slane %v1274, 1
      %v1494 = vsel %vm727, %v1491, %v1493
      %v1495 = vrot.slane %v1475, 1
      %v1496 = vrot.slane %v1231, 1
      %v1497 = vsel %vm727, %v1495, %v1496
      %v1498 = vrot.slane %v1275, 1
      %v1499 = vsel %vm727, %v1496, %v1498
      %v1500 = vrot.slane %v1476, 1
      %v1501 = vrot.slane %v1233, 1
      %v1502 = vsel %vm727, %v1500, %v1501
      %v1503 = vrot.slane %v1276, 1
      %v1504 = vsel %vm727, %v1501, %v1503
      %v1505 = vrot.slane %v1477, 1
      %v1506 = vrot.slane %v1235, 1
      %v1507 = vsel %vm727, %v1505, %v1506
      %v1508 = vrot.slane %v1277, 1
      %v1509 = vsel %vm727, %v1506, %v1508
      %v1510 = vrot.slane %v1478, 1
      %v1511 = vrot.slane %v1237, 1
      %v1512 = vsel %vm727, %v1510, %v1511
      %v1513 = vrot.slane %v1278, 1
      %v1514 = vsel %vm727, %v1511, %v1513
      %v1515 = vrot.slane %v1479, 1
      %v1516 = vrot.slane %v1239, 1
      %v1517 = vsel %vm727, %v1515, %v1516
      %v1518 = vrot.slane %v1279, 1
      %v1519 = vsel %vm727, %v1516, %v1518
      %v1536 = vld [vmem:[%s1] sm:$0xf]
      %v1537 = vld [vmem:[%s1 + $0x4] sm:$0xf]
      %v1538 = vld [vmem:[%s1 + $0x8] sm:$0xf]
      %v1539 = vld [vmem:[%s1 + $0xc] sm:$0xf]
      %v1540 = vld [vmem:[%s1 + $0x10] sm:$0xf]
      %v1541 = vld [vmem:[%s1 + $0x14] sm:$0xf]
      %v1542 = vld [vmem:[%s1 + $0x18] sm:$0xf]
      %v1543 = vld [vmem:[%s1 + $0x1c] sm:$0xf]
      %v1544 = vld [vmem:[%s1 + $0x20] sm:$0xf]
      %v1545 = vld [vmem:[%s1 + $0x24] sm:$0xf]
      %v1546 = vld [vmem:[%s1 + $0x28] sm:$0xf]
      %v1547 = vld [vmem:[%s1 + $0x2c] sm:$0xf]
      %v1548 = vld [vmem:[%s1 + $0x30] sm:$0xf]
      %v1549 = vld [vmem:[%s1 + $0x34] sm:$0xf]
      %v1550 = vld [vmem:[%s1 + $0x38] sm:$0xf]
      %v1551 = vld [vmem:[%s1 + $0x3c] sm:$0xf]
      %v1552 = vld [vmem:[%s1 + $0x40] sm:$0xf]
      %v1553 = vld [vmem:[%s1 + $0x44] sm:$0xf]
      %v1554 = vld [vmem:[%s1 + $0x48] sm:$0xf]
      %v1555 = vld [vmem:[%s1 + $0x4c] sm:$0xf]
      %v1556 = vld [vmem:[%s1 + $0x50] sm:$0xf]
      %v1557 = vld [vmem:[%s1 + $0x54] sm:$0xf]
      %v1558 = vld [vmem:[%s1 + $0x58] sm:$0xf]
      %v1559 = vld [vmem:[%s1 + $0x5c] sm:$0xf]
      %v1560 = vld [vmem:[%s1 + $0x60] sm:$0xf]
      %v1561 = vld [vmem:[%s1 + $0x64] sm:$0xf]
      %v1562 = vld [vmem:[%s1 + $0x68] sm:$0xf]
      %v1563 = vld [vmem:[%s1 + $0x6c] sm:$0xf]
      %v1564 = vld [vmem:[%s1 + $0x70] sm:$0xf]
      %v1565 = vld [vmem:[%s1 + $0x74] sm:$0xf]
      %v1566 = vld [vmem:[%s1 + $0x78] sm:$0xf]
      %v1567 = vld [vmem:[%s1 + $0x7c] sm:$0xf]
      %v1568 = vld [vmem:[%s1 + $0x80] sm:$0xf]
      %v1569 = vld [vmem:[%s1 + $0x84] sm:$0xf]
      %v1570 = vld [vmem:[%s1 + $0x88] sm:$0xf]
      %v1571 = vld [vmem:[%s1 + $0x8c] sm:$0xf]
      %v1572 = vld [vmem:[%s1 + $0x90] sm:$0xf]
      %v1573 = vld [vmem:[%s1 + $0x94] sm:$0xf]
      %v1574 = vld [vmem:[%s1 + $0x98] sm:$0xf]
      %v1575 = vld [vmem:[%s1 + $0x9c] sm:$0xf]
      %v1576 = vld [vmem:[%s1 + $0xa0] sm:$0xf]
      %v1577 = vld [vmem:[%s1 + $0xa4] sm:$0xf]
      %v1578 = vld [vmem:[%s1 + $0xa8] sm:$0xf]
      %v1579 = vld [vmem:[%s1 + $0xac] sm:$0xf]
      %v1580 = vld [vmem:[%s1 + $0xb0] sm:$0xf]
      %v1581 = vld [vmem:[%s1 + $0xb4] sm:$0xf]
      %v1582 = vld [vmem:[%s1 + $0xb8] sm:$0xf]
      %v1583 = vld [vmem:[%s1 + $0xbc] sm:$0xf]
      %v1584 = vld [vmem:[%s1 + $0xc0] sm:$0xf]
      %v1585 = vld [vmem:[%s1 + $0xc4] sm:$0xf]
      %v1586 = vld [vmem:[%s1 + $0xc8] sm:$0xf]
      %v1587 = vld [vmem:[%s1 + $0xcc] sm:$0xf]
      %v1588 = vld [vmem:[%s1 + $0xd0] sm:$0xf]
      %v1589 = vld [vmem:[%s1 + $0xd4] sm:$0xf]
      %v1590 = vld [vmem:[%s1 + $0xd8] sm:$0xf]
      %v1591 = vld [vmem:[%s1 + $0xdc] sm:$0xf]
      %v1592 = vld [vmem:[%s1 + $0xe0] sm:$0xf]
      %v1593 = vld [vmem:[%s1 + $0xe4] sm:$0xf]
      %v1594 = vld [vmem:[%s1 + $0xe8] sm:$0xf]
      %v1595 = vld [vmem:[%s1 + $0xec] sm:$0xf]
      %v1596 = vld [vmem:[%s1 + $0xf0] sm:$0xf]
      %v1597 = vld [vmem:[%s1 + $0xf4] sm:$0xf]
      %v1598 = vld [vmem:[%s1 + $0xf8] sm:$0xf]
      %v1599 = vld [vmem:[%s1 + $0xfc] sm:$0xf]
      %v1600 = vld [vmem:[%s1 + $0x100] sm:$0xf]
      %v1601 = vld [vmem:[%s1 + $0x104] sm:$0xf]
      %v1602 = vld [vmem:[%s1 + $0x108] sm:$0xf]
      %v1603 = vld [vmem:[%s1 + $0x10c] sm:$0xf]
      %v1604 = vld [vmem:[%s1 + $0x110] sm:$0xf]
      %v1605 = vld [vmem:[%s1 + $0x114] sm:$0xf]
      %v1606 = vld [vmem:[%s1 + $0x118] sm:$0xf]
      %v1607 = vld [vmem:[%s1 + $0x11c] sm:$0xf]
      %v1608 = vld [vmem:[%s1 + $0x120] sm:$0xf]
      %v1609 = vld [vmem:[%s1 + $0x124] sm:$0xf]
      %v1610 = vld [vmem:[%s1 + $0x128] sm:$0xf]
      %v1611 = vld [vmem:[%s1 + $0x12c] sm:$0xf]
      %v1612 = vld [vmem:[%s1 + $0x130] sm:$0xf]
      %v1613 = vld [vmem:[%s1 + $0x134] sm:$0xf]
      %v1614 = vld [vmem:[%s1 + $0x138] sm:$0xf]
      %v1615 = vld [vmem:[%s1 + $0x13c] sm:$0xf]
      %v1616 = vld [vmem:[%s1 + $0x140] sm:$0xf]
      %v1617 = vld [vmem:[%s1 + $0x144] sm:$0xf]
      %v1618 = vld [vmem:[%s1 + $0x148] sm:$0xf]
      %v1619 = vld [vmem:[%s1 + $0x14c] sm:$0xf]
      %v1620 = vld [vmem:[%s1 + $0x150] sm:$0xf]
      %v1621 = vld [vmem:[%s1 + $0x154] sm:$0xf]
      %v1622 = vld [vmem:[%s1 + $0x158] sm:$0xf]
      %v1623 = vld [vmem:[%s1 + $0x15c] sm:$0xf]
      %v1624 = vld [vmem:[%s1 + $0x160] sm:$0xf]
      %v1625 = vld [vmem:[%s1 + $0x164] sm:$0xf]
      %v1626 = vld [vmem:[%s1 + $0x168] sm:$0xf]
      %v1627 = vld [vmem:[%s1 + $0x16c] sm:$0xf]
      %v1628 = vld [vmem:[%s1 + $0x170] sm:$0xf]
      %v1629 = vld [vmem:[%s1 + $0x174] sm:$0xf]
      %v1630 = vld [vmem:[%s1 + $0x178] sm:$0xf]
      %v1631 = vld [vmem:[%s1 + $0x17c] sm:$0xf]
      %v1632 = vld [vmem:[%s1 + $0x180] sm:$0xf]
      %v1633 = vld [vmem:[%s1 + $0x184] sm:$0xf]
      %v1634 = vld [vmem:[%s1 + $0x188] sm:$0xf]
      %v1635 = vld [vmem:[%s1 + $0x18c] sm:$0xf]
      %v1636 = vld [vmem:[%s1 + $0x190] sm:$0xf]
      %v1637 = vld [vmem:[%s1 + $0x194] sm:$0xf]
      %v1638 = vld [vmem:[%s1 + $0x198] sm:$0xf]
      %v1639 = vld [vmem:[%s1 + $0x19c] sm:$0xf]
      %v1640 = vld [vmem:[%s1 + $0x1a0] sm:$0xf]
      %v1641 = vld [vmem:[%s1 + $0x1a4] sm:$0xf]
      %v1642 = vld [vmem:[%s1 + $0x1a8] sm:$0xf]
      %v1643 = vld [vmem:[%s1 + $0x1ac] sm:$0xf]
      %v1644 = vld [vmem:[%s1 + $0x1b0] sm:$0xf]
      %v1645 = vld [vmem:[%s1 + $0x1b4] sm:$0xf]
      %v1646 = vld [vmem:[%s1 + $0x1b8] sm:$0xf]
      %v1647 = vld [vmem:[%s1 + $0x1bc] sm:$0xf]
      %v1648 = vld [vmem:[%s1 + $0x1c0] sm:$0xf]
      %v1649 = vld [vmem:[%s1 + $0x1c4] sm:$0xf]
      %v1650 = vld [vmem:[%s1 + $0x1c8] sm:$0xf]
      %v1651 = vld [vmem:[%s1 + $0x1cc] sm:$0xf]
      %v1652 = vld [vmem:[%s1 + $0x1d0] sm:$0xf]
      %v1653 = vld [vmem:[%s1 + $0x1d4] sm:$0xf]
      %v1654 = vld [vmem:[%s1 + $0x1d8] sm:$0xf]
      %v1655 = vld [vmem:[%s1 + $0x1dc] sm:$0xf]
      %v1656 = vld [vmem:[%s1 + $0x1e0] sm:$0xf]
      %v1657 = vld [vmem:[%s1 + $0x1e4] sm:$0xf]
      %v1658 = vld [vmem:[%s1 + $0x1e8] sm:$0xf]
      %v1659 = vld [vmem:[%s1 + $0x1ec] sm:$0xf]
      %v1660 = vld [vmem:[%s1 + $0x1f0] sm:$0xf]
      %v1661 = vld [vmem:[%s1 + $0x1f4] sm:$0xf]
      %v1662 = vld [vmem:[%s1 + $0x1f8] sm:$0xf]
      %v1663 = vld [vmem:[%s1 + $0x1fc] sm:$0xf]
      %v1664 = vld [vmem:[%s1 + $0x200] sm:$0xf]
      %v1665 = vld [vmem:[%s1 + $0x204] sm:$0xf]
      %v1666 = vld [vmem:[%s1 + $0x208] sm:$0xf]
      %v1667 = vld [vmem:[%s1 + $0x20c] sm:$0xf]
      %v1668 = vld [vmem:[%s1 + $0x210] sm:$0xf]
      %v1669 = vld [vmem:[%s1 + $0x214] sm:$0xf]
      %v1670 = vld [vmem:[%s1 + $0x218] sm:$0xf]
      %v1671 = vld [vmem:[%s1 + $0x21c] sm:$0xf]
      %v1672 = vld [vmem:[%s1 + $0x220] sm:$0xf]
      %v1673 = vld [vmem:[%s1 + $0x224] sm:$0xf]
      %v1674 = vld [vmem:[%s1 + $0x228] sm:$0xf]
      %v1675 = vld [vmem:[%s1 + $0x22c] sm:$0xf]
      %v1676 = vld [vmem:[%s1 + $0x230] sm:$0xf]
      %v1677 = vld [vmem:[%s1 + $0x234] sm:$0xf]
      %v1678 = vld [vmem:[%s1 + $0x238] sm:$0xf]
      %v1679 = vld [vmem:[%s1 + $0x23c] sm:$0xf]
      %v1680 = vld [vmem:[%s2] sm:$0x1]
      %v1682 = vperm.slane %v1680, 0
      %v1828 = vunpack.c.l.b16 %v1536
      %v1829 = vunpack.c.l.b16 %v1537
      %v1830 = vunpack.c.l.b16 %v1538
      %v1831 = vunpack.c.l.b16 %v1539
      %v1832 = vunpack.c.l.b16 %v1540
      %v1833 = vunpack.c.l.b16 %v1541
      %v1834 = vunpack.c.l.b16 %v1542
      %v1835 = vunpack.c.l.b16 %v1543
      %v1836 = vunpack.c.l.b16 %v1544
      %v1837 = vunpack.c.l.b16 %v1545
      %v1838 = vunpack.c.l.b16 %v1546
      %v1839 = vunpack.c.l.b16 %v1547
      %v1840 = vunpack.c.l.b16 %v1548
      %v1841 = vunpack.c.l.b16 %v1549
      %v1842 = vunpack.c.l.b16 %v1550
      %v1843 = vunpack.c.l.b16 %v1551
      %v1844 = vunpack.c.l.b16 %v1552
      %v1845 = vunpack.c.l.b16 %v1553
      %v1846 = vunpack.c.l.b16 %v1554
      %v1847 = vunpack.c.l.b16 %v1555
      %v1848 = vunpack.c.l.b16 %v1556
      %v1849 = vunpack.c.l.b16 %v1557
      %v1850 = vunpack.c.l.b16 %v1558
      %v1851 = vunpack.c.l.b16 %v1559
      %v1852 = vunpack.c.l.b16 %v1560
      %v1853 = vunpack.c.l.b16 %v1561
      %v1854 = vunpack.c.l.b16 %v1562
      %v1855 = vunpack.c.l.b16 %v1563
      %v1856 = vunpack.c.l.b16 %v1564
      %v1857 = vunpack.c.l.b16 %v1565
      %v1858 = vunpack.c.l.b16 %v1566
      %v1859 = vunpack.c.l.b16 %v1567
      %v1860 = vunpack.c.l.b16 %v1568
      %v1861 = vunpack.c.l.b16 %v1569
      %v1862 = vunpack.c.l.b16 %v1570
      %v1863 = vunpack.c.l.b16 %v1571
      %v1864 = vunpack.c.l.b16 %v1572
      %v1865 = vunpack.c.l.b16 %v1573
      %v1866 = vunpack.c.l.b16 %v1574
      %v1867 = vunpack.c.l.b16 %v1575
      %v1868 = vunpack.c.l.b16 %v1576
      %v1869 = vunpack.c.l.b16 %v1577
      %v1870 = vunpack.c.l.b16 %v1578
      %v1871 = vunpack.c.l.b16 %v1579
      %v1872 = vunpack.c.l.b16 %v1580
      %v1873 = vunpack.c.l.b16 %v1581
      %v1874 = vunpack.c.l.b16 %v1582
      %v1875 = vunpack.c.l.b16 %v1583
      %v1876 = vunpack.c.l.b16 %v1584
      %v1877 = vunpack.c.l.b16 %v1585
      %v1878 = vunpack.c.l.b16 %v1586
      %v1879 = vunpack.c.l.b16 %v1587
      %v1880 = vunpack.c.l.b16 %v1588
      %v1881 = vunpack.c.l.b16 %v1589
      %v1882 = vunpack.c.l.b16 %v1590
      %v1883 = vunpack.c.l.b16 %v1591
      %v1884 = vunpack.c.l.b16 %v1592
      %v1885 = vunpack.c.l.b16 %v1593
      %v1886 = vunpack.c.l.b16 %v1594
      %v1887 = vunpack.c.l.b16 %v1595
      %v1888 = vunpack.c.l.b16 %v1596
      %v1889 = vunpack.c.l.b16 %v1597
      %v1890 = vunpack.c.l.b16 %v1598
      %v1891 = vunpack.c.l.b16 %v1599
      %v1892 = vunpack.c.l.b16 %v1600
      %v1893 = vunpack.c.l.b16 %v1601
      %v1894 = vunpack.c.l.b16 %v1602
      %v1895 = vunpack.c.l.b16 %v1603
      %v1896 = vunpack.c.l.b16 %v1604
      %v1897 = vunpack.c.l.b16 %v1605
      %v1898 = vunpack.c.l.b16 %v1606
      %v1899 = vunpack.c.l.b16 %v1607
      %v1900 = vunpack.c.l.b16 %v1608
      %v1901 = vunpack.c.l.b16 %v1609
      %v1902 = vunpack.c.l.b16 %v1610
      %v1903 = vunpack.c.l.b16 %v1611
      %v1904 = vunpack.c.l.b16 %v1612
      %v1905 = vunpack.c.l.b16 %v1613
      %v1906 = vunpack.c.l.b16 %v1614
      %v1907 = vunpack.c.l.b16 %v1615
      %v1908 = vunpack.c.l.b16 %v1616
      %v1909 = vunpack.c.l.b16 %v1617
      %v1910 = vunpack.c.l.b16 %v1618
      %v1911 = vunpack.c.l.b16 %v1619
      %v1912 = vunpack.c.l.b16 %v1620
      %v1913 = vunpack.c.l.b16 %v1621
      %v1914 = vunpack.c.l.b16 %v1622
      %v1915 = vunpack.c.l.b16 %v1623
      %v1916 = vunpack.c.l.b16 %v1624
      %v1917 = vunpack.c.l.b16 %v1625
      %v1918 = vunpack.c.l.b16 %v1626
      %v1919 = vunpack.c.l.b16 %v1627
      %v1920 = vunpack.c.l.b16 %v1628
      %v1921 = vunpack.c.l.b16 %v1629
      %v1922 = vunpack.c.l.b16 %v1630
      %v1923 = vunpack.c.l.b16 %v1631
      %v1924 = vunpack.c.l.b16 %v1632
      %v1925 = vunpack.c.l.b16 %v1633
      %v1926 = vunpack.c.l.b16 %v1634
      %v1927 = vunpack.c.l.b16 %v1635
      %v1928 = vunpack.c.l.b16 %v1636
      %v1929 = vunpack.c.l.b16 %v1637
      %v1930 = vunpack.c.l.b16 %v1638
      %v1931 = vunpack.c.l.b16 %v1639
      %v1932 = vunpack.c.l.b16 %v1640
      %v1933 = vunpack.c.l.b16 %v1641
      %v1934 = vunpack.c.l.b16 %v1642
      %v1935 = vunpack.c.l.b16 %v1643
      %v1936 = vunpack.c.l.b16 %v1644
      %v1937 = vunpack.c.l.b16 %v1645
      %v1938 = vunpack.c.l.b16 %v1646
      %v1939 = vunpack.c.l.b16 %v1647
      %v1940 = vunpack.c.l.b16 %v1648
      %v1941 = vunpack.c.l.b16 %v1649
      %v1942 = vunpack.c.l.b16 %v1650
      %v1943 = vunpack.c.l.b16 %v1651
      %v1944 = vunpack.c.l.b16 %v1652
      %v1945 = vunpack.c.l.b16 %v1653
      %v1946 = vunpack.c.l.b16 %v1654
      %v1947 = vunpack.c.l.b16 %v1655
      %v1948 = vunpack.c.l.b16 %v1656
      %v1949 = vunpack.c.l.b16 %v1657
      %v1950 = vunpack.c.l.b16 %v1658
      %v1951 = vunpack.c.l.b16 %v1659
      %v1952 = vunpack.c.l.b16 %v1660
      %v1953 = vunpack.c.l.b16 %v1661
      %v1954 = vunpack.c.l.b16 %v1662
      %v1955 = vunpack.c.l.b16 %v1663
      %v1956 = vunpack.c.l.b16 %v1664
      %v1957 = vunpack.c.l.b16 %v1665
      %v1958 = vunpack.c.l.b16 %v1666
      %v1959 = vunpack.c.l.b16 %v1667
      %v1960 = vunpack.c.l.b16 %v1668
      %v1961 = vunpack.c.l.b16 %v1669
      %v1962 = vunpack.c.l.b16 %v1670
      %v1963 = vunpack.c.l.b16 %v1671
      %v1964 = vunpack.c.l.b16 %v1672
      %v1965 = vunpack.c.l.b16 %v1673
      %v1966 = vunpack.c.l.b16 %v1674
      %v1967 = vunpack.c.l.b16 %v1675
      %v1968 = vunpack.c.l.b16 %v1676
      %v1969 = vunpack.c.l.b16 %v1677
      %v1970 = vunpack.c.l.b16 %v1678
      %v1971 = vunpack.c.l.b16 %v1679
      %v1972 = vpack.c.b16 %v1829, %v1828
      %v1973 = vpack.c.b16 %v1831, %v1830
      %v1974 = vpack.c.b16 %v1833, %v1832
      %v1975 = vpack.c.b16 %v1835, %v1834
      %v1976 = vpack.c.b16 %v1837, %v1836
      %v1977 = vpack.c.b16 %v1839, %v1838
      %v1978 = vpack.c.b16 %v1841, %v1840
      %v1979 = vpack.c.b16 %v1843, %v1842
      %v1980 = vpack.c.b16 %v1845, %v1844
      %v1981 = vpack.c.b16 %v1847, %v1846
      %v1982 = vpack.c.b16 %v1849, %v1848
      %v1983 = vpack.c.b16 %v1851, %v1850
      %v1984 = vpack.c.b16 %v1853, %v1852
      %v1985 = vpack.c.b16 %v1855, %v1854
      %v1986 = vpack.c.b16 %v1857, %v1856
      %v1987 = vpack.c.b16 %v1859, %v1858
      %v1988 = vpack.c.b16 %v1861, %v1860
      %v1989 = vpack.c.b16 %v1863, %v1862
      %v1990 = vpack.c.b16 %v1865, %v1864
      %v1991 = vpack.c.b16 %v1867, %v1866
      %v1992 = vpack.c.b16 %v1869, %v1868
      %v1993 = vpack.c.b16 %v1871, %v1870
      %v1994 = vpack.c.b16 %v1873, %v1872
      %v1995 = vpack.c.b16 %v1875, %v1874
      %v1996 = vpack.c.b16 %v1877, %v1876
      %v1997 = vpack.c.b16 %v1879, %v1878
      %v1998 = vpack.c.b16 %v1881, %v1880
      %v1999 = vpack.c.b16 %v1883, %v1882
      %v2000 = vpack.c.b16 %v1885, %v1884
      %v2001 = vpack.c.b16 %v1887, %v1886
      %v2002 = vpack.c.b16 %v1889, %v1888
      %v2003 = vpack.c.b16 %v1891, %v1890
      %v2004 = vpack.c.b16 %v1893, %v1892
      %v2005 = vpack.c.b16 %v1895, %v1894
      %v2006 = vpack.c.b16 %v1897, %v1896
      %v2007 = vpack.c.b16 %v1899, %v1898
      %v2008 = vpack.c.b16 %v1901, %v1900
      %v2009 = vpack.c.b16 %v1903, %v1902
      %v2010 = vpack.c.b16 %v1905, %v1904
      %v2011 = vpack.c.b16 %v1907, %v1906
      %v2012 = vpack.c.b16 %v1909, %v1908
      %v2013 = vpack.c.b16 %v1911, %v1910
      %v2014 = vpack.c.b16 %v1913, %v1912
      %v2015 = vpack.c.b16 %v1915, %v1914
      %v2016 = vpack.c.b16 %v1917, %v1916
      %v2017 = vpack.c.b16 %v1919, %v1918
      %v2018 = vpack.c.b16 %v1921, %v1920
      %v2019 = vpack.c.b16 %v1923, %v1922
      %v2020 = vpack.c.b16 %v1925, %v1924
      %v2021 = vpack.c.b16 %v1927, %v1926
      %v2022 = vpack.c.b16 %v1929, %v1928
      %v2023 = vpack.c.b16 %v1931, %v1930
      %v2024 = vpack.c.b16 %v1933, %v1932
      %v2025 = vpack.c.b16 %v1935, %v1934
      %v2026 = vpack.c.b16 %v1937, %v1936
      %v2027 = vpack.c.b16 %v1939, %v1938
      %v2028 = vpack.c.b16 %v1941, %v1940
      %v2029 = vpack.c.b16 %v1943, %v1942
      %v2030 = vpack.c.b16 %v1945, %v1944
      %v2031 = vpack.c.b16 %v1947, %v1946
      %v2032 = vpack.c.b16 %v1949, %v1948
      %v2033 = vpack.c.b16 %v1951, %v1950
      %v2034 = vpack.c.b16 %v1953, %v1952
      %v2035 = vpack.c.b16 %v1955, %v1954
      %v2036 = vpack.c.b16 %v1957, %v1956
      %v2037 = vpack.c.b16 %v1959, %v1958
      %v2038 = vpack.c.b16 %v1961, %v1960
      %v2039 = vpack.c.b16 %v1963, %v1962
      %v2040 = vpack.c.b16 %v1965, %v1964
      %v2041 = vpack.c.b16 %v1967, %v1966
      %v2042 = vpack.c.b16 %v1969, %v1968
      %v2043 = vpack.c.b16 %v1971, %v1970
      %2116 = vmatpush.bf16.msra.mxu0 %v1979
      %2117 = vmatpush.bf16.msra.mxu0 %v1978
      %2118 = vmatpush.bf16.msra.mxu0 %v1977
      %2119 = vmatpush.bf16.msra.mxu0 %v1976
      %2120 = vmatpush.bf16.msra.mxu0 %v1975
      %2121 = vmatpush.bf16.msra.mxu0 %v1974
      %2122 = vmatpush.bf16.msra.mxu0 %v1973
      %2123 = vmatpush.bf16.msra.mxu0 %v1972
      %2124 = vmatmul.bf16.gmra.mxu0 %v470
      %v2125 = vpop.f32.mrf.mxu0
      %v2126 = vadd.f32 %v1682, %v2125
      %v2127 = vpop.f32.mrf.mxu0
      %v2128 = vadd.f32 %v1682, %v2127
      %2129 = vmatmul.bf16.gmra.mxu0 %v471
      %v2130 = vpop.f32.mrf.mxu0
      %v2131 = vadd.f32 %v1682, %v2130
      %v2132 = vpop.f32.mrf.mxu0
      %v2133 = vadd.f32 %v1682, %v2132
      %2134 = vmatmul.bf16.gmra.mxu0 %v472
      %v2135 = vpop.f32.mrf.mxu0
      %v2136 = vadd.f32 %v1682, %v2135
      %v2137 = vpop.f32.mrf.mxu0
      %v2138 = vadd.f32 %v1682, %v2137
      %2139 = vmatmul.bf16.gmra.mxu0 %v473
      %v2140 = vpop.f32.mrf.mxu0
      %v2141 = vadd.f32 %v1682, %v2140
      %v2142 = vpop.f32.mrf.mxu0
      %v2143 = vadd.f32 %v1682, %v2142
      %2144 = vmatmul.bf16.gmra.mxu0 %v474
      %v2145 = vpop.f32.mrf.mxu0
      %v2146 = vadd.f32 %v1682, %v2145
      %v2147 = vpop.f32.mrf.mxu0
      %v2148 = vadd.f32 %v1682, %v2147
      %2149 = vmatmul.bf16.gmra.mxu0 %v475
      %v2150 = vpop.f32.mrf.mxu0
      %v2151 = vadd.f32 %v1682, %v2150
      %v2152 = vpop.f32.mrf.mxu0
      %v2153 = vadd.f32 %v1682, %v2152
      %2154 = vmatmul.bf16.gmra.mxu0 %v476
      %v2155 = vpop.f32.mrf.mxu0
      %v2156 = vadd.f32 %v1682, %v2155
      %v2157 = vpop.f32.mrf.mxu0
      %v2158 = vadd.f32 %v1682, %v2157
      %2159 = vmatmul.bf16.gmra.mxu0 %v477
      %v2160 = vpop.f32.mrf.mxu0
      %v2161 = vadd.f32 %v1682, %v2160
      %v2162 = vpop.f32.mrf.mxu0
      %v2163 = vadd.f32 %v1682, %v2162
      %2164 = vmatmul.bf16.gmra.mxu0 %v478
      %v2165 = vpop.f32.mrf.mxu0
      %v2166 = vadd.f32 %v1682, %v2165
      %v2167 = vpop.f32.mrf.mxu0
      %v2168 = vadd.f32 %v1682, %v2167
      %2169 = vmatmul.bf16.gmra.mxu0 %v479
      %v2170 = vpop.f32.mrf.mxu0
      %v2171 = vadd.f32 %v1682, %v2170
      %v2172 = vpop.f32.mrf.mxu0
      %v2173 = vadd.f32 %v1682, %v2172
      %2174 = vmatmul.bf16.gmra.mxu0 %v480
      %v2175 = vpop.f32.mrf.mxu0
      %v2176 = vadd.f32 %v1682, %v2175
      %v2177 = vpop.f32.mrf.mxu0
      %v2178 = vadd.f32 %v1682, %v2177
      %2179 = vmatmul.bf16.gmra.mxu0 %v481
      %v2180 = vpop.f32.mrf.mxu0
      %v2181 = vadd.f32 %v1682, %v2180
      %v2182 = vpop.f32.mrf.mxu0
      %v2183 = vadd.f32 %v1682, %v2182
      %2184 = vmatmul.bf16.gmra.mxu0 %v482
      %v2185 = vpop.f32.mrf.mxu0
      %v2186 = vadd.f32 %v1682, %v2185
      %v2187 = vpop.f32.mrf.mxu0
      %v2188 = vadd.f32 %v1682, %v2187
      %2189 = vmatmul.bf16.gmra.mxu0 %v483
      %v2190 = vpop.f32.mrf.mxu0
      %v2191 = vadd.f32 %v1682, %v2190
      %v2192 = vpop.f32.mrf.mxu0
      %v2193 = vadd.f32 %v1682, %v2192
      %2194 = vmatmul.bf16.gmra.mxu0 %v484
      %v2195 = vpop.f32.mrf.mxu0
      %v2196 = vadd.f32 %v1682, %v2195
      %v2197 = vpop.f32.mrf.mxu0
      %v2198 = vadd.f32 %v1682, %v2197
      %2199 = vmatmul.bf16.gmra.mxu0 %v485
      %v2200 = vpop.f32.mrf.mxu0
      %v2201 = vadd.f32 %v1682, %v2200
      %v2202 = vpop.f32.mrf.mxu0
      %v2203 = vadd.f32 %v1682, %v2202
      %2204 = vdwg.mxu0
      %2205 = vmatpush.bf16.msra.mxu0 %v1987
      %2206 = vmatpush.bf16.msra.mxu0 %v1986
      %2207 = vmatpush.bf16.msra.mxu0 %v1985
      %2208 = vmatpush.bf16.msra.mxu0 %v1984
      %2209 = vmatpush.bf16.msra.mxu0 %v1983
      %2210 = vmatpush.bf16.msra.mxu0 %v1982
      %2211 = vmatpush.bf16.msra.mxu0 %v1981
      %2212 = vmatpush.bf16.msra.mxu0 %v1980
      %2213 = vmatmul.bf16.gmra.mxu0 %v538
      %v2214 = vpop.f32.mrf.mxu0
      %v2215 = vadd.f32 %v2126, %v2214
      %v2216 = vpop.f32.mrf.mxu0
      %v2217 = vadd.f32 %v2128, %v2216
      %2218 = vmatmul.bf16.gmra.mxu0 %v546
      %v2219 = vpop.f32.mrf.mxu0
      %v2220 = vadd.f32 %v2131, %v2219
      %v2221 = vpop.f32.mrf.mxu0
      %v2222 = vadd.f32 %v2133, %v2221
      %2223 = vmatmul.bf16.gmra.mxu0 %v558
      %v2224 = vpop.f32.mrf.mxu0
      %v2225 = vadd.f32 %v2136, %v2224
      %v2226 = vpop.f32.mrf.mxu0
      %v2227 = vadd.f32 %v2138, %v2226
      %2228 = vmatmul.bf16.gmra.mxu0 %v566
      %v2229 = vpop.f32.mrf.mxu0
      %v2230 = vadd.f32 %v2141, %v2229
      %v2231 = vpop.f32.mrf.mxu0
      %v2232 = vadd.f32 %v2143, %v2231
      %2233 = vmatmul.bf16.gmra.mxu0 %v578
      %v2234 = vpop.f32.mrf.mxu0
      %v2235 = vadd.f32 %v2146, %v2234
      %v2236 = vpop.f32.mrf.mxu0
      %v2237 = vadd.f32 %v2148, %v2236
      %2238 = vmatmul.bf16.gmra.mxu0 %v586
      %v2239 = vpop.f32.mrf.mxu0
      %v2240 = vadd.f32 %v2151, %v2239
      %v2241 = vpop.f32.mrf.mxu0
      %v2242 = vadd.f32 %v2153, %v2241
      %2243 = vmatmul.bf16.gmra.mxu0 %v598
      %v2244 = vpop.f32.mrf.mxu0
      %v2245 = vadd.f32 %v2156, %v2244
      %v2246 = vpop.f32.mrf.mxu0
      %v2247 = vadd.f32 %v2158, %v2246
      %2248 = vmatmul.bf16.gmra.mxu0 %v606
      %v2249 = vpop.f32.mrf.mxu0
      %v2250 = vadd.f32 %v2161, %v2249
      %v2251 = vpop.f32.mrf.mxu0
      %v2252 = vadd.f32 %v2163, %v2251
      %2253 = vmatmul.bf16.gmra.mxu0 %v618
      %v2254 = vpop.f32.mrf.mxu0
      %v2255 = vadd.f32 %v2166, %v2254
      %v2256 = vpop.f32.mrf.mxu0
      %v2257 = vadd.f32 %v2168, %v2256
      %2258 = vmatmul.bf16.gmra.mxu0 %v626
      %v2259 = vpop.f32.mrf.mxu0
      %v2260 = vadd.f32 %v2171, %v2259
      %v2261 = vpop.f32.mrf.mxu0
      %v2262 = vadd.f32 %v2173, %v2261
      %2263 = vmatmul.bf16.gmra.mxu0 %v638
      %v2264 = vpop.f32.mrf.mxu0
      %v2265 = vadd.f32 %v2176, %v2264
      %v2266 = vpop.f32.mrf.mxu0
      %v2267 = vadd.f32 %v2178, %v2266
      %2268 = vmatmul.bf16.gmra.mxu0 %v646
      %v2269 = vpop.f32.mrf.mxu0
      %v2270 = vadd.f32 %v2181, %v2269
      %v2271 = vpop.f32.mrf.mxu0
      %v2272 = vadd.f32 %v2183, %v2271
      %2273 = vmatmul.bf16.gmra.mxu0 %v658
      %v2274 = vpop.f32.mrf.mxu0
      %v2275 = vadd.f32 %v2186, %v2274
      %v2276 = vpop.f32.mrf.mxu0
      %v2277 = vadd.f32 %v2188, %v2276
      %2278 = vmatmul.bf16.gmra.mxu0 %v666
      %v2279 = vpop.f32.mrf.mxu0
      %v2280 = vadd.f32 %v2191, %v2279
      %v2281 = vpop.f32.mrf.mxu0
      %v2282 = vadd.f32 %v2193, %v2281
      %2283 = vmatmul.bf16.gmra.mxu0 %v678
      %v2284 = vpop.f32.mrf.mxu0
      %v2285 = vadd.f32 %v2196, %v2284
      %v2286 = vpop.f32.mrf.mxu0
      %v2287 = vadd.f32 %v2198, %v2286
      %2288 = vmatmul.bf16.gmra.mxu0 %v686
      %v2289 = vpop.f32.mrf.mxu0
      %v2290 = vadd.f32 %v2201, %v2289
      %v2291 = vpop.f32.mrf.mxu0
      %v2292 = vadd.f32 %v2203, %v2291
      %2293 = vdwg.mxu0
      %2294 = vmatpush.bf16.msra.mxu0 %v1995
      %2295 = vmatpush.bf16.msra.mxu0 %v1994
      %2296 = vmatpush.bf16.msra.mxu0 %v1993
      %2297 = vmatpush.bf16.msra.mxu0 %v1992
      %2298 = vmatpush.bf16.msra.mxu0 %v1991
      %2299 = vmatpush.bf16.msra.mxu0 %v1990
      %2300 = vmatpush.bf16.msra.mxu0 %v1989
      %2301 = vmatpush.bf16.msra.mxu0 %v1988
      %2302 = vmatmul.bf16.gmra.mxu0 %v730
      %v2303 = vpop.f32.mrf.mxu0
      %v2304 = vadd.f32 %v2215, %v2303
      %v2305 = vpop.f32.mrf.mxu0
      %v2306 = vadd.f32 %v2217, %v2305
      %2307 = vmatmul.bf16.gmra.mxu0 %v732
      %v2308 = vpop.f32.mrf.mxu0
      %v2309 = vadd.f32 %v2220, %v2308
      %v2310 = vpop.f32.mrf.mxu0
      %v2311 = vadd.f32 %v2222, %v2310
      %2312 = vmatmul.bf16.gmra.mxu0 %v735
      %v2313 = vpop.f32.mrf.mxu0
      %v2314 = vadd.f32 %v2225, %v2313
      %v2315 = vpop.f32.mrf.mxu0
      %v2316 = vadd.f32 %v2227, %v2315
      %2317 = vmatmul.bf16.gmra.mxu0 %v737
      %v2318 = vpop.f32.mrf.mxu0
      %v2319 = vadd.f32 %v2230, %v2318
      %v2320 = vpop.f32.mrf.mxu0
      %v2321 = vadd.f32 %v2232, %v2320
      %2322 = vmatmul.bf16.gmra.mxu0 %v740
      %v2323 = vpop.f32.mrf.mxu0
      %v2324 = vadd.f32 %v2235, %v2323
      %v2325 = vpop.f32.mrf.mxu0
      %v2326 = vadd.f32 %v2237, %v2325
      %2327 = vmatmul.bf16.gmra.mxu0 %v742
      %v2328 = vpop.f32.mrf.mxu0
      %v2329 = vadd.f32 %v2240, %v2328
      %v2330 = vpop.f32.mrf.mxu0
      %v2331 = vadd.f32 %v2242, %v2330
      %2332 = vmatmul.bf16.gmra.mxu0 %v745
      %v2333 = vpop.f32.mrf.mxu0
      %v2334 = vadd.f32 %v2245, %v2333
      %v2335 = vpop.f32.mrf.mxu0
      %v2336 = vadd.f32 %v2247, %v2335
      %2337 = vmatmul.bf16.gmra.mxu0 %v747
      %v2338 = vpop.f32.mrf.mxu0
      %v2339 = vadd.f32 %v2250, %v2338
      %v2340 = vpop.f32.mrf.mxu0
      %v2341 = vadd.f32 %v2252, %v2340
      %2342 = vmatmul.bf16.gmra.mxu0 %v750
      %v2343 = vpop.f32.mrf.mxu0
      %v2344 = vadd.f32 %v2255, %v2343
      %v2345 = vpop.f32.mrf.mxu0
      %v2346 = vadd.f32 %v2257, %v2345
      %2347 = vmatmul.bf16.gmra.mxu0 %v752
      %v2348 = vpop.f32.mrf.mxu0
      %v2349 = vadd.f32 %v2260, %v2348
      %v2350 = vpop.f32.mrf.mxu0
      %v2351 = vadd.f32 %v2262, %v2350
      %2352 = vmatmul.bf16.gmra.mxu0 %v755
      %v2353 = vpop.f32.mrf.mxu0
      %v2354 = vadd.f32 %v2265, %v2353
      %v2355 = vpop.f32.mrf.mxu0
      %v2356 = vadd.f32 %v2267, %v2355
      %2357 = vmatmul.bf16.gmra.mxu0 %v757
      %v2358 = vpop.f32.mrf.mxu0
      %v2359 = vadd.f32 %v2270, %v2358
      %v2360 = vpop.f32.mrf.mxu0
      %v2361 = vadd.f32 %v2272, %v2360
      %2362 = vmatmul.bf16.gmra.mxu0 %v760
      %v2363 = vpop.f32.mrf.mxu0
      %v2364 = vadd.f32 %v2275, %v2363
      %v2365 = vpop.f32.mrf.mxu0
      %v2366 = vadd.f32 %v2277, %v2365
      %2367 = vmatmul.bf16.gmra.mxu0 %v762
      %v2368 = vpop.f32.mrf.mxu0
      %v2369 = vadd.f32 %v2280, %v2368
      %v2370 = vpop.f32.mrf.mxu0
      %v2371 = vadd.f32 %v2282, %v2370
      %2372 = vmatmul.bf16.gmra.mxu0 %v765
      %v2373 = vpop.f32.mrf.mxu0
      %v2374 = vadd.f32 %v2285, %v2373
      %v2375 = vpop.f32.mrf.mxu0
      %v2376 = vadd.f32 %v2287, %v2375
      %2377 = vmatmul.bf16.gmra.mxu0 %v767
      %v2378 = vpop.f32.mrf.mxu0
      %v2379 = vadd.f32 %v2290, %v2378
      %v2380 = vpop.f32.mrf.mxu0
      %v2381 = vadd.f32 %v2292, %v2380
      %2382 = vdwg.mxu0
      %2383 = vmatpush.bf16.msra.mxu0 %v2003
      %2384 = vmatpush.bf16.msra.mxu0 %v2002
      %2385 = vmatpush.bf16.msra.mxu0 %v2001
      %2386 = vmatpush.bf16.msra.mxu0 %v2000
      %2387 = vmatpush.bf16.msra.mxu0 %v1999
      %2388 = vmatpush.bf16.msra.mxu0 %v1998
      %2389 = vmatpush.bf16.msra.mxu0 %v1997
      %2390 = vmatpush.bf16.msra.mxu0 %v1996
      %2391 = vmatmul.bf16.gmra.mxu0 %v848
      %v2392 = vpop.f32.mrf.mxu0
      %v2393 = vadd.f32 %v2304, %v2392
      %v2394 = vpop.f32.mrf.mxu0
      %v2395 = vadd.f32 %v2306, %v2394
      %2396 = vmatmul.bf16.gmra.mxu0 %v849
      %v2397 = vpop.f32.mrf.mxu0
      %v2398 = vadd.f32 %v2309, %v2397
      %v2399 = vpop.f32.mrf.mxu0
      %v2400 = vadd.f32 %v2311, %v2399
      %2401 = vmatmul.bf16.gmra.mxu0 %v850
      %v2402 = vpop.f32.mrf.mxu0
      %v2403 = vadd.f32 %v2314, %v2402
      %v2404 = vpop.f32.mrf.mxu0
      %v2405 = vadd.f32 %v2316, %v2404
      %2406 = vmatmul.bf16.gmra.mxu0 %v851
      %v2407 = vpop.f32.mrf.mxu0
      %v2408 = vadd.f32 %v2319, %v2407
      %v2409 = vpop.f32.mrf.mxu0
      %v2410 = vadd.f32 %v2321, %v2409
      %2411 = vmatmul.bf16.gmra.mxu0 %v852
      %v2412 = vpop.f32.mrf.mxu0
      %v2413 = vadd.f32 %v2324, %v2412
      %v2414 = vpop.f32.mrf.mxu0
      %v2415 = vadd.f32 %v2326, %v2414
      %2416 = vmatmul.bf16.gmra.mxu0 %v853
      %v2417 = vpop.f32.mrf.mxu0
      %v2418 = vadd.f32 %v2329, %v2417
      %v2419 = vpop.f32.mrf.mxu0
      %v2420 = vadd.f32 %v2331, %v2419
      %2421 = vmatmul.bf16.gmra.mxu0 %v854
      %v2422 = vpop.f32.mrf.mxu0
      %v2423 = vadd.f32 %v2334, %v2422
      %v2424 = vpop.f32.mrf.mxu0
      %v2425 = vadd.f32 %v2336, %v2424
      %2426 = vmatmul.bf16.gmra.mxu0 %v855
      %v2427 = vpop.f32.mrf.mxu0
      %v2428 = vadd.f32 %v2339, %v2427
      %v2429 = vpop.f32.mrf.mxu0
      %v2430 = vadd.f32 %v2341, %v2429
      %2431 = vmatmul.bf16.gmra.mxu0 %v856
      %v2432 = vpop.f32.mrf.mxu0
      %v2433 = vadd.f32 %v2344, %v2432
      %v2434 = vpop.f32.mrf.mxu0
      %v2435 = vadd.f32 %v2346, %v2434
      %2436 = vmatmul.bf16.gmra.mxu0 %v857
      %v2437 = vpop.f32.mrf.mxu0
      %v2438 = vadd.f32 %v2349, %v2437
      %v2439 = vpop.f32.mrf.mxu0
      %v2440 = vadd.f32 %v2351, %v2439
      %2441 = vmatmul.bf16.gmra.mxu0 %v858
      %v2442 = vpop.f32.mrf.mxu0
      %v2443 = vadd.f32 %v2354, %v2442
      %v2444 = vpop.f32.mrf.mxu0
      %v2445 = vadd.f32 %v2356, %v2444
      %2446 = vmatmul.bf16.gmra.mxu0 %v859
      %v2447 = vpop.f32.mrf.mxu0
      %v2448 = vadd.f32 %v2359, %v2447
      %v2449 = vpop.f32.mrf.mxu0
      %v2450 = vadd.f32 %v2361, %v2449
      %2451 = vmatmul.bf16.gmra.mxu0 %v860
      %v2452 = vpop.f32.mrf.mxu0
      %v2453 = vadd.f32 %v2364, %v2452
      %v2454 = vpop.f32.mrf.mxu0
      %v2455 = vadd.f32 %v2366, %v2454
      %2456 = vmatmul.bf16.gmra.mxu0 %v861
      %v2457 = vpop.f32.mrf.mxu0
      %v2458 = vadd.f32 %v2369, %v2457
      %v2459 = vpop.f32.mrf.mxu0
      %v2460 = vadd.f32 %v2371, %v2459
      %2461 = vmatmul.bf16.gmra.mxu0 %v862
      %v2462 = vpop.f32.mrf.mxu0
      %v2463 = vadd.f32 %v2374, %v2462
      %v2464 = vpop.f32.mrf.mxu0
      %v2465 = vadd.f32 %v2376, %v2464
      %2466 = vmatmul.bf16.gmra.mxu0 %v863
      %v2467 = vpop.f32.mrf.mxu0
      %v2468 = vadd.f32 %v2379, %v2467
      %v2469 = vpop.f32.mrf.mxu0
      %v2470 = vadd.f32 %v2381, %v2469
      %2471 = vdwg.mxu0
      %2472 = vmatpush.bf16.msra.mxu0 %v2011
      %2473 = vmatpush.bf16.msra.mxu0 %v2010
      %2474 = vmatpush.bf16.msra.mxu0 %v2009
      %2475 = vmatpush.bf16.msra.mxu0 %v2008
      %2476 = vmatpush.bf16.msra.mxu0 %v2007
      %2477 = vmatpush.bf16.msra.mxu0 %v2006
      %2478 = vmatpush.bf16.msra.mxu0 %v2005
      %2479 = vmatpush.bf16.msra.mxu0 %v2004
      %2480 = vmatmul.bf16.gmra.mxu0 %v915
      %v2481 = vpop.f32.mrf.mxu0
      %v2482 = vadd.f32 %v2393, %v2481
      %v2483 = vpop.f32.mrf.mxu0
      %v2484 = vadd.f32 %v2395, %v2483
      %2485 = vmatmul.bf16.gmra.mxu0 %v923
      %v2486 = vpop.f32.mrf.mxu0
      %v2487 = vadd.f32 %v2398, %v2486
      %v2488 = vpop.f32.mrf.mxu0
      %v2489 = vadd.f32 %v2400, %v2488
      %2490 = vmatmul.bf16.gmra.mxu0 %v935
      %v2491 = vpop.f32.mrf.mxu0
      %v2492 = vadd.f32 %v2403, %v2491
      %v2493 = vpop.f32.mrf.mxu0
      %v2494 = vadd.f32 %v2405, %v2493
      %2495 = vmatmul.bf16.gmra.mxu0 %v943
      %v2496 = vpop.f32.mrf.mxu0
      %v2497 = vadd.f32 %v2408, %v2496
      %v2498 = vpop.f32.mrf.mxu0
      %v2499 = vadd.f32 %v2410, %v2498
      %2500 = vmatmul.bf16.gmra.mxu0 %v955
      %v2501 = vpop.f32.mrf.mxu0
      %v2502 = vadd.f32 %v2413, %v2501
      %v2503 = vpop.f32.mrf.mxu0
      %v2504 = vadd.f32 %v2415, %v2503
      %2505 = vmatmul.bf16.gmra.mxu0 %v963
      %v2506 = vpop.f32.mrf.mxu0
      %v2507 = vadd.f32 %v2418, %v2506
      %v2508 = vpop.f32.mrf.mxu0
      %v2509 = vadd.f32 %v2420, %v2508
      %2510 = vmatmul.bf16.gmra.mxu0 %v975
      %v2511 = vpop.f32.mrf.mxu0
      %v2512 = vadd.f32 %v2423, %v2511
      %v2513 = vpop.f32.mrf.mxu0
      %v2514 = vadd.f32 %v2425, %v2513
      %2515 = vmatmul.bf16.gmra.mxu0 %v983
      %v2516 = vpop.f32.mrf.mxu0
      %v2517 = vadd.f32 %v2428, %v2516
      %v2518 = vpop.f32.mrf.mxu0
      %v2519 = vadd.f32 %v2430, %v2518
      %2520 = vmatmul.bf16.gmra.mxu0 %v995
      %v2521 = vpop.f32.mrf.mxu0
      %v2522 = vadd.f32 %v2433, %v2521
      %v2523 = vpop.f32.mrf.mxu0
      %v2524 = vadd.f32 %v2435, %v2523
      %2525 = vmatmul.bf16.gmra.mxu0 %v1003
      %v2526 = vpop.f32.mrf.mxu0
      %v2527 = vadd.f32 %v2438, %v2526
      %v2528 = vpop.f32.mrf.mxu0
      %v2529 = vadd.f32 %v2440, %v2528
      %2530 = vmatmul.bf16.gmra.mxu0 %v1015
      %v2531 = vpop.f32.mrf.mxu0
      %v2532 = vadd.f32 %v2443, %v2531
      %v2533 = vpop.f32.mrf.mxu0
      %v2534 = vadd.f32 %v2445, %v2533
      %2535 = vmatmul.bf16.gmra.mxu0 %v1023
      %v2536 = vpop.f32.mrf.mxu0
      %v2537 = vadd.f32 %v2448, %v2536
      %v2538 = vpop.f32.mrf.mxu0
      %v2539 = vadd.f32 %v2450, %v2538
      %2540 = vmatmul.bf16.gmra.mxu0 %v1035
      %v2541 = vpop.f32.mrf.mxu0
      %v2542 = vadd.f32 %v2453, %v2541
      %v2543 = vpop.f32.mrf.mxu0
      %v2544 = vadd.f32 %v2455, %v2543
      %2545 = vmatmul.bf16.gmra.mxu0 %v1043
      %v2546 = vpop.f32.mrf.mxu0
      %v2547 = vadd.f32 %v2458, %v2546
      %v2548 = vpop.f32.mrf.mxu0
      %v2549 = vadd.f32 %v2460, %v2548
      %2550 = vmatmul.bf16.gmra.mxu0 %v1055
      %v2551 = vpop.f32.mrf.mxu0
      %v2552 = vadd.f32 %v2463, %v2551
      %v2553 = vpop.f32.mrf.mxu0
      %v2554 = vadd.f32 %v2465, %v2553
      %2555 = vmatmul.bf16.gmra.mxu0 %v1063
      %v2556 = vpop.f32.mrf.mxu0
      %v2557 = vadd.f32 %v2468, %v2556
      %v2558 = vpop.f32.mrf.mxu0
      %v2559 = vadd.f32 %v2470, %v2558
      %2560 = vdwg.mxu0
      %2561 = vmatpush.bf16.msra.mxu0 %v2019
      %2562 = vmatpush.bf16.msra.mxu0 %v2018
      %2563 = vmatpush.bf16.msra.mxu0 %v2017
      %2564 = vmatpush.bf16.msra.mxu0 %v2016
      %2565 = vmatpush.bf16.msra.mxu0 %v2015
      %2566 = vmatpush.bf16.msra.mxu0 %v2014
      %2567 = vmatpush.bf16.msra.mxu0 %v2013
      %2568 = vmatpush.bf16.msra.mxu0 %v2012
      %2569 = vmatmul.bf16.gmra.mxu0 %v1106
      %v2570 = vpop.f32.mrf.mxu0
      %v2571 = vadd.f32 %v2482, %v2570
      %v2572 = vpop.f32.mrf.mxu0
      %v2573 = vadd.f32 %v2484, %v2572
      %2574 = vmatmul.bf16.gmra.mxu0 %v1108
      %v2575 = vpop.f32.mrf.mxu0
      %v2576 = vadd.f32 %v2487, %v2575
      %v2577 = vpop.f32.mrf.mxu0
      %v2578 = vadd.f32 %v2489, %v2577
      %2579 = vmatmul.bf16.gmra.mxu0 %v1111
      %v2580 = vpop.f32.mrf.mxu0
      %v2581 = vadd.f32 %v2492, %v2580
      %v2582 = vpop.f32.mrf.mxu0
      %v2583 = vadd.f32 %v2494, %v2582
      %2584 = vmatmul.bf16.gmra.mxu0 %v1113
      %v2585 = vpop.f32.mrf.mxu0
      %v2586 = vadd.f32 %v2497, %v2585
      %v2587 = vpop.f32.mrf.mxu0
      %v2588 = vadd.f32 %v2499, %v2587
      %2589 = vmatmul.bf16.gmra.mxu0 %v1116
      %v2590 = vpop.f32.mrf.mxu0
      %v2591 = vadd.f32 %v2502, %v2590
      %v2592 = vpop.f32.mrf.mxu0
      %v2593 = vadd.f32 %v2504, %v2592
      %2594 = vmatmul.bf16.gmra.mxu0 %v1118
      %v2595 = vpop.f32.mrf.mxu0
      %v2596 = vadd.f32 %v2507, %v2595
      %v2597 = vpop.f32.mrf.mxu0
      %v2598 = vadd.f32 %v2509, %v2597
      %2599 = vmatmul.bf16.gmra.mxu0 %v1121
      %v2600 = vpop.f32.mrf.mxu0
      %v2601 = vadd.f32 %v2512, %v2600
      %v2602 = vpop.f32.mrf.mxu0
      %v2603 = vadd.f32 %v2514, %v2602
      %2604 = vmatmul.bf16.gmra.mxu0 %v1123
      %v2605 = vpop.f32.mrf.mxu0
      %v2606 = vadd.f32 %v2517, %v2605
      %v2607 = vpop.f32.mrf.mxu0
      %v2608 = vadd.f32 %v2519, %v2607
      %2609 = vmatmul.bf16.gmra.mxu0 %v1126
      %v2610 = vpop.f32.mrf.mxu0
      %v2611 = vadd.f32 %v2522, %v2610
      %v2612 = vpop.f32.mrf.mxu0
      %v2613 = vadd.f32 %v2524, %v2612
      %2614 = vmatmul.bf16.gmra.mxu0 %v1128
      %v2615 = vpop.f32.mrf.mxu0
      %v2616 = vadd.f32 %v2527, %v2615
      %v2617 = vpop.f32.mrf.mxu0
      %v2618 = vadd.f32 %v2529, %v2617
      %2619 = vmatmul.bf16.gmra.mxu0 %v1131
      %v2620 = vpop.f32.mrf.mxu0
      %v2621 = vadd.f32 %v2532, %v2620
      %v2622 = vpop.f32.mrf.mxu0
      %v2623 = vadd.f32 %v2534, %v2622
      %2624 = vmatmul.bf16.gmra.mxu0 %v1133
      %v2625 = vpop.f32.mrf.mxu0
      %v2626 = vadd.f32 %v2537, %v2625
      %v2627 = vpop.f32.mrf.mxu0
      %v2628 = vadd.f32 %v2539, %v2627
      %2629 = vmatmul.bf16.gmra.mxu0 %v1136
      %v2630 = vpop.f32.mrf.mxu0
      %v2631 = vadd.f32 %v2542, %v2630
      %v2632 = vpop.f32.mrf.mxu0
      %v2633 = vadd.f32 %v2544, %v2632
      %2634 = vmatmul.bf16.gmra.mxu0 %v1138
      %v2635 = vpop.f32.mrf.mxu0
      %v2636 = vadd.f32 %v2547, %v2635
      %v2637 = vpop.f32.mrf.mxu0
      %v2638 = vadd.f32 %v2549, %v2637
      %2639 = vmatmul.bf16.gmra.mxu0 %v1141
      %v2640 = vpop.f32.mrf.mxu0
      %v2641 = vadd.f32 %v2552, %v2640
      %v2642 = vpop.f32.mrf.mxu0
      %v2643 = vadd.f32 %v2554, %v2642
      %2644 = vmatmul.bf16.gmra.mxu0 %v1143
      %v2645 = vpop.f32.mrf.mxu0
      %v2646 = vadd.f32 %v2557, %v2645
      %v2647 = vpop.f32.mrf.mxu0
      %v2648 = vadd.f32 %v2559, %v2647
      %2649 = vdwg.mxu0
      %2650 = vmatpush.bf16.msra.mxu0 %v2027
      %2651 = vmatpush.bf16.msra.mxu0 %v2026
      %2652 = vmatpush.bf16.msra.mxu0 %v2025
      %2653 = vmatpush.bf16.msra.mxu0 %v2024
      %2654 = vmatpush.bf16.msra.mxu0 %v2023
      %2655 = vmatpush.bf16.msra.mxu0 %v2022
      %2656 = vmatpush.bf16.msra.mxu0 %v2021
      %2657 = vmatpush.bf16.msra.mxu0 %v2020
      %2658 = vmatmul.bf16.gmra.mxu0 %v1224
      %v2659 = vpop.f32.mrf.mxu0
      %v2660 = vadd.f32 %v2571, %v2659
      %v2661 = vpop.f32.mrf.mxu0
      %v2662 = vadd.f32 %v2573, %v2661
      %2663 = vmatmul.bf16.gmra.mxu0 %v1225
      %v2664 = vpop.f32.mrf.mxu0
      %v2665 = vadd.f32 %v2576, %v2664
      %v2666 = vpop.f32.mrf.mxu0
      %v2667 = vadd.f32 %v2578, %v2666
      %2668 = vmatmul.bf16.gmra.mxu0 %v1226
      %v2669 = vpop.f32.mrf.mxu0
      %v2670 = vadd.f32 %v2581, %v2669
      %v2671 = vpop.f32.mrf.mxu0
      %v2672 = vadd.f32 %v2583, %v2671
      %2673 = vmatmul.bf16.gmra.mxu0 %v1227
      %v2674 = vpop.f32.mrf.mxu0
      %v2675 = vadd.f32 %v2586, %v2674
      %v2676 = vpop.f32.mrf.mxu0
      %v2677 = vadd.f32 %v2588, %v2676
      %2678 = vmatmul.bf16.gmra.mxu0 %v1228
      %v2679 = vpop.f32.mrf.mxu0
      %v2680 = vadd.f32 %v2591, %v2679
      %v2681 = vpop.f32.mrf.mxu0
      %v2682 = vadd.f32 %v2593, %v2681
      %2683 = vmatmul.bf16.gmra.mxu0 %v1229
      %v2684 = vpop.f32.mrf.mxu0
      %v2685 = vadd.f32 %v2596, %v2684
      %v2686 = vpop.f32.mrf.mxu0
      %v2687 = vadd.f32 %v2598, %v2686
      %2688 = vmatmul.bf16.gmra.mxu0 %v1230
      %v2689 = vpop.f32.mrf.mxu0
      %v2690 = vadd.f32 %v2601, %v2689
      %v2691 = vpop.f32.mrf.mxu0
      %v2692 = vadd.f32 %v2603, %v2691
      %2693 = vmatmul.bf16.gmra.mxu0 %v1231
      %v2694 = vpop.f32.mrf.mxu0
      %v2695 = vadd.f32 %v2606, %v2694
      %v2696 = vpop.f32.mrf.mxu0
      %v2697 = vadd.f32 %v2608, %v2696
      %2698 = vmatmul.bf16.gmra.mxu0 %v1232
      %v2699 = vpop.f32.mrf.mxu0
      %v2700 = vadd.f32 %v2611, %v2699
      %v2701 = vpop.f32.mrf.mxu0
      %v2702 = vadd.f32 %v2613, %v2701
      %2703 = vmatmul.bf16.gmra.mxu0 %v1233
      %v2704 = vpop.f32.mrf.mxu0
      %v2705 = vadd.f32 %v2616, %v2704
      %v2706 = vpop.f32.mrf.mxu0
      %v2707 = vadd.f32 %v2618, %v2706
      %2708 = vmatmul.bf16.gmra.mxu0 %v1234
      %v2709 = vpop.f32.mrf.mxu0
      %v2710 = vadd.f32 %v2621, %v2709
      %v2711 = vpop.f32.mrf.mxu0
      %v2712 = vadd.f32 %v2623, %v2711
      %2713 = vmatmul.bf16.gmra.mxu0 %v1235
      %v2714 = vpop.f32.mrf.mxu0
      %v2715 = vadd.f32 %v2626, %v2714
      %v2716 = vpop.f32.mrf.mxu0
      %v2717 = vadd.f32 %v2628, %v2716
      %2718 = vmatmul.bf16.gmra.mxu0 %v1236
      %v2719 = vpop.f32.mrf.mxu0
      %v2720 = vadd.f32 %v2631, %v2719
      %v2721 = vpop.f32.mrf.mxu0
      %v2722 = vadd.f32 %v2633, %v2721
      %2723 = vmatmul.bf16.gmra.mxu0 %v1237
      %v2724 = vpop.f32.mrf.mxu0
      %v2725 = vadd.f32 %v2636, %v2724
      %v2726 = vpop.f32.mrf.mxu0
      %v2727 = vadd.f32 %v2638, %v2726
      %2728 = vmatmul.bf16.gmra.mxu0 %v1238
      %v2729 = vpop.f32.mrf.mxu0
      %v2730 = vadd.f32 %v2641, %v2729
      %v2731 = vpop.f32.mrf.mxu0
      %v2732 = vadd.f32 %v2643, %v2731
      %2733 = vmatmul.bf16.gmra.mxu0 %v1239
      %v2734 = vpop.f32.mrf.mxu0
      %v2735 = vadd.f32 %v2646, %v2734
      %v2736 = vpop.f32.mrf.mxu0
      %v2737 = vadd.f32 %v2648, %v2736
      %2738 = vdwg.mxu0
      %2739 = vmatpush.bf16.msra.mxu0 %v2035
      %2740 = vmatpush.bf16.msra.mxu0 %v2034
      %2741 = vmatpush.bf16.msra.mxu0 %v2033
      %2742 = vmatpush.bf16.msra.mxu0 %v2032
      %2743 = vmatpush.bf16.msra.mxu0 %v2031
      %2744 = vmatpush.bf16.msra.mxu0 %v2030
      %2745 = vmatpush.bf16.msra.mxu0 %v2029
      %2746 = vmatpush.bf16.msra.mxu0 %v2028
      %2747 = vmatmul.bf16.gmra.mxu0 %v1291
      %v2748 = vpop.f32.mrf.mxu0
      %v2749 = vadd.f32 %v2660, %v2748
      %v2750 = vpop.f32.mrf.mxu0
      %v2751 = vadd.f32 %v2662, %v2750
      %2752 = vmatmul.bf16.gmra.mxu0 %v1299
      %v2753 = vpop.f32.mrf.mxu0
      %v2754 = vadd.f32 %v2665, %v2753
      %v2755 = vpop.f32.mrf.mxu0
      %v2756 = vadd.f32 %v2667, %v2755
      %2757 = vmatmul.bf16.gmra.mxu0 %v1311
      %v2758 = vpop.f32.mrf.mxu0
      %v2759 = vadd.f32 %v2670, %v2758
      %v2760 = vpop.f32.mrf.mxu0
      %v2761 = vadd.f32 %v2672, %v2760
      %2762 = vmatmul.bf16.gmra.mxu0 %v1319
      %v2763 = vpop.f32.mrf.mxu0
      %v2764 = vadd.f32 %v2675, %v2763
      %v2765 = vpop.f32.mrf.mxu0
      %v2766 = vadd.f32 %v2677, %v2765
      %2767 = vmatmul.bf16.gmra.mxu0 %v1331
      %v2768 = vpop.f32.mrf.mxu0
      %v2769 = vadd.f32 %v2680, %v2768
      %v2770 = vpop.f32.mrf.mxu0
      %v2771 = vadd.f32 %v2682, %v2770
      %2772 = vmatmul.bf16.gmra.mxu0 %v1339
      %v2773 = vpop.f32.mrf.mxu0
      %v2774 = vadd.f32 %v2685, %v2773
      %v2775 = vpop.f32.mrf.mxu0
      %v2776 = vadd.f32 %v2687, %v2775
      %2777 = vmatmul.bf16.gmra.mxu0 %v1351
      %v2778 = vpop.f32.mrf.mxu0
      %v2779 = vadd.f32 %v2690, %v2778
      %v2780 = vpop.f32.mrf.mxu0
      %v2781 = vadd.f32 %v2692, %v2780
      %2782 = vmatmul.bf16.gmra.mxu0 %v1359
      %v2783 = vpop.f32.mrf.mxu0
      %v2784 = vadd.f32 %v2695, %v2783
      %v2785 = vpop.f32.mrf.mxu0
      %v2786 = vadd.f32 %v2697, %v2785
      %2787 = vmatmul.bf16.gmra.mxu0 %v1371
      %v2788 = vpop.f32.mrf.mxu0
      %v2789 = vadd.f32 %v2700, %v2788
      %v2790 = vpop.f32.mrf.mxu0
      %v2791 = vadd.f32 %v2702, %v2790
      %2792 = vmatmul.bf16.gmra.mxu0 %v1379
      %v2793 = vpop.f32.mrf.mxu0
      %v2794 = vadd.f32 %v2705, %v2793
      %v2795 = vpop.f32.mrf.mxu0
      %v2796 = vadd.f32 %v2707, %v2795
      %2797 = vmatmul.bf16.gmra.mxu0 %v1391
      %v2798 = vpop.f32.mrf.mxu0
      %v2799 = vadd.f32 %v2710, %v2798
      %v2800 = vpop.f32.mrf.mxu0
      %v2801 = vadd.f32 %v2712, %v2800
      %2802 = vmatmul.bf16.gmra.mxu0 %v1399
      %v2803 = vpop.f32.mrf.mxu0
      %v2804 = vadd.f32 %v2715, %v2803
      %v2805 = vpop.f32.mrf.mxu0
      %v2806 = vadd.f32 %v2717, %v2805
      %2807 = vmatmul.bf16.gmra.mxu0 %v1411
      %v2808 = vpop.f32.mrf.mxu0
      %v2809 = vadd.f32 %v2720, %v2808
      %v2810 = vpop.f32.mrf.mxu0
      %v2811 = vadd.f32 %v2722, %v2810
      %2812 = vmatmul.bf16.gmra.mxu0 %v1419
      %v2813 = vpop.f32.mrf.mxu0
      %v2814 = vadd.f32 %v2725, %v2813
      %v2815 = vpop.f32.mrf.mxu0
      %v2816 = vadd.f32 %v2727, %v2815
      %2817 = vmatmul.bf16.gmra.mxu0 %v1431
      %v2818 = vpop.f32.mrf.mxu0
      %v2819 = vadd.f32 %v2730, %v2818
      %v2820 = vpop.f32.mrf.mxu0
      %v2821 = vadd.f32 %v2732, %v2820
      %2822 = vmatmul.bf16.gmra.mxu0 %v1439
      %v2823 = vpop.f32.mrf.mxu0
      %v2824 = vadd.f32 %v2735, %v2823
      %v2825 = vpop.f32.mrf.mxu0
      %v2826 = vadd.f32 %v2737, %v2825
      %2827 = vdwg.mxu0
      %2828 = vmatpush.bf16.msra.mxu0 %v2043
      %2829 = vmatpush.bf16.msra.mxu0 %v2042
      %2830 = vmatpush.bf16.msra.mxu0 %v2041
      %2831 = vmatpush.bf16.msra.mxu0 %v2040
      %2832 = vmatpush.bf16.msra.mxu0 %v2039
      %2833 = vmatpush.bf16.msra.mxu0 %v2038
      %2834 = vmatpush.bf16.msra.mxu0 %v2037
      %2835 = vmatpush.bf16.msra.mxu0 %v2036
      %2836 = vmatmul.bf16.gmra.mxu0 %v1482
      %v2837 = vpop.f32.mrf.mxu0
      %v2838 = vadd.f32 %v2749, %v2837
      %v2839 = vpop.f32.mrf.mxu0
      %v2840 = vadd.f32 %v2751, %v2839
      %2841 = vmatmul.bf16.gmra.mxu0 %v1484
      %v2842 = vpop.f32.mrf.mxu0
      %v2843 = vadd.f32 %v2754, %v2842
      %v2844 = vpop.f32.mrf.mxu0
      %v2845 = vadd.f32 %v2756, %v2844
      %2846 = vmatmul.bf16.gmra.mxu0 %v1487
      %v2847 = vpop.f32.mrf.mxu0
      %v2848 = vadd.f32 %v2759, %v2847
      %v2849 = vpop.f32.mrf.mxu0
      %v2850 = vadd.f32 %v2761, %v2849
      %2851 = vmatmul.bf16.gmra.mxu0 %v1489
      %v2852 = vpop.f32.mrf.mxu0
      %v2853 = vadd.f32 %v2764, %v2852
      %v2854 = vpop.f32.mrf.mxu0
      %v2855 = vadd.f32 %v2766, %v2854
      %2856 = vmatmul.bf16.gmra.mxu0 %v1492
      %v2857 = vpop.f32.mrf.mxu0
      %v2858 = vadd.f32 %v2769, %v2857
      %v2859 = vpop.f32.mrf.mxu0
      %v2860 = vadd.f32 %v2771, %v2859
      %2861 = vmatmul.bf16.gmra.mxu0 %v1494
      %v2862 = vpop.f32.mrf.mxu0
      %v2863 = vadd.f32 %v2774, %v2862
      %v2864 = vpop.f32.mrf.mxu0
      %v2865 = vadd.f32 %v2776, %v2864
      %2866 = vmatmul.bf16.gmra.mxu0 %v1497
      %v2867 = vpop.f32.mrf.mxu0
      %v2868 = vadd.f32 %v2779, %v2867
      %v2869 = vpop.f32.mrf.mxu0
      %v2870 = vadd.f32 %v2781, %v2869
      %2871 = vmatmul.bf16.gmra.mxu0 %v1499
      %v2872 = vpop.f32.mrf.mxu0
      %v2873 = vadd.f32 %v2784, %v2872
      %v2874 = vpop.f32.mrf.mxu0
      %v2875 = vadd.f32 %v2786, %v2874
      %2876 = vmatmul.bf16.gmra.mxu0 %v1502
      %v2877 = vpop.f32.mrf.mxu0
      %v2878 = vadd.f32 %v2789, %v2877
      %v2879 = vpop.f32.mrf.mxu0
      %v2880 = vadd.f32 %v2791, %v2879
      %2881 = vmatmul.bf16.gmra.mxu0 %v1504
      %v2882 = vpop.f32.mrf.mxu0
      %v2883 = vadd.f32 %v2794, %v2882
      %v2884 = vpop.f32.mrf.mxu0
      %v2885 = vadd.f32 %v2796, %v2884
      %2886 = vmatmul.bf16.gmra.mxu0 %v1507
      %v2887 = vpop.f32.mrf.mxu0
      %v2888 = vadd.f32 %v2799, %v2887
      %v2889 = vpop.f32.mrf.mxu0
      %v2890 = vadd.f32 %v2801, %v2889
      %2891 = vmatmul.bf16.gmra.mxu0 %v1509
      %v2892 = vpop.f32.mrf.mxu0
      %v2893 = vadd.f32 %v2804, %v2892
      %v2894 = vpop.f32.mrf.mxu0
      %v2895 = vadd.f32 %v2806, %v2894
      %2896 = vmatmul.bf16.gmra.mxu0 %v1512
      %v2897 = vpop.f32.mrf.mxu0
      %v2898 = vadd.f32 %v2809, %v2897
      %v2899 = vpop.f32.mrf.mxu0
      %v2900 = vadd.f32 %v2811, %v2899
      %2901 = vmatmul.bf16.gmra.mxu0 %v1514
      %v2902 = vpop.f32.mrf.mxu0
      %v2903 = vadd.f32 %v2814, %v2902
      %v2904 = vpop.f32.mrf.mxu0
      %v2905 = vadd.f32 %v2816, %v2904
      %2906 = vmatmul.bf16.gmra.mxu0 %v1517
      %v2907 = vpop.f32.mrf.mxu0
      %v2908 = vadd.f32 %v2819, %v2907
      %v2909 = vpop.f32.mrf.mxu0
      %v2910 = vadd.f32 %v2821, %v2909
      %2911 = vmatmul.bf16.gmra.mxu0 %v1519
      %v2912 = vpop.f32.mrf.mxu0
      %v2913 = vadd.f32 %v2824, %v2912
      %v2914 = vpop.f32.mrf.mxu0
      %v2915 = vadd.f32 %v2826, %v2914
      %2916 = vdwg.mxu0
      %v2917 = vld [vmem:[%s3] sm:$0x1]
      %v2919 = vperm.slane %v2917, 0
      %v2921 = vmul.f32 %v2838, %v2919
      %v2922 = vmul.f32 %v2840, %v2919
      %v2923 = vmul.f32 %v2843, %v2919
      %v2924 = vmul.f32 %v2845, %v2919
      %v2925 = vmul.f32 %v2848, %v2919
      %v2926 = vmul.f32 %v2850, %v2919
      %v2927 = vmul.f32 %v2853, %v2919
      %v2928 = vmul.f32 %v2855, %v2919
      %v2929 = vmul.f32 %v2858, %v2919
      %v2930 = vmul.f32 %v2860, %v2919
      %v2931 = vmul.f32 %v2863, %v2919
      %v2932 = vmul.f32 %v2865, %v2919
      %v2933 = vmul.f32 %v2868, %v2919
      %v2934 = vmul.f32 %v2870, %v2919
      %v2935 = vmul.f32 %v2873, %v2919
      %v2936 = vmul.f32 %v2875, %v2919
      %v2937 = vmul.f32 %v2878, %v2919
      %v2938 = vmul.f32 %v2880, %v2919
      %v2939 = vmul.f32 %v2883, %v2919
      %v2940 = vmul.f32 %v2885, %v2919
      %v2941 = vmul.f32 %v2888, %v2919
      %v2942 = vmul.f32 %v2890, %v2919
      %v2943 = vmul.f32 %v2893, %v2919
      %v2944 = vmul.f32 %v2895, %v2919
      %v2945 = vmul.f32 %v2898, %v2919
      %v2946 = vmul.f32 %v2900, %v2919
      %v2947 = vmul.f32 %v2903, %v2919
      %v2948 = vmul.f32 %v2905, %v2919
      %v2949 = vmul.f32 %v2908, %v2919
      %v2950 = vmul.f32 %v2910, %v2919
      %v2951 = vmul.f32 %v2913, %v2919
      %v2952 = vmul.f32 %v2915, %v2919
      %v2953 = vld [vmem:[%s4] sm:$0x1]
      %v2955 = vperm.slane %v2953, 0
      %v2957 = vadd.f32 %v2921, %v2955
      %v2958 = vadd.f32 %v2922, %v2955
      %v2959 = vadd.f32 %v2923, %v2955
      %v2960 = vadd.f32 %v2924, %v2955
      %v2961 = vadd.f32 %v2925, %v2955
      %v2962 = vadd.f32 %v2926, %v2955
      %v2963 = vadd.f32 %v2927, %v2955
      %v2964 = vadd.f32 %v2928, %v2955
      %v2965 = vadd.f32 %v2929, %v2955
      %v2966 = vadd.f32 %v2930, %v2955
      %v2967 = vadd.f32 %v2931, %v2955
      %v2968 = vadd.f32 %v2932, %v2955
      %v2969 = vadd.f32 %v2933, %v2955
      %v2970 = vadd.f32 %v2934, %v2955
      %v2971 = vadd.f32 %v2935, %v2955
      %v2972 = vadd.f32 %v2936, %v2955
      %v2973 = vadd.f32 %v2937, %v2955
      %v2974 = vadd.f32 %v2938, %v2955
      %v2975 = vadd.f32 %v2939, %v2955
      %v2976 = vadd.f32 %v2940, %v2955
      %v2977 = vadd.f32 %v2941, %v2955
      %v2978 = vadd.f32 %v2942, %v2955
      %v2979 = vadd.f32 %v2943, %v2955
      %v2980 = vadd.f32 %v2944, %v2955
      %v2981 = vadd.f32 %v2945, %v2955
      %v2982 = vadd.f32 %v2946, %v2955
      %v2983 = vadd.f32 %v2947, %v2955
      %v2984 = vadd.f32 %v2948, %v2955
      %v2985 = vadd.f32 %v2949, %v2955
      %v2986 = vadd.f32 %v2950, %v2955
      %v2987 = vadd.f32 %v2951, %v2955
      %v2988 = vadd.f32 %v2952, %v2955
      %v2989 = vmax.f32 %v2957, 0.0
      %v2990 = vmax.f32 %v2958, 0.0
      %v2991 = vmax.f32 %v2959, 0.0
      %v2992 = vmax.f32 %v2960, 0.0
      %v2993 = vmax.f32 %v2961, 0.0
      %v2994 = vmax.f32 %v2962, 0.0
      %v2995 = vmax.f32 %v2963, 0.0
      %v2996 = vmax.f32 %v2964, 0.0
      %v2997 = vmax.f32 %v2965, 0.0
      %v2998 = vmax.f32 %v2966, 0.0
      %v2999 = vmax.f32 %v2967, 0.0
      %v3000 = vmax.f32 %v2968, 0.0
      %v3001 = vmax.f32 %v2969, 0.0
      %v3002 = vmax.f32 %v2970, 0.0
      %v3003 = vmax.f32 %v2971, 0.0
      %v3004 = vmax.f32 %v2972, 0.0
      %v3005 = vmax.f32 %v2973, 0.0
      %v3006 = vmax.f32 %v2974, 0.0
      %v3007 = vmax.f32 %v2975, 0.0
      %v3008 = vmax.f32 %v2976, 0.0
      %v3009 = vmax.f32 %v2977, 0.0
      %v3010 = vmax.f32 %v2978, 0.0
      %v3011 = vmax.f32 %v2979, 0.0
      %v3012 = vmax.f32 %v2980, 0.0
      %v3013 = vmax.f32 %v2981, 0.0
      %v3014 = vmax.f32 %v2982, 0.0
      %v3015 = vmax.f32 %v2983, 0.0
      %v3016 = vmax.f32 %v2984, 0.0
      %v3017 = vmax.f32 %v2985, 0.0
      %v3018 = vmax.f32 %v2986, 0.0
      %v3019 = vmax.f32 %v2987, 0.0
      %v3020 = vmax.f32 %v2988, 0.0
      %v3021 = vpack.c.bf16 %v2989, %v2989
      %v3022 = vpack.c.bf16 %v2990, %v2990
      %v3023 = vpack.c.bf16 %v2991, %v2991
      %v3024 = vpack.c.bf16 %v2992, %v2992
      %v3025 = vpack.c.bf16 %v2993, %v2993
      %v3026 = vpack.c.bf16 %v2994, %v2994
      %v3027 = vpack.c.bf16 %v2995, %v2995
      %v3028 = vpack.c.bf16 %v2996, %v2996
      %v3029 = vpack.c.bf16 %v2997, %v2997
      %v3030 = vpack.c.bf16 %v2998, %v2998
      %v3031 = vpack.c.bf16 %v2999, %v2999
      %v3032 = vpack.c.bf16 %v3000, %v3000
      %v3033 = vpack.c.bf16 %v3001, %v3001
      %v3034 = vpack.c.bf16 %v3002, %v3002
      %v3035 = vpack.c.bf16 %v3003, %v3003
      %v3036 = vpack.c.bf16 %v3004, %v3004
      %v3037 = vpack.c.bf16 %v3005, %v3005
      %v3038 = vpack.c.bf16 %v3006, %v3006
      %v3039 = vpack.c.bf16 %v3007, %v3007
      %v3040 = vpack.c.bf16 %v3008, %v3008
      %v3041 = vpack.c.bf16 %v3009, %v3009
      %v3042 = vpack.c.bf16 %v3010, %v3010
      %v3043 = vpack.c.bf16 %v3011, %v3011
      %v3044 = vpack.c.bf16 %v3012, %v3012
      %v3045 = vpack.c.bf16 %v3013, %v3013
      %v3046 = vpack.c.bf16 %v3014, %v3014
      %v3047 = vpack.c.bf16 %v3015, %v3015
      %v3048 = vpack.c.bf16 %v3016, %v3016
      %v3049 = vpack.c.bf16 %v3017, %v3017
      %v3050 = vpack.c.bf16 %v3018, %v3018
      %v3051 = vpack.c.bf16 %v3019, %v3019
      %v3052 = vpack.c.bf16 %v3020, %v3020
      %3053 = vst [vmem:[%s248] sm:$0xf] %v3021
      %3054 = vst [vmem:[%s248 + $0x4] sm:$0xf] %v3022
      %3055 = vst [vmem:[%s248 + $0x8] sm:$0xf] %v3023
      %3056 = vst [vmem:[%s248 + $0xc] sm:$0xf] %v3024
      %3057 = vst [vmem:[%s248 + $0x10] sm:$0xf] %v3025
      %3058 = vst [vmem:[%s248 + $0x14] sm:$0xf] %v3026
      %3059 = vst [vmem:[%s248 + $0x18] sm:$0xf] %v3027
      %3060 = vst [vmem:[%s248 + $0x1c] sm:$0xf] %v3028
      %3061 = vst [vmem:[%s248 + $0x20] sm:$0xf] %v3029
      %3062 = vst [vmem:[%s248 + $0x24] sm:$0xf] %v3030
      %3063 = vst [vmem:[%s248 + $0x28] sm:$0xf] %v3031
      %3064 = vst [vmem:[%s248 + $0x2c] sm:$0xf] %v3032
      %3065 = vst [vmem:[%s248 + $0x30] sm:$0xf] %v3033
      %3066 = vst [vmem:[%s248 + $0x34] sm:$0xf] %v3034
      %3067 = vst [vmem:[%s248 + $0x38] sm:$0xf] %v3035
      %3068 = vst [vmem:[%s248 + $0x3c] sm:$0xf] %v3036
      %3069 = vst [vmem:[%s248 + $0x40] sm:$0xf] %v3037
      %3070 = vst [vmem:[%s248 + $0x44] sm:$0xf] %v3038
      %3071 = vst [vmem:[%s248 + $0x48] sm:$0xf] %v3039
      %3072 = vst [vmem:[%s248 + $0x4c] sm:$0xf] %v3040
      %3073 = vst [vmem:[%s248 + $0x50] sm:$0xf] %v3041
      %3074 = vst [vmem:[%s248 + $0x54] sm:$0xf] %v3042
      %3075 = vst [vmem:[%s248 + $0x58] sm:$0xf] %v3043
      %3076 = vst [vmem:[%s248 + $0x5c] sm:$0xf] %v3044
      %3077 = vst [vmem:[%s248 + $0x60] sm:$0xf] %v3045
      %3078 = vst [vmem:[%s248 + $0x64] sm:$0xf] %v3046
      %3079 = vst [vmem:[%s248 + $0x68] sm:$0xf] %v3047
      %3080 = vst [vmem:[%s248 + $0x6c] sm:$0xf] %v3048
      %3081 = vst [vmem:[%s248 + $0x70] sm:$0xf] %v3049
      %3082 = vst [vmem:[%s248 + $0x74] sm:$0xf] %v3050
      %3083 = vst [vmem:[%s248 + $0x78] sm:$0xf] %v3051
      %3084 = vst [vmem:[%s248 + $0x7c] sm:$0xf] %v3052
      %s3085 = smul.u32 8, %s21
      %p3086 = scmp.lt.s32.totalorder %s20, 1
      %s3087 = scalar_select %p3086, %s20, 1
      %p3088 = scmp.lt.s32.totalorder %s3085, 31
      %s3089 = scalar_select %p3088, %s3085, 31
      %s3090 = smul.addr %s3089, 4
      %s3091 = smul.addr %s3087, 128
      %s3092 = sadd.s32 %s3090, %s3091
      %s3093 = smul.addr %s3092, 4
      %s3094 = scalar_lea.vmem %s5, %s3093
      // Predicated region
      $region41: #{residual_block_up_forward.6} parent=39 // pred_check
        %p3095 = pneg %p158
      $region42: #{residual_block_up_forward.6} parent=39 // pred_check_branch
        %3097 = sbr.rel (%p3095) target = $region44
      $region43: #{residual_block_up_forward.6} parent=39 // pred_region
        %s3098 = smul.u32 8, %s21
      $region44: #{residual_block_up_forward.6} parent=39 // pred_fallthru
        _
    $region40: #{residual_block_up_forward.6} parent=5 // pred_fallthru
      _
    %p3099 = scmp.le.s32.totalorder 2, %s11
    // Predicated region
    $region45: #{residual_block_up_forward.6} parent=5 // pred_check
      %p3100 = pneg %p3099
    $region46: #{residual_block_up_forward.6} parent=5 // pred_check_branch
      %3102 = sbr.rel (%p3100) target = $region48
    $region47: #{residual_block_up_forward.6} parent=5 // pred_region
      %s3103 = ssub.s32 %s11, 2
      // Predicated region
      $region49: #{residual_block_up_forward.6} parent=47 // pred_check
        %p3104 = pneg %p164
      $region50: #{residual_block_up_forward.6} parent=47 // pred_check_branch
        %3106 = sbr.rel (%p3104) target = $region52
      $region51: #{residual_block_up_forward.6} parent=47 // pred_region
        %s3107 = smul.u32 8, %s23
        %p3108 = scmp.lt.s32.totalorder %s22, 1
        %s3109 = scalar_select %p3108, %s22, 1
        %p3110 = scmp.lt.s32.totalorder %s3107, 31
        %s3111 = scalar_select %p3110, %s3107, 31
        %s3112 = smul.addr %s3111, 4
        %s3113 = smul.addr %s3109, 128
        %s3114 = sadd.s32 %s3112, %s3113
        %s3115 = smul.addr %s3114, 4
        %s3116 = scalar_lea.vmem %s5, %s3115
      $region52: #{residual_block_up_forward.6} parent=47 // pred_fallthru
        _
    $region48: #{residual_block_up_forward.6} parent=5 // pred_fallthru
      _
  $region6: #{residual_block_up_forward.6} parent=0 // loop_footer
    %s15 = sadd.s32 1, %s11
  $region7: #{residual_block_up_forward.6} parent=0 // loop_footer_branch
    %10 = sbr.rel target = $region3
  $region8: #{residual_block_up_forward.6} parent=0 // loop_exit
    _

// kernel: residual_block_up_forward.7
$region0: #{residual_block_up_forward.7}
  #allocation0 [shape = 'u32[]', space=smem, size = 0x4, offset = 0x4, fixed_abs, tag = 'smem constant byte address 0x4 - core index']
  #allocation1 [shape = 'u32[72,128]{1,0:T(1,128)}', space=vmem, size = 0x9000, scoped, tag = 'internal scratch']
  %s0 = inlined_call_operand.vmem [shape: bf16[2,34,34,128], index: 0, kind: input, shape index: {}]
  %s1 = inlined_call_operand.vmem [shape: bf16[1152,128], index: 1, kind: input, shape index: {}]
  %s2 = inlined_call_operand.vmem [shape: f32[1,128], index: 2, kind: input, shape index: {}]
  %s3 = inlined_call_operand.vmem [shape: bf16[2,32,32,128], index: 3, kind: input, shape index: {}]
  %s4 = inlined_call_operand.vmem [shape: f32[2,32,32,128], index: 4, kind: output, shape index: {}]
  %s5 = sld [smem:[#allocation0]]
  $region49: #{residual_block_up_forward.7} parent=0
    _
  %s7 = ssub.s32 1, %s5
  %s8 = scalar_select 0, %s7, %s5
  loop: start=0, step=1, limit=10
  $region2: #{residual_block_up_forward.7} parent=0 // loop_pre_header
    _
  $region3: #{residual_block_up_forward.7} parent=0 // loop_header
    %s10 = sphi 0, %s14
    %p11 = scmp.ge.s32.totalorder %s10, 10
    %s17 = sphi 0, %s29
    %s18 = sphi 0, %s25
    %s19 = sphi 0, %s17
    %s20 = sphi 0, %s18
    %s21 = sphi 0, %s19
    %s22 = sphi 0, %s20
    %s32 = sphi 0, %s34
    %s35 = sphi 0, %s32
    %s36 = sphi 0, %s35
    %s52 = sphi 0, %s36
    %s56 = sphi 0, %s56
    %s58 = sphi 0, %s56
    %s59 = sphi 0, %s58
    %s73 = sphi 0, %s59
    %s77 = sphi 0, %s77
    %s79 = sphi 0, %s77
    %s80 = sphi 0, %s79
    %s94 = sphi 0, %s80
    %s102 = sphi 0, %s104
    %s105 = sphi 0, %s102
    %s106 = sphi 0, %s105
    %s122 = sphi 0, %s106
    %s130 = sphi 0, %s132
    %s133 = sphi 0, %s130
    %s134 = sphi 0, %s133
    %s150 = sphi 0, %s134
  $region4: #{residual_block_up_forward.7} parent=0 // loop_header_branch
    %13 = sbr.rel (%p11) target = $region8
  $region5: #{residual_block_up_forward.7} parent=0 // loop_body
    %s15 = ssub.s32 %s10, 1
    %s16 = ssub.s32 %s10, 2
    %s23 = sadd.s32 1, %s18
    %p24 = scmp.ge.s32.totalorder %s23, 4
    %s25 = scalar_select %p24, 0, %s23
    %s26 = sadd.s32 1, %s17
    %s27 = scalar_select %p24, %s26, %s17
    %p28 = scmp.ge.s32.totalorder %s27, 2
    %s29 = scalar_select %p28, 0, %s27
    %s30 = ssub.s32 %s17, %s29
    %p31 = scmp.eq.s32.totalorder %s30, 0
    %s33 = sadd.s32 %s32, 1
    %s34 = scalar_select %p31, %s32, %s33
    %p37 = pneg %p31
    %p38 = scmp.eq.s32.totalorder %s10, 7
    %p39 = por %p37, %p38
    %p40 = scmp.ne.s32.totalorder %s32, %s35
    %p41 = scmp.eq.s32.totalorder %s10, 0
    %p42 = por %p40, %p41
    %p43 = scmp.ne.s32.totalorder %s32, %s35
    %p44 = scmp.eq.s32.totalorder %s15, 7
    %p45 = por %p43, %p44
    %p46 = scmp.ne.s32.totalorder %s35, %s36
    %p47 = scmp.eq.s32.totalorder %s15, 0
    %p48 = por %p46, %p47
    %p49 = scmp.ne.s32.totalorder %s35, %s36
    %p50 = scmp.eq.s32.totalorder %s16, 7
    %p51 = por %p49, %p50
    %p53 = scmp.ne.s32.totalorder %s36, %s52
    %p54 = scmp.eq.s32.totalorder %s16, 0
    %p55 = por %p53, %p54
    %s57 = sadd.s32 %s56, 1
    %p60 = scmp.eq.s32.totalorder %s10, 7
    %p61 = scmp.ne.s32.totalorder %s56, %s58
    %p62 = scmp.eq.s32.totalorder %s10, 0
    %p63 = por %p61, %p62
    %p64 = scmp.ne.s32.totalorder %s56, %s58
    %p65 = scmp.eq.s32.totalorder %s15, 7
    %p66 = por %p64, %p65
    %p67 = scmp.ne.s32.totalorder %s58, %s59
    %p68 = scmp.eq.s32.totalorder %s15, 0
    %p69 = por %p67, %p68
    %p70 = scmp.ne.s32.totalorder %s58, %s59
    %p71 = scmp.eq.s32.totalorder %s16, 7
    %p72 = por %p70, %p71
    %p74 = scmp.ne.s32.totalorder %s59, %s73
    %p75 = scmp.eq.s32.totalorder %s16, 0
    %p76 = por %p74, %p75
    %s78 = sadd.s32 %s77, 1
    %p81 = scmp.eq.s32.totalorder %s10, 7
    %p82 = scmp.ne.s32.totalorder %s77, %s79
    %p83 = scmp.eq.s32.totalorder %s10, 0
    %p84 = por %p82, %p83
    %p85 = scmp.ne.s32.totalorder %s77, %s79
    %p86 = scmp.eq.s32.totalorder %s15, 7
    %p87 = por %p85, %p86
    %p88 = scmp.ne.s32.totalorder %s79, %s80
    %p89 = scmp.eq.s32.totalorder %s15, 0
    %p90 = por %p88, %p89
    %p91 = scmp.ne.s32.totalorder %s79, %s80
    %p92 = scmp.eq.s32.totalorder %s16, 7
    %p93 = por %p91, %p92
    %p95 = scmp.ne.s32.totalorder %s80, %s94
    %p96 = scmp.eq.s32.totalorder %s16, 0
    %p97 = por %p95, %p96
    %s98 = ssub.s32 %s17, %s29
    %s99 = ssub.s32 %s18, %s25
    %s100 = sor.u32 %s98, %s99
    %p101 = scmp.eq.s32.totalorder %s100, 0
    %s103 = sadd.s32 %s102, 1
    %s104 = scalar_select %p101, %s102, %s103
    %p107 = pneg %p101
    %p108 = scmp.eq.s32.totalorder %s10, 7
    %p109 = por %p107, %p108
    %p110 = scmp.ne.s32.totalorder %s102, %s105
    %p111 = scmp.eq.s32.totalorder %s10, 0
    %p112 = por %p110, %p111
    %p113 = scmp.ne.s32.totalorder %s102, %s105
    %p114 = scmp.eq.s32.totalorder %s15, 7
    %p115 = por %p113, %p114
    %p116 = scmp.ne.s32.totalorder %s105, %s106
    %p117 = scmp.eq.s32.totalorder %s15, 0
    %p118 = por %p116, %p117
    %p119 = scmp.ne.s32.totalorder %s105, %s106
    %p120 = scmp.eq.s32.totalorder %s16, 7
    %p121 = por %p119, %p120
    %p123 = scmp.ne.s32.totalorder %s106, %s122
    %p124 = scmp.eq.s32.totalorder %s16, 0
    %p125 = por %p123, %p124
    %s126 = ssub.s32 %s17, %s29
    %s127 = ssub.s32 %s18, %s25
    %s128 = sor.u32 %s126, %s127
    %p129 = scmp.eq.s32.totalorder %s128, 0
    %s131 = sadd.s32 %s130, 1
    %s132 = scalar_select %p129, %s130, %s131
    %p135 = pneg %p129
    %p136 = scmp.eq.s32.totalorder %s10, 7
    %p137 = por %p135, %p136
    %p138 = scmp.ne.s32.totalorder %s130, %s133
    %p139 = scmp.eq.s32.totalorder %s10, 0
    %p140 = por %p138, %p139
    %p141 = scmp.ne.s32.totalorder %s130, %s133
    %p142 = scmp.eq.s32.totalorder %s15, 7
    %p143 = por %p141, %p142
    %p144 = scmp.ne.s32.totalorder %s133, %s134
    %p145 = scmp.eq.s32.totalorder %s15, 0
    %p146 = por %p144, %p145
    %p147 = scmp.ne.s32.totalorder %s133, %s134
    %p148 = scmp.eq.s32.totalorder %s16, 7
    %p149 = por %p147, %p148
    %p151 = scmp.ne.s32.totalorder %s134, %s150
    %p152 = scmp.eq.s32.totalorder %s16, 0
    %p153 = por %p151, %p152
    %p154 = scmp.le.s32.totalorder 1, %s10
    %p155 = scmp.lt.s32.totalorder %s10, 9
    %p156 = pnand %p154, %p155
    %p157 = pneg %p156
    // Predicated region
    $region9: #{residual_block_up_forward.7} parent=5 // pred_check
      _
    $region10: #{residual_block_up_forward.7} parent=5 // pred_check_branch
      %159 = sbr.rel (%p156) target = $region12
    $region11: #{residual_block_up_forward.7} parent=5 // pred_region
      %s160 = ssub.s32 %s10, 1
      // Predicated region
      $region13: #{residual_block_up_forward.7} parent=11 // pred_check
        %p161 = pneg %p69
      $region14: #{residual_block_up_forward.7} parent=11 // pred_check_branch
        %163 = sbr.rel (%p161) target = $region16
      $region15: #{residual_block_up_forward.7} parent=11 // pred_region
        _
      $region16: #{residual_block_up_forward.7} parent=11 // pred_fallthru
        _
      // Predicated region
      $region17: #{residual_block_up_forward.7} parent=11 // pred_check
        %p164 = pneg %p90
      $region18: #{residual_block_up_forward.7} parent=11 // pred_check_branch
        %166 = sbr.rel (%p164) target = $region20
      $region19: #{residual_block_up_forward.7} parent=11 // pred_region
        _
      $region20: #{residual_block_up_forward.7} parent=11 // pred_fallthru
        _
    $region12: #{residual_block_up_forward.7} parent=5 // pred_fallthru
      _
    %p167 = scmp.lt.s32.totalorder %s10, 8
    // Predicated region
    $region21: #{residual_block_up_forward.7} parent=5 // pred_check
      %p168 = pneg %p167
    $region22: #{residual_block_up_forward.7} parent=5 // pred_check_branch
      %170 = sbr.rel (%p168) target = $region24
    $region23: #{residual_block_up_forward.7} parent=5 // pred_region
      // Predicated region
      $region25: #{residual_block_up_forward.7} parent=23 // pred_check
        %p171 = pneg %p42
      $region26: #{residual_block_up_forward.7} parent=23 // pred_check_branch
        %173 = sbr.rel (%p171) target = $region28
      $region27: #{residual_block_up_forward.7} parent=23 // pred_region
        %p174 = scmp.lt.s32.totalorder %s17, 1
        %s175 = scalar_select %p174, %s17, 1
        %s176 = smul.addr %s175, 170
        %s177 = smul.addr %s176, 4
        %s178 = scalar_lea.vmem %s0, %s177
      $region28: #{residual_block_up_forward.7} parent=23 // pred_fallthru
        _
      // Predicated region
      $region29: #{residual_block_up_forward.7} parent=23 // pred_check
        %p179 = pneg %p112
      $region30: #{residual_block_up_forward.7} parent=23 // pred_check_branch
        %181 = sbr.rel (%p179) target = $region32
      $region31: #{residual_block_up_forward.7} parent=23 // pred_region
        %s182 = smul.u32 8, %s18
        %p183 = scmp.lt.s32.totalorder %s17, 1
        %s184 = scalar_select %p183, %s17, 1
        %p185 = scmp.lt.s32.totalorder %s182, 31
        %s186 = scalar_select %p185, %s182, 31
        %s187 = smul.addr %s186, 4
        %s188 = smul.addr %s184, 128
        %s189 = sadd.s32 %s187, %s188
        %s190 = smul.addr %s189, 4
        %s191 = scalar_lea.vmem %s3, %s190
        %s192 = smul.u32 8, %s18
      $region32: #{residual_block_up_forward.7} parent=23 // pred_fallthru
        _
    $region24: #{residual_block_up_forward.7} parent=5 // pred_fallthru
      _
    %p193 = scmp.le.s32.totalorder 1, %s10
    %p194 = scmp.lt.s32.totalorder %s10, 9
    %p195 = pnand %p193, %p194
    %p196 = pneg %p195
    // Predicated region
    $region33: #{residual_block_up_forward.7} parent=5 // pred_check
      _
    $region34: #{residual_block_up_forward.7} parent=5 // pred_check_branch
      %198 = sbr.rel (%p195) target = $region36
    $region35: #{residual_block_up_forward.7} parent=5 // pred_region
      %s199 = ssub.s32 %s10, 1
      %p200 = scmp.lt.s32.totalorder %s19, 1
      %s201 = scalar_select %p200, %s19, 1
      %s202 = smul.addr %s201, 170
      %s203 = smul.addr %s202, 4
      %s204 = scalar_lea.vmem %s0, %s203
      %p205 = pneg %p48
      %p206 = pneg %p45
      %p207 = pneg %p69
      %p208 = pneg %p66
      %p209 = pneg %p90
      %p210 = pneg %p87
      %s211 = smul.u32 8, %s20
      %p212 = scmp.lt.s32.totalorder %s19, 1
      %s213 = scalar_select %p212, %s19, 1
      %p214 = scmp.lt.s32.totalorder %s211, 31
      %s215 = scalar_select %p214, %s211, 31
      %s216 = smul.addr %s215, 4
      %s217 = smul.addr %s213, 128
      %s218 = sadd.s32 %s216, %s217
      %s219 = smul.addr %s218, 4
      %s220 = scalar_lea.vmem %s3, %s219
      %p221 = pneg %p118
      %p222 = pneg %p115
      %p223 = pneg %p146
      %p224 = pneg %p143
      %s225 = smul.u32 8, %s20
      %p226 = scmp.lt.s32.totalorder %s19, 1
      %s227 = scalar_select %p226, %s19, 1
      %p228 = scmp.lt.s32.totalorder %s225, 31
      %s229 = scalar_select %p228, %s225, 31
      %s230 = smul.addr %s229, 4
      %s231 = smul.addr %s227, 128
      %s232 = sadd.s32 %s230, %s231
      %s233 = smul.addr %s232, 8
      %s234 = scalar_lea.vmem %s4, %s233
      %p235 = scmp.lt.s32.totalorder %s19, 1
      %s236 = scalar_select %p235, %s19, 1
      %s237 = smul.addr %s236, 170
      %s238 = smul.addr %s237, 4
      %s239 = scalar_lea.vmem %s0, %s238
      %s240 = smul.u32 8, %s20
      %p241 = scmp.lt.s32.totalorder %s19, 1
      %s242 = scalar_select %p241, %s19, 1
      %p243 = scmp.lt.s32.totalorder %s240, 31
      %s244 = scalar_select %p243, %s240, 31
      %s245 = smul.addr %s244, 4
      %s246 = smul.addr %s242, 128
      %s247 = sadd.s32 %s245, %s246
      %s248 = smul.addr %s247, 4
      %s249 = scalar_lea.vmem %s3, %s248
      %s250 = smul.u32 8, %s20
      %s251 = smul.u32 8, %s20
      %p252 = scmp.lt.s32.totalorder %s19, 1
      %s253 = scalar_select %p252, %s19, 1
      %p254 = scmp.lt.s32.totalorder %s251, 31
      %s255 = scalar_select %p254, %s251, 31
      %s256 = smul.addr %s255, 4
      %s257 = smul.addr %s253, 128
      %s258 = sadd.s32 %s256, %s257
      %s259 = smul.addr %s258, 8
      %s260 = scalar_lea.vmem %s4, %s259
      %s261 = smul.u32 8, %s20
      %s262 = smul.u32 %s20, 8
      %s263 = smul.u32 %s262, 5
      %s264 = smul.addr %s263, 4
      %s265 = scalar_lea.vmem %s239, %s264
      %v266 = vld [vmem:[%s265] sm:$0xf]
      %v267 = vld [vmem:[%s265 + $0x4] sm:$0xf]
      %v268 = vld [vmem:[%s265 + $0x8] sm:$0xf]
      %v269 = vld [vmem:[%s265 + $0xc] sm:$0xf]
      %v270 = vld [vmem:[%s265 + $0x14] sm:$0xf]
      %v271 = vld [vmem:[%s265 + $0x18] sm:$0xf]
      %v272 = vld [vmem:[%s265 + $0x1c] sm:$0xf]
      %v273 = vld [vmem:[%s265 + $0x20] sm:$0xf]
      %v274 = vld [vmem:[%s265 + $0x28] sm:$0xf]
      %v275 = vld [vmem:[%s265 + $0x2c] sm:$0xf]
      %v276 = vld [vmem:[%s265 + $0x30] sm:$0xf]
      %v277 = vld [vmem:[%s265 + $0x34] sm:$0xf]
      %v278 = vld [vmem:[%s265 + $0x3c] sm:$0xf]
      %v279 = vld [vmem:[%s265 + $0x40] sm:$0xf]
      %v280 = vld [vmem:[%s265 + $0x44] sm:$0xf]
      %v281 = vld [vmem:[%s265 + $0x48] sm:$0xf]
      %v282 = vld [vmem:[%s265 + $0x50] sm:$0xf]
      %v283 = vld [vmem:[%s265 + $0x54] sm:$0xf]
      %v284 = vld [vmem:[%s265 + $0x58] sm:$0xf]
      %v285 = vld [vmem:[%s265 + $0x5c] sm:$0xf]
      %v286 = vld [vmem:[%s265 + $0x64] sm:$0xf]
      %v287 = vld [vmem:[%s265 + $0x68] sm:$0xf]
      %v288 = vld [vmem:[%s265 + $0x6c] sm:$0xf]
      %v289 = vld [vmem:[%s265 + $0x70] sm:$0xf]
      %v290 = vld [vmem:[%s265 + $0x78] sm:$0xf]
      %v291 = vld [vmem:[%s265 + $0x7c] sm:$0xf]
      %v292 = vld [vmem:[%s265 + $0x80] sm:$0xf]
      %v293 = vld [vmem:[%s265 + $0x84] sm:$0xf]
      %v294 = vld [vmem:[%s265 + $0x8c] sm:$0xf]
      %v295 = vld [vmem:[%s265 + $0x90] sm:$0xf]
      %v296 = vld [vmem:[%s265 + $0x94] sm:$0xf]
      %v297 = vld [vmem:[%s265 + $0x98] sm:$0xf]
      %v298 = vld [vmem:[%s265 + $0x10] sm:$0x1]
      %v299 = vld [vmem:[%s265 + $0x24] sm:$0x1]
      %v300 = vld [vmem:[%s265 + $0x38] sm:$0x1]
      %v301 = vld [vmem:[%s265 + $0x4c] sm:$0x1]
      %v302 = vld [vmem:[%s265 + $0x60] sm:$0x1]
      %v303 = vld [vmem:[%s265 + $0x74] sm:$0x1]
      %v304 = vld [vmem:[%s265 + $0x88] sm:$0x1]
      %v305 = vld [vmem:[%s265 + $0x9c] sm:$0x1]
      %v306 = vld [vmem:[%s265] sm:$0xe]
      %v307 = vld [vmem:[%s265 + $0x14] sm:$0xe]
      %v308 = vld [vmem:[%s265 + $0x28] sm:$0xe]
      %v309 = vld [vmem:[%s265 + $0x3c] sm:$0xe]
      %v310 = vld [vmem:[%s265 + $0x50] sm:$0xe]
      %v311 = vld [vmem:[%s265 + $0x64] sm:$0xe]
      %v312 = vld [vmem:[%s265 + $0x78] sm:$0xe]
      %v313 = vld [vmem:[%s265 + $0x8c] sm:$0xe]
      %s314 = sadd.s32 %s262, 1
      %s315 = smul.u32 %s314, 5
      %s316 = smul.addr %s315, 4
      %s317 = scalar_lea.vmem %s239, %s316
      %v318 = vld [vmem:[%s317] sm:$0xf]
      %v319 = vld [vmem:[%s317 + $0x4] sm:$0xf]
      %v320 = vld [vmem:[%s317 + $0x8] sm:$0xf]
      %v321 = vld [vmem:[%s317 + $0xc] sm:$0xf]
      %v322 = vld [vmem:[%s317 + $0x14] sm:$0xf]
      %v323 = vld [vmem:[%s317 + $0x18] sm:$0xf]
      %v324 = vld [vmem:[%s317 + $0x1c] sm:$0xf]
      %v325 = vld [vmem:[%s317 + $0x20] sm:$0xf]
      %v326 = vld [vmem:[%s317 + $0x28] sm:$0xf]
      %v327 = vld [vmem:[%s317 + $0x2c] sm:$0xf]
      %v328 = vld [vmem:[%s317 + $0x30] sm:$0xf]
      %v329 = vld [vmem:[%s317 + $0x34] sm:$0xf]
      %v330 = vld [vmem:[%s317 + $0x3c] sm:$0xf]
      %v331 = vld [vmem:[%s317 + $0x40] sm:$0xf]
      %v332 = vld [vmem:[%s317 + $0x44] sm:$0xf]
      %v333 = vld [vmem:[%s317 + $0x48] sm:$0xf]
      %v334 = vld [vmem:[%s317 + $0x50] sm:$0xf]
      %v335 = vld [vmem:[%s317 + $0x54] sm:$0xf]
      %v336 = vld [vmem:[%s317 + $0x58] sm:$0xf]
      %v337 = vld [vmem:[%s317 + $0x5c] sm:$0xf]
      %v338 = vld [vmem:[%s317 + $0x64] sm:$0xf]
      %v339 = vld [vmem:[%s317 + $0x68] sm:$0xf]
      %v340 = vld [vmem:[%s317 + $0x6c] sm:$0xf]
      %v341 = vld [vmem:[%s317 + $0x70] sm:$0xf]
      %v342 = vld [vmem:[%s317 + $0x78] sm:$0xf]
      %v343 = vld [vmem:[%s317 + $0x7c] sm:$0xf]
      %v344 = vld [vmem:[%s317 + $0x80] sm:$0xf]
      %v345 = vld [vmem:[%s317 + $0x84] sm:$0xf]
      %v346 = vld [vmem:[%s317 + $0x8c] sm:$0xf]
      %v347 = vld [vmem:[%s317 + $0x90] sm:$0xf]
      %v348 = vld [vmem:[%s317 + $0x94] sm:$0xf]
      %v349 = vld [vmem:[%s317 + $0x98] sm:$0xf]
      %v350 = vld [vmem:[%s317 + $0x10] sm:$0x1]
      %v351 = vld [vmem:[%s317 + $0x24] sm:$0x1]
      %v352 = vld [vmem:[%s317 + $0x38] sm:$0x1]
      %v353 = vld [vmem:[%s317 + $0x4c] sm:$0x1]
      %v354 = vld [vmem:[%s317 + $0x60] sm:$0x1]
      %v355 = vld [vmem:[%s317 + $0x74] sm:$0x1]
      %v356 = vld [vmem:[%s317 + $0x88] sm:$0x1]
      %v357 = vld [vmem:[%s317 + $0x9c] sm:$0x1]
      %v358 = vld [vmem:[%s317] sm:$0xe]
      %v359 = vld [vmem:[%s317 + $0x14] sm:$0xe]
      %v360 = vld [vmem:[%s317 + $0x28] sm:$0xe]
      %v361 = vld [vmem:[%s317 + $0x3c] sm:$0xe]
      %v362 = vld [vmem:[%s317 + $0x50] sm:$0xe]
      %v363 = vld [vmem:[%s317 + $0x64] sm:$0xe]
      %v364 = vld [vmem:[%s317 + $0x78] sm:$0xe]
      %v365 = vld [vmem:[%s317 + $0x8c] sm:$0xe]
      %s366 = sadd.s32 %s262, 2
      %s367 = smul.u32 %s366, 5
      %s368 = smul.addr %s367, 4
      %s369 = scalar_lea.vmem %s239, %s368
      %v370 = vld [vmem:[%s369] sm:$0xf]
      %v371 = vld [vmem:[%s369 + $0x4] sm:$0xf]
      %v372 = vld [vmem:[%s369 + $0x8] sm:$0xf]
      %v373 = vld [vmem:[%s369 + $0xc] sm:$0xf]
      %v374 = vld [vmem:[%s369 + $0x14] sm:$0xf]
      %v375 = vld [vmem:[%s369 + $0x18] sm:$0xf]
      %v376 = vld [vmem:[%s369 + $0x1c] sm:$0xf]
      %v377 = vld [vmem:[%s369 + $0x20] sm:$0xf]
      %v378 = vld [vmem:[%s369 + $0x28] sm:$0xf]
      %v379 = vld [vmem:[%s369 + $0x2c] sm:$0xf]
      %v380 = vld [vmem:[%s369 + $0x30] sm:$0xf]
      %v381 = vld [vmem:[%s369 + $0x34] sm:$0xf]
      %v382 = vld [vmem:[%s369 + $0x3c] sm:$0xf]
      %v383 = vld [vmem:[%s369 + $0x40] sm:$0xf]
      %v384 = vld [vmem:[%s369 + $0x44] sm:$0xf]
      %v385 = vld [vmem:[%s369 + $0x48] sm:$0xf]
      %v386 = vld [vmem:[%s369 + $0x50] sm:$0xf]
      %v387 = vld [vmem:[%s369 + $0x54] sm:$0xf]
      %v388 = vld [vmem:[%s369 + $0x58] sm:$0xf]
      %v389 = vld [vmem:[%s369 + $0x5c] sm:$0xf]
      %v390 = vld [vmem:[%s369 + $0x64] sm:$0xf]
      %v391 = vld [vmem:[%s369 + $0x68] sm:$0xf]
      %v392 = vld [vmem:[%s369 + $0x6c] sm:$0xf]
      %v393 = vld [vmem:[%s369 + $0x70] sm:$0xf]
      %v394 = vld [vmem:[%s369 + $0x78] sm:$0xf]
      %v395 = vld [vmem:[%s369 + $0x7c] sm:$0xf]
      %v396 = vld [vmem:[%s369 + $0x80] sm:$0xf]
      %v397 = vld [vmem:[%s369 + $0x84] sm:$0xf]
      %v398 = vld [vmem:[%s369 + $0x8c] sm:$0xf]
      %v399 = vld [vmem:[%s369 + $0x90] sm:$0xf]
      %v400 = vld [vmem:[%s369 + $0x94] sm:$0xf]
      %v401 = vld [vmem:[%s369 + $0x98] sm:$0xf]
      %v402 = vld [vmem:[%s369 + $0x10] sm:$0x1]
      %v403 = vld [vmem:[%s369 + $0x24] sm:$0x1]
      %v404 = vld [vmem:[%s369 + $0x38] sm:$0x1]
      %v405 = vld [vmem:[%s369 + $0x4c] sm:$0x1]
      %v406 = vld [vmem:[%s369 + $0x60] sm:$0x1]
      %v407 = vld [vmem:[%s369 + $0x74] sm:$0x1]
      %v408 = vld [vmem:[%s369 + $0x88] sm:$0x1]
      %v409 = vld [vmem:[%s369 + $0x9c] sm:$0x1]
      %v410 = vld [vmem:[%s369] sm:$0xe]
      %v411 = vld [vmem:[%s369 + $0x14] sm:$0xe]
      %v412 = vld [vmem:[%s369 + $0x28] sm:$0xe]
      %v413 = vld [vmem:[%s369 + $0x3c] sm:$0xe]
      %v414 = vld [vmem:[%s369 + $0x50] sm:$0xe]
      %v415 = vld [vmem:[%s369 + $0x64] sm:$0xe]
      %v416 = vld [vmem:[%s369 + $0x78] sm:$0xe]
      %v417 = vld [vmem:[%s369 + $0x8c] sm:$0xe]
      %v450 = vunpack.c.l.b16 %v266
      %v451 = vunpack.c.l.b16 %v267
      %v452 = vunpack.c.l.b16 %v268
      %v453 = vunpack.c.l.b16 %v269
      %v454 = vunpack.c.l.b16 %v270
      %v455 = vunpack.c.l.b16 %v271
      %v456 = vunpack.c.l.b16 %v272
      %v457 = vunpack.c.l.b16 %v273
      %v458 = vunpack.c.l.b16 %v274
      %v459 = vunpack.c.l.b16 %v275
      %v460 = vunpack.c.l.b16 %v276
      %v461 = vunpack.c.l.b16 %v277
      %v462 = vunpack.c.l.b16 %v278
      %v463 = vunpack.c.l.b16 %v279
      %v464 = vunpack.c.l.b16 %v280
      %v465 = vunpack.c.l.b16 %v281
      %v466 = vunpack.c.l.b16 %v282
      %v467 = vunpack.c.l.b16 %v283
      %v468 = vunpack.c.l.b16 %v284
      %v469 = vunpack.c.l.b16 %v285
      %v470 = vunpack.c.l.b16 %v286
      %v471 = vunpack.c.l.b16 %v287
      %v472 = vunpack.c.l.b16 %v288
      %v473 = vunpack.c.l.b16 %v289
      %v474 = vunpack.c.l.b16 %v290
      %v475 = vunpack.c.l.b16 %v291
      %v476 = vunpack.c.l.b16 %v292
      %v477 = vunpack.c.l.b16 %v293
      %v478 = vunpack.c.l.b16 %v294
      %v479 = vunpack.c.l.b16 %v295
      %v480 = vunpack.c.l.b16 %v296
      %v481 = vunpack.c.l.b16 %v297
      %v482 = vpack.c.b16 %v451, %v450
      %v483 = vpack.c.b16 %v453, %v452
      %v484 = vpack.c.b16 %v455, %v454
      %v485 = vpack.c.b16 %v457, %v456
      %v486 = vpack.c.b16 %v459, %v458
      %v487 = vpack.c.b16 %v461, %v460
      %v488 = vpack.c.b16 %v463, %v462
      %v489 = vpack.c.b16 %v465, %v464
      %v490 = vpack.c.b16 %v467, %v466
      %v491 = vpack.c.b16 %v469, %v468
      %v492 = vpack.c.b16 %v471, %v470
      %v493 = vpack.c.b16 %v473, %v472
      %v494 = vpack.c.b16 %v475, %v474
      %v495 = vpack.c.b16 %v477, %v476
      %v496 = vpack.c.b16 %v479, %v478
      %v497 = vpack.c.b16 %v481, %v480
      %v522 = vunpack.c.l.b16 %v298
      %v523 = vunpack.c.l.b16 %v299
      %v524 = vunpack.c.l.b16 %v300
      %v525 = vunpack.c.l.b16 %v301
      %v526 = vunpack.c.l.b16 %v302
      %v527 = vunpack.c.l.b16 %v303
      %v528 = vunpack.c.l.b16 %v304
      %v529 = vunpack.c.l.b16 %v305
      %v530 = vpack.c.b16 %v522, %v522
      %v531 = vpack.c.b16 %v523, %v523
      %v532 = vpack.c.b16 %v524, %v524
      %v533 = vpack.c.b16 %v525, %v525
      %v534 = vpack.c.b16 %v526, %v526
      %v535 = vpack.c.b16 %v527, %v527
      %v536 = vpack.c.b16 %v528, %v528
      %v537 = vpack.c.b16 %v529, %v529
      %vm538 = vsmask.f32 7424
      %v540 = vshrl.u32 %v482, 16
      %v542 = vshll.u32 %v482, 16
      %v544 = vrot.slane %v542, 1
      %v545 = vor.u32 %v540, %v544
      %v547 = vshll.u32 %v483, 16
      %v549 = vrot.slane %v547, 1
      %v550 = vsel %vm538, %v545, %v549
      %v551 = vshrl.u32 %v483, 16
      %v553 = vor.u32 %v551, %v549
      %v555 = vshll.u32 %v530, 16
      %v557 = vrot.slane %v555, 1
      %v558 = vsel %vm538, %v553, %v557
      %v560 = vshrl.u32 %v484, 16
      %v562 = vshll.u32 %v484, 16
      %v564 = vrot.slane %v562, 1
      %v565 = vor.u32 %v560, %v564
      %v567 = vshll.u32 %v485, 16
      %v569 = vrot.slane %v567, 1
      %v570 = vsel %vm538, %v565, %v569
      %v571 = vshrl.u32 %v485, 16
      %v573 = vor.u32 %v571, %v569
      %v575 = vshll.u32 %v531, 16
      %v577 = vrot.slane %v575, 1
      %v578 = vsel %vm538, %v573, %v577
      %v580 = vshrl.u32 %v486, 16
      %v582 = vshll.u32 %v486, 16
      %v584 = vrot.slane %v582, 1
      %v585 = vor.u32 %v580, %v584
      %v587 = vshll.u32 %v487, 16
      %v589 = vrot.slane %v587, 1
      %v590 = vsel %vm538, %v585, %v589
      %v591 = vshrl.u32 %v487, 16
      %v593 = vor.u32 %v591, %v589
      %v595 = vshll.u32 %v532, 16
      %v597 = vrot.slane %v595, 1
      %v598 = vsel %vm538, %v593, %v597
      %v600 = vshrl.u32 %v488, 16
      %v602 = vshll.u32 %v488, 16
      %v604 = vrot.slane %v602, 1
      %v605 = vor.u32 %v600, %v604
      %v607 = vshll.u32 %v489, 16
      %v609 = vrot.slane %v607, 1
      %v610 = vsel %vm538, %v605, %v609
      %v611 = vshrl.u32 %v489, 16
      %v613 = vor.u32 %v611, %v609
      %v615 = vshll.u32 %v533, 16
      %v617 = vrot.slane %v615, 1
      %v618 = vsel %vm538, %v613, %v617
      %v620 = vshrl.u32 %v490, 16
      %v622 = vshll.u32 %v490, 16
      %v624 = vrot.slane %v622, 1
      %v625 = vor.u32 %v620, %v624
      %v627 = vshll.u32 %v491, 16
      %v629 = vrot.slane %v627, 1
      %v630 = vsel %vm538, %v625, %v629
      %v631 = vshrl.u32 %v491, 16
      %v633 = vor.u32 %v631, %v629
      %v635 = vshll.u32 %v534, 16
      %v637 = vrot.slane %v635, 1
      %v638 = vsel %vm538, %v633, %v637
      %v640 = vshrl.u32 %v492, 16
      %v642 = vshll.u32 %v492, 16
      %v644 = vrot.slane %v642, 1
      %v645 = vor.u32 %v640, %v644
      %v647 = vshll.u32 %v493, 16
      %v649 = vrot.slane %v647, 1
      %v650 = vsel %vm538, %v645, %v649
      %v651 = vshrl.u32 %v493, 16
      %v653 = vor.u32 %v651, %v649
      %v655 = vshll.u32 %v535, 16
      %v657 = vrot.slane %v655, 1
      %v658 = vsel %vm538, %v653, %v657
      %v660 = vshrl.u32 %v494, 16
      %v662 = vshll.u32 %v494, 16
      %v664 = vrot.slane %v662, 1
      %v665 = vor.u32 %v660, %v664
      %v667 = vshll.u32 %v495, 16
      %v669 = vrot.slane %v667, 1
      %v670 = vsel %vm538, %v665, %v669
      %v671 = vshrl.u32 %v495, 16
      %v673 = vor.u32 %v671, %v669
      %v675 = vshll.u32 %v536, 16
      %v677 = vrot.slane %v675, 1
      %v678 = vsel %vm538, %v673, %v677
      %v680 = vshrl.u32 %v496, 16
      %v682 = vshll.u32 %v496, 16
      %v684 = vrot.slane %v682, 1
      %v685 = vor.u32 %v680, %v684
      %v687 = vshll.u32 %v497, 16
      %v689 = vrot.slane %v687, 1
      %v690 = vsel %vm538, %v685, %v689
      %v691 = vshrl.u32 %v497, 16
      %v693 = vor.u32 %v691, %v689
      %v695 = vshll.u32 %v537, 16
      %v697 = vrot.slane %v695, 1
      %v698 = vsel %vm538, %v693, %v697
      %v723 = vunpack.c.l.b16 %v306
      %v724 = vunpack.c.l.b16 %v307
      %v725 = vunpack.c.l.b16 %v308
      %v726 = vunpack.c.l.b16 %v309
      %v727 = vunpack.c.l.b16 %v310
      %v728 = vunpack.c.l.b16 %v311
      %v729 = vunpack.c.l.b16 %v312
      %v730 = vunpack.c.l.b16 %v313
      %v731 = vpack.c.b16 %v451, %v723
      %v732 = vpack.c.b16 %v455, %v724
      %v733 = vpack.c.b16 %v459, %v725
      %v734 = vpack.c.b16 %v463, %v726
      %v735 = vpack.c.b16 %v467, %v727
      %v736 = vpack.c.b16 %v471, %v728
      %v737 = vpack.c.b16 %v475, %v729
      %v738 = vpack.c.b16 %v479, %v730
      %vm739 = vcmask 1046528
      %v740 = vrot.slane %v731, 1
      %v741 = vrot.slane %v483, 1
      %v742 = vsel %vm739, %v740, %v741
      %v743 = vrot.slane %v530, 1
      %v744 = vsel %vm739, %v741, %v743
      %v745 = vrot.slane %v732, 1
      %v746 = vrot.slane %v485, 1
      %v747 = vsel %vm739, %v745, %v746
      %v748 = vrot.slane %v531, 1
      %v749 = vsel %vm739, %v746, %v748
      %v750 = vrot.slane %v733, 1
      %v751 = vrot.slane %v487, 1
      %v752 = vsel %vm739, %v750, %v751
      %v753 = vrot.slane %v532, 1
      %v754 = vsel %vm739, %v751, %v753
      %v755 = vrot.slane %v734, 1
      %v756 = vrot.slane %v489, 1
      %v757 = vsel %vm739, %v755, %v756
      %v758 = vrot.slane %v533, 1
      %v759 = vsel %vm739, %v756, %v758
      %v760 = vrot.slane %v735, 1
      %v761 = vrot.slane %v491, 1
      %v762 = vsel %vm739, %v760, %v761
      %v763 = vrot.slane %v534, 1
      %v764 = vsel %vm739, %v761, %v763
      %v765 = vrot.slane %v736, 1
      %v766 = vrot.slane %v493, 1
      %v767 = vsel %vm739, %v765, %v766
      %v768 = vrot.slane %v535, 1
      %v769 = vsel %vm739, %v766, %v768
      %v770 = vrot.slane %v737, 1
      %v771 = vrot.slane %v495, 1
      %v772 = vsel %vm739, %v770, %v771
      %v773 = vrot.slane %v536, 1
      %v774 = vsel %vm739, %v771, %v773
      %v775 = vrot.slane %v738, 1
      %v776 = vrot.slane %v497, 1
      %v777 = vsel %vm739, %v775, %v776
      %v778 = vrot.slane %v537, 1
      %v779 = vsel %vm739, %v776, %v778
      %v828 = vunpack.c.l.b16 %v318
      %v829 = vunpack.c.l.b16 %v319
      %v830 = vunpack.c.l.b16 %v320
      %v831 = vunpack.c.l.b16 %v321
      %v832 = vunpack.c.l.b16 %v322
      %v833 = vunpack.c.l.b16 %v323
      %v834 = vunpack.c.l.b16 %v324
      %v835 = vunpack.c.l.b16 %v325
      %v836 = vunpack.c.l.b16 %v326
      %v837 = vunpack.c.l.b16 %v327
      %v838 = vunpack.c.l.b16 %v328
      %v839 = vunpack.c.l.b16 %v329
      %v840 = vunpack.c.l.b16 %v330
      %v841 = vunpack.c.l.b16 %v331
      %v842 = vunpack.c.l.b16 %v332
      %v843 = vunpack.c.l.b16 %v333
      %v844 = vunpack.c.l.b16 %v334
      %v845 = vunpack.c.l.b16 %v335
      %v846 = vunpack.c.l.b16 %v336
      %v847 = vunpack.c.l.b16 %v337
      %v848 = vunpack.c.l.b16 %v338
      %v849 = vunpack.c.l.b16 %v339
      %v850 = vunpack.c.l.b16 %v340
      %v851 = vunpack.c.l.b16 %v341
      %v852 = vunpack.c.l.b16 %v342
      %v853 = vunpack.c.l.b16 %v343
      %v854 = vunpack.c.l.b16 %v344
      %v855 = vunpack.c.l.b16 %v345
      %v856 = vunpack.c.l.b16 %v346
      %v857 = vunpack.c.l.b16 %v347
      %v858 = vunpack.c.l.b16 %v348
      %v859 = vunpack.c.l.b16 %v349
      %v860 = vpack.c.b16 %v829, %v828
      %v861 = vpack.c.b16 %v831, %v830
      %v862 = vpack.c.b16 %v833, %v832
      %v863 = vpack.c.b16 %v835, %v834
      %v864 = vpack.c.b16 %v837, %v836
      %v865 = vpack.c.b16 %v839, %v838
      %v866 = vpack.c.b16 %v841, %v840
      %v867 = vpack.c.b16 %v843, %v842
      %v868 = vpack.c.b16 %v845, %v844
      %v869 = vpack.c.b16 %v847, %v846
      %v870 = vpack.c.b16 %v849, %v848
      %v871 = vpack.c.b16 %v851, %v850
      %v872 = vpack.c.b16 %v853, %v852
      %v873 = vpack.c.b16 %v855, %v854
      %v874 = vpack.c.b16 %v857, %v856
      %v875 = vpack.c.b16 %v859, %v858
      %v900 = vunpack.c.l.b16 %v350
      %v901 = vunpack.c.l.b16 %v351
      %v902 = vunpack.c.l.b16 %v352
      %v903 = vunpack.c.l.b16 %v353
      %v904 = vunpack.c.l.b16 %v354
      %v905 = vunpack.c.l.b16 %v355
      %v906 = vunpack.c.l.b16 %v356
      %v907 = vunpack.c.l.b16 %v357
      %v908 = vpack.c.b16 %v900, %v900
      %v909 = vpack.c.b16 %v901, %v901
      %v910 = vpack.c.b16 %v902, %v902
      %v911 = vpack.c.b16 %v903, %v903
      %v912 = vpack.c.b16 %v904, %v904
      %v913 = vpack.c.b16 %v905, %v905
      %v914 = vpack.c.b16 %v906, %v906
      %v915 = vpack.c.b16 %v907, %v907
      %v917 = vshrl.u32 %v860, 16
      %v919 = vshll.u32 %v860, 16
      %v921 = vrot.slane %v919, 1
      %v922 = vor.u32 %v917, %v921
      %v924 = vshll.u32 %v861, 16
      %v926 = vrot.slane %v924, 1
      %v927 = vsel %vm538, %v922, %v926
      %v928 = vshrl.u32 %v861, 16
      %v930 = vor.u32 %v928, %v926
      %v932 = vshll.u32 %v908, 16
      %v934 = vrot.slane %v932, 1
      %v935 = vsel %vm538, %v930, %v934
      %v937 = vshrl.u32 %v862, 16
      %v939 = vshll.u32 %v862, 16
      %v941 = vrot.slane %v939, 1
      %v942 = vor.u32 %v937, %v941
      %v944 = vshll.u32 %v863, 16
      %v946 = vrot.slane %v944, 1
      %v947 = vsel %vm538, %v942, %v946
      %v948 = vshrl.u32 %v863, 16
      %v950 = vor.u32 %v948, %v946
      %v952 = vshll.u32 %v909, 16
      %v954 = vrot.slane %v952, 1
      %v955 = vsel %vm538, %v950, %v954
      %v957 = vshrl.u32 %v864, 16
      %v959 = vshll.u32 %v864, 16
      %v961 = vrot.slane %v959, 1
      %v962 = vor.u32 %v957, %v961
      %v964 = vshll.u32 %v865, 16
      %v966 = vrot.slane %v964, 1
      %v967 = vsel %vm538, %v962, %v966
      %v968 = vshrl.u32 %v865, 16
      %v970 = vor.u32 %v968, %v966
      %v972 = vshll.u32 %v910, 16
      %v974 = vrot.slane %v972, 1
      %v975 = vsel %vm538, %v970, %v974
      %v977 = vshrl.u32 %v866, 16
      %v979 = vshll.u32 %v866, 16
      %v981 = vrot.slane %v979, 1
      %v982 = vor.u32 %v977, %v981
      %v984 = vshll.u32 %v867, 16
      %v986 = vrot.slane %v984, 1
      %v987 = vsel %vm538, %v982, %v986
      %v988 = vshrl.u32 %v867, 16
      %v990 = vor.u32 %v988, %v986
      %v992 = vshll.u32 %v911, 16
      %v994 = vrot.slane %v992, 1
      %v995 = vsel %vm538, %v990, %v994
      %v997 = vshrl.u32 %v868, 16
      %v999 = vshll.u32 %v868, 16
      %v1001 = vrot.slane %v999, 1
      %v1002 = vor.u32 %v997, %v1001
      %v1004 = vshll.u32 %v869, 16
      %v1006 = vrot.slane %v1004, 1
      %v1007 = vsel %vm538, %v1002, %v1006
      %v1008 = vshrl.u32 %v869, 16
      %v1010 = vor.u32 %v1008, %v1006
      %v1012 = vshll.u32 %v912, 16
      %v1014 = vrot.slane %v1012, 1
      %v1015 = vsel %vm538, %v1010, %v1014
      %v1017 = vshrl.u32 %v870, 16
      %v1019 = vshll.u32 %v870, 16
      %v1021 = vrot.slane %v1019, 1
      %v1022 = vor.u32 %v1017, %v1021
      %v1024 = vshll.u32 %v871, 16
      %v1026 = vrot.slane %v1024, 1
      %v1027 = vsel %vm538, %v1022, %v1026
      %v1028 = vshrl.u32 %v871, 16
      %v1030 = vor.u32 %v1028, %v1026
      %v1032 = vshll.u32 %v913, 16
      %v1034 = vrot.slane %v1032, 1
      %v1035 = vsel %vm538, %v1030, %v1034
      %v1037 = vshrl.u32 %v872, 16
      %v1039 = vshll.u32 %v872, 16
      %v1041 = vrot.slane %v1039, 1
      %v1042 = vor.u32 %v1037, %v1041
      %v1044 = vshll.u32 %v873, 16
      %v1046 = vrot.slane %v1044, 1
      %v1047 = vsel %vm538, %v1042, %v1046
      %v1048 = vshrl.u32 %v873, 16
      %v1050 = vor.u32 %v1048, %v1046
      %v1052 = vshll.u32 %v914, 16
      %v1054 = vrot.slane %v1052, 1
      %v1055 = vsel %vm538, %v1050, %v1054
      %v1057 = vshrl.u32 %v874, 16
      %v1059 = vshll.u32 %v874, 16
      %v1061 = vrot.slane %v1059, 1
      %v1062 = vor.u32 %v1057, %v1061
      %v1064 = vshll.u32 %v875, 16
      %v1066 = vrot.slane %v1064, 1
      %v1067 = vsel %vm538, %v1062, %v1066
      %v1068 = vshrl.u32 %v875, 16
      %v1070 = vor.u32 %v1068, %v1066
      %v1072 = vshll.u32 %v915, 16
      %v1074 = vrot.slane %v1072, 1
      %v1075 = vsel %vm538, %v1070, %v1074
      %v1100 = vunpack.c.l.b16 %v358
      %v1101 = vunpack.c.l.b16 %v359
      %v1102 = vunpack.c.l.b16 %v360
      %v1103 = vunpack.c.l.b16 %v361
      %v1104 = vunpack.c.l.b16 %v362
      %v1105 = vunpack.c.l.b16 %v363
      %v1106 = vunpack.c.l.b16 %v364
      %v1107 = vunpack.c.l.b16 %v365
      %v1108 = vpack.c.b16 %v829, %v1100
      %v1109 = vpack.c.b16 %v833, %v1101
      %v1110 = vpack.c.b16 %v837, %v1102
      %v1111 = vpack.c.b16 %v841, %v1103
      %v1112 = vpack.c.b16 %v845, %v1104
      %v1113 = vpack.c.b16 %v849, %v1105
      %v1114 = vpack.c.b16 %v853, %v1106
      %v1115 = vpack.c.b16 %v857, %v1107
      %v1116 = vrot.slane %v1108, 1
      %v1117 = vrot.slane %v861, 1
      %v1118 = vsel %vm739, %v1116, %v1117
      %v1119 = vrot.slane %v908, 1
      %v1120 = vsel %vm739, %v1117, %v1119
      %v1121 = vrot.slane %v1109, 1
      %v1122 = vrot.slane %v863, 1
      %v1123 = vsel %vm739, %v1121, %v1122
      %v1124 = vrot.slane %v909, 1
      %v1125 = vsel %vm739, %v1122, %v1124
      %v1126 = vrot.slane %v1110, 1
      %v1127 = vrot.slane %v865, 1
      %v1128 = vsel %vm739, %v1126, %v1127
      %v1129 = vrot.slane %v910, 1
      %v1130 = vsel %vm739, %v1127, %v1129
      %v1131 = vrot.slane %v1111, 1
      %v1132 = vrot.slane %v867, 1
      %v1133 = vsel %vm739, %v1131, %v1132
      %v1134 = vrot.slane %v911, 1
      %v1135 = vsel %vm739, %v1132, %v1134
      %v1136 = vrot.slane %v1112, 1
      %v1137 = vrot.slane %v869, 1
      %v1138 = vsel %vm739, %v1136, %v1137
      %v1139 = vrot.slane %v912, 1
      %v1140 = vsel %vm739, %v1137, %v1139
      %v1141 = vrot.slane %v1113, 1
      %v1142 = vrot.slane %v871, 1
      %v1143 = vsel %vm739, %v1141, %v1142
      %v1144 = vrot.slane %v913, 1
      %v1145 = vsel %vm739, %v1142, %v1144
      %v1146 = vrot.slane %v1114, 1
      %v1147 = vrot.slane %v873, 1
      %v1148 = vsel %vm739, %v1146, %v1147
      %v1149 = vrot.slane %v914, 1
      %v1150 = vsel %vm739, %v1147, %v1149
      %v1151 = vrot.slane %v1115, 1
      %v1152 = vrot.slane %v875, 1
      %v1153 = vsel %vm739, %v1151, %v1152
      %v1154 = vrot.slane %v915, 1
      %v1155 = vsel %vm739, %v1152, %v1154
      %v1204 = vunpack.c.l.b16 %v370
      %v1205 = vunpack.c.l.b16 %v371
      %v1206 = vunpack.c.l.b16 %v372
      %v1207 = vunpack.c.l.b16 %v373
      %v1208 = vunpack.c.l.b16 %v374
      %v1209 = vunpack.c.l.b16 %v375
      %v1210 = vunpack.c.l.b16 %v376
      %v1211 = vunpack.c.l.b16 %v377
      %v1212 = vunpack.c.l.b16 %v378
      %v1213 = vunpack.c.l.b16 %v379
      %v1214 = vunpack.c.l.b16 %v380
      %v1215 = vunpack.c.l.b16 %v381
      %v1216 = vunpack.c.l.b16 %v382
      %v1217 = vunpack.c.l.b16 %v383
      %v1218 = vunpack.c.l.b16 %v384
      %v1219 = vunpack.c.l.b16 %v385
      %v1220 = vunpack.c.l.b16 %v386
      %v1221 = vunpack.c.l.b16 %v387
      %v1222 = vunpack.c.l.b16 %v388
      %v1223 = vunpack.c.l.b16 %v389
      %v1224 = vunpack.c.l.b16 %v390
      %v1225 = vunpack.c.l.b16 %v391
      %v1226 = vunpack.c.l.b16 %v392
      %v1227 = vunpack.c.l.b16 %v393
      %v1228 = vunpack.c.l.b16 %v394
      %v1229 = vunpack.c.l.b16 %v395
      %v1230 = vunpack.c.l.b16 %v396
      %v1231 = vunpack.c.l.b16 %v397
      %v1232 = vunpack.c.l.b16 %v398
      %v1233 = vunpack.c.l.b16 %v399
      %v1234 = vunpack.c.l.b16 %v400
      %v1235 = vunpack.c.l.b16 %v401
      %v1236 = vpack.c.b16 %v1205, %v1204
      %v1237 = vpack.c.b16 %v1207, %v1206
      %v1238 = vpack.c.b16 %v1209, %v1208
      %v1239 = vpack.c.b16 %v1211, %v1210
      %v1240 = vpack.c.b16 %v1213, %v1212
      %v1241 = vpack.c.b16 %v1215, %v1214
      %v1242 = vpack.c.b16 %v1217, %v1216
      %v1243 = vpack.c.b16 %v1219, %v1218
      %v1244 = vpack.c.b16 %v1221, %v1220
      %v1245 = vpack.c.b16 %v1223, %v1222
      %v1246 = vpack.c.b16 %v1225, %v1224
      %v1247 = vpack.c.b16 %v1227, %v1226
      %v1248 = vpack.c.b16 %v1229, %v1228
      %v1249 = vpack.c.b16 %v1231, %v1230
      %v1250 = vpack.c.b16 %v1233, %v1232
      %v1251 = vpack.c.b16 %v1235, %v1234
      %v1276 = vunpack.c.l.b16 %v402
      %v1277 = vunpack.c.l.b16 %v403
      %v1278 = vunpack.c.l.b16 %v404
      %v1279 = vunpack.c.l.b16 %v405
      %v1280 = vunpack.c.l.b16 %v406
      %v1281 = vunpack.c.l.b16 %v407
      %v1282 = vunpack.c.l.b16 %v408
      %v1283 = vunpack.c.l.b16 %v409
      %v1284 = vpack.c.b16 %v1276, %v1276
      %v1285 = vpack.c.b16 %v1277, %v1277
      %v1286 = vpack.c.b16 %v1278, %v1278
      %v1287 = vpack.c.b16 %v1279, %v1279
      %v1288 = vpack.c.b16 %v1280, %v1280
      %v1289 = vpack.c.b16 %v1281, %v1281
      %v1290 = vpack.c.b16 %v1282, %v1282
      %v1291 = vpack.c.b16 %v1283, %v1283
      %v1293 = vshrl.u32 %v1236, 16
      %v1295 = vshll.u32 %v1236, 16
      %v1297 = vrot.slane %v1295, 1
      %v1298 = vor.u32 %v1293, %v1297
      %v1300 = vshll.u32 %v1237, 16
      %v1302 = vrot.slane %v1300, 1
      %v1303 = vsel %vm538, %v1298, %v1302
      %v1304 = vshrl.u32 %v1237, 16
      %v1306 = vor.u32 %v1304, %v1302
      %v1308 = vshll.u32 %v1284, 16
      %v1310 = vrot.slane %v1308, 1
      %v1311 = vsel %vm538, %v1306, %v1310
      %v1313 = vshrl.u32 %v1238, 16
      %v1315 = vshll.u32 %v1238, 16
      %v1317 = vrot.slane %v1315, 1
      %v1318 = vor.u32 %v1313, %v1317
      %v1320 = vshll.u32 %v1239, 16
      %v1322 = vrot.slane %v1320, 1
      %v1323 = vsel %vm538, %v1318, %v1322
      %v1324 = vshrl.u32 %v1239, 16
      %v1326 = vor.u32 %v1324, %v1322
      %v1328 = vshll.u32 %v1285, 16
      %v1330 = vrot.slane %v1328, 1
      %v1331 = vsel %vm538, %v1326, %v1330
      %v1333 = vshrl.u32 %v1240, 16
      %v1335 = vshll.u32 %v1240, 16
      %v1337 = vrot.slane %v1335, 1
      %v1338 = vor.u32 %v1333, %v1337
      %v1340 = vshll.u32 %v1241, 16
      %v1342 = vrot.slane %v1340, 1
      %v1343 = vsel %vm538, %v1338, %v1342
      %v1344 = vshrl.u32 %v1241, 16
      %v1346 = vor.u32 %v1344, %v1342
      %v1348 = vshll.u32 %v1286, 16
      %v1350 = vrot.slane %v1348, 1
      %v1351 = vsel %vm538, %v1346, %v1350
      %v1353 = vshrl.u32 %v1242, 16
      %v1355 = vshll.u32 %v1242, 16
      %v1357 = vrot.slane %v1355, 1
      %v1358 = vor.u32 %v1353, %v1357
      %v1360 = vshll.u32 %v1243, 16
      %v1362 = vrot.slane %v1360, 1
      %v1363 = vsel %vm538, %v1358, %v1362
      %v1364 = vshrl.u32 %v1243, 16
      %v1366 = vor.u32 %v1364, %v1362
      %v1368 = vshll.u32 %v1287, 16
      %v1370 = vrot.slane %v1368, 1
      %v1371 = vsel %vm538, %v1366, %v1370
      %v1373 = vshrl.u32 %v1244, 16
      %v1375 = vshll.u32 %v1244, 16
      %v1377 = vrot.slane %v1375, 1
      %v1378 = vor.u32 %v1373, %v1377
      %v1380 = vshll.u32 %v1245, 16
      %v1382 = vrot.slane %v1380, 1
      %v1383 = vsel %vm538, %v1378, %v1382
      %v1384 = vshrl.u32 %v1245, 16
      %v1386 = vor.u32 %v1384, %v1382
      %v1388 = vshll.u32 %v1288, 16
      %v1390 = vrot.slane %v1388, 1
      %v1391 = vsel %vm538, %v1386, %v1390
      %v1393 = vshrl.u32 %v1246, 16
      %v1395 = vshll.u32 %v1246, 16
      %v1397 = vrot.slane %v1395, 1
      %v1398 = vor.u32 %v1393, %v1397
      %v1400 = vshll.u32 %v1247, 16
      %v1402 = vrot.slane %v1400, 1
      %v1403 = vsel %vm538, %v1398, %v1402
      %v1404 = vshrl.u32 %v1247, 16
      %v1406 = vor.u32 %v1404, %v1402
      %v1408 = vshll.u32 %v1289, 16
      %v1410 = vrot.slane %v1408, 1
      %v1411 = vsel %vm538, %v1406, %v1410
      %v1413 = vshrl.u32 %v1248, 16
      %v1415 = vshll.u32 %v1248, 16
      %v1417 = vrot.slane %v1415, 1
      %v1418 = vor.u32 %v1413, %v1417
      %v1420 = vshll.u32 %v1249, 16
      %v1422 = vrot.slane %v1420, 1
      %v1423 = vsel %vm538, %v1418, %v1422
      %v1424 = vshrl.u32 %v1249, 16
      %v1426 = vor.u32 %v1424, %v1422
      %v1428 = vshll.u32 %v1290, 16
      %v1430 = vrot.slane %v1428, 1
      %v1431 = vsel %vm538, %v1426, %v1430
      %v1433 = vshrl.u32 %v1250, 16
      %v1435 = vshll.u32 %v1250, 16
      %v1437 = vrot.slane %v1435, 1
      %v1438 = vor.u32 %v1433, %v1437
      %v1440 = vshll.u32 %v1251, 16
      %v1442 = vrot.slane %v1440, 1
      %v1443 = vsel %vm538, %v1438, %v1442
      %v1444 = vshrl.u32 %v1251, 16
      %v1446 = vor.u32 %v1444, %v1442
      %v1448 = vshll.u32 %v1291, 16
      %v1450 = vrot.slane %v1448, 1
      %v1451 = vsel %vm538, %v1446, %v1450
      %v1476 = vunpack.c.l.b16 %v410
      %v1477 = vunpack.c.l.b16 %v411
      %v1478 = vunpack.c.l.b16 %v412
      %v1479 = vunpack.c.l.b16 %v413
      %v1480 = vunpack.c.l.b16 %v414
      %v1481 = vunpack.c.l.b16 %v415
      %v1482 = vunpack.c.l.b16 %v416
      %v1483 = vunpack.c.l.b16 %v417
      %v1484 = vpack.c.b16 %v1205, %v1476
      %v1485 = vpack.c.b16 %v1209, %v1477
      %v1486 = vpack.c.b16 %v1213, %v1478
      %v1487 = vpack.c.b16 %v1217, %v1479
      %v1488 = vpack.c.b16 %v1221, %v1480
      %v1489 = vpack.c.b16 %v1225, %v1481
      %v1490 = vpack.c.b16 %v1229, %v1482
      %v1491 = vpack.c.b16 %v1233, %v1483
      %v1492 = vrot.slane %v1484, 1
      %v1493 = vrot.slane %v1237, 1
      %v1494 = vsel %vm739, %v1492, %v1493
      %v1495 = vrot.slane %v1284, 1
      %v1496 = vsel %vm739, %v1493, %v1495
      %v1497 = vrot.slane %v1485, 1
      %v1498 = vrot.slane %v1239, 1
      %v1499 = vsel %vm739, %v1497, %v1498
      %v1500 = vrot.slane %v1285, 1
      %v1501 = vsel %vm739, %v1498, %v1500
      %v1502 = vrot.slane %v1486, 1
      %v1503 = vrot.slane %v1241, 1
      %v1504 = vsel %vm739, %v1502, %v1503
      %v1505 = vrot.slane %v1286, 1
      %v1506 = vsel %vm739, %v1503, %v1505
      %v1507 = vrot.slane %v1487, 1
      %v1508 = vrot.slane %v1243, 1
      %v1509 = vsel %vm739, %v1507, %v1508
      %v1510 = vrot.slane %v1287, 1
      %v1511 = vsel %vm739, %v1508, %v1510
      %v1512 = vrot.slane %v1488, 1
      %v1513 = vrot.slane %v1245, 1
      %v1514 = vsel %vm739, %v1512, %v1513
      %v1515 = vrot.slane %v1288, 1
      %v1516 = vsel %vm739, %v1513, %v1515
      %v1517 = vrot.slane %v1489, 1
      %v1518 = vrot.slane %v1247, 1
      %v1519 = vsel %vm739, %v1517, %v1518
      %v1520 = vrot.slane %v1289, 1
      %v1521 = vsel %vm739, %v1518, %v1520
      %v1522 = vrot.slane %v1490, 1
      %v1523 = vrot.slane %v1249, 1
      %v1524 = vsel %vm739, %v1522, %v1523
      %v1525 = vrot.slane %v1290, 1
      %v1526 = vsel %vm739, %v1523, %v1525
      %v1527 = vrot.slane %v1491, 1
      %v1528 = vrot.slane %v1251, 1
      %v1529 = vsel %vm739, %v1527, %v1528
      %v1530 = vrot.slane %v1291, 1
      %v1531 = vsel %vm739, %v1528, %v1530
      %v1548 = vld [vmem:[%s1] sm:$0xf]
      %v1549 = vld [vmem:[%s1 + $0x4] sm:$0xf]
      %v1550 = vld [vmem:[%s1 + $0x8] sm:$0xf]
      %v1551 = vld [vmem:[%s1 + $0xc] sm:$0xf]
      %v1552 = vld [vmem:[%s1 + $0x10] sm:$0xf]
      %v1553 = vld [vmem:[%s1 + $0x14] sm:$0xf]
      %v1554 = vld [vmem:[%s1 + $0x18] sm:$0xf]
      %v1555 = vld [vmem:[%s1 + $0x1c] sm:$0xf]
      %v1556 = vld [vmem:[%s1 + $0x20] sm:$0xf]
      %v1557 = vld [vmem:[%s1 + $0x24] sm:$0xf]
      %v1558 = vld [vmem:[%s1 + $0x28] sm:$0xf]
      %v1559 = vld [vmem:[%s1 + $0x2c] sm:$0xf]
      %v1560 = vld [vmem:[%s1 + $0x30] sm:$0xf]
      %v1561 = vld [vmem:[%s1 + $0x34] sm:$0xf]
      %v1562 = vld [vmem:[%s1 + $0x38] sm:$0xf]
      %v1563 = vld [vmem:[%s1 + $0x3c] sm:$0xf]
      %v1564 = vld [vmem:[%s1 + $0x40] sm:$0xf]
      %v1565 = vld [vmem:[%s1 + $0x44] sm:$0xf]
      %v1566 = vld [vmem:[%s1 + $0x48] sm:$0xf]
      %v1567 = vld [vmem:[%s1 + $0x4c] sm:$0xf]
      %v1568 = vld [vmem:[%s1 + $0x50] sm:$0xf]
      %v1569 = vld [vmem:[%s1 + $0x54] sm:$0xf]
      %v1570 = vld [vmem:[%s1 + $0x58] sm:$0xf]
      %v1571 = vld [vmem:[%s1 + $0x5c] sm:$0xf]
      %v1572 = vld [vmem:[%s1 + $0x60] sm:$0xf]
      %v1573 = vld [vmem:[%s1 + $0x64] sm:$0xf]
      %v1574 = vld [vmem:[%s1 + $0x68] sm:$0xf]
      %v1575 = vld [vmem:[%s1 + $0x6c] sm:$0xf]
      %v1576 = vld [vmem:[%s1 + $0x70] sm:$0xf]
      %v1577 = vld [vmem:[%s1 + $0x74] sm:$0xf]
      %v1578 = vld [vmem:[%s1 + $0x78] sm:$0xf]
      %v1579 = vld [vmem:[%s1 + $0x7c] sm:$0xf]
      %v1580 = vld [vmem:[%s1 + $0x80] sm:$0xf]
      %v1581 = vld [vmem:[%s1 + $0x84] sm:$0xf]
      %v1582 = vld [vmem:[%s1 + $0x88] sm:$0xf]
      %v1583 = vld [vmem:[%s1 + $0x8c] sm:$0xf]
      %v1584 = vld [vmem:[%s1 + $0x90] sm:$0xf]
      %v1585 = vld [vmem:[%s1 + $0x94] sm:$0xf]
      %v1586 = vld [vmem:[%s1 + $0x98] sm:$0xf]
      %v1587 = vld [vmem:[%s1 + $0x9c] sm:$0xf]
      %v1588 = vld [vmem:[%s1 + $0xa0] sm:$0xf]
      %v1589 = vld [vmem:[%s1 + $0xa4] sm:$0xf]
      %v1590 = vld [vmem:[%s1 + $0xa8] sm:$0xf]
      %v1591 = vld [vmem:[%s1 + $0xac] sm:$0xf]
      %v1592 = vld [vmem:[%s1 + $0xb0] sm:$0xf]
      %v1593 = vld [vmem:[%s1 + $0xb4] sm:$0xf]
      %v1594 = vld [vmem:[%s1 + $0xb8] sm:$0xf]
      %v1595 = vld [vmem:[%s1 + $0xbc] sm:$0xf]
      %v1596 = vld [vmem:[%s1 + $0xc0] sm:$0xf]
      %v1597 = vld [vmem:[%s1 + $0xc4] sm:$0xf]
      %v1598 = vld [vmem:[%s1 + $0xc8] sm:$0xf]
      %v1599 = vld [vmem:[%s1 + $0xcc] sm:$0xf]
      %v1600 = vld [vmem:[%s1 + $0xd0] sm:$0xf]
      %v1601 = vld [vmem:[%s1 + $0xd4] sm:$0xf]
      %v1602 = vld [vmem:[%s1 + $0xd8] sm:$0xf]
      %v1603 = vld [vmem:[%s1 + $0xdc] sm:$0xf]
      %v1604 = vld [vmem:[%s1 + $0xe0] sm:$0xf]
      %v1605 = vld [vmem:[%s1 + $0xe4] sm:$0xf]
      %v1606 = vld [vmem:[%s1 + $0xe8] sm:$0xf]
      %v1607 = vld [vmem:[%s1 + $0xec] sm:$0xf]
      %v1608 = vld [vmem:[%s1 + $0xf0] sm:$0xf]
      %v1609 = vld [vmem:[%s1 + $0xf4] sm:$0xf]
      %v1610 = vld [vmem:[%s1 + $0xf8] sm:$0xf]
      %v1611 = vld [vmem:[%s1 + $0xfc] sm:$0xf]
      %v1612 = vld [vmem:[%s1 + $0x100] sm:$0xf]
      %v1613 = vld [vmem:[%s1 + $0x104] sm:$0xf]
      %v1614 = vld [vmem:[%s1 + $0x108] sm:$0xf]
      %v1615 = vld [vmem:[%s1 + $0x10c] sm:$0xf]
      %v1616 = vld [vmem:[%s1 + $0x110] sm:$0xf]
      %v1617 = vld [vmem:[%s1 + $0x114] sm:$0xf]
      %v1618 = vld [vmem:[%s1 + $0x118] sm:$0xf]
      %v1619 = vld [vmem:[%s1 + $0x11c] sm:$0xf]
      %v1620 = vld [vmem:[%s1 + $0x120] sm:$0xf]
      %v1621 = vld [vmem:[%s1 + $0x124] sm:$0xf]
      %v1622 = vld [vmem:[%s1 + $0x128] sm:$0xf]
      %v1623 = vld [vmem:[%s1 + $0x12c] sm:$0xf]
      %v1624 = vld [vmem:[%s1 + $0x130] sm:$0xf]
      %v1625 = vld [vmem:[%s1 + $0x134] sm:$0xf]
      %v1626 = vld [vmem:[%s1 + $0x138] sm:$0xf]
      %v1627 = vld [vmem:[%s1 + $0x13c] sm:$0xf]
      %v1628 = vld [vmem:[%s1 + $0x140] sm:$0xf]
      %v1629 = vld [vmem:[%s1 + $0x144] sm:$0xf]
      %v1630 = vld [vmem:[%s1 + $0x148] sm:$0xf]
      %v1631 = vld [vmem:[%s1 + $0x14c] sm:$0xf]
      %v1632 = vld [vmem:[%s1 + $0x150] sm:$0xf]
      %v1633 = vld [vmem:[%s1 + $0x154] sm:$0xf]
      %v1634 = vld [vmem:[%s1 + $0x158] sm:$0xf]
      %v1635 = vld [vmem:[%s1 + $0x15c] sm:$0xf]
      %v1636 = vld [vmem:[%s1 + $0x160] sm:$0xf]
      %v1637 = vld [vmem:[%s1 + $0x164] sm:$0xf]
      %v1638 = vld [vmem:[%s1 + $0x168] sm:$0xf]
      %v1639 = vld [vmem:[%s1 + $0x16c] sm:$0xf]
      %v1640 = vld [vmem:[%s1 + $0x170] sm:$0xf]
      %v1641 = vld [vmem:[%s1 + $0x174] sm:$0xf]
      %v1642 = vld [vmem:[%s1 + $0x178] sm:$0xf]
      %v1643 = vld [vmem:[%s1 + $0x17c] sm:$0xf]
      %v1644 = vld [vmem:[%s1 + $0x180] sm:$0xf]
      %v1645 = vld [vmem:[%s1 + $0x184] sm:$0xf]
      %v1646 = vld [vmem:[%s1 + $0x188] sm:$0xf]
      %v1647 = vld [vmem:[%s1 + $0x18c] sm:$0xf]
      %v1648 = vld [vmem:[%s1 + $0x190] sm:$0xf]
      %v1649 = vld [vmem:[%s1 + $0x194] sm:$0xf]
      %v1650 = vld [vmem:[%s1 + $0x198] sm:$0xf]
      %v1651 = vld [vmem:[%s1 + $0x19c] sm:$0xf]
      %v1652 = vld [vmem:[%s1 + $0x1a0] sm:$0xf]
      %v1653 = vld [vmem:[%s1 + $0x1a4] sm:$0xf]
      %v1654 = vld [vmem:[%s1 + $0x1a8] sm:$0xf]
      %v1655 = vld [vmem:[%s1 + $0x1ac] sm:$0xf]
      %v1656 = vld [vmem:[%s1 + $0x1b0] sm:$0xf]
      %v1657 = vld [vmem:[%s1 + $0x1b4] sm:$0xf]
      %v1658 = vld [vmem:[%s1 + $0x1b8] sm:$0xf]
      %v1659 = vld [vmem:[%s1 + $0x1bc] sm:$0xf]
      %v1660 = vld [vmem:[%s1 + $0x1c0] sm:$0xf]
      %v1661 = vld [vmem:[%s1 + $0x1c4] sm:$0xf]
      %v1662 = vld [vmem:[%s1 + $0x1c8] sm:$0xf]
      %v1663 = vld [vmem:[%s1 + $0x1cc] sm:$0xf]
      %v1664 = vld [vmem:[%s1 + $0x1d0] sm:$0xf]
      %v1665 = vld [vmem:[%s1 + $0x1d4] sm:$0xf]
      %v1666 = vld [vmem:[%s1 + $0x1d8] sm:$0xf]
      %v1667 = vld [vmem:[%s1 + $0x1dc] sm:$0xf]
      %v1668 = vld [vmem:[%s1 + $0x1e0] sm:$0xf]
      %v1669 = vld [vmem:[%s1 + $0x1e4] sm:$0xf]
      %v1670 = vld [vmem:[%s1 + $0x1e8] sm:$0xf]
      %v1671 = vld [vmem:[%s1 + $0x1ec] sm:$0xf]
      %v1672 = vld [vmem:[%s1 + $0x1f0] sm:$0xf]
      %v1673 = vld [vmem:[%s1 + $0x1f4] sm:$0xf]
      %v1674 = vld [vmem:[%s1 + $0x1f8] sm:$0xf]
      %v1675 = vld [vmem:[%s1 + $0x1fc] sm:$0xf]
      %v1676 = vld [vmem:[%s1 + $0x200] sm:$0xf]
      %v1677 = vld [vmem:[%s1 + $0x204] sm:$0xf]
      %v1678 = vld [vmem:[%s1 + $0x208] sm:$0xf]
      %v1679 = vld [vmem:[%s1 + $0x20c] sm:$0xf]
      %v1680 = vld [vmem:[%s1 + $0x210] sm:$0xf]
      %v1681 = vld [vmem:[%s1 + $0x214] sm:$0xf]
      %v1682 = vld [vmem:[%s1 + $0x218] sm:$0xf]
      %v1683 = vld [vmem:[%s1 + $0x21c] sm:$0xf]
      %v1684 = vld [vmem:[%s1 + $0x220] sm:$0xf]
      %v1685 = vld [vmem:[%s1 + $0x224] sm:$0xf]
      %v1686 = vld [vmem:[%s1 + $0x228] sm:$0xf]
      %v1687 = vld [vmem:[%s1 + $0x22c] sm:$0xf]
      %v1688 = vld [vmem:[%s1 + $0x230] sm:$0xf]
      %v1689 = vld [vmem:[%s1 + $0x234] sm:$0xf]
      %v1690 = vld [vmem:[%s1 + $0x238] sm:$0xf]
      %v1691 = vld [vmem:[%s1 + $0x23c] sm:$0xf]
      %v1692 = vld [vmem:[%s2] sm:$0x1]
      %v1694 = vperm.slane %v1692, 0
      %v1840 = vunpack.c.l.b16 %v1548
      %v1841 = vunpack.c.l.b16 %v1549
      %v1842 = vunpack.c.l.b16 %v1550
      %v1843 = vunpack.c.l.b16 %v1551
      %v1844 = vunpack.c.l.b16 %v1552
      %v1845 = vunpack.c.l.b16 %v1553
      %v1846 = vunpack.c.l.b16 %v1554
      %v1847 = vunpack.c.l.b16 %v1555
      %v1848 = vunpack.c.l.b16 %v1556
      %v1849 = vunpack.c.l.b16 %v1557
      %v1850 = vunpack.c.l.b16 %v1558
      %v1851 = vunpack.c.l.b16 %v1559
      %v1852 = vunpack.c.l.b16 %v1560
      %v1853 = vunpack.c.l.b16 %v1561
      %v1854 = vunpack.c.l.b16 %v1562
      %v1855 = vunpack.c.l.b16 %v1563
      %v1856 = vunpack.c.l.b16 %v1564
      %v1857 = vunpack.c.l.b16 %v1565
      %v1858 = vunpack.c.l.b16 %v1566
      %v1859 = vunpack.c.l.b16 %v1567
      %v1860 = vunpack.c.l.b16 %v1568
      %v1861 = vunpack.c.l.b16 %v1569
      %v1862 = vunpack.c.l.b16 %v1570
      %v1863 = vunpack.c.l.b16 %v1571
      %v1864 = vunpack.c.l.b16 %v1572
      %v1865 = vunpack.c.l.b16 %v1573
      %v1866 = vunpack.c.l.b16 %v1574
      %v1867 = vunpack.c.l.b16 %v1575
      %v1868 = vunpack.c.l.b16 %v1576
      %v1869 = vunpack.c.l.b16 %v1577
      %v1870 = vunpack.c.l.b16 %v1578
      %v1871 = vunpack.c.l.b16 %v1579
      %v1872 = vunpack.c.l.b16 %v1580
      %v1873 = vunpack.c.l.b16 %v1581
      %v1874 = vunpack.c.l.b16 %v1582
      %v1875 = vunpack.c.l.b16 %v1583
      %v1876 = vunpack.c.l.b16 %v1584
      %v1877 = vunpack.c.l.b16 %v1585
      %v1878 = vunpack.c.l.b16 %v1586
      %v1879 = vunpack.c.l.b16 %v1587
      %v1880 = vunpack.c.l.b16 %v1588
      %v1881 = vunpack.c.l.b16 %v1589
      %v1882 = vunpack.c.l.b16 %v1590
      %v1883 = vunpack.c.l.b16 %v1591
      %v1884 = vunpack.c.l.b16 %v1592
      %v1885 = vunpack.c.l.b16 %v1593
      %v1886 = vunpack.c.l.b16 %v1594
      %v1887 = vunpack.c.l.b16 %v1595
      %v1888 = vunpack.c.l.b16 %v1596
      %v1889 = vunpack.c.l.b16 %v1597
      %v1890 = vunpack.c.l.b16 %v1598
      %v1891 = vunpack.c.l.b16 %v1599
      %v1892 = vunpack.c.l.b16 %v1600
      %v1893 = vunpack.c.l.b16 %v1601
      %v1894 = vunpack.c.l.b16 %v1602
      %v1895 = vunpack.c.l.b16 %v1603
      %v1896 = vunpack.c.l.b16 %v1604
      %v1897 = vunpack.c.l.b16 %v1605
      %v1898 = vunpack.c.l.b16 %v1606
      %v1899 = vunpack.c.l.b16 %v1607
      %v1900 = vunpack.c.l.b16 %v1608
      %v1901 = vunpack.c.l.b16 %v1609
      %v1902 = vunpack.c.l.b16 %v1610
      %v1903 = vunpack.c.l.b16 %v1611
      %v1904 = vunpack.c.l.b16 %v1612
      %v1905 = vunpack.c.l.b16 %v1613
      %v1906 = vunpack.c.l.b16 %v1614
      %v1907 = vunpack.c.l.b16 %v1615
      %v1908 = vunpack.c.l.b16 %v1616
      %v1909 = vunpack.c.l.b16 %v1617
      %v1910 = vunpack.c.l.b16 %v1618
      %v1911 = vunpack.c.l.b16 %v1619
      %v1912 = vunpack.c.l.b16 %v1620
      %v1913 = vunpack.c.l.b16 %v1621
      %v1914 = vunpack.c.l.b16 %v1622
      %v1915 = vunpack.c.l.b16 %v1623
      %v1916 = vunpack.c.l.b16 %v1624
      %v1917 = vunpack.c.l.b16 %v1625
      %v1918 = vunpack.c.l.b16 %v1626
      %v1919 = vunpack.c.l.b16 %v1627
      %v1920 = vunpack.c.l.b16 %v1628
      %v1921 = vunpack.c.l.b16 %v1629
      %v1922 = vunpack.c.l.b16 %v1630
      %v1923 = vunpack.c.l.b16 %v1631
      %v1924 = vunpack.c.l.b16 %v1632
      %v1925 = vunpack.c.l.b16 %v1633
      %v1926 = vunpack.c.l.b16 %v1634
      %v1927 = vunpack.c.l.b16 %v1635
      %v1928 = vunpack.c.l.b16 %v1636
      %v1929 = vunpack.c.l.b16 %v1637
      %v1930 = vunpack.c.l.b16 %v1638
      %v1931 = vunpack.c.l.b16 %v1639
      %v1932 = vunpack.c.l.b16 %v1640
      %v1933 = vunpack.c.l.b16 %v1641
      %v1934 = vunpack.c.l.b16 %v1642
      %v1935 = vunpack.c.l.b16 %v1643
      %v1936 = vunpack.c.l.b16 %v1644
      %v1937 = vunpack.c.l.b16 %v1645
      %v1938 = vunpack.c.l.b16 %v1646
      %v1939 = vunpack.c.l.b16 %v1647
      %v1940 = vunpack.c.l.b16 %v1648
      %v1941 = vunpack.c.l.b16 %v1649
      %v1942 = vunpack.c.l.b16 %v1650
      %v1943 = vunpack.c.l.b16 %v1651
      %v1944 = vunpack.c.l.b16 %v1652
      %v1945 = vunpack.c.l.b16 %v1653
      %v1946 = vunpack.c.l.b16 %v1654
      %v1947 = vunpack.c.l.b16 %v1655
      %v1948 = vunpack.c.l.b16 %v1656
      %v1949 = vunpack.c.l.b16 %v1657
      %v1950 = vunpack.c.l.b16 %v1658
      %v1951 = vunpack.c.l.b16 %v1659
      %v1952 = vunpack.c.l.b16 %v1660
      %v1953 = vunpack.c.l.b16 %v1661
      %v1954 = vunpack.c.l.b16 %v1662
      %v1955 = vunpack.c.l.b16 %v1663
      %v1956 = vunpack.c.l.b16 %v1664
      %v1957 = vunpack.c.l.b16 %v1665
      %v1958 = vunpack.c.l.b16 %v1666
      %v1959 = vunpack.c.l.b16 %v1667
      %v1960 = vunpack.c.l.b16 %v1668
      %v1961 = vunpack.c.l.b16 %v1669
      %v1962 = vunpack.c.l.b16 %v1670
      %v1963 = vunpack.c.l.b16 %v1671
      %v1964 = vunpack.c.l.b16 %v1672
      %v1965 = vunpack.c.l.b16 %v1673
      %v1966 = vunpack.c.l.b16 %v1674
      %v1967 = vunpack.c.l.b16 %v1675
      %v1968 = vunpack.c.l.b16 %v1676
      %v1969 = vunpack.c.l.b16 %v1677
      %v1970 = vunpack.c.l.b16 %v1678
      %v1971 = vunpack.c.l.b16 %v1679
      %v1972 = vunpack.c.l.b16 %v1680
      %v1973 = vunpack.c.l.b16 %v1681
      %v1974 = vunpack.c.l.b16 %v1682
      %v1975 = vunpack.c.l.b16 %v1683
      %v1976 = vunpack.c.l.b16 %v1684
      %v1977 = vunpack.c.l.b16 %v1685
      %v1978 = vunpack.c.l.b16 %v1686
      %v1979 = vunpack.c.l.b16 %v1687
      %v1980 = vunpack.c.l.b16 %v1688
      %v1981 = vunpack.c.l.b16 %v1689
      %v1982 = vunpack.c.l.b16 %v1690
      %v1983 = vunpack.c.l.b16 %v1691
      %v1984 = vpack.c.b16 %v1841, %v1840
      %v1985 = vpack.c.b16 %v1843, %v1842
      %v1986 = vpack.c.b16 %v1845, %v1844
      %v1987 = vpack.c.b16 %v1847, %v1846
      %v1988 = vpack.c.b16 %v1849, %v1848
      %v1989 = vpack.c.b16 %v1851, %v1850
      %v1990 = vpack.c.b16 %v1853, %v1852
      %v1991 = vpack.c.b16 %v1855, %v1854
      %v1992 = vpack.c.b16 %v1857, %v1856
      %v1993 = vpack.c.b16 %v1859, %v1858
      %v1994 = vpack.c.b16 %v1861, %v1860
      %v1995 = vpack.c.b16 %v1863, %v1862
      %v1996 = vpack.c.b16 %v1865, %v1864
      %v1997 = vpack.c.b16 %v1867, %v1866
      %v1998 = vpack.c.b16 %v1869, %v1868
      %v1999 = vpack.c.b16 %v1871, %v1870
      %v2000 = vpack.c.b16 %v1873, %v1872
      %v2001 = vpack.c.b16 %v1875, %v1874
      %v2002 = vpack.c.b16 %v1877, %v1876
      %v2003 = vpack.c.b16 %v1879, %v1878
      %v2004 = vpack.c.b16 %v1881, %v1880
      %v2005 = vpack.c.b16 %v1883, %v1882
      %v2006 = vpack.c.b16 %v1885, %v1884
      %v2007 = vpack.c.b16 %v1887, %v1886
      %v2008 = vpack.c.b16 %v1889, %v1888
      %v2009 = vpack.c.b16 %v1891, %v1890
      %v2010 = vpack.c.b16 %v1893, %v1892
      %v2011 = vpack.c.b16 %v1895, %v1894
      %v2012 = vpack.c.b16 %v1897, %v1896
      %v2013 = vpack.c.b16 %v1899, %v1898
      %v2014 = vpack.c.b16 %v1901, %v1900
      %v2015 = vpack.c.b16 %v1903, %v1902
      %v2016 = vpack.c.b16 %v1905, %v1904
      %v2017 = vpack.c.b16 %v1907, %v1906
      %v2018 = vpack.c.b16 %v1909, %v1908
      %v2019 = vpack.c.b16 %v1911, %v1910
      %v2020 = vpack.c.b16 %v1913, %v1912
      %v2021 = vpack.c.b16 %v1915, %v1914
      %v2022 = vpack.c.b16 %v1917, %v1916
      %v2023 = vpack.c.b16 %v1919, %v1918
      %v2024 = vpack.c.b16 %v1921, %v1920
      %v2025 = vpack.c.b16 %v1923, %v1922
      %v2026 = vpack.c.b16 %v1925, %v1924
      %v2027 = vpack.c.b16 %v1927, %v1926
      %v2028 = vpack.c.b16 %v1929, %v1928
      %v2029 = vpack.c.b16 %v1931, %v1930
      %v2030 = vpack.c.b16 %v1933, %v1932
      %v2031 = vpack.c.b16 %v1935, %v1934
      %v2032 = vpack.c.b16 %v1937, %v1936
      %v2033 = vpack.c.b16 %v1939, %v1938
      %v2034 = vpack.c.b16 %v1941, %v1940
      %v2035 = vpack.c.b16 %v1943, %v1942
      %v2036 = vpack.c.b16 %v1945, %v1944
      %v2037 = vpack.c.b16 %v1947, %v1946
      %v2038 = vpack.c.b16 %v1949, %v1948
      %v2039 = vpack.c.b16 %v1951, %v1950
      %v2040 = vpack.c.b16 %v1953, %v1952
      %v2041 = vpack.c.b16 %v1955, %v1954
      %v2042 = vpack.c.b16 %v1957, %v1956
      %v2043 = vpack.c.b16 %v1959, %v1958
      %v2044 = vpack.c.b16 %v1961, %v1960
      %v2045 = vpack.c.b16 %v1963, %v1962
      %v2046 = vpack.c.b16 %v1965, %v1964
      %v2047 = vpack.c.b16 %v1967, %v1966
      %v2048 = vpack.c.b16 %v1969, %v1968
      %v2049 = vpack.c.b16 %v1971, %v1970
      %v2050 = vpack.c.b16 %v1973, %v1972
      %v2051 = vpack.c.b16 %v1975, %v1974
      %v2052 = vpack.c.b16 %v1977, %v1976
      %v2053 = vpack.c.b16 %v1979, %v1978
      %v2054 = vpack.c.b16 %v1981, %v1980
      %v2055 = vpack.c.b16 %v1983, %v1982
      %2128 = vmatpush.bf16.msra.mxu0 %v1991
      %2129 = vmatpush.bf16.msra.mxu0 %v1990
      %2130 = vmatpush.bf16.msra.mxu0 %v1989
      %2131 = vmatpush.bf16.msra.mxu0 %v1988
      %2132 = vmatpush.bf16.msra.mxu0 %v1987
      %2133 = vmatpush.bf16.msra.mxu0 %v1986
      %2134 = vmatpush.bf16.msra.mxu0 %v1985
      %2135 = vmatpush.bf16.msra.mxu0 %v1984
      %2136 = vmatmul.bf16.gmra.mxu0 %v482
      %v2137 = vpop.f32.mrf.mxu0
      %v2138 = vadd.f32 %v1694, %v2137
      %v2139 = vpop.f32.mrf.mxu0
      %v2140 = vadd.f32 %v1694, %v2139
      %2141 = vmatmul.bf16.gmra.mxu0 %v483
      %v2142 = vpop.f32.mrf.mxu0
      %v2143 = vadd.f32 %v1694, %v2142
      %v2144 = vpop.f32.mrf.mxu0
      %v2145 = vadd.f32 %v1694, %v2144
      %2146 = vmatmul.bf16.gmra.mxu0 %v484
      %v2147 = vpop.f32.mrf.mxu0
      %v2148 = vadd.f32 %v1694, %v2147
      %v2149 = vpop.f32.mrf.mxu0
      %v2150 = vadd.f32 %v1694, %v2149
      %2151 = vmatmul.bf16.gmra.mxu0 %v485
      %v2152 = vpop.f32.mrf.mxu0
      %v2153 = vadd.f32 %v1694, %v2152
      %v2154 = vpop.f32.mrf.mxu0
      %v2155 = vadd.f32 %v1694, %v2154
      %2156 = vmatmul.bf16.gmra.mxu0 %v486
      %v2157 = vpop.f32.mrf.mxu0
      %v2158 = vadd.f32 %v1694, %v2157
      %v2159 = vpop.f32.mrf.mxu0
      %v2160 = vadd.f32 %v1694, %v2159
      %2161 = vmatmul.bf16.gmra.mxu0 %v487
      %v2162 = vpop.f32.mrf.mxu0
      %v2163 = vadd.f32 %v1694, %v2162
      %v2164 = vpop.f32.mrf.mxu0
      %v2165 = vadd.f32 %v1694, %v2164
      %2166 = vmatmul.bf16.gmra.mxu0 %v488
      %v2167 = vpop.f32.mrf.mxu0
      %v2168 = vadd.f32 %v1694, %v2167
      %v2169 = vpop.f32.mrf.mxu0
      %v2170 = vadd.f32 %v1694, %v2169
      %2171 = vmatmul.bf16.gmra.mxu0 %v489
      %v2172 = vpop.f32.mrf.mxu0
      %v2173 = vadd.f32 %v1694, %v2172
      %v2174 = vpop.f32.mrf.mxu0
      %v2175 = vadd.f32 %v1694, %v2174
      %2176 = vmatmul.bf16.gmra.mxu0 %v490
      %v2177 = vpop.f32.mrf.mxu0
      %v2178 = vadd.f32 %v1694, %v2177
      %v2179 = vpop.f32.mrf.mxu0
      %v2180 = vadd.f32 %v1694, %v2179
      %2181 = vmatmul.bf16.gmra.mxu0 %v491
      %v2182 = vpop.f32.mrf.mxu0
      %v2183 = vadd.f32 %v1694, %v2182
      %v2184 = vpop.f32.mrf.mxu0
      %v2185 = vadd.f32 %v1694, %v2184
      %2186 = vmatmul.bf16.gmra.mxu0 %v492
      %v2187 = vpop.f32.mrf.mxu0
      %v2188 = vadd.f32 %v1694, %v2187
      %v2189 = vpop.f32.mrf.mxu0
      %v2190 = vadd.f32 %v1694, %v2189
      %2191 = vmatmul.bf16.gmra.mxu0 %v493
      %v2192 = vpop.f32.mrf.mxu0
      %v2193 = vadd.f32 %v1694, %v2192
      %v2194 = vpop.f32.mrf.mxu0
      %v2195 = vadd.f32 %v1694, %v2194
      %2196 = vmatmul.bf16.gmra.mxu0 %v494
      %v2197 = vpop.f32.mrf.mxu0
      %v2198 = vadd.f32 %v1694, %v2197
      %v2199 = vpop.f32.mrf.mxu0
      %v2200 = vadd.f32 %v1694, %v2199
      %2201 = vmatmul.bf16.gmra.mxu0 %v495
      %v2202 = vpop.f32.mrf.mxu0
      %v2203 = vadd.f32 %v1694, %v2202
      %v2204 = vpop.f32.mrf.mxu0
      %v2205 = vadd.f32 %v1694, %v2204
      %2206 = vmatmul.bf16.gmra.mxu0 %v496
      %v2207 = vpop.f32.mrf.mxu0
      %v2208 = vadd.f32 %v1694, %v2207
      %v2209 = vpop.f32.mrf.mxu0
      %v2210 = vadd.f32 %v1694, %v2209
      %2211 = vmatmul.bf16.gmra.mxu0 %v497
      %v2212 = vpop.f32.mrf.mxu0
      %v2213 = vadd.f32 %v1694, %v2212
      %v2214 = vpop.f32.mrf.mxu0
      %v2215 = vadd.f32 %v1694, %v2214
      %2216 = vdwg.mxu0
      %2217 = vmatpush.bf16.msra.mxu0 %v1999
      %2218 = vmatpush.bf16.msra.mxu0 %v1998
      %2219 = vmatpush.bf16.msra.mxu0 %v1997
      %2220 = vmatpush.bf16.msra.mxu0 %v1996
      %2221 = vmatpush.bf16.msra.mxu0 %v1995
      %2222 = vmatpush.bf16.msra.mxu0 %v1994
      %2223 = vmatpush.bf16.msra.mxu0 %v1993
      %2224 = vmatpush.bf16.msra.mxu0 %v1992
      %2225 = vmatmul.bf16.gmra.mxu0 %v550
      %v2226 = vpop.f32.mrf.mxu0
      %v2227 = vadd.f32 %v2138, %v2226
      %v2228 = vpop.f32.mrf.mxu0
      %v2229 = vadd.f32 %v2140, %v2228
      %2230 = vmatmul.bf16.gmra.mxu0 %v558
      %v2231 = vpop.f32.mrf.mxu0
      %v2232 = vadd.f32 %v2143, %v2231
      %v2233 = vpop.f32.mrf.mxu0
      %v2234 = vadd.f32 %v2145, %v2233
      %2235 = vmatmul.bf16.gmra.mxu0 %v570
      %v2236 = vpop.f32.mrf.mxu0
      %v2237 = vadd.f32 %v2148, %v2236
      %v2238 = vpop.f32.mrf.mxu0
      %v2239 = vadd.f32 %v2150, %v2238
      %2240 = vmatmul.bf16.gmra.mxu0 %v578
      %v2241 = vpop.f32.mrf.mxu0
      %v2242 = vadd.f32 %v2153, %v2241
      %v2243 = vpop.f32.mrf.mxu0
      %v2244 = vadd.f32 %v2155, %v2243
      %2245 = vmatmul.bf16.gmra.mxu0 %v590
      %v2246 = vpop.f32.mrf.mxu0
      %v2247 = vadd.f32 %v2158, %v2246
      %v2248 = vpop.f32.mrf.mxu0
      %v2249 = vadd.f32 %v2160, %v2248
      %2250 = vmatmul.bf16.gmra.mxu0 %v598
      %v2251 = vpop.f32.mrf.mxu0
      %v2252 = vadd.f32 %v2163, %v2251
      %v2253 = vpop.f32.mrf.mxu0
      %v2254 = vadd.f32 %v2165, %v2253
      %2255 = vmatmul.bf16.gmra.mxu0 %v610
      %v2256 = vpop.f32.mrf.mxu0
      %v2257 = vadd.f32 %v2168, %v2256
      %v2258 = vpop.f32.mrf.mxu0
      %v2259 = vadd.f32 %v2170, %v2258
      %2260 = vmatmul.bf16.gmra.mxu0 %v618
      %v2261 = vpop.f32.mrf.mxu0
      %v2262 = vadd.f32 %v2173, %v2261
      %v2263 = vpop.f32.mrf.mxu0
      %v2264 = vadd.f32 %v2175, %v2263
      %2265 = vmatmul.bf16.gmra.mxu0 %v630
      %v2266 = vpop.f32.mrf.mxu0
      %v2267 = vadd.f32 %v2178, %v2266
      %v2268 = vpop.f32.mrf.mxu0
      %v2269 = vadd.f32 %v2180, %v2268
      %2270 = vmatmul.bf16.gmra.mxu0 %v638
      %v2271 = vpop.f32.mrf.mxu0
      %v2272 = vadd.f32 %v2183, %v2271
      %v2273 = vpop.f32.mrf.mxu0
      %v2274 = vadd.f32 %v2185, %v2273
      %2275 = vmatmul.bf16.gmra.mxu0 %v650
      %v2276 = vpop.f32.mrf.mxu0
      %v2277 = vadd.f32 %v2188, %v2276
      %v2278 = vpop.f32.mrf.mxu0
      %v2279 = vadd.f32 %v2190, %v2278
      %2280 = vmatmul.bf16.gmra.mxu0 %v658
      %v2281 = vpop.f32.mrf.mxu0
      %v2282 = vadd.f32 %v2193, %v2281
      %v2283 = vpop.f32.mrf.mxu0
      %v2284 = vadd.f32 %v2195, %v2283
      %2285 = vmatmul.bf16.gmra.mxu0 %v670
      %v2286 = vpop.f32.mrf.mxu0
      %v2287 = vadd.f32 %v2198, %v2286
      %v2288 = vpop.f32.mrf.mxu0
      %v2289 = vadd.f32 %v2200, %v2288
      %2290 = vmatmul.bf16.gmra.mxu0 %v678
      %v2291 = vpop.f32.mrf.mxu0
      %v2292 = vadd.f32 %v2203, %v2291
      %v2293 = vpop.f32.mrf.mxu0
      %v2294 = vadd.f32 %v2205, %v2293
      %2295 = vmatmul.bf16.gmra.mxu0 %v690
      %v2296 = vpop.f32.mrf.mxu0
      %v2297 = vadd.f32 %v2208, %v2296
      %v2298 = vpop.f32.mrf.mxu0
      %v2299 = vadd.f32 %v2210, %v2298
      %2300 = vmatmul.bf16.gmra.mxu0 %v698
      %v2301 = vpop.f32.mrf.mxu0
      %v2302 = vadd.f32 %v2213, %v2301
      %v2303 = vpop.f32.mrf.mxu0
      %v2304 = vadd.f32 %v2215, %v2303
      %2305 = vdwg.mxu0
      %2306 = vmatpush.bf16.msra.mxu0 %v2007
      %2307 = vmatpush.bf16.msra.mxu0 %v2006
      %2308 = vmatpush.bf16.msra.mxu0 %v2005
      %2309 = vmatpush.bf16.msra.mxu0 %v2004
      %2310 = vmatpush.bf16.msra.mxu0 %v2003
      %2311 = vmatpush.bf16.msra.mxu0 %v2002
      %2312 = vmatpush.bf16.msra.mxu0 %v2001
      %2313 = vmatpush.bf16.msra.mxu0 %v2000
      %2314 = vmatmul.bf16.gmra.mxu0 %v742
      %v2315 = vpop.f32.mrf.mxu0
      %v2316 = vadd.f32 %v2227, %v2315
      %v2317 = vpop.f32.mrf.mxu0
      %v2318 = vadd.f32 %v2229, %v2317
      %2319 = vmatmul.bf16.gmra.mxu0 %v744
      %v2320 = vpop.f32.mrf.mxu0
      %v2321 = vadd.f32 %v2232, %v2320
      %v2322 = vpop.f32.mrf.mxu0
      %v2323 = vadd.f32 %v2234, %v2322
      %2324 = vmatmul.bf16.gmra.mxu0 %v747
      %v2325 = vpop.f32.mrf.mxu0
      %v2326 = vadd.f32 %v2237, %v2325
      %v2327 = vpop.f32.mrf.mxu0
      %v2328 = vadd.f32 %v2239, %v2327
      %2329 = vmatmul.bf16.gmra.mxu0 %v749
      %v2330 = vpop.f32.mrf.mxu0
      %v2331 = vadd.f32 %v2242, %v2330
      %v2332 = vpop.f32.mrf.mxu0
      %v2333 = vadd.f32 %v2244, %v2332
      %2334 = vmatmul.bf16.gmra.mxu0 %v752
      %v2335 = vpop.f32.mrf.mxu0
      %v2336 = vadd.f32 %v2247, %v2335
      %v2337 = vpop.f32.mrf.mxu0
      %v2338 = vadd.f32 %v2249, %v2337
      %2339 = vmatmul.bf16.gmra.mxu0 %v754
      %v2340 = vpop.f32.mrf.mxu0
      %v2341 = vadd.f32 %v2252, %v2340
      %v2342 = vpop.f32.mrf.mxu0
      %v2343 = vadd.f32 %v2254, %v2342
      %2344 = vmatmul.bf16.gmra.mxu0 %v757
      %v2345 = vpop.f32.mrf.mxu0
      %v2346 = vadd.f32 %v2257, %v2345
      %v2347 = vpop.f32.mrf.mxu0
      %v2348 = vadd.f32 %v2259, %v2347
      %2349 = vmatmul.bf16.gmra.mxu0 %v759
      %v2350 = vpop.f32.mrf.mxu0
      %v2351 = vadd.f32 %v2262, %v2350
      %v2352 = vpop.f32.mrf.mxu0
      %v2353 = vadd.f32 %v2264, %v2352
      %2354 = vmatmul.bf16.gmra.mxu0 %v762
      %v2355 = vpop.f32.mrf.mxu0
      %v2356 = vadd.f32 %v2267, %v2355
      %v2357 = vpop.f32.mrf.mxu0
      %v2358 = vadd.f32 %v2269, %v2357
      %2359 = vmatmul.bf16.gmra.mxu0 %v764
      %v2360 = vpop.f32.mrf.mxu0
      %v2361 = vadd.f32 %v2272, %v2360
      %v2362 = vpop.f32.mrf.mxu0
      %v2363 = vadd.f32 %v2274, %v2362
      %2364 = vmatmul.bf16.gmra.mxu0 %v767
      %v2365 = vpop.f32.mrf.mxu0
      %v2366 = vadd.f32 %v2277, %v2365
      %v2367 = vpop.f32.mrf.mxu0
      %v2368 = vadd.f32 %v2279, %v2367
      %2369 = vmatmul.bf16.gmra.mxu0 %v769
      %v2370 = vpop.f32.mrf.mxu0
      %v2371 = vadd.f32 %v2282, %v2370
      %v2372 = vpop.f32.mrf.mxu0
      %v2373 = vadd.f32 %v2284, %v2372
      %2374 = vmatmul.bf16.gmra.mxu0 %v772
      %v2375 = vpop.f32.mrf.mxu0
      %v2376 = vadd.f32 %v2287, %v2375
      %v2377 = vpop.f32.mrf.mxu0
      %v2378 = vadd.f32 %v2289, %v2377
      %2379 = vmatmul.bf16.gmra.mxu0 %v774
      %v2380 = vpop.f32.mrf.mxu0
      %v2381 = vadd.f32 %v2292, %v2380
      %v2382 = vpop.f32.mrf.mxu0
      %v2383 = vadd.f32 %v2294, %v2382
      %2384 = vmatmul.bf16.gmra.mxu0 %v777
      %v2385 = vpop.f32.mrf.mxu0
      %v2386 = vadd.f32 %v2297, %v2385
      %v2387 = vpop.f32.mrf.mxu0
      %v2388 = vadd.f32 %v2299, %v2387
      %2389 = vmatmul.bf16.gmra.mxu0 %v779
      %v2390 = vpop.f32.mrf.mxu0
      %v2391 = vadd.f32 %v2302, %v2390
      %v2392 = vpop.f32.mrf.mxu0
      %v2393 = vadd.f32 %v2304, %v2392
      %2394 = vdwg.mxu0
      %2395 = vmatpush.bf16.msra.mxu0 %v2015
      %2396 = vmatpush.bf16.msra.mxu0 %v2014
      %2397 = vmatpush.bf16.msra.mxu0 %v2013
      %2398 = vmatpush.bf16.msra.mxu0 %v2012
      %2399 = vmatpush.bf16.msra.mxu0 %v2011
      %2400 = vmatpush.bf16.msra.mxu0 %v2010
      %2401 = vmatpush.bf16.msra.mxu0 %v2009
      %2402 = vmatpush.bf16.msra.mxu0 %v2008
      %2403 = vmatmul.bf16.gmra.mxu0 %v860
      %v2404 = vpop.f32.mrf.mxu0
      %v2405 = vadd.f32 %v2316, %v2404
      %v2406 = vpop.f32.mrf.mxu0
      %v2407 = vadd.f32 %v2318, %v2406
      %2408 = vmatmul.bf16.gmra.mxu0 %v861
      %v2409 = vpop.f32.mrf.mxu0
      %v2410 = vadd.f32 %v2321, %v2409
      %v2411 = vpop.f32.mrf.mxu0
      %v2412 = vadd.f32 %v2323, %v2411
      %2413 = vmatmul.bf16.gmra.mxu0 %v862
      %v2414 = vpop.f32.mrf.mxu0
      %v2415 = vadd.f32 %v2326, %v2414
      %v2416 = vpop.f32.mrf.mxu0
      %v2417 = vadd.f32 %v2328, %v2416
      %2418 = vmatmul.bf16.gmra.mxu0 %v863
      %v2419 = vpop.f32.mrf.mxu0
      %v2420 = vadd.f32 %v2331, %v2419
      %v2421 = vpop.f32.mrf.mxu0
      %v2422 = vadd.f32 %v2333, %v2421
      %2423 = vmatmul.bf16.gmra.mxu0 %v864
      %v2424 = vpop.f32.mrf.mxu0
      %v2425 = vadd.f32 %v2336, %v2424
      %v2426 = vpop.f32.mrf.mxu0
      %v2427 = vadd.f32 %v2338, %v2426
      %2428 = vmatmul.bf16.gmra.mxu0 %v865
      %v2429 = vpop.f32.mrf.mxu0
      %v2430 = vadd.f32 %v2341, %v2429
      %v2431 = vpop.f32.mrf.mxu0
      %v2432 = vadd.f32 %v2343, %v2431
      %2433 = vmatmul.bf16.gmra.mxu0 %v866
      %v2434 = vpop.f32.mrf.mxu0
      %v2435 = vadd.f32 %v2346, %v2434
      %v2436 = vpop.f32.mrf.mxu0
      %v2437 = vadd.f32 %v2348, %v2436
      %2438 = vmatmul.bf16.gmra.mxu0 %v867
      %v2439 = vpop.f32.mrf.mxu0
      %v2440 = vadd.f32 %v2351, %v2439
      %v2441 = vpop.f32.mrf.mxu0
      %v2442 = vadd.f32 %v2353, %v2441
      %2443 = vmatmul.bf16.gmra.mxu0 %v868
      %v2444 = vpop.f32.mrf.mxu0
      %v2445 = vadd.f32 %v2356, %v2444
      %v2446 = vpop.f32.mrf.mxu0
      %v2447 = vadd.f32 %v2358, %v2446
      %2448 = vmatmul.bf16.gmra.mxu0 %v869
      %v2449 = vpop.f32.mrf.mxu0
      %v2450 = vadd.f32 %v2361, %v2449
      %v2451 = vpop.f32.mrf.mxu0
      %v2452 = vadd.f32 %v2363, %v2451
      %2453 = vmatmul.bf16.gmra.mxu0 %v870
      %v2454 = vpop.f32.mrf.mxu0
      %v2455 = vadd.f32 %v2366, %v2454
      %v2456 = vpop.f32.mrf.mxu0
      %v2457 = vadd.f32 %v2368, %v2456
      %2458 = vmatmul.bf16.gmra.mxu0 %v871
      %v2459 = vpop.f32.mrf.mxu0
      %v2460 = vadd.f32 %v2371, %v2459
      %v2461 = vpop.f32.mrf.mxu0
      %v2462 = vadd.f32 %v2373, %v2461
      %2463 = vmatmul.bf16.gmra.mxu0 %v872
      %v2464 = vpop.f32.mrf.mxu0
      %v2465 = vadd.f32 %v2376, %v2464
      %v2466 = vpop.f32.mrf.mxu0
      %v2467 = vadd.f32 %v2378, %v2466
      %2468 = vmatmul.bf16.gmra.mxu0 %v873
      %v2469 = vpop.f32.mrf.mxu0
      %v2470 = vadd.f32 %v2381, %v2469
      %v2471 = vpop.f32.mrf.mxu0
      %v2472 = vadd.f32 %v2383, %v2471
      %2473 = vmatmul.bf16.gmra.mxu0 %v874
      %v2474 = vpop.f32.mrf.mxu0
      %v2475 = vadd.f32 %v2386, %v2474
      %v2476 = vpop.f32.mrf.mxu0
      %v2477 = vadd.f32 %v2388, %v2476
      %2478 = vmatmul.bf16.gmra.mxu0 %v875
      %v2479 = vpop.f32.mrf.mxu0
      %v2480 = vadd.f32 %v2391, %v2479
      %v2481 = vpop.f32.mrf.mxu0
      %v2482 = vadd.f32 %v2393, %v2481
      %2483 = vdwg.mxu0
      %2484 = vmatpush.bf16.msra.mxu0 %v2023
      %2485 = vmatpush.bf16.msra.mxu0 %v2022
      %2486 = vmatpush.bf16.msra.mxu0 %v2021
      %2487 = vmatpush.bf16.msra.mxu0 %v2020
      %2488 = vmatpush.bf16.msra.mxu0 %v2019
      %2489 = vmatpush.bf16.msra.mxu0 %v2018
      %2490 = vmatpush.bf16.msra.mxu0 %v2017
      %2491 = vmatpush.bf16.msra.mxu0 %v2016
      %2492 = vmatmul.bf16.gmra.mxu0 %v927
      %v2493 = vpop.f32.mrf.mxu0
      %v2494 = vadd.f32 %v2405, %v2493
      %v2495 = vpop.f32.mrf.mxu0
      %v2496 = vadd.f32 %v2407, %v2495
      %2497 = vmatmul.bf16.gmra.mxu0 %v935
      %v2498 = vpop.f32.mrf.mxu0
      %v2499 = vadd.f32 %v2410, %v2498
      %v2500 = vpop.f32.mrf.mxu0
      %v2501 = vadd.f32 %v2412, %v2500
      %2502 = vmatmul.bf16.gmra.mxu0 %v947
      %v2503 = vpop.f32.mrf.mxu0
      %v2504 = vadd.f32 %v2415, %v2503
      %v2505 = vpop.f32.mrf.mxu0
      %v2506 = vadd.f32 %v2417, %v2505
      %2507 = vmatmul.bf16.gmra.mxu0 %v955
      %v2508 = vpop.f32.mrf.mxu0
      %v2509 = vadd.f32 %v2420, %v2508
      %v2510 = vpop.f32.mrf.mxu0
      %v2511 = vadd.f32 %v2422, %v2510
      %2512 = vmatmul.bf16.gmra.mxu0 %v967
      %v2513 = vpop.f32.mrf.mxu0
      %v2514 = vadd.f32 %v2425, %v2513
      %v2515 = vpop.f32.mrf.mxu0
      %v2516 = vadd.f32 %v2427, %v2515
      %2517 = vmatmul.bf16.gmra.mxu0 %v975
      %v2518 = vpop.f32.mrf.mxu0
      %v2519 = vadd.f32 %v2430, %v2518
      %v2520 = vpop.f32.mrf.mxu0
      %v2521 = vadd.f32 %v2432, %v2520
      %2522 = vmatmul.bf16.gmra.mxu0 %v987
      %v2523 = vpop.f32.mrf.mxu0
      %v2524 = vadd.f32 %v2435, %v2523
      %v2525 = vpop.f32.mrf.mxu0
      %v2526 = vadd.f32 %v2437, %v2525
      %2527 = vmatmul.bf16.gmra.mxu0 %v995
      %v2528 = vpop.f32.mrf.mxu0
      %v2529 = vadd.f32 %v2440, %v2528
      %v2530 = vpop.f32.mrf.mxu0
      %v2531 = vadd.f32 %v2442, %v2530
      %2532 = vmatmul.bf16.gmra.mxu0 %v1007
      %v2533 = vpop.f32.mrf.mxu0
      %v2534 = vadd.f32 %v2445, %v2533
      %v2535 = vpop.f32.mrf.mxu0
      %v2536 = vadd.f32 %v2447, %v2535
      %2537 = vmatmul.bf16.gmra.mxu0 %v1015
      %v2538 = vpop.f32.mrf.mxu0
      %v2539 = vadd.f32 %v2450, %v2538
      %v2540 = vpop.f32.mrf.mxu0
      %v2541 = vadd.f32 %v2452, %v2540
      %2542 = vmatmul.bf16.gmra.mxu0 %v1027
      %v2543 = vpop.f32.mrf.mxu0
      %v2544 = vadd.f32 %v2455, %v2543
      %v2545 = vpop.f32.mrf.mxu0
      %v2546 = vadd.f32 %v2457, %v2545
      %2547 = vmatmul.bf16.gmra.mxu0 %v1035
      %v2548 = vpop.f32.mrf.mxu0
      %v2549 = vadd.f32 %v2460, %v2548
      %v2550 = vpop.f32.mrf.mxu0
      %v2551 = vadd.f32 %v2462, %v2550
      %2552 = vmatmul.bf16.gmra.mxu0 %v1047
      %v2553 = vpop.f32.mrf.mxu0
      %v2554 = vadd.f32 %v2465, %v2553
      %v2555 = vpop.f32.mrf.mxu0
      %v2556 = vadd.f32 %v2467, %v2555
      %2557 = vmatmul.bf16.gmra.mxu0 %v1055
      %v2558 = vpop.f32.mrf.mxu0
      %v2559 = vadd.f32 %v2470, %v2558
      %v2560 = vpop.f32.mrf.mxu0
      %v2561 = vadd.f32 %v2472, %v2560
      %2562 = vmatmul.bf16.gmra.mxu0 %v1067
      %v2563 = vpop.f32.mrf.mxu0
      %v2564 = vadd.f32 %v2475, %v2563
      %v2565 = vpop.f32.mrf.mxu0
      %v2566 = vadd.f32 %v2477, %v2565
      %2567 = vmatmul.bf16.gmra.mxu0 %v1075
      %v2568 = vpop.f32.mrf.mxu0
      %v2569 = vadd.f32 %v2480, %v2568
      %v2570 = vpop.f32.mrf.mxu0
      %v2571 = vadd.f32 %v2482, %v2570
      %2572 = vdwg.mxu0
      %2573 = vmatpush.bf16.msra.mxu0 %v2031
      %2574 = vmatpush.bf16.msra.mxu0 %v2030
      %2575 = vmatpush.bf16.msra.mxu0 %v2029
      %2576 = vmatpush.bf16.msra.mxu0 %v2028
      %2577 = vmatpush.bf16.msra.mxu0 %v2027
      %2578 = vmatpush.bf16.msra.mxu0 %v2026
      %2579 = vmatpush.bf16.msra.mxu0 %v2025
      %2580 = vmatpush.bf16.msra.mxu0 %v2024
      %2581 = vmatmul.bf16.gmra.mxu0 %v1118
      %v2582 = vpop.f32.mrf.mxu0
      %v2583 = vadd.f32 %v2494, %v2582
      %v2584 = vpop.f32.mrf.mxu0
      %v2585 = vadd.f32 %v2496, %v2584
      %2586 = vmatmul.bf16.gmra.mxu0 %v1120
      %v2587 = vpop.f32.mrf.mxu0
      %v2588 = vadd.f32 %v2499, %v2587
      %v2589 = vpop.f32.mrf.mxu0
      %v2590 = vadd.f32 %v2501, %v2589
      %2591 = vmatmul.bf16.gmra.mxu0 %v1123
      %v2592 = vpop.f32.mrf.mxu0
      %v2593 = vadd.f32 %v2504, %v2592
      %v2594 = vpop.f32.mrf.mxu0
      %v2595 = vadd.f32 %v2506, %v2594
      %2596 = vmatmul.bf16.gmra.mxu0 %v1125
      %v2597 = vpop.f32.mrf.mxu0
      %v2598 = vadd.f32 %v2509, %v2597
      %v2599 = vpop.f32.mrf.mxu0
      %v2600 = vadd.f32 %v2511, %v2599
      %2601 = vmatmul.bf16.gmra.mxu0 %v1128
      %v2602 = vpop.f32.mrf.mxu0
      %v2603 = vadd.f32 %v2514, %v2602
      %v2604 = vpop.f32.mrf.mxu0
      %v2605 = vadd.f32 %v2516, %v2604
      %2606 = vmatmul.bf16.gmra.mxu0 %v1130
      %v2607 = vpop.f32.mrf.mxu0
      %v2608 = vadd.f32 %v2519, %v2607
      %v2609 = vpop.f32.mrf.mxu0
      %v2610 = vadd.f32 %v2521, %v2609
      %2611 = vmatmul.bf16.gmra.mxu0 %v1133
      %v2612 = vpop.f32.mrf.mxu0
      %v2613 = vadd.f32 %v2524, %v2612
      %v2614 = vpop.f32.mrf.mxu0
      %v2615 = vadd.f32 %v2526, %v2614
      %2616 = vmatmul.bf16.gmra.mxu0 %v1135
      %v2617 = vpop.f32.mrf.mxu0
      %v2618 = vadd.f32 %v2529, %v2617
      %v2619 = vpop.f32.mrf.mxu0
      %v2620 = vadd.f32 %v2531, %v2619
      %2621 = vmatmul.bf16.gmra.mxu0 %v1138
      %v2622 = vpop.f32.mrf.mxu0
      %v2623 = vadd.f32 %v2534, %v2622
      %v2624 = vpop.f32.mrf.mxu0
      %v2625 = vadd.f32 %v2536, %v2624
      %2626 = vmatmul.bf16.gmra.mxu0 %v1140
      %v2627 = vpop.f32.mrf.mxu0
      %v2628 = vadd.f32 %v2539, %v2627
      %v2629 = vpop.f32.mrf.mxu0
      %v2630 = vadd.f32 %v2541, %v2629
      %2631 = vmatmul.bf16.gmra.mxu0 %v1143
      %v2632 = vpop.f32.mrf.mxu0
      %v2633 = vadd.f32 %v2544, %v2632
      %v2634 = vpop.f32.mrf.mxu0
      %v2635 = vadd.f32 %v2546, %v2634
      %2636 = vmatmul.bf16.gmra.mxu0 %v1145
      %v2637 = vpop.f32.mrf.mxu0
      %v2638 = vadd.f32 %v2549, %v2637
      %v2639 = vpop.f32.mrf.mxu0
      %v2640 = vadd.f32 %v2551, %v2639
      %2641 = vmatmul.bf16.gmra.mxu0 %v1148
      %v2642 = vpop.f32.mrf.mxu0
      %v2643 = vadd.f32 %v2554, %v2642
      %v2644 = vpop.f32.mrf.mxu0
      %v2645 = vadd.f32 %v2556, %v2644
      %2646 = vmatmul.bf16.gmra.mxu0 %v1150
      %v2647 = vpop.f32.mrf.mxu0
      %v2648 = vadd.f32 %v2559, %v2647
      %v2649 = vpop.f32.mrf.mxu0
      %v2650 = vadd.f32 %v2561, %v2649
      %2651 = vmatmul.bf16.gmra.mxu0 %v1153
      %v2652 = vpop.f32.mrf.mxu0
      %v2653 = vadd.f32 %v2564, %v2652
      %v2654 = vpop.f32.mrf.mxu0
      %v2655 = vadd.f32 %v2566, %v2654
      %2656 = vmatmul.bf16.gmra.mxu0 %v1155
      %v2657 = vpop.f32.mrf.mxu0
      %v2658 = vadd.f32 %v2569, %v2657
      %v2659 = vpop.f32.mrf.mxu0
      %v2660 = vadd.f32 %v2571, %v2659
      %2661 = vdwg.mxu0
      %2662 = vmatpush.bf16.msra.mxu0 %v2039
      %2663 = vmatpush.bf16.msra.mxu0 %v2038
      %2664 = vmatpush.bf16.msra.mxu0 %v2037
      %2665 = vmatpush.bf16.msra.mxu0 %v2036
      %2666 = vmatpush.bf16.msra.mxu0 %v2035
      %2667 = vmatpush.bf16.msra.mxu0 %v2034
      %2668 = vmatpush.bf16.msra.mxu0 %v2033
      %2669 = vmatpush.bf16.msra.mxu0 %v2032
      %2670 = vmatmul.bf16.gmra.mxu0 %v1236
      %v2671 = vpop.f32.mrf.mxu0
      %v2672 = vadd.f32 %v2583, %v2671
      %v2673 = vpop.f32.mrf.mxu0
      %v2674 = vadd.f32 %v2585, %v2673
      %2675 = vmatmul.bf16.gmra.mxu0 %v1237
      %v2676 = vpop.f32.mrf.mxu0
      %v2677 = vadd.f32 %v2588, %v2676
      %v2678 = vpop.f32.mrf.mxu0
      %v2679 = vadd.f32 %v2590, %v2678
      %2680 = vmatmul.bf16.gmra.mxu0 %v1238
      %v2681 = vpop.f32.mrf.mxu0
      %v2682 = vadd.f32 %v2593, %v2681
      %v2683 = vpop.f32.mrf.mxu0
      %v2684 = vadd.f32 %v2595, %v2683
      %2685 = vmatmul.bf16.gmra.mxu0 %v1239
      %v2686 = vpop.f32.mrf.mxu0
      %v2687 = vadd.f32 %v2598, %v2686
      %v2688 = vpop.f32.mrf.mxu0
      %v2689 = vadd.f32 %v2600, %v2688
      %2690 = vmatmul.bf16.gmra.mxu0 %v1240
      %v2691 = vpop.f32.mrf.mxu0
      %v2692 = vadd.f32 %v2603, %v2691
      %v2693 = vpop.f32.mrf.mxu0
      %v2694 = vadd.f32 %v2605, %v2693
      %2695 = vmatmul.bf16.gmra.mxu0 %v1241
      %v2696 = vpop.f32.mrf.mxu0
      %v2697 = vadd.f32 %v2608, %v2696
      %v2698 = vpop.f32.mrf.mxu0
      %v2699 = vadd.f32 %v2610, %v2698
      %2700 = vmatmul.bf16.gmra.mxu0 %v1242
      %v2701 = vpop.f32.mrf.mxu0
      %v2702 = vadd.f32 %v2613, %v2701
      %v2703 = vpop.f32.mrf.mxu0
      %v2704 = vadd.f32 %v2615, %v2703
      %2705 = vmatmul.bf16.gmra.mxu0 %v1243
      %v2706 = vpop.f32.mrf.mxu0
      %v2707 = vadd.f32 %v2618, %v2706
      %v2708 = vpop.f32.mrf.mxu0
      %v2709 = vadd.f32 %v2620, %v2708
      %2710 = vmatmul.bf16.gmra.mxu0 %v1244
      %v2711 = vpop.f32.mrf.mxu0
      %v2712 = vadd.f32 %v2623, %v2711
      %v2713 = vpop.f32.mrf.mxu0
      %v2714 = vadd.f32 %v2625, %v2713
      %2715 = vmatmul.bf16.gmra.mxu0 %v1245
      %v2716 = vpop.f32.mrf.mxu0
      %v2717 = vadd.f32 %v2628, %v2716
      %v2718 = vpop.f32.mrf.mxu0
      %v2719 = vadd.f32 %v2630, %v2718
      %2720 = vmatmul.bf16.gmra.mxu0 %v1246
      %v2721 = vpop.f32.mrf.mxu0
      %v2722 = vadd.f32 %v2633, %v2721
      %v2723 = vpop.f32.mrf.mxu0
      %v2724 = vadd.f32 %v2635, %v2723
      %2725 = vmatmul.bf16.gmra.mxu0 %v1247
      %v2726 = vpop.f32.mrf.mxu0
      %v2727 = vadd.f32 %v2638, %v2726
      %v2728 = vpop.f32.mrf.mxu0
      %v2729 = vadd.f32 %v2640, %v2728
      %2730 = vmatmul.bf16.gmra.mxu0 %v1248
      %v2731 = vpop.f32.mrf.mxu0
      %v2732 = vadd.f32 %v2643, %v2731
      %v2733 = vpop.f32.mrf.mxu0
      %v2734 = vadd.f32 %v2645, %v2733
      %2735 = vmatmul.bf16.gmra.mxu0 %v1249
      %v2736 = vpop.f32.mrf.mxu0
      %v2737 = vadd.f32 %v2648, %v2736
      %v2738 = vpop.f32.mrf.mxu0
      %v2739 = vadd.f32 %v2650, %v2738
      %2740 = vmatmul.bf16.gmra.mxu0 %v1250
      %v2741 = vpop.f32.mrf.mxu0
      %v2742 = vadd.f32 %v2653, %v2741
      %v2743 = vpop.f32.mrf.mxu0
      %v2744 = vadd.f32 %v2655, %v2743
      %2745 = vmatmul.bf16.gmra.mxu0 %v1251
      %v2746 = vpop.f32.mrf.mxu0
      %v2747 = vadd.f32 %v2658, %v2746
      %v2748 = vpop.f32.mrf.mxu0
      %v2749 = vadd.f32 %v2660, %v2748
      %2750 = vdwg.mxu0
      %2751 = vmatpush.bf16.msra.mxu0 %v2047
      %2752 = vmatpush.bf16.msra.mxu0 %v2046
      %2753 = vmatpush.bf16.msra.mxu0 %v2045
      %2754 = vmatpush.bf16.msra.mxu0 %v2044
      %2755 = vmatpush.bf16.msra.mxu0 %v2043
      %2756 = vmatpush.bf16.msra.mxu0 %v2042
      %2757 = vmatpush.bf16.msra.mxu0 %v2041
      %2758 = vmatpush.bf16.msra.mxu0 %v2040
      %2759 = vmatmul.bf16.gmra.mxu0 %v1303
      %v2760 = vpop.f32.mrf.mxu0
      %v2761 = vadd.f32 %v2672, %v2760
      %v2762 = vpop.f32.mrf.mxu0
      %v2763 = vadd.f32 %v2674, %v2762
      %2764 = vmatmul.bf16.gmra.mxu0 %v1311
      %v2765 = vpop.f32.mrf.mxu0
      %v2766 = vadd.f32 %v2677, %v2765
      %v2767 = vpop.f32.mrf.mxu0
      %v2768 = vadd.f32 %v2679, %v2767
      %2769 = vmatmul.bf16.gmra.mxu0 %v1323
      %v2770 = vpop.f32.mrf.mxu0
      %v2771 = vadd.f32 %v2682, %v2770
      %v2772 = vpop.f32.mrf.mxu0
      %v2773 = vadd.f32 %v2684, %v2772
      %2774 = vmatmul.bf16.gmra.mxu0 %v1331
      %v2775 = vpop.f32.mrf.mxu0
      %v2776 = vadd.f32 %v2687, %v2775
      %v2777 = vpop.f32.mrf.mxu0
      %v2778 = vadd.f32 %v2689, %v2777
      %2779 = vmatmul.bf16.gmra.mxu0 %v1343
      %v2780 = vpop.f32.mrf.mxu0
      %v2781 = vadd.f32 %v2692, %v2780
      %v2782 = vpop.f32.mrf.mxu0
      %v2783 = vadd.f32 %v2694, %v2782
      %2784 = vmatmul.bf16.gmra.mxu0 %v1351
      %v2785 = vpop.f32.mrf.mxu0
      %v2786 = vadd.f32 %v2697, %v2785
      %v2787 = vpop.f32.mrf.mxu0
      %v2788 = vadd.f32 %v2699, %v2787
      %2789 = vmatmul.bf16.gmra.mxu0 %v1363
      %v2790 = vpop.f32.mrf.mxu0
      %v2791 = vadd.f32 %v2702, %v2790
      %v2792 = vpop.f32.mrf.mxu0
      %v2793 = vadd.f32 %v2704, %v2792
      %2794 = vmatmul.bf16.gmra.mxu0 %v1371
      %v2795 = vpop.f32.mrf.mxu0
      %v2796 = vadd.f32 %v2707, %v2795
      %v2797 = vpop.f32.mrf.mxu0
      %v2798 = vadd.f32 %v2709, %v2797
      %2799 = vmatmul.bf16.gmra.mxu0 %v1383
      %v2800 = vpop.f32.mrf.mxu0
      %v2801 = vadd.f32 %v2712, %v2800
      %v2802 = vpop.f32.mrf.mxu0
      %v2803 = vadd.f32 %v2714, %v2802
      %2804 = vmatmul.bf16.gmra.mxu0 %v1391
      %v2805 = vpop.f32.mrf.mxu0
      %v2806 = vadd.f32 %v2717, %v2805
      %v2807 = vpop.f32.mrf.mxu0
      %v2808 = vadd.f32 %v2719, %v2807
      %2809 = vmatmul.bf16.gmra.mxu0 %v1403
      %v2810 = vpop.f32.mrf.mxu0
      %v2811 = vadd.f32 %v2722, %v2810
      %v2812 = vpop.f32.mrf.mxu0
      %v2813 = vadd.f32 %v2724, %v2812
      %2814 = vmatmul.bf16.gmra.mxu0 %v1411
      %v2815 = vpop.f32.mrf.mxu0
      %v2816 = vadd.f32 %v2727, %v2815
      %v2817 = vpop.f32.mrf.mxu0
      %v2818 = vadd.f32 %v2729, %v2817
      %2819 = vmatmul.bf16.gmra.mxu0 %v1423
      %v2820 = vpop.f32.mrf.mxu0
      %v2821 = vadd.f32 %v2732, %v2820
      %v2822 = vpop.f32.mrf.mxu0
      %v2823 = vadd.f32 %v2734, %v2822
      %2824 = vmatmul.bf16.gmra.mxu0 %v1431
      %v2825 = vpop.f32.mrf.mxu0
      %v2826 = vadd.f32 %v2737, %v2825
      %v2827 = vpop.f32.mrf.mxu0
      %v2828 = vadd.f32 %v2739, %v2827
      %2829 = vmatmul.bf16.gmra.mxu0 %v1443
      %v2830 = vpop.f32.mrf.mxu0
      %v2831 = vadd.f32 %v2742, %v2830
      %v2832 = vpop.f32.mrf.mxu0
      %v2833 = vadd.f32 %v2744, %v2832
      %2834 = vmatmul.bf16.gmra.mxu0 %v1451
      %v2835 = vpop.f32.mrf.mxu0
      %v2836 = vadd.f32 %v2747, %v2835
      %v2837 = vpop.f32.mrf.mxu0
      %v2838 = vadd.f32 %v2749, %v2837
      %2839 = vdwg.mxu0
      %2840 = vmatpush.bf16.msra.mxu0 %v2055
      %2841 = vmatpush.bf16.msra.mxu0 %v2054
      %2842 = vmatpush.bf16.msra.mxu0 %v2053
      %2843 = vmatpush.bf16.msra.mxu0 %v2052
      %2844 = vmatpush.bf16.msra.mxu0 %v2051
      %2845 = vmatpush.bf16.msra.mxu0 %v2050
      %2846 = vmatpush.bf16.msra.mxu0 %v2049
      %2847 = vmatpush.bf16.msra.mxu0 %v2048
      %2848 = vmatmul.bf16.gmra.mxu0 %v1494
      %v2849 = vpop.f32.mrf.mxu0
      %v2850 = vadd.f32 %v2761, %v2849
      %v2851 = vpop.f32.mrf.mxu0
      %v2852 = vadd.f32 %v2763, %v2851
      %2853 = vmatmul.bf16.gmra.mxu0 %v1496
      %v2854 = vpop.f32.mrf.mxu0
      %v2855 = vadd.f32 %v2766, %v2854
      %v2856 = vpop.f32.mrf.mxu0
      %v2857 = vadd.f32 %v2768, %v2856
      %2858 = vmatmul.bf16.gmra.mxu0 %v1499
      %v2859 = vpop.f32.mrf.mxu0
      %v2860 = vadd.f32 %v2771, %v2859
      %v2861 = vpop.f32.mrf.mxu0
      %v2862 = vadd.f32 %v2773, %v2861
      %2863 = vmatmul.bf16.gmra.mxu0 %v1501
      %v2864 = vpop.f32.mrf.mxu0
      %v2865 = vadd.f32 %v2776, %v2864
      %v2866 = vpop.f32.mrf.mxu0
      %v2867 = vadd.f32 %v2778, %v2866
      %2868 = vmatmul.bf16.gmra.mxu0 %v1504
      %v2869 = vpop.f32.mrf.mxu0
      %v2870 = vadd.f32 %v2781, %v2869
      %v2871 = vpop.f32.mrf.mxu0
      %v2872 = vadd.f32 %v2783, %v2871
      %2873 = vmatmul.bf16.gmra.mxu0 %v1506
      %v2874 = vpop.f32.mrf.mxu0
      %v2875 = vadd.f32 %v2786, %v2874
      %v2876 = vpop.f32.mrf.mxu0
      %v2877 = vadd.f32 %v2788, %v2876
      %2878 = vmatmul.bf16.gmra.mxu0 %v1509
      %v2879 = vpop.f32.mrf.mxu0
      %v2880 = vadd.f32 %v2791, %v2879
      %v2881 = vpop.f32.mrf.mxu0
      %v2882 = vadd.f32 %v2793, %v2881
      %2883 = vmatmul.bf16.gmra.mxu0 %v1511
      %v2884 = vpop.f32.mrf.mxu0
      %v2885 = vadd.f32 %v2796, %v2884
      %v2886 = vpop.f32.mrf.mxu0
      %v2887 = vadd.f32 %v2798, %v2886
      %2888 = vmatmul.bf16.gmra.mxu0 %v1514
      %v2889 = vpop.f32.mrf.mxu0
      %v2890 = vadd.f32 %v2801, %v2889
      %v2891 = vpop.f32.mrf.mxu0
      %v2892 = vadd.f32 %v2803, %v2891
      %2893 = vmatmul.bf16.gmra.mxu0 %v1516
      %v2894 = vpop.f32.mrf.mxu0
      %v2895 = vadd.f32 %v2806, %v2894
      %v2896 = vpop.f32.mrf.mxu0
      %v2897 = vadd.f32 %v2808, %v2896
      %2898 = vmatmul.bf16.gmra.mxu0 %v1519
      %v2899 = vpop.f32.mrf.mxu0
      %v2900 = vadd.f32 %v2811, %v2899
      %v2901 = vpop.f32.mrf.mxu0
      %v2902 = vadd.f32 %v2813, %v2901
      %2903 = vmatmul.bf16.gmra.mxu0 %v1521
      %v2904 = vpop.f32.mrf.mxu0
      %v2905 = vadd.f32 %v2816, %v2904
      %v2906 = vpop.f32.mrf.mxu0
      %v2907 = vadd.f32 %v2818, %v2906
      %2908 = vmatmul.bf16.gmra.mxu0 %v1524
      %v2909 = vpop.f32.mrf.mxu0
      %v2910 = vadd.f32 %v2821, %v2909
      %v2911 = vpop.f32.mrf.mxu0
      %v2912 = vadd.f32 %v2823, %v2911
      %2913 = vmatmul.bf16.gmra.mxu0 %v1526
      %v2914 = vpop.f32.mrf.mxu0
      %v2915 = vadd.f32 %v2826, %v2914
      %v2916 = vpop.f32.mrf.mxu0
      %v2917 = vadd.f32 %v2828, %v2916
      %2918 = vmatmul.bf16.gmra.mxu0 %v1529
      %v2919 = vpop.f32.mrf.mxu0
      %v2920 = vadd.f32 %v2831, %v2919
      %v2921 = vpop.f32.mrf.mxu0
      %v2922 = vadd.f32 %v2833, %v2921
      %2923 = vmatmul.bf16.gmra.mxu0 %v1531
      %v2924 = vpop.f32.mrf.mxu0
      %v2925 = vadd.f32 %v2836, %v2924
      %v2926 = vpop.f32.mrf.mxu0
      %v2927 = vadd.f32 %v2838, %v2926
      %2928 = vdwg.mxu0
      %v2929 = vld [vmem:[%s249] sm:$0xf]
      %v2930 = vld [vmem:[%s249 + $0x4] sm:$0xf]
      %v2931 = vld [vmem:[%s249 + $0x8] sm:$0xf]
      %v2932 = vld [vmem:[%s249 + $0xc] sm:$0xf]
      %v2933 = vld [vmem:[%s249 + $0x10] sm:$0xf]
      %v2934 = vld [vmem:[%s249 + $0x14] sm:$0xf]
      %v2935 = vld [vmem:[%s249 + $0x18] sm:$0xf]
      %v2936 = vld [vmem:[%s249 + $0x1c] sm:$0xf]
      %v2937 = vld [vmem:[%s249 + $0x20] sm:$0xf]
      %v2938 = vld [vmem:[%s249 + $0x24] sm:$0xf]
      %v2939 = vld [vmem:[%s249 + $0x28] sm:$0xf]
      %v2940 = vld [vmem:[%s249 + $0x2c] sm:$0xf]
      %v2941 = vld [vmem:[%s249 + $0x30] sm:$0xf]
      %v2942 = vld [vmem:[%s249 + $0x34] sm:$0xf]
      %v2943 = vld [vmem:[%s249 + $0x38] sm:$0xf]
      %v2944 = vld [vmem:[%s249 + $0x3c] sm:$0xf]
      %v2945 = vld [vmem:[%s249 + $0x40] sm:$0xf]
      %v2946 = vld [vmem:[%s249 + $0x44] sm:$0xf]
      %v2947 = vld [vmem:[%s249 + $0x48] sm:$0xf]
      %v2948 = vld [vmem:[%s249 + $0x4c] sm:$0xf]
      %v2949 = vld [vmem:[%s249 + $0x50] sm:$0xf]
      %v2950 = vld [vmem:[%s249 + $0x54] sm:$0xf]
      %v2951 = vld [vmem:[%s249 + $0x58] sm:$0xf]
      %v2952 = vld [vmem:[%s249 + $0x5c] sm:$0xf]
      %v2953 = vld [vmem:[%s249 + $0x60] sm:$0xf]
      %v2954 = vld [vmem:[%s249 + $0x64] sm:$0xf]
      %v2955 = vld [vmem:[%s249 + $0x68] sm:$0xf]
      %v2956 = vld [vmem:[%s249 + $0x6c] sm:$0xf]
      %v2957 = vld [vmem:[%s249 + $0x70] sm:$0xf]
      %v2958 = vld [vmem:[%s249 + $0x74] sm:$0xf]
      %v2959 = vld [vmem:[%s249 + $0x78] sm:$0xf]
      %v2960 = vld [vmem:[%s249 + $0x7c] sm:$0xf]
      %v2961 = vunpack.c.l.bf16 %v2929
      %v2962 = vunpack.c.l.bf16 %v2930
      %v2963 = vunpack.c.l.bf16 %v2931
      %v2964 = vunpack.c.l.bf16 %v2932
      %v2965 = vunpack.c.l.bf16 %v2933
      %v2966 = vunpack.c.l.bf16 %v2934
      %v2967 = vunpack.c.l.bf16 %v2935
      %v2968 = vunpack.c.l.bf16 %v2936
      %v2969 = vunpack.c.l.bf16 %v2937
      %v2970 = vunpack.c.l.bf16 %v2938
      %v2971 = vunpack.c.l.bf16 %v2939
      %v2972 = vunpack.c.l.bf16 %v2940
      %v2973 = vunpack.c.l.bf16 %v2941
      %v2974 = vunpack.c.l.bf16 %v2942
      %v2975 = vunpack.c.l.bf16 %v2943
      %v2976 = vunpack.c.l.bf16 %v2944
      %v2977 = vunpack.c.l.bf16 %v2945
      %v2978 = vunpack.c.l.bf16 %v2946
      %v2979 = vunpack.c.l.bf16 %v2947
      %v2980 = vunpack.c.l.bf16 %v2948
      %v2981 = vunpack.c.l.bf16 %v2949
      %v2982 = vunpack.c.l.bf16 %v2950
      %v2983 = vunpack.c.l.bf16 %v2951
      %v2984 = vunpack.c.l.bf16 %v2952
      %v2985 = vunpack.c.l.bf16 %v2953
      %v2986 = vunpack.c.l.bf16 %v2954
      %v2987 = vunpack.c.l.bf16 %v2955
      %v2988 = vunpack.c.l.bf16 %v2956
      %v2989 = vunpack.c.l.bf16 %v2957
      %v2990 = vunpack.c.l.bf16 %v2958
      %v2991 = vunpack.c.l.bf16 %v2959
      %v2992 = vunpack.c.l.bf16 %v2960
      %v2993 = vadd.f32 %v2850, %v2961
      %v2994 = vadd.f32 %v2852, %v2962
      %v2995 = vadd.f32 %v2855, %v2963
      %v2996 = vadd.f32 %v2857, %v2964
      %v2997 = vadd.f32 %v2860, %v2965
      %v2998 = vadd.f32 %v2862, %v2966
      %v2999 = vadd.f32 %v2865, %v2967
      %v3000 = vadd.f32 %v2867, %v2968
      %v3001 = vadd.f32 %v2870, %v2969
      %v3002 = vadd.f32 %v2872, %v2970
      %v3003 = vadd.f32 %v2875, %v2971
      %v3004 = vadd.f32 %v2877, %v2972
      %v3005 = vadd.f32 %v2880, %v2973
      %v3006 = vadd.f32 %v2882, %v2974
      %v3007 = vadd.f32 %v2885, %v2975
      %v3008 = vadd.f32 %v2887, %v2976
      %v3009 = vadd.f32 %v2890, %v2977
      %v3010 = vadd.f32 %v2892, %v2978
      %v3011 = vadd.f32 %v2895, %v2979
      %v3012 = vadd.f32 %v2897, %v2980
      %v3013 = vadd.f32 %v2900, %v2981
      %v3014 = vadd.f32 %v2902, %v2982
      %v3015 = vadd.f32 %v2905, %v2983
      %v3016 = vadd.f32 %v2907, %v2984
      %v3017 = vadd.f32 %v2910, %v2985
      %v3018 = vadd.f32 %v2912, %v2986
      %v3019 = vadd.f32 %v2915, %v2987
      %v3020 = vadd.f32 %v2917, %v2988
      %v3021 = vadd.f32 %v2920, %v2989
      %v3022 = vadd.f32 %v2922, %v2990
      %v3023 = vadd.f32 %v2925, %v2991
      %v3024 = vadd.f32 %v2927, %v2992
      %3025 = vst [vmem:[%s260] sm:$0xff] %v2993
      %3026 = vst [vmem:[%s260 + $0x8] sm:$0xff] %v2994
      %3027 = vst [vmem:[%s260 + $0x10] sm:$0xff] %v2995
      %3028 = vst [vmem:[%s260 + $0x18] sm:$0xff] %v2996
      %3029 = vst [vmem:[%s260 + $0x20] sm:$0xff] %v2997
      %3030 = vst [vmem:[%s260 + $0x28] sm:$0xff] %v2998
      %3031 = vst [vmem:[%s260 + $0x30] sm:$0xff] %v2999
      %3032 = vst [vmem:[%s260 + $0x38] sm:$0xff] %v3000
      %3033 = vst [vmem:[%s260 + $0x40] sm:$0xff] %v3001
      %3034 = vst [vmem:[%s260 + $0x48] sm:$0xff] %v3002
      %3035 = vst [vmem:[%s260 + $0x50] sm:$0xff] %v3003
      %3036 = vst [vmem:[%s260 + $0x58] sm:$0xff] %v3004
      %3037 = vst [vmem:[%s260 + $0x60] sm:$0xff] %v3005
      %3038 = vst [vmem:[%s260 + $0x68] sm:$0xff] %v3006
      %3039 = vst [vmem:[%s260 + $0x70] sm:$0xff] %v3007
      %3040 = vst [vmem:[%s260 + $0x78] sm:$0xff] %v3008
      %3041 = vst [vmem:[%s260 + $0x80] sm:$0xff] %v3009
      %3042 = vst [vmem:[%s260 + $0x88] sm:$0xff] %v3010
      %3043 = vst [vmem:[%s260 + $0x90] sm:$0xff] %v3011
      %3044 = vst [vmem:[%s260 + $0x98] sm:$0xff] %v3012
      %3045 = vst [vmem:[%s260 + $0xa0] sm:$0xff] %v3013
      %3046 = vst [vmem:[%s260 + $0xa8] sm:$0xff] %v3014
      %3047 = vst [vmem:[%s260 + $0xb0] sm:$0xff] %v3015
      %3048 = vst [vmem:[%s260 + $0xb8] sm:$0xff] %v3016
      %3049 = vst [vmem:[%s260 + $0xc0] sm:$0xff] %v3017
      %3050 = vst [vmem:[%s260 + $0xc8] sm:$0xff] %v3018
      %3051 = vst [vmem:[%s260 + $0xd0] sm:$0xff] %v3019
      %3052 = vst [vmem:[%s260 + $0xd8] sm:$0xff] %v3020
      %3053 = vst [vmem:[%s260 + $0xe0] sm:$0xff] %v3021
      %3054 = vst [vmem:[%s260 + $0xe8] sm:$0xff] %v3022
      %3055 = vst [vmem:[%s260 + $0xf0] sm:$0xff] %v3023
      %3056 = vst [vmem:[%s260 + $0xf8] sm:$0xff] %v3024
      %s3057 = smul.u32 8, %s20
      %p3058 = scmp.lt.s32.totalorder %s19, 1
      %s3059 = scalar_select %p3058, %s19, 1
      %p3060 = scmp.lt.s32.totalorder %s3057, 31
      %s3061 = scalar_select %p3060, %s3057, 31
      %s3062 = smul.addr %s3061, 4
      %s3063 = smul.addr %s3059, 128
      %s3064 = sadd.s32 %s3062, %s3063
      %s3065 = smul.addr %s3064, 8
      %s3066 = scalar_lea.vmem %s4, %s3065
      // Predicated region
      $region37: #{residual_block_up_forward.7} parent=35 // pred_check
        %p3067 = pneg %p143
      $region38: #{residual_block_up_forward.7} parent=35 // pred_check_branch
        %3069 = sbr.rel (%p3067) target = $region40
      $region39: #{residual_block_up_forward.7} parent=35 // pred_region
        %s3070 = smul.u32 8, %s20
      $region40: #{residual_block_up_forward.7} parent=35 // pred_fallthru
        _
    $region36: #{residual_block_up_forward.7} parent=5 // pred_fallthru
      _
    %p3071 = scmp.le.s32.totalorder 2, %s10
    // Predicated region
    $region41: #{residual_block_up_forward.7} parent=5 // pred_check
      %p3072 = pneg %p3071
    $region42: #{residual_block_up_forward.7} parent=5 // pred_check_branch
      %3074 = sbr.rel (%p3072) target = $region44
    $region43: #{residual_block_up_forward.7} parent=5 // pred_region
      %s3075 = ssub.s32 %s10, 2
      // Predicated region
      $region45: #{residual_block_up_forward.7} parent=43 // pred_check
        %p3076 = pneg %p149
      $region46: #{residual_block_up_forward.7} parent=43 // pred_check_branch
        %3078 = sbr.rel (%p3076) target = $region48
      $region47: #{residual_block_up_forward.7} parent=43 // pred_region
        %s3079 = smul.u32 8, %s22
        %p3080 = scmp.lt.s32.totalorder %s21, 1
        %s3081 = scalar_select %p3080, %s21, 1
        %p3082 = scmp.lt.s32.totalorder %s3079, 31
        %s3083 = scalar_select %p3082, %s3079, 31
        %s3084 = smul.addr %s3083, 4
        %s3085 = smul.addr %s3081, 128
        %s3086 = sadd.s32 %s3084, %s3085
        %s3087 = smul.addr %s3086, 8
        %s3088 = scalar_lea.vmem %s4, %s3087
      $region48: #{residual_block_up_forward.7} parent=43 // pred_fallthru
        _
    $region44: #{residual_block_up_forward.7} parent=5 // pred_fallthru
      _
  $region6: #{residual_block_up_forward.7} parent=0 // loop_footer
    %s14 = sadd.s32 1, %s10
  $region7: #{residual_block_up_forward.7} parent=0 // loop_footer_branch
    %9 = sbr.rel target = $region3
  $region8: #{residual_block_up_forward.7} parent=0 // loop_exit
    _

</llo_original>
